<compile_context>
chip_gen: v7x
topology: tpu7x:2x2x1
jax: 0.10.0
libtpu: 0.0.40
codegen_flags: <defaults>
</compile_context>

<pallas_src>
import functools

import jax
import jax.numpy as jnp
from jax import lax
from jax.experimental import pallas as pl
from jax.experimental.pallas import tpu as pltpu

# ----------------------------- config ---------------------------------------
PAD = 0
DICT_SIZE = 32          # rc.dictionary_size
EMBED_DIM = 32          # config.sable.encoder_embed_dim
NUM_HEADS = 4           # config.sable.encoder_attention_heads
HEAD_DIM = EMBED_DIM // NUM_HEADS
FFN_DIM = 64            # config.sable.encoder_ffn_embed_dim
NUM_LAYERS = 2          # config.sable.encoder_layers
GAUSS_K = 16            # gaussian basis size in the distance encoder
OUT_DIM = 384           # lm_head output_dim
LN_EPS = 1e-5

# Row layout of the packed small-vector constant block (one 128-lane row each).
VP_GMEAN, VP_GINVSTD, VP_GNORM, VP_DE_B1, VP_DE_B2 = 0, 1, 2, 3, 4
VP_EMB_G, VP_EMB_B = 5, 6
VP_LAYER0 = 7            # per layer: ln1_g, ln1_b, b_qkv, b_o, ln2_g, ln2_b, fc1_b, fc2_b
VP_PER_LAYER = 8
VP_FINAL_G = VP_LAYER0 + VP_PER_LAYER * NUM_LAYERS
VP_FINAL_B = VP_FINAL_G + 1
VP_LMD_B = VP_FINAL_G + 2
VP_LMLN_G = VP_FINAL_G + 3
VP_LMLN_B = VP_FINAL_G + 4
VP_NROWS = VP_FINAL_G + 5


# ----------------------------- in-kernel helpers -----------------------------
def _gelu(x):
    # tanh-approximation GELU (EUP friendly).
    # TODO(synk): reference may use exact erf-based F.gelu; difference is ~1e-3.
    return 0.5 * x * (1.0 + jnp.tanh(0.7978845608028654 * (x + 0.044715 * x * x * x)))


def _ln(x, g, b):
    mu = jnp.mean(x, axis=-1, keepdims=True)
    var = jnp.mean(jnp.square(x - mu), axis=-1, keepdims=True)
    return (x - mu) * lax.rsqrt(var + LN_EPS) * g + b


# ----------------------------- fused forward kernel --------------------------
def _fused_forward_kernel(
        # batched inputs (blocked over the leading block axis)
        tok_col_ref, tok_row_ref, dist_ref,
        # weights (whole-block, VMEM-resident)
        embed_ref, de_w1_ref, de_w2_ref,
        wqkv_ref, wo_ref, fc1_ref, fc2_ref,
        lmdw_ref, lmow_ref, lmob_ref, pool_ref, vp_ref,
        # output
        out_ref,
        # VMEM scratch
        qkv_scr, attn_scr, bias_scr,
        *, block_b, seq_len):
    f32 = jnp.float32
    Bb, L = block_b, seq_len
    R = Bb * L
    D, H, Dh, K = EMBED_DIM, NUM_HEADS, HEAD_DIM, GAUSS_K

    def vp(row, n):
        # static ref slice into the packed small-vector block -> (1, n)
        return vp_ref[row:row + 1, :n]

    tok_col = tok_col_ref[0]                         # (R, 1)    int32
    tok_row = tok_row_ref[0]                         # (Bb, L)   int32
    d_exp = dist_ref[0]                              # (R, L*K)  f32

    # ---- token embedding as one-hot @ table (PAD row of the table is zero) ----
    onehot = (tok_col == lax.broadcasted_iota(jnp.int32, (R, DICT_SIZE), 1)).astype(f32)
    x = jnp.dot(onehot, embed_ref[...], preferred_element_type=f32)          # (R, D)

    # ---- padding masks ----
    keep = jnp.where(tok_col == PAD, 0.0, 1.0).astype(f32)                   # (R, 1)
    keyb = jnp.where(tok_row == PAD, -1e9, 0.0).astype(f32)                  # (Bb, L)

    # ---- DistanceEncoder: rows=(sample,query), lanes=(key,basis) -> (key,head) ----
    a = (d_exp - vp(VP_GMEAN, L * K)) * vp(VP_GINVSTD, L * K)
    g = jnp.exp(-0.5 * a * a) * vp(VP_GNORM, L * K)                          # (R, L*K)
    h1 = _gelu(jnp.dot(g, de_w1_ref[...], preferred_element_type=f32) + vp(VP_DE_B1, L * K))
    bias_scr[...] = (jnp.dot(h1, de_w2_ref[...], preferred_element_type=f32)
                     + vp(VP_DE_B2, H * L))                                  # (R, H*L)

    # ---- embedding layernorm + zero padded rows (eval mode: no dropout) ----
    x = _ln(x, vp(VP_EMB_G, D), vp(VP_EMB_B, D)) * keep

    scale = 1.0 / float(Dh) ** 0.5
    for li in range(NUM_LAYERS):
        base = VP_LAYER0 + VP_PER_LAYER * li
        # pre-LN self-attention with fused QKV projection over all block tokens
        y = _ln(x, vp(base + 0, D), vp(base + 1, D))
        qkv_scr[...] = jnp.dot(y, wqkv_ref[li], preferred_element_type=f32) + vp(base + 2, 3 * D)
        for bs in range(Bb):
            r0 = bs * L
            kb = keyb[bs:bs + 1, :]                                          # (1, L)
            for hh in range(H):
                c = hh * Dh
                qh = qkv_scr[r0:r0 + L, c:c + Dh]
                kh = qkv_scr[r0:r0 + L, D + c:D + c + Dh]
                vh = qkv_scr[r0:r0 + L, 2 * D + c:2 * D + c + Dh]
                s = lax.dot_general(qh, kh, (((1,), (1,)), ((), ())),
                                    preferred_element_type=f32) * scale
                s = s + bias_scr[r0:r0 + L, hh * L:(hh + 1) * L] + kb
                s = s - jnp.max(s, axis=-1, keepdims=True)
                p = jnp.exp(s)
                p = p * pl.reciprocal(jnp.sum(p, axis=-1, keepdims=True), approx=True)
                attn_scr[r0:r0 + L, c:c + Dh] = jnp.dot(p, vh, preferred_element_type=f32)
        x = x + jnp.dot(attn_scr[...], wo_ref[li], preferred_element_type=f32) + vp(base + 3, D)
        # pre-LN FFN
        y = _ln(x, vp(base + 4, D), vp(base + 5, D))
        y = _gelu(jnp.dot(y, fc1_ref[li], preferred_element_type=f32) + vp(base + 6, FFN_DIM))
        x = x + jnp.dot(y, fc2_ref[li], preferred_element_type=f32) + vp(base + 7, D)

    x = _ln(x, vp(VP_FINAL_G, D), vp(VP_FINAL_B, D))

    # ---- MaskLMHead (dense -> gelu -> LN -> 32x384 proj) + per-sample mean ----
    y = _gelu(jnp.dot(x, lmdw_ref[...], preferred_element_type=f32) + vp(VP_LMD_B, D))
    y = _ln(y, vp(VP_LMLN_G, D), vp(VP_LMLN_B, D))
    logits = jnp.dot(y, lmow_ref[...], preferred_element_type=f32) + lmob_ref[...]   # (R, 384)
    # block-diagonal pooling matmul: (Bb, R) @ (R, 384) -> lane-dense (Bb, 384) store
    out_ref[0] = jnp.dot(pool_ref[...], logits, preferred_element_type=f32)


# ----------------------------- BlockSpec helpers ------------------------------
def _block_leading_spec(shape):
    """Block only the leading axis (size 1 per step); trailing dims stay full."""
    nd = len(shape)
    return pl.BlockSpec((1,) + tuple(shape[1:]), lambda i, nd=nd: (i,) + (0,) * (nd - 1))


def _const_spec(shape):
    """Whole array as a single block, same block every grid step."""
    nd = len(shape)
    return pl.BlockSpec(tuple(shape), lambda i, nd=nd: (0,) * nd)


# ----------------------------- parameters ------------------------------------
def init_params(key):
    keys = iter(jax.random.split(key, 128))

    def w(shape, scale=0.02):
        return (scale * jax.random.normal(next(keys), shape)).astype(jnp.float32)

    p = {}
    emb = w((DICT_SIZE, EMBED_DIM), 1.0)
    p['embed'] = emb.at[PAD].set(0.0)                      # padding_idx row = 0

    # DistanceEncoder (gaussian basis -> MLP -> per-head bias), Uni-Mol style
    p['gauss_mean'] = jnp.linspace(0.0, 8.0, GAUSS_K).astype(jnp.float32)
    p['gauss_std'] = jnp.linspace(0.5, 2.0, GAUSS_K).astype(jnp.float32)
    p['de_w1'] = w((GAUSS_K, GAUSS_K))
    p['de_b1'] = jnp.zeros((GAUSS_K,), jnp.float32)
    p['de_w2'] = w((GAUSS_K, NUM_HEADS))
    p['de_b2'] = jnp.zeros((NUM_HEADS,), jnp.float32)

    # TransformerEncoderWithPair
    p['emb_ln_g'] = jnp.ones((EMBED_DIM,), jnp.float32)
    p['emb_ln_b'] = jnp.zeros((EMBED_DIM,), jnp.float32)
    layers = []
    for _ in range(NUM_LAYERS):
        layers.append(dict(
            ln1_g=jnp.ones((EMBED_DIM,), jnp.float32), ln1_b=jnp.zeros((EMBED_DIM,), jnp.float32),
            wq=w((EMBED_DIM, EMBED_DIM)), bq=jnp.zeros((EMBED_DIM,), jnp.float32),
            wk=w((EMBED_DIM, EMBED_DIM)), bk=jnp.zeros((EMBED_DIM,), jnp.float32),
            wv=w((EMBED_DIM, EMBED_DIM)), bv=jnp.zeros((EMBED_DIM,), jnp.float32),
            wo=w((EMBED_DIM, EMBED_DIM)), bo=jnp.zeros((EMBED_DIM,), jnp.float32),
            ln2_g=jnp.ones((EMBED_DIM,), jnp.float32), ln2_b=jnp.zeros((EMBED_DIM,), jnp.float32),
            fc1_w=w((EMBED_DIM, FFN_DIM)), fc1_b=jnp.zeros((FFN_DIM,), jnp.float32),
            fc2_w=w((FFN_DIM, EMBED_DIM)), fc2_b=jnp.zeros((EMBED_DIM,), jnp.float32),
        ))
    p['layers'] = layers
    p['final_ln_g'] = jnp.ones((EMBED_DIM,), jnp.float32)
    p['final_ln_b'] = jnp.zeros((EMBED_DIM,), jnp.float32)

    # MaskLMHead (dense -> gelu -> layernorm -> proj to 384)
    p['lm_dense_w'] = w((EMBED_DIM, EMBED_DIM))
    p['lm_dense_b'] = jnp.zeros((EMBED_DIM,), jnp.float32)
    p['lm_ln_g'] = jnp.ones((EMBED_DIM,), jnp.float32)
    p['lm_ln_b'] = jnp.zeros((EMBED_DIM,), jnp.float32)
    p['lm_out_w'] = w((EMBED_DIM, OUT_DIM))
    p['lm_out_b'] = jnp.zeros((OUT_DIM,), jnp.float32)
    return p


# ----------------------------- forward pass ----------------------------------
@jax.jit
def forward(params, src_coordinate, src_distance, src_residue):
    # TODO(synk): DistanceEncoder source not provided; src_coordinate is accepted
    # but the bias is built from src_distance via a Gaussian-basis MLP (Uni-Mol style).
    del src_coordinate
    B, L = src_residue.shape
    D, H, Dh, K, NL, F = EMBED_DIM, NUM_HEADS, HEAD_DIM, GAUSS_K, NUM_LAYERS, FFN_DIM

    # --- block size: target ~128 activation rows per grid step; cap unrolling.
    # On v7x prefer block_b such that the grid stays >= 2 so both TCs get work.
    block_b = max(1, min(B, max(1, 128 // L), 16))
    nb = -(-B // block_b)
    Bpad = nb * block_b
    R = block_b * L

    # ---- kernel-friendly input layouts (tiny one-time reshapes, done by XLA) ----
    res = src_residue.astype(jnp.int32)
    dist = src_distance.astype(jnp.float32)
    if Bpad != B:
        res = jnp.concatenate([res, jnp.full((Bpad - B, L), PAD, jnp.int32)], axis=0)
        dist = jnp.concatenate([dist, jnp.zeros((Bpad - B, L, L), jnp.float32)], axis=0)
    tok_col = res.reshape(nb, R, 1)
    tok_row = res.reshape(nb, block_b, L)
    # gaussian-basis input, rows=(sample, query), lanes=(key, basis)
    dist_exp = jnp.broadcast_to(dist[..., None], (Bpad, L, L, K)).reshape(nb, R, L * K)

    # ---- weight packing (layout only; fused QKV, stacked layers) ----
    lyr = params['layers']
    stack = lambda name: jnp.stack([l[name] for l in lyr])
    wqkv = jnp.stack([jnp.concatenate([l['wq'], l['wk'], l['wv']], axis=1) for l in lyr])  # (NL,D,3D)
    wo = stack('wo')                                  # (NL, D, D)
    fc1 = stack('fc1_w')                              # (NL, D, F)
    fc2 = stack('fc2_w')                              # (NL, F, D)

    # DistanceEncoder as block-diagonal matmuls whose output lanes are (key, basis)/(head, key)
    eyeL = jnp.eye(L, dtype=jnp.float32)
    de_w1k = jnp.kron(eyeL, params['de_w1'])                                  # (L*K, L*K)
    de_w2k = jnp.einsum('jl,kh->jkhl', eyeL, params['de_w2']).reshape(L * K, H * L)

    std = params['gauss_std']
    mean_t = jnp.tile(params['gauss_mean'], L)                                # (L*K,)
    invstd_t = jnp.tile(1.0 / std, L)
    norm_t = jnp.tile(1.0 / (std * 2.5066282746310002), L)
    de_b1_t = jnp.tile(params['de_b1'], L)                                    # (L*K,)
    de_b2_t = jnp.repeat(params['de_b2'], L)                                  # (H*L,)

    # ---- pack all small vectors into one lane-padded constant block ----
    vpw = 128 * ((max(128, L * K, 3 * D, F) + 127) // 128)

    def _padrow(v):
        v = jnp.asarray(v, jnp.float32).reshape(-1)
        return jnp.pad(v, (0, vpw - v.shape[0]))

    vp_rows = [mean_t, invstd_t, norm_t, de_b1_t, de_b2_t,
               params['emb_ln_g'], params['emb_ln_b']]
    for l in lyr:
        vp_rows += [l['ln1_g'], l['ln1_b'],
                    jnp.concatenate([l['bq'], l['bk'], l['bv']]),
                    l['bo'], l['ln2_g'], l['ln2_b'], l['fc1_b'], l['fc2_b']]
    vp_rows += [params['final_ln_g'], params['final_ln_b'],
                params['lm_dense_b'], params['lm_ln_g'], params['lm_ln_b']]
    assert len(vp_rows) == VP_NROWS
    vpack = jnp.stack([_padrow(r) for r in vp_rows])
    vpack = jnp.pad(vpack, ((0, (-VP_NROWS) % 8), (0, 0)))                    # (32, vpw)

    # pooling matrix: per-sample mean over L as a single matmul
    pool = jnp.kron(jnp.eye(block_b, dtype=jnp.float32),
                    jnp.full((1, L), 1.0 / L, jnp.float32))                   # (Bb, R)

    batched = [tok_col, tok_row, dist_exp]
    consts = [params['embed'], de_w1k, de_w2k, wqkv, wo, fc1, fc2,
              params['lm_dense_w'], params['lm_out_w'],
              params['lm_out_b'].reshape(1, OUT_DIM), pool, vpack]

    out = pl.pallas_call(
        functools.partial(_fused_forward_kernel, block_b=block_b, seq_len=L),
        out_shape=jax.ShapeDtypeStruct((nb, block_b, OUT_DIM), jnp.float32),
        grid=(nb,),
        in_specs=[_block_leading_spec(a.shape) for a in batched]
                 + [_const_spec(a.shape) for a in consts],
        out_specs=_block_leading_spec((nb, block_b, OUT_DIM)),
        scratch_shapes=[pltpu.VMEM((R, 3 * D), jnp.float32),   # fused QKV
                        pltpu.VMEM((R, D), jnp.float32),       # merged attention heads
                        pltpu.VMEM((R, H * L), jnp.float32)],  # per-(sample,head) bias tiles
        compiler_params=pltpu.CompilerParams(
            dimension_semantics=("parallel",),                 # v7x: split blocks over 2 TCs
            vmem_limit_bytes=32 * 1024 * 1024),                # safe on v5e/v6e/v7x
    )(*batched, *consts)
    return out.reshape(Bpad, OUT_DIM)[:B]


# ----------------------------- main ------------------------------------------
if __name__ == "__main__":
    key = jax.random.PRNGKey(0)
    pkey, ckey, rkey = jax.random.split(key, 3)
    params = init_params(pkey)

    B, L = 2, 8
    src_coordinate = 3.0 * jax.random.normal(ckey, (B, L, 3), dtype=jnp.float32)
    diff = src_coordinate[:, :, None, :] - src_coordinate[:, None, :, :]
    src_distance = jnp.sqrt(jnp.sum(diff * diff, axis=-1) + 1e-12)       # (B, L, L)
    src_residue = jax.random.randint(rkey, (B, L), 1, DICT_SIZE)
    src_residue = src_residue.at[1, L - 2:].set(PAD)                     # add some padding

    out = forward(params, src_coordinate, src_distance, src_residue)
    out = jax.block_until_ready(out)
    assert out.shape == (B, OUT_DIM), out.shape
    assert bool(jnp.all(jnp.isfinite(out)))
    print("KERNEL_OK")
</pallas_src>

<mosaic_0001>
module attributes {stable_mosaic.version = 11 : i64} {
  func.func @_fused_forward_kernel(%arg0: i32, %arg1: memref<1x16x1xi32, #tpu.memory_space<vmem>>, %arg2: memref<1x2x8xi32, #tpu.memory_space<vmem>>, %arg3: memref<1x16x128xf32, #tpu.memory_space<vmem>>, %arg4: memref<32x32xf32, #tpu.memory_space<vmem>>, %arg5: memref<128x128xf32, #tpu.memory_space<vmem>>, %arg6: memref<128x32xf32, #tpu.memory_space<vmem>>, %arg7: memref<2x32x96xf32, #tpu.memory_space<vmem>>, %arg8: memref<2x32x32xf32, #tpu.memory_space<vmem>>, %arg9: memref<2x32x64xf32, #tpu.memory_space<vmem>>, %arg10: memref<2x64x32xf32, #tpu.memory_space<vmem>>, %arg11: memref<32x32xf32, #tpu.memory_space<vmem>>, %arg12: memref<32x384xf32, #tpu.memory_space<vmem>>, %arg13: memref<1x384xf32, #tpu.memory_space<vmem>>, %arg14: memref<2x16xf32, #tpu.memory_space<vmem>>, %arg15: memref<32x128xf32, #tpu.memory_space<vmem>>, %arg16: memref<1x2x384xf32, #tpu.memory_space<vmem>>, %arg17: memref<16x96xf32, #tpu.memory_space<vmem>>, %arg18: memref<16x32xf32, #tpu.memory_space<vmem>>, %arg19: memref<16x32xf32, #tpu.memory_space<vmem>>) attributes {dimension_semantics = [#tpu.dimension_semantics<parallel>], iteration_bounds = array<i64: 1>, scalar_prefetch = 0 : i64, scratch_operands = 3 : i64, tpu.core_type = #tpu.core_type<tc>, window_params = [{transform_indices = @transform_0, window_bounds = array<i64: 1, 16, 1>}, {transform_indices = @transform_1, window_bounds = array<i64: 1, 2, 8>}, {transform_indices = @transform_2, window_bounds = array<i64: 1, 16, 128>}, {pipeline_mode = #tpu.pipeline_mode<synchronous>, transform_indices = @transform_3, window_bounds = array<i64: 32, 32>}, {pipeline_mode = #tpu.pipeline_mode<synchronous>, transform_indices = @transform_4, window_bounds = array<i64: 128, 128>}, {pipeline_mode = #tpu.pipeline_mode<synchronous>, transform_indices = @transform_5, window_bounds = array<i64: 128, 32>}, {pipeline_mode = #tpu.pipeline_mode<synchronous>, transform_indices = @transform_6, window_bounds = array<i64: 2, 32, 96>}, {pipeline_mode = #tpu.pipeline_mode<synchronous>, transform_indices = @transform_7, window_bounds = array<i64: 2, 32, 32>}, {pipeline_mode = #tpu.pipeline_mode<synchronous>, transform_indices = @transform_8, window_bounds = array<i64: 2, 32, 64>}, {pipeline_mode = #tpu.pipeline_mode<synchronous>, transform_indices = @transform_9, window_bounds = array<i64: 2, 64, 32>}, {pipeline_mode = #tpu.pipeline_mode<synchronous>, transform_indices = @transform_10, window_bounds = array<i64: 32, 32>}, {pipeline_mode = #tpu.pipeline_mode<synchronous>, transform_indices = @transform_11, window_bounds = array<i64: 32, 384>}, {pipeline_mode = #tpu.pipeline_mode<synchronous>, transform_indices = @transform_12, window_bounds = array<i64: 1, 384>}, {pipeline_mode = #tpu.pipeline_mode<synchronous>, transform_indices = @transform_13, window_bounds = array<i64: 2, 16>}, {pipeline_mode = #tpu.pipeline_mode<synchronous>, transform_indices = @transform_14, window_bounds = array<i64: 32, 128>}, {transform_indices = @transform_15, window_bounds = array<i64: 1, 2, 384>}]} {
    %c0 = arith.constant 0 : index
    %c0_0 = arith.constant 0 : index
    %c0_1 = arith.constant 0 : index
    %0 = vector.load %arg1[%c0, %c0_0, %c0_1] : memref<1x16x1xi32, #tpu.memory_space<vmem>>, vector<1x16x1xi32>
    %1 = vector.shape_cast %0 : vector<1x16x1xi32> to vector<16x1xi32>
    %c0_2 = arith.constant 0 : index
    %c0_3 = arith.constant 0 : index
    %c0_4 = arith.constant 0 : index
    %2 = vector.load %arg2[%c0_2, %c0_3, %c0_4] : memref<1x2x8xi32, #tpu.memory_space<vmem>>, vector<1x2x8xi32>
    %3 = vector.shape_cast %2 : vector<1x2x8xi32> to vector<2x8xi32>
    %c0_5 = arith.constant 0 : index
    %c0_6 = arith.constant 0 : index
    %c0_7 = arith.constant 0 : index
    %4 = vector.load %arg3[%c0_5, %c0_6, %c0_7] : memref<1x16x128xf32, #tpu.memory_space<vmem>>, vector<1x16x128xf32>
    %5 = vector.shape_cast %4 : vector<1x16x128xf32> to vector<16x128xf32>
    %6 = tpu.iota {dimensions = array<i32: 1>} : vector<16x32xi32>
    %7 = vector.broadcast %1 : vector<16x1xi32> to vector<16x32xi32>
    %8 = arith.cmpi eq, %7, %6 : vector<16x32xi32>
    %9 = arith.extui %8 : vector<16x32xi1> to vector<16x32xi32>
    %10 = arith.sitofp %9 : vector<16x32xi32> to vector<16x32xf32>
    %c0_8 = arith.constant 0 : index
    %c0_9 = arith.constant 0 : index
    %11 = vector.load %arg4[%c0_8, %c0_9] : memref<32x32xf32, #tpu.memory_space<vmem>>, vector<32x32xf32>
    %cst = arith.constant dense<0.000000e+00> : vector<16x32xf32>
    %12 = tpu.matmul %10, %11, %cst {dimension_numbers = #tpu.dot_dimension_numbers<[1], [0], [0], [1], [0, 0, 1, 1], [], []>} : vector<16x32xf32>, vector<32x32xf32>, vector<16x32xf32> -> vector<16x32xf32>
    %c0_i32 = arith.constant 0 : i32
    %13 = vector.broadcast %c0_i32 : i32 to vector<16x1xi32>
    %14 = arith.cmpi eq, %1, %13 : vector<16x1xi32>
    %cst_10 = arith.constant 0.000000e+00 : f32
    %cst_11 = arith.constant 1.000000e+00 : f32
    %15 = vector.broadcast %cst_10 : f32 to vector<16x1xf32>
    %16 = vector.broadcast %cst_11 : f32 to vector<16x1xf32>
    %17 = arith.select %14, %15, %16 : vector<16x1xi1>, vector<16x1xf32>
    %c0_i32_12 = arith.constant 0 : i32
    %18 = vector.broadcast %c0_i32_12 : i32 to vector<2x8xi32>
    %19 = arith.cmpi eq, %3, %18 : vector<2x8xi32>
    %cst_13 = arith.constant -1.000000e+09 : f32
    %cst_14 = arith.constant 0.000000e+00 : f32
    %20 = vector.broadcast %cst_13 : f32 to vector<2x8xf32>
    %21 = vector.broadcast %cst_14 : f32 to vector<2x8xf32>
    %22 = arith.select %19, %20, %21 : vector<2x8xi1>, vector<2x8xf32>
    %c0_15 = arith.constant 0 : index
    %c0_16 = arith.constant 0 : index
    %23 = vector.load %arg15[%c0_15, %c0_16] : memref<32x128xf32, #tpu.memory_space<vmem>>, vector<1x128xf32>
    %24 = vector.broadcast %23 : vector<1x128xf32> to vector<16x128xf32>
    %25 = arith.subf %5, %24 : vector<16x128xf32>
    %c1 = arith.constant 1 : index
    %c0_17 = arith.constant 0 : index
    %26 = vector.load %arg15[%c1, %c0_17] : memref<32x128xf32, #tpu.memory_space<vmem>>, vector<1x128xf32>
    %27 = vector.broadcast %26 : vector<1x128xf32> to vector<16x128xf32>
    %28 = arith.mulf %25, %27 : vector<16x128xf32>
    %cst_18 = arith.constant -5.000000e-01 : f32
    %29 = vector.broadcast %cst_18 : f32 to vector<16x128xf32>
    %30 = arith.mulf %29, %28 : vector<16x128xf32>
    %31 = arith.mulf %30, %28 : vector<16x128xf32>
    %32 = math.exp %31 : vector<16x128xf32>
    %c2 = arith.constant 2 : index
    %c0_19 = arith.constant 0 : index
    %33 = vector.load %arg15[%c2, %c0_19] : memref<32x128xf32, #tpu.memory_space<vmem>>, vector<1x128xf32>
    %34 = vector.broadcast %33 : vector<1x128xf32> to vector<16x128xf32>
    %35 = arith.mulf %32, %34 : vector<16x128xf32>
    %c0_20 = arith.constant 0 : index
    %c0_21 = arith.constant 0 : index
    %36 = vector.load %arg5[%c0_20, %c0_21] : memref<128x128xf32, #tpu.memory_space<vmem>>, vector<128x128xf32>
    %cst_22 = arith.constant dense<0.000000e+00> : vector<16x128xf32>
    %37 = tpu.matmul %35, %36, %cst_22 {dimension_numbers = #tpu.dot_dimension_numbers<[1], [0], [0], [1], [0, 0, 1, 1], [], []>} : vector<16x128xf32>, vector<128x128xf32>, vector<16x128xf32> -> vector<16x128xf32>
    %c3 = arith.constant 3 : index
    %c0_23 = arith.constant 0 : index
    %38 = vector.load %arg15[%c3, %c0_23] : memref<32x128xf32, #tpu.memory_space<vmem>>, vector<1x128xf32>
    %39 = vector.broadcast %38 : vector<1x128xf32> to vector<16x128xf32>
    %40 = arith.addf %37, %39 : vector<16x128xf32>
    %cst_24 = arith.constant 5.000000e-01 : f32
    %41 = vector.broadcast %cst_24 : f32 to vector<16x128xf32>
    %42 = arith.mulf %41, %40 : vector<16x128xf32>
    %cst_25 = arith.constant 4.471500e-02 : f32
    %43 = vector.broadcast %cst_25 : f32 to vector<16x128xf32>
    %44 = arith.mulf %43, %40 : vector<16x128xf32>
    %45 = arith.mulf %44, %40 : vector<16x128xf32>
    %46 = arith.mulf %45, %40 : vector<16x128xf32>
    %47 = arith.addf %40, %46 : vector<16x128xf32>
    %cst_26 = arith.constant 0.797884583 : f32
    %48 = vector.broadcast %cst_26 : f32 to vector<16x128xf32>
    %49 = arith.mulf %48, %47 : vector<16x128xf32>
    %50 = math.tanh %49 : vector<16x128xf32>
    %cst_27 = arith.constant 1.000000e+00 : f32
    %51 = vector.broadcast %cst_27 : f32 to vector<16x128xf32>
    %52 = arith.addf %51, %50 : vector<16x128xf32>
    %53 = arith.mulf %42, %52 : vector<16x128xf32>
    %c0_28 = arith.constant 0 : index
    %c0_29 = arith.constant 0 : index
    %54 = vector.load %arg6[%c0_28, %c0_29] : memref<128x32xf32, #tpu.memory_space<vmem>>, vector<128x32xf32>
    %cst_30 = arith.constant dense<0.000000e+00> : vector<16x32xf32>
    %55 = tpu.matmul %53, %54, %cst_30 {dimension_numbers = #tpu.dot_dimension_numbers<[1], [0], [0], [1], [0, 0, 1, 1], [], []>} : vector<16x128xf32>, vector<128x32xf32>, vector<16x32xf32> -> vector<16x32xf32>
    %c4 = arith.constant 4 : index
    %c0_31 = arith.constant 0 : index
    %56 = vector.load %arg15[%c4, %c0_31] : memref<32x128xf32, #tpu.memory_space<vmem>>, vector<1x32xf32>
    %57 = vector.broadcast %56 : vector<1x32xf32> to vector<16x32xf32>
    %58 = arith.addf %55, %57 : vector<16x32xf32>
    %c0_32 = arith.constant 0 : index
    %c0_33 = arith.constant 0 : index
    %59 = vector.load %arg19[%c0_32, %c0_33] : memref<16x32xf32, #tpu.memory_space<vmem>>, vector<16x32xf32>
    tpu.vector_store %arg19[%c0_32, %c0_33], %58 {strides = array<i32>} : memref<16x32xf32, #tpu.memory_space<vmem>>, vector<16x32xf32>,
    %c5 = arith.constant 5 : index
    %c0_34 = arith.constant 0 : index
    %60 = vector.load %arg15[%c5, %c0_34] : memref<32x128xf32, #tpu.memory_space<vmem>>, vector<1x32xf32>
    %c6 = arith.constant 6 : index
    %c0_35 = arith.constant 0 : index
    %61 = vector.load %arg15[%c6, %c0_35] : memref<32x128xf32, #tpu.memory_space<vmem>>, vector<1x32xf32>
    %cst_36 = arith.constant dense<0.000000e+00> : vector<16xf32>
    %62 = vector.multi_reduction <add>, %12, %cst_36 [1] : vector<16x32xf32> to vector<16xf32>
    %63 = vector.shape_cast %62 : vector<16xf32> to vector<16x1xf32>
    %cst_37 = arith.constant 3.200000e+01 : f32
    %64 = vector.broadcast %cst_37 : f32 to vector<16x1xf32>
    %65 = arith.divf %63, %64 : vector<16x1xf32>
    %66 = vector.broadcast %65 : vector<16x1xf32> to vector<16x32xf32>
    %67 = arith.subf %12, %66 : vector<16x32xf32>
    %68 = arith.mulf %67, %67 : vector<16x32xf32>
    %cst_38 = arith.constant dense<0.000000e+00> : vector<16xf32>
    %69 = vector.multi_reduction <add>, %68, %cst_38 [1] : vector<16x32xf32> to vector<16xf32>
    %70 = vector.shape_cast %69 : vector<16xf32> to vector<16x1xf32>
    %cst_39 = arith.constant 3.200000e+01 : f32
    %71 = vector.broadcast %cst_39 : f32 to vector<16x1xf32>
    %72 = arith.divf %70, %71 : vector<16x1xf32>
    %73 = vector.broadcast %65 : vector<16x1xf32> to vector<16x32xf32>
    %74 = arith.subf %12, %73 : vector<16x32xf32>
    %cst_40 = arith.constant 9.99999974E-6 : f32
    %75 = vector.broadcast %cst_40 : f32 to vector<16x1xf32>
    %76 = arith.addf %72, %75 : vector<16x1xf32>
    %77 = math.rsqrt %76 : vector<16x1xf32>
    %78 = vector.broadcast %77 : vector<16x1xf32> to vector<16x32xf32>
    %79 = arith.mulf %74, %78 : vector<16x32xf32>
    %80 = vector.broadcast %60 : vector<1x32xf32> to vector<16x32xf32>
    %81 = arith.mulf %79, %80 : vector<16x32xf32>
    %82 = vector.broadcast %61 : vector<1x32xf32> to vector<16x32xf32>
    %83 = arith.addf %81, %82 : vector<16x32xf32>
    %84 = vector.broadcast %17 : vector<16x1xf32> to vector<16x32xf32>
    %85 = arith.mulf %83, %84 : vector<16x32xf32>
    %c7 = arith.constant 7 : index
    %c0_41 = arith.constant 0 : index
    %86 = vector.load %arg15[%c7, %c0_41] : memref<32x128xf32, #tpu.memory_space<vmem>>, vector<1x32xf32>
    %c8 = arith.constant 8 : index
    %c0_42 = arith.constant 0 : index
    %87 = vector.load %arg15[%c8, %c0_42] : memref<32x128xf32, #tpu.memory_space<vmem>>, vector<1x32xf32>
    %cst_43 = arith.constant dense<0.000000e+00> : vector<16xf32>
    %88 = vector.multi_reduction <add>, %85, %cst_43 [1] : vector<16x32xf32> to vector<16xf32>
    %89 = vector.shape_cast %88 : vector<16xf32> to vector<16x1xf32>
    %cst_44 = arith.constant 3.200000e+01 : f32
    %90 = vector.broadcast %cst_44 : f32 to vector<16x1xf32>
    %91 = arith.divf %89, %90 : vector<16x1xf32>
    %92 = vector.broadcast %91 : vector<16x1xf32> to vector<16x32xf32>
    %93 = arith.subf %85, %92 : vector<16x32xf32>
    %94 = arith.mulf %93, %93 : vector<16x32xf32>
    %cst_45 = arith.constant dense<0.000000e+00> : vector<16xf32>
    %95 = vector.multi_reduction <add>, %94, %cst_45 [1] : vector<16x32xf32> to vector<16xf32>
    %96 = vector.shape_cast %95 : vector<16xf32> to vector<16x1xf32>
    %cst_46 = arith.constant 3.200000e+01 : f32
    %97 = vector.broadcast %cst_46 : f32 to vector<16x1xf32>
    %98 = arith.divf %96, %97 : vector<16x1xf32>
    %99 = vector.broadcast %91 : vector<16x1xf32> to vector<16x32xf32>
    %100 = arith.subf %85, %99 : vector<16x32xf32>
    %cst_47 = arith.constant 9.99999974E-6 : f32
    %101 = vector.broadcast %cst_47 : f32 to vector<16x1xf32>
    %102 = arith.addf %98, %101 : vector<16x1xf32>
    %103 = math.rsqrt %102 : vector<16x1xf32>
    %104 = vector.broadcast %103 : vector<16x1xf32> to vector<16x32xf32>
    %105 = arith.mulf %100, %104 : vector<16x32xf32>
    %106 = vector.broadcast %86 : vector<1x32xf32> to vector<16x32xf32>
    %107 = arith.mulf %105, %106 : vector<16x32xf32>
    %108 = vector.broadcast %87 : vector<1x32xf32> to vector<16x32xf32>
    %109 = arith.addf %107, %108 : vector<16x32xf32>
    %c0_48 = arith.constant 0 : index
    %c0_49 = arith.constant 0 : index
    %c0_50 = arith.constant 0 : index
    %110 = vector.load %arg7[%c0_48, %c0_49, %c0_50] : memref<2x32x96xf32, #tpu.memory_space<vmem>>, vector<1x32x96xf32>
    %111 = vector.shape_cast %110 : vector<1x32x96xf32> to vector<32x96xf32>
    %cst_51 = arith.constant dense<0.000000e+00> : vector<16x96xf32>
    %112 = tpu.matmul %109, %111, %cst_51 {dimension_numbers = #tpu.dot_dimension_numbers<[1], [0], [0], [1], [0, 0, 1, 1], [], []>} : vector<16x32xf32>, vector<32x96xf32>, vector<16x96xf32> -> vector<16x96xf32>
    %c9 = arith.constant 9 : index
    %c0_52 = arith.constant 0 : index
    %113 = vector.load %arg15[%c9, %c0_52] : memref<32x128xf32, #tpu.memory_space<vmem>>, vector<1x96xf32>
    %114 = vector.broadcast %113 : vector<1x96xf32> to vector<16x96xf32>
    %115 = arith.addf %112, %114 : vector<16x96xf32>
    %c0_53 = arith.constant 0 : index
    %c0_54 = arith.constant 0 : index
    %116 = vector.load %arg17[%c0_53, %c0_54] : memref<16x96xf32, #tpu.memory_space<vmem>>, vector<16x96xf32>
    tpu.vector_store %arg17[%c0_53, %c0_54], %115 {strides = array<i32>} : memref<16x96xf32, #tpu.memory_space<vmem>>, vector<16x96xf32>,
    %117 = vector.extract_strided_slice %22 {offsets = [0, 0], sizes = [1, 8], strides = [1, 1]} : vector<2x8xf32> to vector<1x8xf32>
    %c0_55 = arith.constant 0 : index
    %c0_56 = arith.constant 0 : index
    %118 = vector.load %arg17[%c0_55, %c0_56] : memref<16x96xf32, #tpu.memory_space<vmem>>, vector<8x8xf32>
    %c0_57 = arith.constant 0 : index
    %c32 = arith.constant 32 : index
    %119 = vector.load %arg17[%c0_57, %c32] : memref<16x96xf32, #tpu.memory_space<vmem>>, vector<8x8xf32>
    %c0_58 = arith.constant 0 : index
    %c64 = arith.constant 64 : index
    %120 = vector.load %arg17[%c0_58, %c64] : memref<16x96xf32, #tpu.memory_space<vmem>>, vector<8x8xf32>
    %cst_59 = arith.constant dense<0.000000e+00> : vector<8x8xf32>
    %121 = tpu.matmul %118, %119, %cst_59 {dimension_numbers = #tpu.dot_dimension_numbers<[1], [1], [0], [0], [0, 0, 1, 0], [], []>} : vector<8x8xf32>, vector<8x8xf32>, vector<8x8xf32> -> vector<8x8xf32>
    %cst_60 = arith.constant 0.353553385 : f32
    %122 = vector.broadcast %cst_60 : f32 to vector<8x8xf32>
    %123 = arith.mulf %121, %122 : vector<8x8xf32>
    %c0_61 = arith.constant 0 : index
    %c0_62 = arith.constant 0 : index
    %124 = vector.load %arg19[%c0_61, %c0_62] : memref<16x32xf32, #tpu.memory_space<vmem>>, vector<8x8xf32>
    %125 = arith.addf %123, %124 : vector<8x8xf32>
    %126 = vector.broadcast %117 : vector<1x8xf32> to vector<8x8xf32>
    %127 = arith.addf %125, %126 : vector<8x8xf32>
    %cst_63 = arith.constant dense<0xFF800000> : vector<8xf32>
    %128 = vector.multi_reduction <maximumf>, %127, %cst_63 [1] : vector<8x8xf32> to vector<8xf32>
    %129 = vector.shape_cast %128 : vector<8xf32> to vector<8x1xf32>
    %130 = vector.broadcast %129 : vector<8x1xf32> to vector<8x8xf32>
    %131 = arith.subf %127, %130 : vector<8x8xf32>
    %132 = math.exp %131 : vector<8x8xf32>
    %cst_64 = arith.constant dense<0.000000e+00> : vector<8xf32>
    %133 = vector.multi_reduction <add>, %132, %cst_64 [1] : vector<8x8xf32> to vector<8xf32>
    %134 = vector.shape_cast %133 : vector<8xf32> to vector<8x1xf32>
    %135 = tpu.reciprocal %134 {approx = true} : vector<8x1xf32> -> vector<8x1xf32>
    %136 = vector.broadcast %135 : vector<8x1xf32> to vector<8x8xf32>
    %137 = arith.mulf %132, %136 : vector<8x8xf32>
    %cst_65 = arith.constant dense<0.000000e+00> : vector<8x8xf32>
    %138 = tpu.matmul %137, %120, %cst_65 {dimension_numbers = #tpu.dot_dimension_numbers<[1], [0], [0], [1], [0, 0, 1, 1], [], []>} : vector<8x8xf32>, vector<8x8xf32>, vector<8x8xf32> -> vector<8x8xf32>
    %c0_66 = arith.constant 0 : index
    %c0_67 = arith.constant 0 : index
    %139 = vector.load %arg18[%c0_66, %c0_67] : memref<16x32xf32, #tpu.memory_space<vmem>>, vector<8x8xf32>
    tpu.vector_store %arg18[%c0_66, %c0_67], %138 {strides = array<i32>} : memref<16x32xf32, #tpu.memory_space<vmem>>, vector<8x8xf32>,
    %c0_68 = arith.constant 0 : index
    %c8_69 = arith.constant 8 : index
    %140 = vector.load %arg17[%c0_68, %c8_69] : memref<16x96xf32, #tpu.memory_space<vmem>>, vector<8x8xf32>
    %c0_70 = arith.constant 0 : index
    %c40 = arith.constant 40 : index
    %141 = vector.load %arg17[%c0_70, %c40] : memref<16x96xf32, #tpu.memory_space<vmem>>, vector<8x8xf32>
    %c0_71 = arith.constant 0 : index
    %c72 = arith.constant 72 : index
    %142 = vector.load %arg17[%c0_71, %c72] : memref<16x96xf32, #tpu.memory_space<vmem>>, vector<8x8xf32>
    %cst_72 = arith.constant dense<0.000000e+00> : vector<8x8xf32>
    %143 = tpu.matmul %140, %141, %cst_72 {dimension_numbers = #tpu.dot_dimension_numbers<[1], [1], [0], [0], [0, 0, 1, 0], [], []>} : vector<8x8xf32>, vector<8x8xf32>, vector<8x8xf32> -> vector<8x8xf32>
    %cst_73 = arith.constant 0.353553385 : f32
    %144 = vector.broadcast %cst_73 : f32 to vector<8x8xf32>
    %145 = arith.mulf %143, %144 : vector<8x8xf32>
    %c0_74 = arith.constant 0 : index
    %c8_75 = arith.constant 8 : index
    %146 = vector.load %arg19[%c0_74, %c8_75] : memref<16x32xf32, #tpu.memory_space<vmem>>, vector<8x8xf32>
    %147 = arith.addf %145, %146 : vector<8x8xf32>
    %148 = vector.broadcast %117 : vector<1x8xf32> to vector<8x8xf32>
    %149 = arith.addf %147, %148 : vector<8x8xf32>
    %cst_76 = arith.constant dense<0xFF800000> : vector<8xf32>
    %150 = vector.multi_reduction <maximumf>, %149, %cst_76 [1] : vector<8x8xf32> to vector<8xf32>
    %151 = vector.shape_cast %150 : vector<8xf32> to vector<8x1xf32>
    %152 = vector.broadcast %151 : vector<8x1xf32> to vector<8x8xf32>
    %153 = arith.subf %149, %152 : vector<8x8xf32>
    %154 = math.exp %153 : vector<8x8xf32>
    %cst_77 = arith.constant dense<0.000000e+00> : vector<8xf32>
    %155 = vector.multi_reduction <add>, %154, %cst_77 [1] : vector<8x8xf32> to vector<8xf32>
    %156 = vector.shape_cast %155 : vector<8xf32> to vector<8x1xf32>
    %157 = tpu.reciprocal %156 {approx = true} : vector<8x1xf32> -> vector<8x1xf32>
    %158 = vector.broadcast %157 : vector<8x1xf32> to vector<8x8xf32>
    %159 = arith.mulf %154, %158 : vector<8x8xf32>
    %cst_78 = arith.constant dense<0.000000e+00> : vector<8x8xf32>
    %160 = tpu.matmul %159, %142, %cst_78 {dimension_numbers = #tpu.dot_dimension_numbers<[1], [0], [0], [1], [0, 0, 1, 1], [], []>} : vector<8x8xf32>, vector<8x8xf32>, vector<8x8xf32> -> vector<8x8xf32>
    %c0_79 = arith.constant 0 : index
    %c8_80 = arith.constant 8 : index
    %161 = vector.load %arg18[%c0_79, %c8_80] : memref<16x32xf32, #tpu.memory_space<vmem>>, vector<8x8xf32>
    tpu.vector_store %arg18[%c0_79, %c8_80], %160 {strides = array<i32>} : memref<16x32xf32, #tpu.memory_space<vmem>>, vector<8x8xf32>,
    %c0_81 = arith.constant 0 : index
    %c16 = arith.constant 16 : index
    %162 = vector.load %arg17[%c0_81, %c16] : memref<16x96xf32, #tpu.memory_space<vmem>>, vector<8x8xf32>
    %c0_82 = arith.constant 0 : index
    %c48 = arith.constant 48 : index
    %163 = vector.load %arg17[%c0_82, %c48] : memref<16x96xf32, #tpu.memory_space<vmem>>, vector<8x8xf32>
    %c0_83 = arith.constant 0 : index
    %c80 = arith.constant 80 : index
    %164 = vector.load %arg17[%c0_83, %c80] : memref<16x96xf32, #tpu.memory_space<vmem>>, vector<8x8xf32>
    %cst_84 = arith.constant dense<0.000000e+00> : vector<8x8xf32>
    %165 = tpu.matmul %162, %163, %cst_84 {dimension_numbers = #tpu.dot_dimension_numbers<[1], [1], [0], [0], [0, 0, 1, 0], [], []>} : vector<8x8xf32>, vector<8x8xf32>, vector<8x8xf32> -> vector<8x8xf32>
    %cst_85 = arith.constant 0.353553385 : f32
    %166 = vector.broadcast %cst_85 : f32 to vector<8x8xf32>
    %167 = arith.mulf %165, %166 : vector<8x8xf32>
    %c0_86 = arith.constant 0 : index
    %c16_87 = arith.constant 16 : index
    %168 = vector.load %arg19[%c0_86, %c16_87] : memref<16x32xf32, #tpu.memory_space<vmem>>, vector<8x8xf32>
    %169 = arith.addf %167, %168 : vector<8x8xf32>
    %170 = vector.broadcast %117 : vector<1x8xf32> to vector<8x8xf32>
    %171 = arith.addf %169, %170 : vector<8x8xf32>
    %cst_88 = arith.constant dense<0xFF800000> : vector<8xf32>
    %172 = vector.multi_reduction <maximumf>, %171, %cst_88 [1] : vector<8x8xf32> to vector<8xf32>
    %173 = vector.shape_cast %172 : vector<8xf32> to vector<8x1xf32>
    %174 = vector.broadcast %173 : vector<8x1xf32> to vector<8x8xf32>
    %175 = arith.subf %171, %174 : vector<8x8xf32>
    %176 = math.exp %175 : vector<8x8xf32>
    %cst_89 = arith.constant dense<0.000000e+00> : vector<8xf32>
    %177 = vector.multi_reduction <add>, %176, %cst_89 [1] : vector<8x8xf32> to vector<8xf32>
    %178 = vector.shape_cast %177 : vector<8xf32> to vector<8x1xf32>
    %179 = tpu.reciprocal %178 {approx = true} : vector<8x1xf32> -> vector<8x1xf32>
    %180 = vector.broadcast %179 : vector<8x1xf32> to vector<8x8xf32>
    %181 = arith.mulf %176, %180 : vector<8x8xf32>
    %cst_90 = arith.constant dense<0.000000e+00> : vector<8x8xf32>
    %182 = tpu.matmul %181, %164, %cst_90 {dimension_numbers = #tpu.dot_dimension_numbers<[1], [0], [0], [1], [0, 0, 1, 1], [], []>} : vector<8x8xf32>, vector<8x8xf32>, vector<8x8xf32> -> vector<8x8xf32>
    %c0_91 = arith.constant 0 : index
    %c16_92 = arith.constant 16 : index
    %183 = vector.load %arg18[%c0_91, %c16_92] : memref<16x32xf32, #tpu.memory_space<vmem>>, vector<8x8xf32>
    tpu.vector_store %arg18[%c0_91, %c16_92], %182 {strides = array<i32>} : memref<16x32xf32, #tpu.memory_space<vmem>>, vector<8x8xf32>,
    %c0_93 = arith.constant 0 : index
    %c24 = arith.constant 24 : index
    %184 = vector.load %arg17[%c0_93, %c24] : memref<16x96xf32, #tpu.memory_space<vmem>>, vector<8x8xf32>
    %c0_94 = arith.constant 0 : index
    %c56 = arith.constant 56 : index
    %185 = vector.load %arg17[%c0_94, %c56] : memref<16x96xf32, #tpu.memory_space<vmem>>, vector<8x8xf32>
    %c0_95 = arith.constant 0 : index
    %c88 = arith.constant 88 : index
    %186 = vector.load %arg17[%c0_95, %c88] : memref<16x96xf32, #tpu.memory_space<vmem>>, vector<8x8xf32>
    %cst_96 = arith.constant dense<0.000000e+00> : vector<8x8xf32>
    %187 = tpu.matmul %184, %185, %cst_96 {dimension_numbers = #tpu.dot_dimension_numbers<[1], [1], [0], [0], [0, 0, 1, 0], [], []>} : vector<8x8xf32>, vector<8x8xf32>, vector<8x8xf32> -> vector<8x8xf32>
    %cst_97 = arith.constant 0.353553385 : f32
    %188 = vector.broadcast %cst_97 : f32 to vector<8x8xf32>
    %189 = arith.mulf %187, %188 : vector<8x8xf32>
    %c0_98 = arith.constant 0 : index
    %c24_99 = arith.constant 24 : index
    %190 = vector.load %arg19[%c0_98, %c24_99] : memref<16x32xf32, #tpu.memory_space<vmem>>, vector<8x8xf32>
    %191 = arith.addf %189, %190 : vector<8x8xf32>
    %192 = vector.broadcast %117 : vector<1x8xf32> to vector<8x8xf32>
    %193 = arith.addf %191, %192 : vector<8x8xf32>
    %cst_100 = arith.constant dense<0xFF800000> : vector<8xf32>
    %194 = vector.multi_reduction <maximumf>, %193, %cst_100 [1] : vector<8x8xf32> to vector<8xf32>
    %195 = vector.shape_cast %194 : vector<8xf32> to vector<8x1xf32>
    %196 = vector.broadcast %195 : vector<8x1xf32> to vector<8x8xf32>
    %197 = arith.subf %193, %196 : vector<8x8xf32>
    %198 = math.exp %197 : vector<8x8xf32>
    %cst_101 = arith.constant dense<0.000000e+00> : vector<8xf32>
    %199 = vector.multi_reduction <add>, %198, %cst_101 [1] : vector<8x8xf32> to vector<8xf32>
    %200 = vector.shape_cast %199 : vector<8xf32> to vector<8x1xf32>
    %201 = tpu.reciprocal %200 {approx = true} : vector<8x1xf32> -> vector<8x1xf32>
    %202 = vector.broadcast %201 : vector<8x1xf32> to vector<8x8xf32>
    %203 = arith.mulf %198, %202 : vector<8x8xf32>
    %cst_102 = arith.constant dense<0.000000e+00> : vector<8x8xf32>
    %204 = tpu.matmul %203, %186, %cst_102 {dimension_numbers = #tpu.dot_dimension_numbers<[1], [0], [0], [1], [0, 0, 1, 1], [], []>} : vector<8x8xf32>, vector<8x8xf32>, vector<8x8xf32> -> vector<8x8xf32>
    %c0_103 = arith.constant 0 : index
    %c24_104 = arith.constant 24 : index
    %205 = vector.load %arg18[%c0_103, %c24_104] : memref<16x32xf32, #tpu.memory_space<vmem>>, vector<8x8xf32>
    tpu.vector_store %arg18[%c0_103, %c24_104], %204 {strides = array<i32>} : memref<16x32xf32, #tpu.memory_space<vmem>>, vector<8x8xf32>,
    %206 = vector.extract_strided_slice %22 {offsets = [1, 0], sizes = [1, 8], strides = [1, 1]} : vector<2x8xf32> to vector<1x8xf32>
    %c8_105 = arith.constant 8 : index
    %c0_106 = arith.constant 0 : index
    %207 = vector.load %arg17[%c8_105, %c0_106] : memref<16x96xf32, #tpu.memory_space<vmem>>, vector<8x8xf32>
    %c8_107 = arith.constant 8 : index
    %c32_108 = arith.constant 32 : index
    %208 = vector.load %arg17[%c8_107, %c32_108] : memref<16x96xf32, #tpu.memory_space<vmem>>, vector<8x8xf32>
    %c8_109 = arith.constant 8 : index
    %c64_110 = arith.constant 64 : index
    %209 = vector.load %arg17[%c8_109, %c64_110] : memref<16x96xf32, #tpu.memory_space<vmem>>, vector<8x8xf32>
    %cst_111 = arith.constant dense<0.000000e+00> : vector<8x8xf32>
    %210 = tpu.matmul %207, %208, %cst_111 {dimension_numbers = #tpu.dot_dimension_numbers<[1], [1], [0], [0], [0, 0, 1, 0], [], []>} : vector<8x8xf32>, vector<8x8xf32>, vector<8x8xf32> -> vector<8x8xf32>
    %cst_112 = arith.constant 0.353553385 : f32
    %211 = vector.broadcast %cst_112 : f32 to vector<8x8xf32>
    %212 = arith.mulf %210, %211 : vector<8x8xf32>
    %c8_113 = arith.constant 8 : index
    %c0_114 = arith.constant 0 : index
    %213 = vector.load %arg19[%c8_113, %c0_114] : memref<16x32xf32, #tpu.memory_space<vmem>>, vector<8x8xf32>
    %214 = arith.addf %212, %213 : vector<8x8xf32>
    %215 = vector.broadcast %206 : vector<1x8xf32> to vector<8x8xf32>
    %216 = arith.addf %214, %215 : vector<8x8xf32>
    %cst_115 = arith.constant dense<0xFF800000> : vector<8xf32>
    %217 = vector.multi_reduction <maximumf>, %216, %cst_115 [1] : vector<8x8xf32> to vector<8xf32>
    %218 = vector.shape_cast %217 : vector<8xf32> to vector<8x1xf32>
    %219 = vector.broadcast %218 : vector<8x1xf32> to vector<8x8xf32>
    %220 = arith.subf %216, %219 : vector<8x8xf32>
    %221 = math.exp %220 : vector<8x8xf32>
    %cst_116 = arith.constant dense<0.000000e+00> : vector<8xf32>
    %222 = vector.multi_reduction <add>, %221, %cst_116 [1] : vector<8x8xf32> to vector<8xf32>
    %223 = vector.shape_cast %222 : vector<8xf32> to vector<8x1xf32>
    %224 = tpu.reciprocal %223 {approx = true} : vector<8x1xf32> -> vector<8x1xf32>
    %225 = vector.broadcast %224 : vector<8x1xf32> to vector<8x8xf32>
    %226 = arith.mulf %221, %225 : vector<8x8xf32>
    %cst_117 = arith.constant dense<0.000000e+00> : vector<8x8xf32>
    %227 = tpu.matmul %226, %209, %cst_117 {dimension_numbers = #tpu.dot_dimension_numbers<[1], [0], [0], [1], [0, 0, 1, 1], [], []>} : vector<8x8xf32>, vector<8x8xf32>, vector<8x8xf32> -> vector<8x8xf32>
    %c8_118 = arith.constant 8 : index
    %c0_119 = arith.constant 0 : index
    %228 = vector.load %arg18[%c8_118, %c0_119] : memref<16x32xf32, #tpu.memory_space<vmem>>, vector<8x8xf32>
    tpu.vector_store %arg18[%c8_118, %c0_119], %227 {strides = array<i32>} : memref<16x32xf32, #tpu.memory_space<vmem>>, vector<8x8xf32>,
    %c8_120 = arith.constant 8 : index
    %c8_121 = arith.constant 8 : index
    %229 = vector.load %arg17[%c8_120, %c8_121] : memref<16x96xf32, #tpu.memory_space<vmem>>, vector<8x8xf32>
    %c8_122 = arith.constant 8 : index
    %c40_123 = arith.constant 40 : index
    %230 = vector.load %arg17[%c8_122, %c40_123] : memref<16x96xf32, #tpu.memory_space<vmem>>, vector<8x8xf32>
    %c8_124 = arith.constant 8 : index
    %c72_125 = arith.constant 72 : index
    %231 = vector.load %arg17[%c8_124, %c72_125] : memref<16x96xf32, #tpu.memory_space<vmem>>, vector<8x8xf32>
    %cst_126 = arith.constant dense<0.000000e+00> : vector<8x8xf32>
    %232 = tpu.matmul %229, %230, %cst_126 {dimension_numbers = #tpu.dot_dimension_numbers<[1], [1], [0], [0], [0, 0, 1, 0], [], []>} : vector<8x8xf32>, vector<8x8xf32>, vector<8x8xf32> -> vector<8x8xf32>
    %cst_127 = arith.constant 0.353553385 : f32
    %233 = vector.broadcast %cst_127 : f32 to vector<8x8xf32>
    %234 = arith.mulf %232, %233 : vector<8x8xf32>
    %c8_128 = arith.constant 8 : index
    %c8_129 = arith.constant 8 : index
    %235 = vector.load %arg19[%c8_128, %c8_129] : memref<16x32xf32, #tpu.memory_space<vmem>>, vector<8x8xf32>
    %236 = arith.addf %234, %235 : vector<8x8xf32>
    %237 = vector.broadcast %206 : vector<1x8xf32> to vector<8x8xf32>
    %238 = arith.addf %236, %237 : vector<8x8xf32>
    %cst_130 = arith.constant dense<0xFF800000> : vector<8xf32>
    %239 = vector.multi_reduction <maximumf>, %238, %cst_130 [1] : vector<8x8xf32> to vector<8xf32>
    %240 = vector.shape_cast %239 : vector<8xf32> to vector<8x1xf32>
    %241 = vector.broadcast %240 : vector<8x1xf32> to vector<8x8xf32>
    %242 = arith.subf %238, %241 : vector<8x8xf32>
    %243 = math.exp %242 : vector<8x8xf32>
    %cst_131 = arith.constant dense<0.000000e+00> : vector<8xf32>
    %244 = vector.multi_reduction <add>, %243, %cst_131 [1] : vector<8x8xf32> to vector<8xf32>
    %245 = vector.shape_cast %244 : vector<8xf32> to vector<8x1xf32>
    %246 = tpu.reciprocal %245 {approx = true} : vector<8x1xf32> -> vector<8x1xf32>
    %247 = vector.broadcast %246 : vector<8x1xf32> to vector<8x8xf32>
    %248 = arith.mulf %243, %247 : vector<8x8xf32>
    %cst_132 = arith.constant dense<0.000000e+00> : vector<8x8xf32>
    %249 = tpu.matmul %248, %231, %cst_132 {dimension_numbers = #tpu.dot_dimension_numbers<[1], [0], [0], [1], [0, 0, 1, 1], [], []>} : vector<8x8xf32>, vector<8x8xf32>, vector<8x8xf32> -> vector<8x8xf32>
    %c8_133 = arith.constant 8 : index
    %c8_134 = arith.constant 8 : index
    %250 = vector.load %arg18[%c8_133, %c8_134] : memref<16x32xf32, #tpu.memory_space<vmem>>, vector<8x8xf32>
    tpu.vector_store %arg18[%c8_133, %c8_134], %249 {strides = array<i32>} : memref<16x32xf32, #tpu.memory_space<vmem>>, vector<8x8xf32>,
    %c8_135 = arith.constant 8 : index
    %c16_136 = arith.constant 16 : index
    %251 = vector.load %arg17[%c8_135, %c16_136] : memref<16x96xf32, #tpu.memory_space<vmem>>, vector<8x8xf32>
    %c8_137 = arith.constant 8 : index
    %c48_138 = arith.constant 48 : index
    %252 = vector.load %arg17[%c8_137, %c48_138] : memref<16x96xf32, #tpu.memory_space<vmem>>, vector<8x8xf32>
    %c8_139 = arith.constant 8 : index
    %c80_140 = arith.constant 80 : index
    %253 = vector.load %arg17[%c8_139, %c80_140] : memref<16x96xf32, #tpu.memory_space<vmem>>, vector<8x8xf32>
    %cst_141 = arith.constant dense<0.000000e+00> : vector<8x8xf32>
    %254 = tpu.matmul %251, %252, %cst_141 {dimension_numbers = #tpu.dot_dimension_numbers<[1], [1], [0], [0], [0, 0, 1, 0], [], []>} : vector<8x8xf32>, vector<8x8xf32>, vector<8x8xf32> -> vector<8x8xf32>
    %cst_142 = arith.constant 0.353553385 : f32
    %255 = vector.broadcast %cst_142 : f32 to vector<8x8xf32>
    %256 = arith.mulf %254, %255 : vector<8x8xf32>
    %c8_143 = arith.constant 8 : index
    %c16_144 = arith.constant 16 : index
    %257 = vector.load %arg19[%c8_143, %c16_144] : memref<16x32xf32, #tpu.memory_space<vmem>>, vector<8x8xf32>
    %258 = arith.addf %256, %257 : vector<8x8xf32>
    %259 = vector.broadcast %206 : vector<1x8xf32> to vector<8x8xf32>
    %260 = arith.addf %258, %259 : vector<8x8xf32>
    %cst_145 = arith.constant dense<0xFF800000> : vector<8xf32>
    %261 = vector.multi_reduction <maximumf>, %260, %cst_145 [1] : vector<8x8xf32> to vector<8xf32>
    %262 = vector.shape_cast %261 : vector<8xf32> to vector<8x1xf32>
    %263 = vector.broadcast %262 : vector<8x1xf32> to vector<8x8xf32>
    %264 = arith.subf %260, %263 : vector<8x8xf32>
    %265 = math.exp %264 : vector<8x8xf32>
    %cst_146 = arith.constant dense<0.000000e+00> : vector<8xf32>
    %266 = vector.multi_reduction <add>, %265, %cst_146 [1] : vector<8x8xf32> to vector<8xf32>
    %267 = vector.shape_cast %266 : vector<8xf32> to vector<8x1xf32>
    %268 = tpu.reciprocal %267 {approx = true} : vector<8x1xf32> -> vector<8x1xf32>
    %269 = vector.broadcast %268 : vector<8x1xf32> to vector<8x8xf32>
    %270 = arith.mulf %265, %269 : vector<8x8xf32>
    %cst_147 = arith.constant dense<0.000000e+00> : vector<8x8xf32>
    %271 = tpu.matmul %270, %253, %cst_147 {dimension_numbers = #tpu.dot_dimension_numbers<[1], [0], [0], [1], [0, 0, 1, 1], [], []>} : vector<8x8xf32>, vector<8x8xf32>, vector<8x8xf32> -> vector<8x8xf32>
    %c8_148 = arith.constant 8 : index
    %c16_149 = arith.constant 16 : index
    %272 = vector.load %arg18[%c8_148, %c16_149] : memref<16x32xf32, #tpu.memory_space<vmem>>, vector<8x8xf32>
    tpu.vector_store %arg18[%c8_148, %c16_149], %271 {strides = array<i32>} : memref<16x32xf32, #tpu.memory_space<vmem>>, vector<8x8xf32>,
    %c8_150 = arith.constant 8 : index
    %c24_151 = arith.constant 24 : index
    %273 = vector.load %arg17[%c8_150, %c24_151] : memref<16x96xf32, #tpu.memory_space<vmem>>, vector<8x8xf32>
    %c8_152 = arith.constant 8 : index
    %c56_153 = arith.constant 56 : index
    %274 = vector.load %arg17[%c8_152, %c56_153] : memref<16x96xf32, #tpu.memory_space<vmem>>, vector<8x8xf32>
    %c8_154 = arith.constant 8 : index
    %c88_155 = arith.constant 88 : index
    %275 = vector.load %arg17[%c8_154, %c88_155] : memref<16x96xf32, #tpu.memory_space<vmem>>, vector<8x8xf32>
    %cst_156 = arith.constant dense<0.000000e+00> : vector<8x8xf32>
    %276 = tpu.matmul %273, %274, %cst_156 {dimension_numbers = #tpu.dot_dimension_numbers<[1], [1], [0], [0], [0, 0, 1, 0], [], []>} : vector<8x8xf32>, vector<8x8xf32>, vector<8x8xf32> -> vector<8x8xf32>
    %cst_157 = arith.constant 0.353553385 : f32
    %277 = vector.broadcast %cst_157 : f32 to vector<8x8xf32>
    %278 = arith.mulf %276, %277 : vector<8x8xf32>
    %c8_158 = arith.constant 8 : index
    %c24_159 = arith.constant 24 : index
    %279 = vector.load %arg19[%c8_158, %c24_159] : memref<16x32xf32, #tpu.memory_space<vmem>>, vector<8x8xf32>
    %280 = arith.addf %278, %279 : vector<8x8xf32>
    %281 = vector.broadcast %206 : vector<1x8xf32> to vector<8x8xf32>
    %282 = arith.addf %280, %281 : vector<8x8xf32>
    %cst_160 = arith.constant dense<0xFF800000> : vector<8xf32>
    %283 = vector.multi_reduction <maximumf>, %282, %cst_160 [1] : vector<8x8xf32> to vector<8xf32>
    %284 = vector.shape_cast %283 : vector<8xf32> to vector<8x1xf32>
    %285 = vector.broadcast %284 : vector<8x1xf32> to vector<8x8xf32>
    %286 = arith.subf %282, %285 : vector<8x8xf32>
    %287 = math.exp %286 : vector<8x8xf32>
    %cst_161 = arith.constant dense<0.000000e+00> : vector<8xf32>
    %288 = vector.multi_reduction <add>, %287, %cst_161 [1] : vector<8x8xf32> to vector<8xf32>
    %289 = vector.shape_cast %288 : vector<8xf32> to vector<8x1xf32>
    %290 = tpu.reciprocal %289 {approx = true} : vector<8x1xf32> -> vector<8x1xf32>
    %291 = vector.broadcast %290 : vector<8x1xf32> to vector<8x8xf32>
    %292 = arith.mulf %287, %291 : vector<8x8xf32>
    %cst_162 = arith.constant dense<0.000000e+00> : vector<8x8xf32>
    %293 = tpu.matmul %292, %275, %cst_162 {dimension_numbers = #tpu.dot_dimension_numbers<[1], [0], [0], [1], [0, 0, 1, 1], [], []>} : vector<8x8xf32>, vector<8x8xf32>, vector<8x8xf32> -> vector<8x8xf32>
    %c8_163 = arith.constant 8 : index
    %c24_164 = arith.constant 24 : index
    %294 = vector.load %arg18[%c8_163, %c24_164] : memref<16x32xf32, #tpu.memory_space<vmem>>, vector<8x8xf32>
    tpu.vector_store %arg18[%c8_163, %c24_164], %293 {strides = array<i32>} : memref<16x32xf32, #tpu.memory_space<vmem>>, vector<8x8xf32>,
    %c0_165 = arith.constant 0 : index
    %c0_166 = arith.constant 0 : index
    %295 = vector.load %arg18[%c0_165, %c0_166] : memref<16x32xf32, #tpu.memory_space<vmem>>, vector<16x32xf32>
    %c0_167 = arith.constant 0 : index
    %c0_168 = arith.constant 0 : index
    %c0_169 = arith.constant 0 : index
    %296 = vector.load %arg8[%c0_167, %c0_168, %c0_169] : memref<2x32x32xf32, #tpu.memory_space<vmem>>, vector<1x32x32xf32>
    %297 = vector.shape_cast %296 : vector<1x32x32xf32> to vector<32x32xf32>
    %cst_170 = arith.constant dense<0.000000e+00> : vector<16x32xf32>
    %298 = tpu.matmul %295, %297, %cst_170 {dimension_numbers = #tpu.dot_dimension_numbers<[1], [0], [0], [1], [0, 0, 1, 1], [], []>} : vector<16x32xf32>, vector<32x32xf32>, vector<16x32xf32> -> vector<16x32xf32>
    %299 = arith.addf %85, %298 : vector<16x32xf32>
    %c10 = arith.constant 10 : index
    %c0_171 = arith.constant 0 : index
    %300 = vector.load %arg15[%c10, %c0_171] : memref<32x128xf32, #tpu.memory_space<vmem>>, vector<1x32xf32>
    %301 = vector.broadcast %300 : vector<1x32xf32> to vector<16x32xf32>
    %302 = arith.addf %299, %301 : vector<16x32xf32>
    %c11 = arith.constant 11 : index
    %c0_172 = arith.constant 0 : index
    %303 = vector.load %arg15[%c11, %c0_172] : memref<32x128xf32, #tpu.memory_space<vmem>>, vector<1x32xf32>
    %c12 = arith.constant 12 : index
    %c0_173 = arith.constant 0 : index
    %304 = vector.load %arg15[%c12, %c0_173] : memref<32x128xf32, #tpu.memory_space<vmem>>, vector<1x32xf32>
    %cst_174 = arith.constant dense<0.000000e+00> : vector<16xf32>
    %305 = vector.multi_reduction <add>, %302, %cst_174 [1] : vector<16x32xf32> to vector<16xf32>
    %306 = vector.shape_cast %305 : vector<16xf32> to vector<16x1xf32>
    %cst_175 = arith.constant 3.200000e+01 : f32
    %307 = vector.broadcast %cst_175 : f32 to vector<16x1xf32>
    %308 = arith.divf %306, %307 : vector<16x1xf32>
    %309 = vector.broadcast %308 : vector<16x1xf32> to vector<16x32xf32>
    %310 = arith.subf %302, %309 : vector<16x32xf32>
    %311 = arith.mulf %310, %310 : vector<16x32xf32>
    %cst_176 = arith.constant dense<0.000000e+00> : vector<16xf32>
    %312 = vector.multi_reduction <add>, %311, %cst_176 [1] : vector<16x32xf32> to vector<16xf32>
    %313 = vector.shape_cast %312 : vector<16xf32> to vector<16x1xf32>
    %cst_177 = arith.constant 3.200000e+01 : f32
    %314 = vector.broadcast %cst_177 : f32 to vector<16x1xf32>
    %315 = arith.divf %313, %314 : vector<16x1xf32>
    %316 = vector.broadcast %308 : vector<16x1xf32> to vector<16x32xf32>
    %317 = arith.subf %302, %316 : vector<16x32xf32>
    %cst_178 = arith.constant 9.99999974E-6 : f32
    %318 = vector.broadcast %cst_178 : f32 to vector<16x1xf32>
    %319 = arith.addf %315, %318 : vector<16x1xf32>
    %320 = math.rsqrt %319 : vector<16x1xf32>
    %321 = vector.broadcast %320 : vector<16x1xf32> to vector<16x32xf32>
    %322 = arith.mulf %317, %321 : vector<16x32xf32>
    %323 = vector.broadcast %303 : vector<1x32xf32> to vector<16x32xf32>
    %324 = arith.mulf %322, %323 : vector<16x32xf32>
    %325 = vector.broadcast %304 : vector<1x32xf32> to vector<16x32xf32>
    %326 = arith.addf %324, %325 : vector<16x32xf32>
    %c0_179 = arith.constant 0 : index
    %c0_180 = arith.constant 0 : index
    %c0_181 = arith.constant 0 : index
    %327 = vector.load %arg9[%c0_179, %c0_180, %c0_181] : memref<2x32x64xf32, #tpu.memory_space<vmem>>, vector<1x32x64xf32>
    %328 = vector.shape_cast %327 : vector<1x32x64xf32> to vector<32x64xf32>
    %cst_182 = arith.constant dense<0.000000e+00> : vector<16x64xf32>
    %329 = tpu.matmul %326, %328, %cst_182 {dimension_numbers = #tpu.dot_dimension_numbers<[1], [0], [0], [1], [0, 0, 1, 1], [], []>} : vector<16x32xf32>, vector<32x64xf32>, vector<16x64xf32> -> vector<16x64xf32>
    %c13 = arith.constant 13 : index
    %c0_183 = arith.constant 0 : index
    %330 = vector.load %arg15[%c13, %c0_183] : memref<32x128xf32, #tpu.memory_space<vmem>>, vector<1x64xf32>
    %331 = vector.broadcast %330 : vector<1x64xf32> to vector<16x64xf32>
    %332 = arith.addf %329, %331 : vector<16x64xf32>
    %cst_184 = arith.constant 5.000000e-01 : f32
    %333 = vector.broadcast %cst_184 : f32 to vector<16x64xf32>
    %334 = arith.mulf %333, %332 : vector<16x64xf32>
    %cst_185 = arith.constant 4.471500e-02 : f32
    %335 = vector.broadcast %cst_185 : f32 to vector<16x64xf32>
    %336 = arith.mulf %335, %332 : vector<16x64xf32>
    %337 = arith.mulf %336, %332 : vector<16x64xf32>
    %338 = arith.mulf %337, %332 : vector<16x64xf32>
    %339 = arith.addf %332, %338 : vector<16x64xf32>
    %cst_186 = arith.constant 0.797884583 : f32
    %340 = vector.broadcast %cst_186 : f32 to vector<16x64xf32>
    %341 = arith.mulf %340, %339 : vector<16x64xf32>
    %342 = math.tanh %341 : vector<16x64xf32>
    %cst_187 = arith.constant 1.000000e+00 : f32
    %343 = vector.broadcast %cst_187 : f32 to vector<16x64xf32>
    %344 = arith.addf %343, %342 : vector<16x64xf32>
    %345 = arith.mulf %334, %344 : vector<16x64xf32>
    %c0_188 = arith.constant 0 : index
    %c0_189 = arith.constant 0 : index
    %c0_190 = arith.constant 0 : index
    %346 = vector.load %arg10[%c0_188, %c0_189, %c0_190] : memref<2x64x32xf32, #tpu.memory_space<vmem>>, vector<1x64x32xf32>
    %347 = vector.shape_cast %346 : vector<1x64x32xf32> to vector<64x32xf32>
    %cst_191 = arith.constant dense<0.000000e+00> : vector<16x32xf32>
    %348 = tpu.matmul %345, %347, %cst_191 {dimension_numbers = #tpu.dot_dimension_numbers<[1], [0], [0], [1], [0, 0, 1, 1], [], []>} : vector<16x64xf32>, vector<64x32xf32>, vector<16x32xf32> -> vector<16x32xf32>
    %349 = arith.addf %302, %348 : vector<16x32xf32>
    %c14 = arith.constant 14 : index
    %c0_192 = arith.constant 0 : index
    %350 = vector.load %arg15[%c14, %c0_192] : memref<32x128xf32, #tpu.memory_space<vmem>>, vector<1x32xf32>
    %351 = vector.broadcast %350 : vector<1x32xf32> to vector<16x32xf32>
    %352 = arith.addf %349, %351 : vector<16x32xf32>
    %c15 = arith.constant 15 : index
    %c0_193 = arith.constant 0 : index
    %353 = vector.load %arg15[%c15, %c0_193] : memref<32x128xf32, #tpu.memory_space<vmem>>, vector<1x32xf32>
    %c16_194 = arith.constant 16 : index
    %c0_195 = arith.constant 0 : index
    %354 = vector.load %arg15[%c16_194, %c0_195] : memref<32x128xf32, #tpu.memory_space<vmem>>, vector<1x32xf32>
    %cst_196 = arith.constant dense<0.000000e+00> : vector<16xf32>
    %355 = vector.multi_reduction <add>, %352, %cst_196 [1] : vector<16x32xf32> to vector<16xf32>
    %356 = vector.shape_cast %355 : vector<16xf32> to vector<16x1xf32>
    %cst_197 = arith.constant 3.200000e+01 : f32
    %357 = vector.broadcast %cst_197 : f32 to vector<16x1xf32>
    %358 = arith.divf %356, %357 : vector<16x1xf32>
    %359 = vector.broadcast %358 : vector<16x1xf32> to vector<16x32xf32>
    %360 = arith.subf %352, %359 : vector<16x32xf32>
    %361 = arith.mulf %360, %360 : vector<16x32xf32>
    %cst_198 = arith.constant dense<0.000000e+00> : vector<16xf32>
    %362 = vector.multi_reduction <add>, %361, %cst_198 [1] : vector<16x32xf32> to vector<16xf32>
    %363 = vector.shape_cast %362 : vector<16xf32> to vector<16x1xf32>
    %cst_199 = arith.constant 3.200000e+01 : f32
    %364 = vector.broadcast %cst_199 : f32 to vector<16x1xf32>
    %365 = arith.divf %363, %364 : vector<16x1xf32>
    %366 = vector.broadcast %358 : vector<16x1xf32> to vector<16x32xf32>
    %367 = arith.subf %352, %366 : vector<16x32xf32>
    %cst_200 = arith.constant 9.99999974E-6 : f32
    %368 = vector.broadcast %cst_200 : f32 to vector<16x1xf32>
    %369 = arith.addf %365, %368 : vector<16x1xf32>
    %370 = math.rsqrt %369 : vector<16x1xf32>
    %371 = vector.broadcast %370 : vector<16x1xf32> to vector<16x32xf32>
    %372 = arith.mulf %367, %371 : vector<16x32xf32>
    %373 = vector.broadcast %353 : vector<1x32xf32> to vector<16x32xf32>
    %374 = arith.mulf %372, %373 : vector<16x32xf32>
    %375 = vector.broadcast %354 : vector<1x32xf32> to vector<16x32xf32>
    %376 = arith.addf %374, %375 : vector<16x32xf32>
    %c1_201 = arith.constant 1 : index
    %c0_202 = arith.constant 0 : index
    %c0_203 = arith.constant 0 : index
    %377 = vector.load %arg7[%c1_201, %c0_202, %c0_203] : memref<2x32x96xf32, #tpu.memory_space<vmem>>, vector<1x32x96xf32>
    %378 = vector.shape_cast %377 : vector<1x32x96xf32> to vector<32x96xf32>
    %cst_204 = arith.constant dense<0.000000e+00> : vector<16x96xf32>
    %379 = tpu.matmul %376, %378, %cst_204 {dimension_numbers = #tpu.dot_dimension_numbers<[1], [0], [0], [1], [0, 0, 1, 1], [], []>} : vector<16x32xf32>, vector<32x96xf32>, vector<16x96xf32> -> vector<16x96xf32>
    %c17 = arith.constant 17 : index
    %c0_205 = arith.constant 0 : index
    %380 = vector.load %arg15[%c17, %c0_205] : memref<32x128xf32, #tpu.memory_space<vmem>>, vector<1x96xf32>
    %381 = vector.broadcast %380 : vector<1x96xf32> to vector<16x96xf32>
    %382 = arith.addf %379, %381 : vector<16x96xf32>
    %c0_206 = arith.constant 0 : index
    %c0_207 = arith.constant 0 : index
    %383 = vector.load %arg17[%c0_206, %c0_207] : memref<16x96xf32, #tpu.memory_space<vmem>>, vector<16x96xf32>
    tpu.vector_store %arg17[%c0_206, %c0_207], %382 {strides = array<i32>} : memref<16x96xf32, #tpu.memory_space<vmem>>, vector<16x96xf32>,
    %384 = vector.extract_strided_slice %22 {offsets = [0, 0], sizes = [1, 8], strides = [1, 1]} : vector<2x8xf32> to vector<1x8xf32>
    %c0_208 = arith.constant 0 : index
    %c0_209 = arith.constant 0 : index
    %385 = vector.load %arg17[%c0_208, %c0_209] : memref<16x96xf32, #tpu.memory_space<vmem>>, vector<8x8xf32>
    %c0_210 = arith.constant 0 : index
    %c32_211 = arith.constant 32 : index
    %386 = vector.load %arg17[%c0_210, %c32_211] : memref<16x96xf32, #tpu.memory_space<vmem>>, vector<8x8xf32>
    %c0_212 = arith.constant 0 : index
    %c64_213 = arith.constant 64 : index
    %387 = vector.load %arg17[%c0_212, %c64_213] : memref<16x96xf32, #tpu.memory_space<vmem>>, vector<8x8xf32>
    %cst_214 = arith.constant dense<0.000000e+00> : vector<8x8xf32>
    %388 = tpu.matmul %385, %386, %cst_214 {dimension_numbers = #tpu.dot_dimension_numbers<[1], [1], [0], [0], [0, 0, 1, 0], [], []>} : vector<8x8xf32>, vector<8x8xf32>, vector<8x8xf32> -> vector<8x8xf32>
    %cst_215 = arith.constant 0.353553385 : f32
    %389 = vector.broadcast %cst_215 : f32 to vector<8x8xf32>
    %390 = arith.mulf %388, %389 : vector<8x8xf32>
    %c0_216 = arith.constant 0 : index
    %c0_217 = arith.constant 0 : index
    %391 = vector.load %arg19[%c0_216, %c0_217] : memref<16x32xf32, #tpu.memory_space<vmem>>, vector<8x8xf32>
    %392 = arith.addf %390, %391 : vector<8x8xf32>
    %393 = vector.broadcast %384 : vector<1x8xf32> to vector<8x8xf32>
    %394 = arith.addf %392, %393 : vector<8x8xf32>
    %cst_218 = arith.constant dense<0xFF800000> : vector<8xf32>
    %395 = vector.multi_reduction <maximumf>, %394, %cst_218 [1] : vector<8x8xf32> to vector<8xf32>
    %396 = vector.shape_cast %395 : vector<8xf32> to vector<8x1xf32>
    %397 = vector.broadcast %396 : vector<8x1xf32> to vector<8x8xf32>
    %398 = arith.subf %394, %397 : vector<8x8xf32>
    %399 = math.exp %398 : vector<8x8xf32>
    %cst_219 = arith.constant dense<0.000000e+00> : vector<8xf32>
    %400 = vector.multi_reduction <add>, %399, %cst_219 [1] : vector<8x8xf32> to vector<8xf32>
    %401 = vector.shape_cast %400 : vector<8xf32> to vector<8x1xf32>
    %402 = tpu.reciprocal %401 {approx = true} : vector<8x1xf32> -> vector<8x1xf32>
    %403 = vector.broadcast %402 : vector<8x1xf32> to vector<8x8xf32>
    %404 = arith.mulf %399, %403 : vector<8x8xf32>
    %cst_220 = arith.constant dense<0.000000e+00> : vector<8x8xf32>
    %405 = tpu.matmul %404, %387, %cst_220 {dimension_numbers = #tpu.dot_dimension_numbers<[1], [0], [0], [1], [0, 0, 1, 1], [], []>} : vector<8x8xf32>, vector<8x8xf32>, vector<8x8xf32> -> vector<8x8xf32>
    %c0_221 = arith.constant 0 : index
    %c0_222 = arith.constant 0 : index
    %406 = vector.load %arg18[%c0_221, %c0_222] : memref<16x32xf32, #tpu.memory_space<vmem>>, vector<8x8xf32>
    tpu.vector_store %arg18[%c0_221, %c0_222], %405 {strides = array<i32>} : memref<16x32xf32, #tpu.memory_space<vmem>>, vector<8x8xf32>,
    %c0_223 = arith.constant 0 : index
    %c8_224 = arith.constant 8 : index
    %407 = vector.load %arg17[%c0_223, %c8_224] : memref<16x96xf32, #tpu.memory_space<vmem>>, vector<8x8xf32>
    %c0_225 = arith.constant 0 : index
    %c40_226 = arith.constant 40 : index
    %408 = vector.load %arg17[%c0_225, %c40_226] : memref<16x96xf32, #tpu.memory_space<vmem>>, vector<8x8xf32>
    %c0_227 = arith.constant 0 : index
    %c72_228 = arith.constant 72 : index
    %409 = vector.load %arg17[%c0_227, %c72_228] : memref<16x96xf32, #tpu.memory_space<vmem>>, vector<8x8xf32>
    %cst_229 = arith.constant dense<0.000000e+00> : vector<8x8xf32>
    %410 = tpu.matmul %407, %408, %cst_229 {dimension_numbers = #tpu.dot_dimension_numbers<[1], [1], [0], [0], [0, 0, 1, 0], [], []>} : vector<8x8xf32>, vector<8x8xf32>, vector<8x8xf32> -> vector<8x8xf32>
    %cst_230 = arith.constant 0.353553385 : f32
    %411 = vector.broadcast %cst_230 : f32 to vector<8x8xf32>
    %412 = arith.mulf %410, %411 : vector<8x8xf32>
    %c0_231 = arith.constant 0 : index
    %c8_232 = arith.constant 8 : index
    %413 = vector.load %arg19[%c0_231, %c8_232] : memref<16x32xf32, #tpu.memory_space<vmem>>, vector<8x8xf32>
    %414 = arith.addf %412, %413 : vector<8x8xf32>
    %415 = vector.broadcast %384 : vector<1x8xf32> to vector<8x8xf32>
    %416 = arith.addf %414, %415 : vector<8x8xf32>
    %cst_233 = arith.constant dense<0xFF800000> : vector<8xf32>
    %417 = vector.multi_reduction <maximumf>, %416, %cst_233 [1] : vector<8x8xf32> to vector<8xf32>
    %418 = vector.shape_cast %417 : vector<8xf32> to vector<8x1xf32>
    %419 = vector.broadcast %418 : vector<8x1xf32> to vector<8x8xf32>
    %420 = arith.subf %416, %419 : vector<8x8xf32>
    %421 = math.exp %420 : vector<8x8xf32>
    %cst_234 = arith.constant dense<0.000000e+00> : vector<8xf32>
    %422 = vector.multi_reduction <add>, %421, %cst_234 [1] : vector<8x8xf32> to vector<8xf32>
    %423 = vector.shape_cast %422 : vector<8xf32> to vector<8x1xf32>
    %424 = tpu.reciprocal %423 {approx = true} : vector<8x1xf32> -> vector<8x1xf32>
    %425 = vector.broadcast %424 : vector<8x1xf32> to vector<8x8xf32>
    %426 = arith.mulf %421, %425 : vector<8x8xf32>
    %cst_235 = arith.constant dense<0.000000e+00> : vector<8x8xf32>
    %427 = tpu.matmul %426, %409, %cst_235 {dimension_numbers = #tpu.dot_dimension_numbers<[1], [0], [0], [1], [0, 0, 1, 1], [], []>} : vector<8x8xf32>, vector<8x8xf32>, vector<8x8xf32> -> vector<8x8xf32>
    %c0_236 = arith.constant 0 : index
    %c8_237 = arith.constant 8 : index
    %428 = vector.load %arg18[%c0_236, %c8_237] : memref<16x32xf32, #tpu.memory_space<vmem>>, vector<8x8xf32>
    tpu.vector_store %arg18[%c0_236, %c8_237], %427 {strides = array<i32>} : memref<16x32xf32, #tpu.memory_space<vmem>>, vector<8x8xf32>,
    %c0_238 = arith.constant 0 : index
    %c16_239 = arith.constant 16 : index
    %429 = vector.load %arg17[%c0_238, %c16_239] : memref<16x96xf32, #tpu.memory_space<vmem>>, vector<8x8xf32>
    %c0_240 = arith.constant 0 : index
    %c48_241 = arith.constant 48 : index
    %430 = vector.load %arg17[%c0_240, %c48_241] : memref<16x96xf32, #tpu.memory_space<vmem>>, vector<8x8xf32>
    %c0_242 = arith.constant 0 : index
    %c80_243 = arith.constant 80 : index
    %431 = vector.load %arg17[%c0_242, %c80_243] : memref<16x96xf32, #tpu.memory_space<vmem>>, vector<8x8xf32>
    %cst_244 = arith.constant dense<0.000000e+00> : vector<8x8xf32>
    %432 = tpu.matmul %429, %430, %cst_244 {dimension_numbers = #tpu.dot_dimension_numbers<[1], [1], [0], [0], [0, 0, 1, 0], [], []>} : vector<8x8xf32>, vector<8x8xf32>, vector<8x8xf32> -> vector<8x8xf32>
    %cst_245 = arith.constant 0.353553385 : f32
    %433 = vector.broadcast %cst_245 : f32 to vector<8x8xf32>
    %434 = arith.mulf %432, %433 : vector<8x8xf32>
    %c0_246 = arith.constant 0 : index
    %c16_247 = arith.constant 16 : index
    %435 = vector.load %arg19[%c0_246, %c16_247] : memref<16x32xf32, #tpu.memory_space<vmem>>, vector<8x8xf32>
    %436 = arith.addf %434, %435 : vector<8x8xf32>
    %437 = vector.broadcast %384 : vector<1x8xf32> to vector<8x8xf32>
    %438 = arith.addf %436, %437 : vector<8x8xf32>
    %cst_248 = arith.constant dense<0xFF800000> : vector<8xf32>
    %439 = vector.multi_reduction <maximumf>, %438, %cst_248 [1] : vector<8x8xf32> to vector<8xf32>
    %440 = vector.shape_cast %439 : vector<8xf32> to vector<8x1xf32>
    %441 = vector.broadcast %440 : vector<8x1xf32> to vector<8x8xf32>
    %442 = arith.subf %438, %441 : vector<8x8xf32>
    %443 = math.exp %442 : vector<8x8xf32>
    %cst_249 = arith.constant dense<0.000000e+00> : vector<8xf32>
    %444 = vector.multi_reduction <add>, %443, %cst_249 [1] : vector<8x8xf32> to vector<8xf32>
    %445 = vector.shape_cast %444 : vector<8xf32> to vector<8x1xf32>
    %446 = tpu.reciprocal %445 {approx = true} : vector<8x1xf32> -> vector<8x1xf32>
    %447 = vector.broadcast %446 : vector<8x1xf32> to vector<8x8xf32>
    %448 = arith.mulf %443, %447 : vector<8x8xf32>
    %cst_250 = arith.constant dense<0.000000e+00> : vector<8x8xf32>
    %449 = tpu.matmul %448, %431, %cst_250 {dimension_numbers = #tpu.dot_dimension_numbers<[1], [0], [0], [1], [0, 0, 1, 1], [], []>} : vector<8x8xf32>, vector<8x8xf32>, vector<8x8xf32> -> vector<8x8xf32>
    %c0_251 = arith.constant 0 : index
    %c16_252 = arith.constant 16 : index
    %450 = vector.load %arg18[%c0_251, %c16_252] : memref<16x32xf32, #tpu.memory_space<vmem>>, vector<8x8xf32>
    tpu.vector_store %arg18[%c0_251, %c16_252], %449 {strides = array<i32>} : memref<16x32xf32, #tpu.memory_space<vmem>>, vector<8x8xf32>,
    %c0_253 = arith.constant 0 : index
    %c24_254 = arith.constant 24 : index
    %451 = vector.load %arg17[%c0_253, %c24_254] : memref<16x96xf32, #tpu.memory_space<vmem>>, vector<8x8xf32>
    %c0_255 = arith.constant 0 : index
    %c56_256 = arith.constant 56 : index
    %452 = vector.load %arg17[%c0_255, %c56_256] : memref<16x96xf32, #tpu.memory_space<vmem>>, vector<8x8xf32>
    %c0_257 = arith.constant 0 : index
    %c88_258 = arith.constant 88 : index
    %453 = vector.load %arg17[%c0_257, %c88_258] : memref<16x96xf32, #tpu.memory_space<vmem>>, vector<8x8xf32>
    %cst_259 = arith.constant dense<0.000000e+00> : vector<8x8xf32>
    %454 = tpu.matmul %451, %452, %cst_259 {dimension_numbers = #tpu.dot_dimension_numbers<[1], [1], [0], [0], [0, 0, 1, 0], [], []>} : vector<8x8xf32>, vector<8x8xf32>, vector<8x8xf32> -> vector<8x8xf32>
    %cst_260 = arith.constant 0.353553385 : f32
    %455 = vector.broadcast %cst_260 : f32 to vector<8x8xf32>
    %456 = arith.mulf %454, %455 : vector<8x8xf32>
    %c0_261 = arith.constant 0 : index
    %c24_262 = arith.constant 24 : index
    %457 = vector.load %arg19[%c0_261, %c24_262] : memref<16x32xf32, #tpu.memory_space<vmem>>, vector<8x8xf32>
    %458 = arith.addf %456, %457 : vector<8x8xf32>
    %459 = vector.broadcast %384 : vector<1x8xf32> to vector<8x8xf32>
    %460 = arith.addf %458, %459 : vector<8x8xf32>
    %cst_263 = arith.constant dense<0xFF800000> : vector<8xf32>
    %461 = vector.multi_reduction <maximumf>, %460, %cst_263 [1] : vector<8x8xf32> to vector<8xf32>
    %462 = vector.shape_cast %461 : vector<8xf32> to vector<8x1xf32>
    %463 = vector.broadcast %462 : vector<8x1xf32> to vector<8x8xf32>
    %464 = arith.subf %460, %463 : vector<8x8xf32>
    %465 = math.exp %464 : vector<8x8xf32>
    %cst_264 = arith.constant dense<0.000000e+00> : vector<8xf32>
    %466 = vector.multi_reduction <add>, %465, %cst_264 [1] : vector<8x8xf32> to vector<8xf32>
    %467 = vector.shape_cast %466 : vector<8xf32> to vector<8x1xf32>
    %468 = tpu.reciprocal %467 {approx = true} : vector<8x1xf32> -> vector<8x1xf32>
    %469 = vector.broadcast %468 : vector<8x1xf32> to vector<8x8xf32>
    %470 = arith.mulf %465, %469 : vector<8x8xf32>
    %cst_265 = arith.constant dense<0.000000e+00> : vector<8x8xf32>
    %471 = tpu.matmul %470, %453, %cst_265 {dimension_numbers = #tpu.dot_dimension_numbers<[1], [0], [0], [1], [0, 0, 1, 1], [], []>} : vector<8x8xf32>, vector<8x8xf32>, vector<8x8xf32> -> vector<8x8xf32>
    %c0_266 = arith.constant 0 : index
    %c24_267 = arith.constant 24 : index
    %472 = vector.load %arg18[%c0_266, %c24_267] : memref<16x32xf32, #tpu.memory_space<vmem>>, vector<8x8xf32>
    tpu.vector_store %arg18[%c0_266, %c24_267], %471 {strides = array<i32>} : memref<16x32xf32, #tpu.memory_space<vmem>>, vector<8x8xf32>,
    %473 = vector.extract_strided_slice %22 {offsets = [1, 0], sizes = [1, 8], strides = [1, 1]} : vector<2x8xf32> to vector<1x8xf32>
    %c8_268 = arith.constant 8 : index
    %c0_269 = arith.constant 0 : index
    %474 = vector.load %arg17[%c8_268, %c0_269] : memref<16x96xf32, #tpu.memory_space<vmem>>, vector<8x8xf32>
    %c8_270 = arith.constant 8 : index
    %c32_271 = arith.constant 32 : index
    %475 = vector.load %arg17[%c8_270, %c32_271] : memref<16x96xf32, #tpu.memory_space<vmem>>, vector<8x8xf32>
    %c8_272 = arith.constant 8 : index
    %c64_273 = arith.constant 64 : index
    %476 = vector.load %arg17[%c8_272, %c64_273] : memref<16x96xf32, #tpu.memory_space<vmem>>, vector<8x8xf32>
    %cst_274 = arith.constant dense<0.000000e+00> : vector<8x8xf32>
    %477 = tpu.matmul %474, %475, %cst_274 {dimension_numbers = #tpu.dot_dimension_numbers<[1], [1], [0], [0], [0, 0, 1, 0], [], []>} : vector<8x8xf32>, vector<8x8xf32>, vector<8x8xf32> -> vector<8x8xf32>
    %cst_275 = arith.constant 0.353553385 : f32
    %478 = vector.broadcast %cst_275 : f32 to vector<8x8xf32>
    %479 = arith.mulf %477, %478 : vector<8x8xf32>
    %c8_276 = arith.constant 8 : index
    %c0_277 = arith.constant 0 : index
    %480 = vector.load %arg19[%c8_276, %c0_277] : memref<16x32xf32, #tpu.memory_space<vmem>>, vector<8x8xf32>
    %481 = arith.addf %479, %480 : vector<8x8xf32>
    %482 = vector.broadcast %473 : vector<1x8xf32> to vector<8x8xf32>
    %483 = arith.addf %481, %482 : vector<8x8xf32>
    %cst_278 = arith.constant dense<0xFF800000> : vector<8xf32>
    %484 = vector.multi_reduction <maximumf>, %483, %cst_278 [1] : vector<8x8xf32> to vector<8xf32>
    %485 = vector.shape_cast %484 : vector<8xf32> to vector<8x1xf32>
    %486 = vector.broadcast %485 : vector<8x1xf32> to vector<8x8xf32>
    %487 = arith.subf %483, %486 : vector<8x8xf32>
    %488 = math.exp %487 : vector<8x8xf32>
    %cst_279 = arith.constant dense<0.000000e+00> : vector<8xf32>
    %489 = vector.multi_reduction <add>, %488, %cst_279 [1] : vector<8x8xf32> to vector<8xf32>
    %490 = vector.shape_cast %489 : vector<8xf32> to vector<8x1xf32>
    %491 = tpu.reciprocal %490 {approx = true} : vector<8x1xf32> -> vector<8x1xf32>
    %492 = vector.broadcast %491 : vector<8x1xf32> to vector<8x8xf32>
    %493 = arith.mulf %488, %492 : vector<8x8xf32>
    %cst_280 = arith.constant dense<0.000000e+00> : vector<8x8xf32>
    %494 = tpu.matmul %493, %476, %cst_280 {dimension_numbers = #tpu.dot_dimension_numbers<[1], [0], [0], [1], [0, 0, 1, 1], [], []>} : vector<8x8xf32>, vector<8x8xf32>, vector<8x8xf32> -> vector<8x8xf32>
    %c8_281 = arith.constant 8 : index
    %c0_282 = arith.constant 0 : index
    %495 = vector.load %arg18[%c8_281, %c0_282] : memref<16x32xf32, #tpu.memory_space<vmem>>, vector<8x8xf32>
    tpu.vector_store %arg18[%c8_281, %c0_282], %494 {strides = array<i32>} : memref<16x32xf32, #tpu.memory_space<vmem>>, vector<8x8xf32>,
    %c8_283 = arith.constant 8 : index
    %c8_284 = arith.constant 8 : index
    %496 = vector.load %arg17[%c8_283, %c8_284] : memref<16x96xf32, #tpu.memory_space<vmem>>, vector<8x8xf32>
    %c8_285 = arith.constant 8 : index
    %c40_286 = arith.constant 40 : index
    %497 = vector.load %arg17[%c8_285, %c40_286] : memref<16x96xf32, #tpu.memory_space<vmem>>, vector<8x8xf32>
    %c8_287 = arith.constant 8 : index
    %c72_288 = arith.constant 72 : index
    %498 = vector.load %arg17[%c8_287, %c72_288] : memref<16x96xf32, #tpu.memory_space<vmem>>, vector<8x8xf32>
    %cst_289 = arith.constant dense<0.000000e+00> : vector<8x8xf32>
    %499 = tpu.matmul %496, %497, %cst_289 {dimension_numbers = #tpu.dot_dimension_numbers<[1], [1], [0], [0], [0, 0, 1, 0], [], []>} : vector<8x8xf32>, vector<8x8xf32>, vector<8x8xf32> -> vector<8x8xf32>
    %cst_290 = arith.constant 0.353553385 : f32
    %500 = vector.broadcast %cst_290 : f32 to vector<8x8xf32>
    %501 = arith.mulf %499, %500 : vector<8x8xf32>
    %c8_291 = arith.constant 8 : index
    %c8_292 = arith.constant 8 : index
    %502 = vector.load %arg19[%c8_291, %c8_292] : memref<16x32xf32, #tpu.memory_space<vmem>>, vector<8x8xf32>
    %503 = arith.addf %501, %502 : vector<8x8xf32>
    %504 = vector.broadcast %473 : vector<1x8xf32> to vector<8x8xf32>
    %505 = arith.addf %503, %504 : vector<8x8xf32>
    %cst_293 = arith.constant dense<0xFF800000> : vector<8xf32>
    %506 = vector.multi_reduction <maximumf>, %505, %cst_293 [1] : vector<8x8xf32> to vector<8xf32>
    %507 = vector.shape_cast %506 : vector<8xf32> to vector<8x1xf32>
    %508 = vector.broadcast %507 : vector<8x1xf32> to vector<8x8xf32>
    %509 = arith.subf %505, %508 : vector<8x8xf32>
    %510 = math.exp %509 : vector<8x8xf32>
    %cst_294 = arith.constant dense<0.000000e+00> : vector<8xf32>
    %511 = vector.multi_reduction <add>, %510, %cst_294 [1] : vector<8x8xf32> to vector<8xf32>
    %512 = vector.shape_cast %511 : vector<8xf32> to vector<8x1xf32>
    %513 = tpu.reciprocal %512 {approx = true} : vector<8x1xf32> -> vector<8x1xf32>
    %514 = vector.broadcast %513 : vector<8x1xf32> to vector<8x8xf32>
    %515 = arith.mulf %510, %514 : vector<8x8xf32>
    %cst_295 = arith.constant dense<0.000000e+00> : vector<8x8xf32>
    %516 = tpu.matmul %515, %498, %cst_295 {dimension_numbers = #tpu.dot_dimension_numbers<[1], [0], [0], [1], [0, 0, 1, 1], [], []>} : vector<8x8xf32>, vector<8x8xf32>, vector<8x8xf32> -> vector<8x8xf32>
    %c8_296 = arith.constant 8 : index
    %c8_297 = arith.constant 8 : index
    %517 = vector.load %arg18[%c8_296, %c8_297] : memref<16x32xf32, #tpu.memory_space<vmem>>, vector<8x8xf32>
    tpu.vector_store %arg18[%c8_296, %c8_297], %516 {strides = array<i32>} : memref<16x32xf32, #tpu.memory_space<vmem>>, vector<8x8xf32>,
    %c8_298 = arith.constant 8 : index
    %c16_299 = arith.constant 16 : index
    %518 = vector.load %arg17[%c8_298, %c16_299] : memref<16x96xf32, #tpu.memory_space<vmem>>, vector<8x8xf32>
    %c8_300 = arith.constant 8 : index
    %c48_301 = arith.constant 48 : index
    %519 = vector.load %arg17[%c8_300, %c48_301] : memref<16x96xf32, #tpu.memory_space<vmem>>, vector<8x8xf32>
    %c8_302 = arith.constant 8 : index
    %c80_303 = arith.constant 80 : index
    %520 = vector.load %arg17[%c8_302, %c80_303] : memref<16x96xf32, #tpu.memory_space<vmem>>, vector<8x8xf32>
    %cst_304 = arith.constant dense<0.000000e+00> : vector<8x8xf32>
    %521 = tpu.matmul %518, %519, %cst_304 {dimension_numbers = #tpu.dot_dimension_numbers<[1], [1], [0], [0], [0, 0, 1, 0], [], []>} : vector<8x8xf32>, vector<8x8xf32>, vector<8x8xf32> -> vector<8x8xf32>
    %cst_305 = arith.constant 0.353553385 : f32
    %522 = vector.broadcast %cst_305 : f32 to vector<8x8xf32>
    %523 = arith.mulf %521, %522 : vector<8x8xf32>
    %c8_306 = arith.constant 8 : index
    %c16_307 = arith.constant 16 : index
    %524 = vector.load %arg19[%c8_306, %c16_307] : memref<16x32xf32, #tpu.memory_space<vmem>>, vector<8x8xf32>
    %525 = arith.addf %523, %524 : vector<8x8xf32>
    %526 = vector.broadcast %473 : vector<1x8xf32> to vector<8x8xf32>
    %527 = arith.addf %525, %526 : vector<8x8xf32>
    %cst_308 = arith.constant dense<0xFF800000> : vector<8xf32>
    %528 = vector.multi_reduction <maximumf>, %527, %cst_308 [1] : vector<8x8xf32> to vector<8xf32>
    %529 = vector.shape_cast %528 : vector<8xf32> to vector<8x1xf32>
    %530 = vector.broadcast %529 : vector<8x1xf32> to vector<8x8xf32>
    %531 = arith.subf %527, %530 : vector<8x8xf32>
    %532 = math.exp %531 : vector<8x8xf32>
    %cst_309 = arith.constant dense<0.000000e+00> : vector<8xf32>
    %533 = vector.multi_reduction <add>, %532, %cst_309 [1] : vector<8x8xf32> to vector<8xf32>
    %534 = vector.shape_cast %533 : vector<8xf32> to vector<8x1xf32>
    %535 = tpu.reciprocal %534 {approx = true} : vector<8x1xf32> -> vector<8x1xf32>
    %536 = vector.broadcast %535 : vector<8x1xf32> to vector<8x8xf32>
    %537 = arith.mulf %532, %536 : vector<8x8xf32>
    %cst_310 = arith.constant dense<0.000000e+00> : vector<8x8xf32>
    %538 = tpu.matmul %537, %520, %cst_310 {dimension_numbers = #tpu.dot_dimension_numbers<[1], [0], [0], [1], [0, 0, 1, 1], [], []>} : vector<8x8xf32>, vector<8x8xf32>, vector<8x8xf32> -> vector<8x8xf32>
    %c8_311 = arith.constant 8 : index
    %c16_312 = arith.constant 16 : index
    %539 = vector.load %arg18[%c8_311, %c16_312] : memref<16x32xf32, #tpu.memory_space<vmem>>, vector<8x8xf32>
    tpu.vector_store %arg18[%c8_311, %c16_312], %538 {strides = array<i32>} : memref<16x32xf32, #tpu.memory_space<vmem>>, vector<8x8xf32>,
    %c8_313 = arith.constant 8 : index
    %c24_314 = arith.constant 24 : index
    %540 = vector.load %arg17[%c8_313, %c24_314] : memref<16x96xf32, #tpu.memory_space<vmem>>, vector<8x8xf32>
    %c8_315 = arith.constant 8 : index
    %c56_316 = arith.constant 56 : index
    %541 = vector.load %arg17[%c8_315, %c56_316] : memref<16x96xf32, #tpu.memory_space<vmem>>, vector<8x8xf32>
    %c8_317 = arith.constant 8 : index
    %c88_318 = arith.constant 88 : index
    %542 = vector.load %arg17[%c8_317, %c88_318] : memref<16x96xf32, #tpu.memory_space<vmem>>, vector<8x8xf32>
    %cst_319 = arith.constant dense<0.000000e+00> : vector<8x8xf32>
    %543 = tpu.matmul %540, %541, %cst_319 {dimension_numbers = #tpu.dot_dimension_numbers<[1], [1], [0], [0], [0, 0, 1, 0], [], []>} : vector<8x8xf32>, vector<8x8xf32>, vector<8x8xf32> -> vector<8x8xf32>
    %cst_320 = arith.constant 0.353553385 : f32
    %544 = vector.broadcast %cst_320 : f32 to vector<8x8xf32>
    %545 = arith.mulf %543, %544 : vector<8x8xf32>
    %c8_321 = arith.constant 8 : index
    %c24_322 = arith.constant 24 : index
    %546 = vector.load %arg19[%c8_321, %c24_322] : memref<16x32xf32, #tpu.memory_space<vmem>>, vector<8x8xf32>
    %547 = arith.addf %545, %546 : vector<8x8xf32>
    %548 = vector.broadcast %473 : vector<1x8xf32> to vector<8x8xf32>
    %549 = arith.addf %547, %548 : vector<8x8xf32>
    %cst_323 = arith.constant dense<0xFF800000> : vector<8xf32>
    %550 = vector.multi_reduction <maximumf>, %549, %cst_323 [1] : vector<8x8xf32> to vector<8xf32>
    %551 = vector.shape_cast %550 : vector<8xf32> to vector<8x1xf32>
    %552 = vector.broadcast %551 : vector<8x1xf32> to vector<8x8xf32>
    %553 = arith.subf %549, %552 : vector<8x8xf32>
    %554 = math.exp %553 : vector<8x8xf32>
    %cst_324 = arith.constant dense<0.000000e+00> : vector<8xf32>
    %555 = vector.multi_reduction <add>, %554, %cst_324 [1] : vector<8x8xf32> to vector<8xf32>
    %556 = vector.shape_cast %555 : vector<8xf32> to vector<8x1xf32>
    %557 = tpu.reciprocal %556 {approx = true} : vector<8x1xf32> -> vector<8x1xf32>
    %558 = vector.broadcast %557 : vector<8x1xf32> to vector<8x8xf32>
    %559 = arith.mulf %554, %558 : vector<8x8xf32>
    %cst_325 = arith.constant dense<0.000000e+00> : vector<8x8xf32>
    %560 = tpu.matmul %559, %542, %cst_325 {dimension_numbers = #tpu.dot_dimension_numbers<[1], [0], [0], [1], [0, 0, 1, 1], [], []>} : vector<8x8xf32>, vector<8x8xf32>, vector<8x8xf32> -> vector<8x8xf32>
    %c8_326 = arith.constant 8 : index
    %c24_327 = arith.constant 24 : index
    %561 = vector.load %arg18[%c8_326, %c24_327] : memref<16x32xf32, #tpu.memory_space<vmem>>, vector<8x8xf32>
    tpu.vector_store %arg18[%c8_326, %c24_327], %560 {strides = array<i32>} : memref<16x32xf32, #tpu.memory_space<vmem>>, vector<8x8xf32>,
    %c0_328 = arith.constant 0 : index
    %c0_329 = arith.constant 0 : index
    %562 = vector.load %arg18[%c0_328, %c0_329] : memref<16x32xf32, #tpu.memory_space<vmem>>, vector<16x32xf32>
    %c1_330 = arith.constant 1 : index
    %c0_331 = arith.constant 0 : index
    %c0_332 = arith.constant 0 : index
    %563 = vector.load %arg8[%c1_330, %c0_331, %c0_332] : memref<2x32x32xf32, #tpu.memory_space<vmem>>, vector<1x32x32xf32>
    %564 = vector.shape_cast %563 : vector<1x32x32xf32> to vector<32x32xf32>
    %cst_333 = arith.constant dense<0.000000e+00> : vector<16x32xf32>
    %565 = tpu.matmul %562, %564, %cst_333 {dimension_numbers = #tpu.dot_dimension_numbers<[1], [0], [0], [1], [0, 0, 1, 1], [], []>} : vector<16x32xf32>, vector<32x32xf32>, vector<16x32xf32> -> vector<16x32xf32>
    %566 = arith.addf %352, %565 : vector<16x32xf32>
    %c18 = arith.constant 18 : index
    %c0_334 = arith.constant 0 : index
    %567 = vector.load %arg15[%c18, %c0_334] : memref<32x128xf32, #tpu.memory_space<vmem>>, vector<1x32xf32>
    %568 = vector.broadcast %567 : vector<1x32xf32> to vector<16x32xf32>
    %569 = arith.addf %566, %568 : vector<16x32xf32>
    %c19 = arith.constant 19 : index
    %c0_335 = arith.constant 0 : index
    %570 = vector.load %arg15[%c19, %c0_335] : memref<32x128xf32, #tpu.memory_space<vmem>>, vector<1x32xf32>
    %c20 = arith.constant 20 : index
    %c0_336 = arith.constant 0 : index
    %571 = vector.load %arg15[%c20, %c0_336] : memref<32x128xf32, #tpu.memory_space<vmem>>, vector<1x32xf32>
    %cst_337 = arith.constant dense<0.000000e+00> : vector<16xf32>
    %572 = vector.multi_reduction <add>, %569, %cst_337 [1] : vector<16x32xf32> to vector<16xf32>
    %573 = vector.shape_cast %572 : vector<16xf32> to vector<16x1xf32>
    %cst_338 = arith.constant 3.200000e+01 : f32
    %574 = vector.broadcast %cst_338 : f32 to vector<16x1xf32>
    %575 = arith.divf %573, %574 : vector<16x1xf32>
    %576 = vector.broadcast %575 : vector<16x1xf32> to vector<16x32xf32>
    %577 = arith.subf %569, %576 : vector<16x32xf32>
    %578 = arith.mulf %577, %577 : vector<16x32xf32>
    %cst_339 = arith.constant dense<0.000000e+00> : vector<16xf32>
    %579 = vector.multi_reduction <add>, %578, %cst_339 [1] : vector<16x32xf32> to vector<16xf32>
    %580 = vector.shape_cast %579 : vector<16xf32> to vector<16x1xf32>
    %cst_340 = arith.constant 3.200000e+01 : f32
    %581 = vector.broadcast %cst_340 : f32 to vector<16x1xf32>
    %582 = arith.divf %580, %581 : vector<16x1xf32>
    %583 = vector.broadcast %575 : vector<16x1xf32> to vector<16x32xf32>
    %584 = arith.subf %569, %583 : vector<16x32xf32>
    %cst_341 = arith.constant 9.99999974E-6 : f32
    %585 = vector.broadcast %cst_341 : f32 to vector<16x1xf32>
    %586 = arith.addf %582, %585 : vector<16x1xf32>
    %587 = math.rsqrt %586 : vector<16x1xf32>
    %588 = vector.broadcast %587 : vector<16x1xf32> to vector<16x32xf32>
    %589 = arith.mulf %584, %588 : vector<16x32xf32>
    %590 = vector.broadcast %570 : vector<1x32xf32> to vector<16x32xf32>
    %591 = arith.mulf %589, %590 : vector<16x32xf32>
    %592 = vector.broadcast %571 : vector<1x32xf32> to vector<16x32xf32>
    %593 = arith.addf %591, %592 : vector<16x32xf32>
    %c1_342 = arith.constant 1 : index
    %c0_343 = arith.constant 0 : index
    %c0_344 = arith.constant 0 : index
    %594 = vector.load %arg9[%c1_342, %c0_343, %c0_344] : memref<2x32x64xf32, #tpu.memory_space<vmem>>, vector<1x32x64xf32>
    %595 = vector.shape_cast %594 : vector<1x32x64xf32> to vector<32x64xf32>
    %cst_345 = arith.constant dense<0.000000e+00> : vector<16x64xf32>
    %596 = tpu.matmul %593, %595, %cst_345 {dimension_numbers = #tpu.dot_dimension_numbers<[1], [0], [0], [1], [0, 0, 1, 1], [], []>} : vector<16x32xf32>, vector<32x64xf32>, vector<16x64xf32> -> vector<16x64xf32>
    %c21 = arith.constant 21 : index
    %c0_346 = arith.constant 0 : index
    %597 = vector.load %arg15[%c21, %c0_346] : memref<32x128xf32, #tpu.memory_space<vmem>>, vector<1x64xf32>
    %598 = vector.broadcast %597 : vector<1x64xf32> to vector<16x64xf32>
    %599 = arith.addf %596, %598 : vector<16x64xf32>
    %cst_347 = arith.constant 5.000000e-01 : f32
    %600 = vector.broadcast %cst_347 : f32 to vector<16x64xf32>
    %601 = arith.mulf %600, %599 : vector<16x64xf32>
    %cst_348 = arith.constant 4.471500e-02 : f32
    %602 = vector.broadcast %cst_348 : f32 to vector<16x64xf32>
    %603 = arith.mulf %602, %599 : vector<16x64xf32>
    %604 = arith.mulf %603, %599 : vector<16x64xf32>
    %605 = arith.mulf %604, %599 : vector<16x64xf32>
    %606 = arith.addf %599, %605 : vector<16x64xf32>
    %cst_349 = arith.constant 0.797884583 : f32
    %607 = vector.broadcast %cst_349 : f32 to vector<16x64xf32>
    %608 = arith.mulf %607, %606 : vector<16x64xf32>
    %609 = math.tanh %608 : vector<16x64xf32>
    %cst_350 = arith.constant 1.000000e+00 : f32
    %610 = vector.broadcast %cst_350 : f32 to vector<16x64xf32>
    %611 = arith.addf %610, %609 : vector<16x64xf32>
    %612 = arith.mulf %601, %611 : vector<16x64xf32>
    %c1_351 = arith.constant 1 : index
    %c0_352 = arith.constant 0 : index
    %c0_353 = arith.constant 0 : index
    %613 = vector.load %arg10[%c1_351, %c0_352, %c0_353] : memref<2x64x32xf32, #tpu.memory_space<vmem>>, vector<1x64x32xf32>
    %614 = vector.shape_cast %613 : vector<1x64x32xf32> to vector<64x32xf32>
    %cst_354 = arith.constant dense<0.000000e+00> : vector<16x32xf32>
    %615 = tpu.matmul %612, %614, %cst_354 {dimension_numbers = #tpu.dot_dimension_numbers<[1], [0], [0], [1], [0, 0, 1, 1], [], []>} : vector<16x64xf32>, vector<64x32xf32>, vector<16x32xf32> -> vector<16x32xf32>
    %616 = arith.addf %569, %615 : vector<16x32xf32>
    %c22 = arith.constant 22 : index
    %c0_355 = arith.constant 0 : index
    %617 = vector.load %arg15[%c22, %c0_355] : memref<32x128xf32, #tpu.memory_space<vmem>>, vector<1x32xf32>
    %618 = vector.broadcast %617 : vector<1x32xf32> to vector<16x32xf32>
    %619 = arith.addf %616, %618 : vector<16x32xf32>
    %c23 = arith.constant 23 : index
    %c0_356 = arith.constant 0 : index
    %620 = vector.load %arg15[%c23, %c0_356] : memref<32x128xf32, #tpu.memory_space<vmem>>, vector<1x32xf32>
    %c24_357 = arith.constant 24 : index
    %c0_358 = arith.constant 0 : index
    %621 = vector.load %arg15[%c24_357, %c0_358] : memref<32x128xf32, #tpu.memory_space<vmem>>, vector<1x32xf32>
    %cst_359 = arith.constant dense<0.000000e+00> : vector<16xf32>
    %622 = vector.multi_reduction <add>, %619, %cst_359 [1] : vector<16x32xf32> to vector<16xf32>
    %623 = vector.shape_cast %622 : vector<16xf32> to vector<16x1xf32>
    %cst_360 = arith.constant 3.200000e+01 : f32
    %624 = vector.broadcast %cst_360 : f32 to vector<16x1xf32>
    %625 = arith.divf %623, %624 : vector<16x1xf32>
    %626 = vector.broadcast %625 : vector<16x1xf32> to vector<16x32xf32>
    %627 = arith.subf %619, %626 : vector<16x32xf32>
    %628 = arith.mulf %627, %627 : vector<16x32xf32>
    %cst_361 = arith.constant dense<0.000000e+00> : vector<16xf32>
    %629 = vector.multi_reduction <add>, %628, %cst_361 [1] : vector<16x32xf32> to vector<16xf32>
    %630 = vector.shape_cast %629 : vector<16xf32> to vector<16x1xf32>
    %cst_362 = arith.constant 3.200000e+01 : f32
    %631 = vector.broadcast %cst_362 : f32 to vector<16x1xf32>
    %632 = arith.divf %630, %631 : vector<16x1xf32>
    %633 = vector.broadcast %625 : vector<16x1xf32> to vector<16x32xf32>
    %634 = arith.subf %619, %633 : vector<16x32xf32>
    %cst_363 = arith.constant 9.99999974E-6 : f32
    %635 = vector.broadcast %cst_363 : f32 to vector<16x1xf32>
    %636 = arith.addf %632, %635 : vector<16x1xf32>
    %637 = math.rsqrt %636 : vector<16x1xf32>
    %638 = vector.broadcast %637 : vector<16x1xf32> to vector<16x32xf32>
    %639 = arith.mulf %634, %638 : vector<16x32xf32>
    %640 = vector.broadcast %620 : vector<1x32xf32> to vector<16x32xf32>
    %641 = arith.mulf %639, %640 : vector<16x32xf32>
    %642 = vector.broadcast %621 : vector<1x32xf32> to vector<16x32xf32>
    %643 = arith.addf %641, %642 : vector<16x32xf32>
    %c0_364 = arith.constant 0 : index
    %c0_365 = arith.constant 0 : index
    %644 = vector.load %arg11[%c0_364, %c0_365] : memref<32x32xf32, #tpu.memory_space<vmem>>, vector<32x32xf32>
    %cst_366 = arith.constant dense<0.000000e+00> : vector<16x32xf32>
    %645 = tpu.matmul %643, %644, %cst_366 {dimension_numbers = #tpu.dot_dimension_numbers<[1], [0], [0], [1], [0, 0, 1, 1], [], []>} : vector<16x32xf32>, vector<32x32xf32>, vector<16x32xf32> -> vector<16x32xf32>
    %c25 = arith.constant 25 : index
    %c0_367 = arith.constant 0 : index
    %646 = vector.load %arg15[%c25, %c0_367] : memref<32x128xf32, #tpu.memory_space<vmem>>, vector<1x32xf32>
    %647 = vector.broadcast %646 : vector<1x32xf32> to vector<16x32xf32>
    %648 = arith.addf %645, %647 : vector<16x32xf32>
    %cst_368 = arith.constant 5.000000e-01 : f32
    %649 = vector.broadcast %cst_368 : f32 to vector<16x32xf32>
    %650 = arith.mulf %649, %648 : vector<16x32xf32>
    %cst_369 = arith.constant 4.471500e-02 : f32
    %651 = vector.broadcast %cst_369 : f32 to vector<16x32xf32>
    %652 = arith.mulf %651, %648 : vector<16x32xf32>
    %653 = arith.mulf %652, %648 : vector<16x32xf32>
    %654 = arith.mulf %653, %648 : vector<16x32xf32>
    %655 = arith.addf %648, %654 : vector<16x32xf32>
    %cst_370 = arith.constant 0.797884583 : f32
    %656 = vector.broadcast %cst_370 : f32 to vector<16x32xf32>
    %657 = arith.mulf %656, %655 : vector<16x32xf32>
    %658 = math.tanh %657 : vector<16x32xf32>
    %cst_371 = arith.constant 1.000000e+00 : f32
    %659 = vector.broadcast %cst_371 : f32 to vector<16x32xf32>
    %660 = arith.addf %659, %658 : vector<16x32xf32>
    %661 = arith.mulf %650, %660 : vector<16x32xf32>
    %c26 = arith.constant 26 : index
    %c0_372 = arith.constant 0 : index
    %662 = vector.load %arg15[%c26, %c0_372] : memref<32x128xf32, #tpu.memory_space<vmem>>, vector<1x32xf32>
    %c27 = arith.constant 27 : index
    %c0_373 = arith.constant 0 : index
    %663 = vector.load %arg15[%c27, %c0_373] : memref<32x128xf32, #tpu.memory_space<vmem>>, vector<1x32xf32>
    %cst_374 = arith.constant dense<0.000000e+00> : vector<16xf32>
    %664 = vector.multi_reduction <add>, %661, %cst_374 [1] : vector<16x32xf32> to vector<16xf32>
    %665 = vector.shape_cast %664 : vector<16xf32> to vector<16x1xf32>
    %cst_375 = arith.constant 3.200000e+01 : f32
    %666 = vector.broadcast %cst_375 : f32 to vector<16x1xf32>
    %667 = arith.divf %665, %666 : vector<16x1xf32>
    %668 = vector.broadcast %667 : vector<16x1xf32> to vector<16x32xf32>
    %669 = arith.subf %661, %668 : vector<16x32xf32>
    %670 = arith.mulf %669, %669 : vector<16x32xf32>
    %cst_376 = arith.constant dense<0.000000e+00> : vector<16xf32>
    %671 = vector.multi_reduction <add>, %670, %cst_376 [1] : vector<16x32xf32> to vector<16xf32>
    %672 = vector.shape_cast %671 : vector<16xf32> to vector<16x1xf32>
    %cst_377 = arith.constant 3.200000e+01 : f32
    %673 = vector.broadcast %cst_377 : f32 to vector<16x1xf32>
    %674 = arith.divf %672, %673 : vector<16x1xf32>
    %675 = vector.broadcast %667 : vector<16x1xf32> to vector<16x32xf32>
    %676 = arith.subf %661, %675 : vector<16x32xf32>
    %cst_378 = arith.constant 9.99999974E-6 : f32
    %677 = vector.broadcast %cst_378 : f32 to vector<16x1xf32>
    %678 = arith.addf %674, %677 : vector<16x1xf32>
    %679 = math.rsqrt %678 : vector<16x1xf32>
    %680 = vector.broadcast %679 : vector<16x1xf32> to vector<16x32xf32>
    %681 = arith.mulf %676, %680 : vector<16x32xf32>
    %682 = vector.broadcast %662 : vector<1x32xf32> to vector<16x32xf32>
    %683 = arith.mulf %681, %682 : vector<16x32xf32>
    %684 = vector.broadcast %663 : vector<1x32xf32> to vector<16x32xf32>
    %685 = arith.addf %683, %684 : vector<16x32xf32>
    %c0_379 = arith.constant 0 : index
    %c0_380 = arith.constant 0 : index
    %686 = vector.load %arg12[%c0_379, %c0_380] : memref<32x384xf32, #tpu.memory_space<vmem>>, vector<32x384xf32>
    %cst_381 = arith.constant dense<0.000000e+00> : vector<16x384xf32>
    %687 = tpu.matmul %685, %686, %cst_381 {dimension_numbers = #tpu.dot_dimension_numbers<[1], [0], [0], [1], [0, 0, 1, 1], [], []>} : vector<16x32xf32>, vector<32x384xf32>, vector<16x384xf32> -> vector<16x384xf32>
    %c0_382 = arith.constant 0 : index
    %c0_383 = arith.constant 0 : index
    %688 = vector.load %arg13[%c0_382, %c0_383] : memref<1x384xf32, #tpu.memory_space<vmem>>, vector<1x384xf32>
    %689 = vector.broadcast %688 : vector<1x384xf32> to vector<16x384xf32>
    %690 = arith.addf %687, %689 : vector<16x384xf32>
    %c0_384 = arith.constant 0 : index
    %c0_385 = arith.constant 0 : index
    %691 = vector.load %arg14[%c0_384, %c0_385] : memref<2x16xf32, #tpu.memory_space<vmem>>, vector<2x16xf32>
    %cst_386 = arith.constant dense<0.000000e+00> : vector<2x384xf32>
    %692 = tpu.matmul %691, %690, %cst_386 {dimension_numbers = #tpu.dot_dimension_numbers<[1], [0], [0], [1], [0, 0, 1, 1], [], []>} : vector<2x16xf32>, vector<16x384xf32>, vector<2x384xf32> -> vector<2x384xf32>
    %c0_387 = arith.constant 0 : index
    %c0_388 = arith.constant 0 : index
    %c0_389 = arith.constant 0 : index
    %693 = vector.load %arg16[%c0_387, %c0_388, %c0_389] : memref<1x2x384xf32, #tpu.memory_space<vmem>>, vector<1x2x384xf32>
    %694 = vector.shape_cast %693 : vector<1x2x384xf32> to vector<2x384xf32>
    %695 = vector.shape_cast %692 : vector<2x384xf32> to vector<1x2x384xf32>
    tpu.vector_store %arg16[%c0_387, %c0_388, %c0_389], %695 {strides = array<i32>} : memref<1x2x384xf32, #tpu.memory_space<vmem>>, vector<1x2x384xf32>,
    return
  }
  func.func @transform_0(%arg0: i32) -> (i32, i32, i32) {
    %c0_i32 = arith.constant 0 : i32
    %c0_i32_0 = arith.constant 0 : i32
    %c0_i32_1 = arith.constant 0 : i32
    return %arg0, %c0_i32, %c0_i32_0 : i32, i32, i32
  }
  func.func @transform_1(%arg0: i32) -> (i32, i32, i32) {
    %c0_i32 = arith.constant 0 : i32
    %c0_i32_0 = arith.constant 0 : i32
    %c0_i32_1 = arith.constant 0 : i32
    return %arg0, %c0_i32, %c0_i32_0 : i32, i32, i32
  }
  func.func @transform_2(%arg0: i32) -> (i32, i32, i32) {
    %c0_i32 = arith.constant 0 : i32
    %c0_i32_0 = arith.constant 0 : i32
    %c0_i32_1 = arith.constant 0 : i32
    return %arg0, %c0_i32, %c0_i32_0 : i32, i32, i32
  }
  func.func @transform_3(%arg0: i32) -> (i32, i32) {
    %c0_i32 = arith.constant 0 : i32
    %c0_i32_0 = arith.constant 0 : i32
    %c0_i32_1 = arith.constant 0 : i32
    return %c0_i32, %c0_i32_0 : i32, i32
  }
  func.func @transform_4(%arg0: i32) -> (i32, i32) {
    %c0_i32 = arith.constant 0 : i32
    %c0_i32_0 = arith.constant 0 : i32
    %c0_i32_1 = arith.constant 0 : i32
    return %c0_i32, %c0_i32_0 : i32, i32
  }
  func.func @transform_5(%arg0: i32) -> (i32, i32) {
    %c0_i32 = arith.constant 0 : i32
    %c0_i32_0 = arith.constant 0 : i32
    %c0_i32_1 = arith.constant 0 : i32
    return %c0_i32, %c0_i32_0 : i32, i32
  }
  func.func @transform_6(%arg0: i32) -> (i32, i32, i32) {
    %c0_i32 = arith.constant 0 : i32
    %c0_i32_0 = arith.constant 0 : i32
    %c0_i32_1 = arith.constant 0 : i32
    %c0_i32_2 = arith.constant 0 : i32
    return %c0_i32, %c0_i32_0, %c0_i32_1 : i32, i32, i32
  }
  func.func @transform_7(%arg0: i32) -> (i32, i32, i32) {
    %c0_i32 = arith.constant 0 : i32
    %c0_i32_0 = arith.constant 0 : i32
    %c0_i32_1 = arith.constant 0 : i32
    %c0_i32_2 = arith.constant 0 : i32
    return %c0_i32, %c0_i32_0, %c0_i32_1 : i32, i32, i32
  }
  func.func @transform_8(%arg0: i32) -> (i32, i32, i32) {
    %c0_i32 = arith.constant 0 : i32
    %c0_i32_0 = arith.constant 0 : i32
    %c0_i32_1 = arith.constant 0 : i32
    %c0_i32_2 = arith.constant 0 : i32
    return %c0_i32, %c0_i32_0, %c0_i32_1 : i32, i32, i32
  }
  func.func @transform_9(%arg0: i32) -> (i32, i32, i32) {
    %c0_i32 = arith.constant 0 : i32
    %c0_i32_0 = arith.constant 0 : i32
    %c0_i32_1 = arith.constant 0 : i32
    %c0_i32_2 = arith.constant 0 : i32
    return %c0_i32, %c0_i32_0, %c0_i32_1 : i32, i32, i32
  }
  func.func @transform_10(%arg0: i32) -> (i32, i32) {
    %c0_i32 = arith.constant 0 : i32
    %c0_i32_0 = arith.constant 0 : i32
    %c0_i32_1 = arith.constant 0 : i32
    return %c0_i32, %c0_i32_0 : i32, i32
  }
  func.func @transform_11(%arg0: i32) -> (i32, i32) {
    %c0_i32 = arith.constant 0 : i32
    %c0_i32_0 = arith.constant 0 : i32
    %c0_i32_1 = arith.constant 0 : i32
    return %c0_i32, %c0_i32_0 : i32, i32
  }
  func.func @transform_12(%arg0: i32) -> (i32, i32) {
    %c0_i32 = arith.constant 0 : i32
    %c0_i32_0 = arith.constant 0 : i32
    %c0_i32_1 = arith.constant 0 : i32
    return %c0_i32, %c0_i32_0 : i32, i32
  }
  func.func @transform_13(%arg0: i32) -> (i32, i32) {
    %c0_i32 = arith.constant 0 : i32
    %c0_i32_0 = arith.constant 0 : i32
    %c0_i32_1 = arith.constant 0 : i32
    return %c0_i32, %c0_i32_0 : i32, i32
  }
  func.func @transform_14(%arg0: i32) -> (i32, i32) {
    %c0_i32 = arith.constant 0 : i32
    %c0_i32_0 = arith.constant 0 : i32
    %c0_i32_1 = arith.constant 0 : i32
    return %c0_i32, %c0_i32_0 : i32, i32
  }
  func.func @transform_15(%arg0: i32) -> (i32, i32, i32) {
    %c0_i32 = arith.constant 0 : i32
    %c0_i32_0 = arith.constant 0 : i32
    %c0_i32_1 = arith.constant 0 : i32
    return %arg0, %c0_i32, %c0_i32_0 : i32, i32, i32
  }
}

</mosaic_0001>

<llo_original>
// kernel: tile.23
$region0: #{tile.23}
  #allocation0 [shape = 's32[1]{0}', space=sflag, size = 0x4, scoped, tag = 'scoped memory for tile.23']
  %s0 = inlined_call_operand.vmem [shape: f32[16], index: 0, kind: input, shape index: {}]
  %s1 = inlined_call_operand.vmem [shape: f32[8,16], index: 1, kind: output, shape index: {}]
  // Predicated region
  $region2: #{tile.23} parent=0 // pred_check
    _
  $region3: #{tile.23} parent=0 // pred_check_branch
    %3 = sbr.rel (0) target = $region5
  $region4: #{tile.23} parent=0 // pred_region
    _
  $region5: #{tile.23} parent=0 // pred_fallthru
    _
  %v4 = vld [vmem:[%s0] ss:$0 sm:$0xff]
  %5 = vst [vmem:[%s1] sm:$0xff] %v4

// kernel: forward.1
$region0: #{forward.1}
  #allocation0 [shape = 'u32[]', space=smem, size = 0x4, offset = 0x4, fixed_abs, tag = 'smem constant byte address 0x4 - core index']
  #allocation1 [shape = 'u32[144,128]{1,0:T(1,128)}', space=vmem, size = 0x12000, scoped, tag = 'internal scratch']
  #allocation2 [shape = 'f32[16,96]{1,0:T(8,128)}', space=vmem, size = 0x2000, scoped, tag = 'scratch operand']
  #allocation3 [shape = 'f32[16,32]{1,0:T(8,128)}', space=vmem, size = 0x2000, scoped, tag = 'scratch operand']
  #allocation4 [shape = 'f32[16,32]{1,0:T(8,128)}', space=vmem, size = 0x2000, scoped, tag = 'scratch operand']
  %s0 = inlined_call_operand.vmem [shape: s32[1,16,1], index: 0, kind: input, shape index: {}]
  %s1 = inlined_call_operand.vmem [shape: s32[1,2,8], index: 1, kind: input, shape index: {}]
  %s2 = inlined_call_operand.vmem [shape: f32[1,16,128], index: 2, kind: input, shape index: {}]
  %s3 = inlined_call_operand.vmem [shape: f32[32,32], index: 3, kind: input, shape index: {}]
  %s4 = inlined_call_operand.vmem [shape: f32[128,128], index: 4, kind: input, shape index: {}]
  %s5 = inlined_call_operand.vmem [shape: f32[128,32], index: 5, kind: input, shape index: {}]
  %s6 = inlined_call_operand.vmem [shape: f32[2,32,96], index: 6, kind: input, shape index: {}]
  %s7 = inlined_call_operand.vmem [shape: f32[2,32,32], index: 7, kind: input, shape index: {}]
  %s8 = inlined_call_operand.vmem [shape: f32[2,32,64], index: 8, kind: input, shape index: {}]
  %s9 = inlined_call_operand.vmem [shape: f32[2,64,32], index: 9, kind: input, shape index: {}]
  %s10 = inlined_call_operand.vmem [shape: f32[32,32], index: 10, kind: input, shape index: {}]
  %s11 = inlined_call_operand.vmem [shape: f32[32,384], index: 11, kind: input, shape index: {}]
  %s12 = inlined_call_operand.vmem [shape: f32[1,384], index: 12, kind: input, shape index: {}]
  %s13 = inlined_call_operand.vmem [shape: f32[2,16], index: 13, kind: input, shape index: {}]
  %s14 = inlined_call_operand.vmem [shape: f32[32,128], index: 14, kind: input, shape index: {}]
  %s15 = inlined_call_operand.hbm [shape: f32[1,2,384], index: 15, kind: output, shape index: {}]
  %s16 = sld [smem:[#allocation0]]
  $region70: #{forward.1} parent=0
    _
  %s18 = ssub.s32 1, %s16
  %s19 = scalar_select 0, %s18, %s16
  $region1: #{forward.1} parent=0
    #allocation5 [shape = 'u8[3072]{0}', space=vmem, size = 0xc00, scoped, tag = 'output window, operand 0, single buffered']
    #allocation6 [shape = 's32[1]{0}', space=sflag, size = 0x4, scoped, tag = 'scoped memory for forward.1']
    %20 = vsyncpa [#allocation6], 0
    // Predicated region
    $region2: #{forward.1} parent=1 // pred_check
      _
    $region3: #{forward.1} parent=1 // pred_check_branch
      %22 = sbr.rel (0) target = $region5
    $region4: #{forward.1} parent=1 // pred_region
      _
    $region5: #{forward.1} parent=1 // pred_fallthru
      _
    // Predicated region
    $region6: #{forward.1} parent=1 // pred_check
      _
    $region7: #{forward.1} parent=1 // pred_check_branch
      %24 = sbr.rel (0) target = $region9
    $region8: #{forward.1} parent=1 // pred_region
      _
    $region9: #{forward.1} parent=1 // pred_fallthru
      _
    // Predicated region
    $region10: #{forward.1} parent=1 // pred_check
      _
    $region11: #{forward.1} parent=1 // pred_check_branch
      %26 = sbr.rel (0) target = $region13
    $region12: #{forward.1} parent=1 // pred_region
      _
    $region13: #{forward.1} parent=1 // pred_fallthru
      _
    // Predicated region
    $region14: #{forward.1} parent=1 // pred_check
      _
    $region15: #{forward.1} parent=1 // pred_check_branch
      %28 = sbr.rel (0) target = $region17
    $region16: #{forward.1} parent=1 // pred_region
      _
    $region17: #{forward.1} parent=1 // pred_fallthru
      _
    // Predicated region
    $region18: #{forward.1} parent=1 // pred_check
      _
    $region19: #{forward.1} parent=1 // pred_check_branch
      %30 = sbr.rel (0) target = $region21
    $region20: #{forward.1} parent=1 // pred_region
      _
    $region21: #{forward.1} parent=1 // pred_fallthru
      _
    // Predicated region
    $region22: #{forward.1} parent=1 // pred_check
      _
    $region23: #{forward.1} parent=1 // pred_check_branch
      %32 = sbr.rel (0) target = $region25
    $region24: #{forward.1} parent=1 // pred_region
      _
    $region25: #{forward.1} parent=1 // pred_fallthru
      _
    // Predicated region
    $region26: #{forward.1} parent=1 // pred_check
      _
    $region27: #{forward.1} parent=1 // pred_check_branch
      %34 = sbr.rel (0) target = $region29
    $region28: #{forward.1} parent=1 // pred_region
      _
    $region29: #{forward.1} parent=1 // pred_fallthru
      _
    // Predicated region
    $region30: #{forward.1} parent=1 // pred_check
      _
    $region31: #{forward.1} parent=1 // pred_check_branch
      %36 = sbr.rel (0) target = $region33
    $region32: #{forward.1} parent=1 // pred_region
      _
    $region33: #{forward.1} parent=1 // pred_fallthru
      _
    // Predicated region
    $region34: #{forward.1} parent=1 // pred_check
      _
    $region35: #{forward.1} parent=1 // pred_check_branch
      %38 = sbr.rel (0) target = $region37
    $region36: #{forward.1} parent=1 // pred_region
      _
    $region37: #{forward.1} parent=1 // pred_fallthru
      _
    // Predicated region
    $region38: #{forward.1} parent=1 // pred_check
      _
    $region39: #{forward.1} parent=1 // pred_check_branch
      %40 = sbr.rel (0) target = $region41
    $region40: #{forward.1} parent=1 // pred_region
      _
    $region41: #{forward.1} parent=1 // pred_fallthru
      _
    // Predicated region
    $region42: #{forward.1} parent=1 // pred_check
      _
    $region43: #{forward.1} parent=1 // pred_check_branch
      %42 = sbr.rel (0) target = $region45
    $region44: #{forward.1} parent=1 // pred_region
      _
    $region45: #{forward.1} parent=1 // pred_fallthru
      _
    // Predicated region
    $region46: #{forward.1} parent=1 // pred_check
      _
    $region47: #{forward.1} parent=1 // pred_check_branch
      %44 = sbr.rel (0) target = $region49
    $region48: #{forward.1} parent=1 // pred_region
      _
    $region49: #{forward.1} parent=1 // pred_fallthru
      _
    // Predicated region
    $region50: #{forward.1} parent=1 // pred_check
      _
    $region51: #{forward.1} parent=1 // pred_check_branch
      %46 = sbr.rel (0) target = $region53
    $region52: #{forward.1} parent=1 // pred_region
      _
    $region53: #{forward.1} parent=1 // pred_fallthru
      _
    // Predicated region
    $region54: #{forward.1} parent=1 // pred_check
      _
    $region55: #{forward.1} parent=1 // pred_check_branch
      %48 = sbr.rel (0) target = $region57
    $region56: #{forward.1} parent=1 // pred_region
      _
    $region57: #{forward.1} parent=1 // pred_fallthru
      _
    // Predicated region
    $region58: #{forward.1} parent=1 // pred_check
      _
    $region59: #{forward.1} parent=1 // pred_check_branch
      %50 = sbr.rel (0) target = $region61
    $region60: #{forward.1} parent=1 // pred_region
      _
    $region61: #{forward.1} parent=1 // pred_fallthru
      _
    %v51 = vld [vmem:[%s0] sm:$0xff]
    %v52 = vld [vmem:[%s0 + $0x8] sm:$0xff]
    %v53 = vld [vmem:[%s1] sm:$0x3]
    %v54 = vld [vmem:[%s2] sm:$0xff]
    %v55 = vld [vmem:[%s2 + $0x8] sm:$0xff]
    %v56 = vlaneseq
    %v57 = vand.u32 %v56, 127
    %58 = vset.pattern.permute.xlu0 0
    %59 = vperm.xlu0 %58, %v51
    %v60 = vpop.permute.xlu0 %59
    %61 = vset.pattern.permute.xlu0 0
    %62 = vperm.xlu0 %61, %v52
    %v63 = vpop.permute.xlu0 %62
    %vm64 = vcmp.eq.s32.totalorder %v60, %v57
    %vm65 = vcmp.eq.s32.totalorder %v63, %v57
    %v66 = vsel %vm64, 1, 0
    %v67 = vsel %vm65, 1, 0
    %v68 = vcvt.s32.f32 %v66
    %v69 = vcvt.s32.f32 %v67
    %v70 = vld [vmem:[%s3] sm:$0xff]
    %v71 = vld [vmem:[%s3 + $0x8] sm:$0xff]
    %v72 = vld [vmem:[%s3 + $0x10] sm:$0xff]
    %v73 = vld [vmem:[%s3 + $0x18] sm:$0xff]
    %vm74 = vcmask 261120
    %v76 = vsel %vm74, %v68, 0
    %v79 = vsel %vm74, %v69, 0
    %81 = vmatprep.subr.mxu0 0.0
    %82 = vmatpush1.msra.mxu0 %v70
    %83 = vmatprep.subr.mxu0 0.0
    %84 = vmatpush1.msra.mxu0 %v71
    %85 = vmatprep.subr.mxu0 0.0
    %86 = vmatpush1.msra.mxu0 %v72
    %87 = vmatprep.subr.mxu0 0.0
    %88 = vmatpush1.msra.mxu0 %v73
    %89 = vmatprep.subr.mxu0 0.0
    %90 = vmatpush1.msra.mxu0 0.0
    %91 = vmatprep.subr.mxu0 0.0
    %92 = vmatpush1.msra.mxu0 0.0
    %93 = vmatprep.subr.mxu0 0.0
    %94 = vmatpush1.msra.mxu0 0.0
    %95 = vmatprep.subr.mxu0 0.0
    %96 = vmatpush1.msra.mxu0 0.0
    %97 = vmatprep.subr.mxu0 0.0
    %98 = vmatpush1.msra.mxu0 0.0
    %99 = vmatprep.subr.mxu0 0.0
    %100 = vmatpush1.msra.mxu0 0.0
    %101 = vmatprep.subr.mxu0 0.0
    %102 = vmatpush1.msra.mxu0 0.0
    %103 = vmatprep.subr.mxu0 0.0
    %104 = vmatpush1.msra.mxu0 0.0
    %105 = vmatprep.subr.mxu0 0.0
    %106 = vmatpush1.msra.mxu0 0.0
    %107 = vmatprep.subr.mxu0 0.0
    %108 = vmatpush1.msra.mxu0 0.0
    %109 = vmatprep.subr.mxu0 0.0
    %110 = vmatpush1.msra.mxu0 0.0
    %111 = vmatprep.subr.mxu0 0.0
    %112 = vmatpush1.msra.mxu0 0.0
    %113 = vmatprep.subr.mxu0 0.0
    %114 = vmatpush1.msra.mxu0 0.0
    %115 = vmatprep.subr.mxu0 0.0
    %116 = vmatpush1.msra.mxu0 0.0
    %117 = vmatprep.subr.mxu0 0.0
    %118 = vmatpush1.msra.mxu0 0.0
    %119 = vmatprep.subr.mxu0 0.0
    %120 = vmatpush1.msra.mxu0 0.0
    %121 = vmatprep.subr.mxu0 0.0
    %122 = vmatpush1.msra.mxu0 0.0
    %123 = vmatprep.subr.mxu0 0.0
    %124 = vmatpush1.msra.mxu0 0.0
    %125 = vmatprep.subr.mxu0 0.0
    %126 = vmatpush1.msra.mxu0 0.0
    %127 = vmatprep.subr.mxu0 0.0
    %128 = vmatpush1.msra.mxu0 0.0
    %129 = vmatprep.subr.mxu0 0.0
    %130 = vmatpush1.msra.mxu0 0.0
    %131 = vmatprep.subr.mxu0 0.0
    %132 = vmatpush1.msra.mxu0 0.0
    %133 = vmatprep.subr.mxu0 0.0
    %134 = vmatpush1.msra.mxu0 0.0
    %135 = vmatprep.subr.mxu0 0.0
    %136 = vmatpush1.msra.mxu0 0.0
    %137 = vmatprep.subr.mxu0 0.0
    %138 = vmatpush1.msra.mxu0 0.0
    %139 = vmatprep.subr.mxu0 0.0
    %140 = vmatpush1.msra.mxu0 0.0
    %141 = vmatprep.subr.mxu0 0.0
    %142 = vmatpush1.msra.mxu0 0.0
    %143 = vmatprep.subr.mxu0 0.0
    %144 = vmatpush1.msra.mxu0 0.0
    %145 = vmatprep.mubr.f32.mxu0 0.0
    %146 = vmatmul.mubr.f32.gmra.mrb[0].mxu0 %v76
    %v147 = vpop.f32.mrb[0].mxu0
    %v148 = vadd.f32 0.0, %v147
    %v149 = vpop.f32.mrb[0].mxu0
    %150 = vmatprep.mubr.f32.mxu0 0.0
    %151 = vmatmul.mubr.f32.gmra.mrb[0].mxu0 %v79
    %v152 = vpop.f32.mrb[0].mxu0
    %v153 = vadd.f32 0.0, %v152
    %v154 = vpop.f32.mrb[0].mxu0
    %155 = vdwg.mxu0
    %vm156 = vcmp.eq.s32.totalorder %v51, 0
    %vm157 = vcmp.eq.s32.totalorder %v52, 0
    %v158 = vsel %vm156, 0.0, 1.0
    %v159 = vsel %vm157, 0.0, 1.0
    %vm160 = vcmp.eq.s32.totalorder %v53, 0
    %v161 = vsel %vm160, -1e+09, 0.0
    %v162 = vld [vmem:[%s14] sm:$0x1]
    %v163 = vlaneseq
    %v164 = vshrl.u32 %v163, 7
    %v165 = vsub.s32 0, %v164
    %v166 = vrot.slane %v162, %v165
    %v167 = vsub.f32 %v54, %v166
    %v168 = vsub.f32 %v55, %v166
    %v169 = vld [vmem:[%s14 + $0x1] sm:$0x1]
    %v170 = vlaneseq
    %v171 = vshrl.u32 %v170, 7
    %v172 = vsub.s32 0, %v171
    %v173 = vrot.slane %v169, %v172
    %v174 = vmul.f32 %v167, %v173
    %v175 = vmul.f32 %v168, %v173
    %v176 = vmul.f32 %v174, -0.5
    %v177 = vmul.f32 %v175, -0.5
    %v178 = vmul.f32 %v176, %v174
    %v179 = vmul.f32 %v177, %v175
    %v180 = vmul.f32 %v178, 1.442695
    %v181 = vpow.pop %v180
    %v182 = vmul.f32 %v179, 1.442695
    %v183 = vpow.pop %v182
    %v184 = vld [vmem:[%s14 + $0x2] sm:$0x1]
    %v185 = vlaneseq
    %v186 = vshrl.u32 %v185, 7
    %v187 = vsub.s32 0, %v186
    %v188 = vrot.slane %v184, %v187
    %v189 = vmul.f32 %v181, %v188
    %v190 = vmul.f32 %v183, %v188
    %v191 = vld [vmem:[%s4] sm:$0xff]
    %v192 = vld [vmem:[%s4 + $0x8] sm:$0xff]
    %v193 = vld [vmem:[%s4 + $0x10] sm:$0xff]
    %v194 = vld [vmem:[%s4 + $0x18] sm:$0xff]
    %v195 = vld [vmem:[%s4 + $0x20] sm:$0xff]
    %v196 = vld [vmem:[%s4 + $0x28] sm:$0xff]
    %v197 = vld [vmem:[%s4 + $0x30] sm:$0xff]
    %v198 = vld [vmem:[%s4 + $0x38] sm:$0xff]
    %v199 = vld [vmem:[%s4 + $0x40] sm:$0xff]
    %v200 = vld [vmem:[%s4 + $0x48] sm:$0xff]
    %v201 = vld [vmem:[%s4 + $0x50] sm:$0xff]
    %v202 = vld [vmem:[%s4 + $0x58] sm:$0xff]
    %v203 = vld [vmem:[%s4 + $0x60] sm:$0xff]
    %v204 = vld [vmem:[%s4 + $0x68] sm:$0xff]
    %v205 = vld [vmem:[%s4 + $0x70] sm:$0xff]
    %v206 = vld [vmem:[%s4 + $0x78] sm:$0xff]
    %v207 = vld [vmem:[%s14 + $0x3] sm:$0x1]
    %v208 = vlaneseq
    %v209 = vshrl.u32 %v208, 7
    %v210 = vsub.s32 0, %v209
    %v211 = vrot.slane %v207, %v210
    %212 = vmatprep.subr.mxu0 0.0
    %213 = vmatpush1.msra.mxu0 %v191
    %214 = vmatprep.subr.mxu0 0.0
    %215 = vmatpush1.msra.mxu0 %v192
    %216 = vmatprep.subr.mxu0 0.0
    %217 = vmatpush1.msra.mxu0 %v193
    %218 = vmatprep.subr.mxu0 0.0
    %219 = vmatpush1.msra.mxu0 %v194
    %220 = vmatprep.subr.mxu0 0.0
    %221 = vmatpush1.msra.mxu0 %v195
    %222 = vmatprep.subr.mxu0 0.0
    %223 = vmatpush1.msra.mxu0 %v196
    %224 = vmatprep.subr.mxu0 0.0
    %225 = vmatpush1.msra.mxu0 %v197
    %226 = vmatprep.subr.mxu0 0.0
    %227 = vmatpush1.msra.mxu0 %v198
    %228 = vmatprep.subr.mxu0 0.0
    %229 = vmatpush1.msra.mxu0 %v199
    %230 = vmatprep.subr.mxu0 0.0
    %231 = vmatpush1.msra.mxu0 %v200
    %232 = vmatprep.subr.mxu0 0.0
    %233 = vmatpush1.msra.mxu0 %v201
    %234 = vmatprep.subr.mxu0 0.0
    %235 = vmatpush1.msra.mxu0 %v202
    %236 = vmatprep.subr.mxu0 0.0
    %237 = vmatpush1.msra.mxu0 %v203
    %238 = vmatprep.subr.mxu0 0.0
    %239 = vmatpush1.msra.mxu0 %v204
    %240 = vmatprep.subr.mxu0 0.0
    %241 = vmatpush1.msra.mxu0 %v205
    %242 = vmatprep.subr.mxu0 0.0
    %243 = vmatpush1.msra.mxu0 %v206
    %244 = vmatprep.subr.mxu0 0.0
    %245 = vmatpush1.msra.mxu0 0.0
    %246 = vmatprep.subr.mxu0 0.0
    %247 = vmatpush1.msra.mxu0 0.0
    %248 = vmatprep.subr.mxu0 0.0
    %249 = vmatpush1.msra.mxu0 0.0
    %250 = vmatprep.subr.mxu0 0.0
    %251 = vmatpush1.msra.mxu0 0.0
    %252 = vmatprep.subr.mxu0 0.0
    %253 = vmatpush1.msra.mxu0 0.0
    %254 = vmatprep.subr.mxu0 0.0
    %255 = vmatpush1.msra.mxu0 0.0
    %256 = vmatprep.subr.mxu0 0.0
    %257 = vmatpush1.msra.mxu0 0.0
    %258 = vmatprep.subr.mxu0 0.0
    %259 = vmatpush1.msra.mxu0 0.0
    %260 = vmatprep.subr.mxu0 0.0
    %261 = vmatpush1.msra.mxu0 0.0
    %262 = vmatprep.subr.mxu0 0.0
    %263 = vmatpush1.msra.mxu0 0.0
    %264 = vmatprep.subr.mxu0 0.0
    %265 = vmatpush1.msra.mxu0 0.0
    %266 = vmatprep.subr.mxu0 0.0
    %267 = vmatpush1.msra.mxu0 0.0
    %268 = vmatprep.subr.mxu0 0.0
    %269 = vmatpush1.msra.mxu0 0.0
    %270 = vmatprep.subr.mxu0 0.0
    %271 = vmatpush1.msra.mxu0 0.0
    %272 = vmatprep.subr.mxu0 0.0
    %273 = vmatpush1.msra.mxu0 0.0
    %274 = vmatprep.subr.mxu0 0.0
    %275 = vmatpush1.msra.mxu0 0.0
    %276 = vmatprep.mubr.f32.mxu0 0.0
    %277 = vmatmul.mubr.f32.gmra.mrb[0].mxu0 %v189
    %v278 = vpop.f32.mrb[0].mxu0
    %v279 = vadd.f32 %v211, %v278
    %v280 = vpop.f32.mrb[0].mxu0
    %281 = vmatprep.mubr.f32.mxu0 0.0
    %282 = vmatmul.mubr.f32.gmra.mrb[0].mxu0 %v190
    %v283 = vpop.f32.mrb[0].mxu0
    %v284 = vadd.f32 %v211, %v283
    %v285 = vpop.f32.mrb[0].mxu0
    %286 = vdwg.mxu0
    %v287 = vmul.f32 %v279, 0.5
    %v288 = vmul.f32 %v284, 0.5
    %v289 = vmul.f32 %v279, 0.044715
    %v290 = vmul.f32 %v284, 0.044715
    %v291 = vmul.f32 %v289, %v279
    %v292 = vmul.f32 %v290, %v284
    %v293 = vmul.f32 %v291, %v279
    %v294 = vmul.f32 %v292, %v284
    %v295 = vadd.f32 %v279, %v293
    %v296 = vadd.f32 %v284, %v294
    %v297 = vmul.f32 %v295, 0.7978846
    %v298 = vmul.f32 %v296, 0.7978846
    %v299 = vtanh.pop %v297
    %v300 = vtanh.pop %v298
    %v301 = vadd.f32 %v299, 1.0
    %v302 = vadd.f32 %v300, 1.0
    %v303 = vmul.f32 %v287, %v301
    %v304 = vmul.f32 %v288, %v302
    %v305 = vld [vmem:[%s5] sm:$0xff]
    %v306 = vld [vmem:[%s5 + $0x8] sm:$0xff]
    %v307 = vld [vmem:[%s5 + $0x10] sm:$0xff]
    %v308 = vld [vmem:[%s5 + $0x18] sm:$0xff]
    %v309 = vld [vmem:[%s5 + $0x20] sm:$0xff]
    %v310 = vld [vmem:[%s5 + $0x28] sm:$0xff]
    %v311 = vld [vmem:[%s5 + $0x30] sm:$0xff]
    %v312 = vld [vmem:[%s5 + $0x38] sm:$0xff]
    %v313 = vld [vmem:[%s5 + $0x40] sm:$0xff]
    %v314 = vld [vmem:[%s5 + $0x48] sm:$0xff]
    %v315 = vld [vmem:[%s5 + $0x50] sm:$0xff]
    %v316 = vld [vmem:[%s5 + $0x58] sm:$0xff]
    %v317 = vld [vmem:[%s5 + $0x60] sm:$0xff]
    %v318 = vld [vmem:[%s5 + $0x68] sm:$0xff]
    %v319 = vld [vmem:[%s5 + $0x70] sm:$0xff]
    %v320 = vld [vmem:[%s5 + $0x78] sm:$0xff]
    %v321 = vld [vmem:[%s14 + $0x4] sm:$0x1]
    %v322 = vlaneseq
    %v323 = vshrl.u32 %v322, 7
    %v324 = vsub.s32 0, %v323
    %v325 = vrot.slane %v321, %v324
    %326 = vmatprep.subr.mxu0 0.0
    %327 = vmatpush1.msra.mxu0 %v305
    %328 = vmatprep.subr.mxu0 0.0
    %329 = vmatpush1.msra.mxu0 %v306
    %330 = vmatprep.subr.mxu0 0.0
    %331 = vmatpush1.msra.mxu0 %v307
    %332 = vmatprep.subr.mxu0 0.0
    %333 = vmatpush1.msra.mxu0 %v308
    %334 = vmatprep.subr.mxu0 0.0
    %335 = vmatpush1.msra.mxu0 %v309
    %336 = vmatprep.subr.mxu0 0.0
    %337 = vmatpush1.msra.mxu0 %v310
    %338 = vmatprep.subr.mxu0 0.0
    %339 = vmatpush1.msra.mxu0 %v311
    %340 = vmatprep.subr.mxu0 0.0
    %341 = vmatpush1.msra.mxu0 %v312
    %342 = vmatprep.subr.mxu0 0.0
    %343 = vmatpush1.msra.mxu0 %v313
    %344 = vmatprep.subr.mxu0 0.0
    %345 = vmatpush1.msra.mxu0 %v314
    %346 = vmatprep.subr.mxu0 0.0
    %347 = vmatpush1.msra.mxu0 %v315
    %348 = vmatprep.subr.mxu0 0.0
    %349 = vmatpush1.msra.mxu0 %v316
    %350 = vmatprep.subr.mxu0 0.0
    %351 = vmatpush1.msra.mxu0 %v317
    %352 = vmatprep.subr.mxu0 0.0
    %353 = vmatpush1.msra.mxu0 %v318
    %354 = vmatprep.subr.mxu0 0.0
    %355 = vmatpush1.msra.mxu0 %v319
    %356 = vmatprep.subr.mxu0 0.0
    %357 = vmatpush1.msra.mxu0 %v320
    %358 = vmatprep.subr.mxu0 0.0
    %359 = vmatpush1.msra.mxu0 0.0
    %360 = vmatprep.subr.mxu0 0.0
    %361 = vmatpush1.msra.mxu0 0.0
    %362 = vmatprep.subr.mxu0 0.0
    %363 = vmatpush1.msra.mxu0 0.0
    %364 = vmatprep.subr.mxu0 0.0
    %365 = vmatpush1.msra.mxu0 0.0
    %366 = vmatprep.subr.mxu0 0.0
    %367 = vmatpush1.msra.mxu0 0.0
    %368 = vmatprep.subr.mxu0 0.0
    %369 = vmatpush1.msra.mxu0 0.0
    %370 = vmatprep.subr.mxu0 0.0
    %371 = vmatpush1.msra.mxu0 0.0
    %372 = vmatprep.subr.mxu0 0.0
    %373 = vmatpush1.msra.mxu0 0.0
    %374 = vmatprep.subr.mxu0 0.0
    %375 = vmatpush1.msra.mxu0 0.0
    %376 = vmatprep.subr.mxu0 0.0
    %377 = vmatpush1.msra.mxu0 0.0
    %378 = vmatprep.subr.mxu0 0.0
    %379 = vmatpush1.msra.mxu0 0.0
    %380 = vmatprep.subr.mxu0 0.0
    %381 = vmatpush1.msra.mxu0 0.0
    %382 = vmatprep.subr.mxu0 0.0
    %383 = vmatpush1.msra.mxu0 0.0
    %384 = vmatprep.subr.mxu0 0.0
    %385 = vmatpush1.msra.mxu0 0.0
    %386 = vmatprep.subr.mxu0 0.0
    %387 = vmatpush1.msra.mxu0 0.0
    %388 = vmatprep.subr.mxu0 0.0
    %389 = vmatpush1.msra.mxu0 0.0
    %390 = vmatprep.mubr.f32.mxu0 0.0
    %391 = vmatmul.mubr.f32.gmra.mrb[0].mxu0 %v303
    %v392 = vpop.f32.mrb[0].mxu0
    %v393 = vadd.f32 %v325, %v392
    %v394 = vpop.f32.mrb[0].mxu0
    %395 = vmatprep.mubr.f32.mxu0 0.0
    %396 = vmatmul.mubr.f32.gmra.mrb[0].mxu0 %v304
    %v397 = vpop.f32.mrb[0].mxu0
    %v398 = vadd.f32 %v325, %v397
    %v399 = vpop.f32.mrb[0].mxu0
    %400 = vdwg.mxu0
    %401 = vst.msk [vmem:[#allocation4] sm:$0xff] %vm74, %v393
    %402 = vst.msk [vmem:[#allocation4 + $0x8] sm:$0xff] %vm74, %v398
    %v403 = vld [vmem:[%s14 + $0x5] sm:$0x1]
    %v404 = vld [vmem:[%s14 + $0x6] sm:$0x1]
    %v405 = vsel %vm74, %v148, 0.0
    %406 = vadd.xlane.f32.xlu0 %v405
    %v407 = vpop.xlane.xlu0 %406
    %v408 = vsel %vm74, %v153, 0.0
    %409 = vadd.xlane.f32.xlu0 %v408
    %v410 = vpop.xlane.xlu0 %409
    %v411 = vrcp.pop 32.0
    %v412 = vmul.f32 %v407, %v411
    %v413 = vmul.f32 %v410, %v411
    %v414 = vsub.f32 %v148, %v412
    %v415 = vsub.f32 %v153, %v413
    %v416 = vmul.f32 %v414, %v414
    %v417 = vmul.f32 %v415, %v415
    %v418 = vsel %vm74, %v416, 0.0
    %419 = vadd.xlane.f32.xlu0 %v418
    %v420 = vpop.xlane.xlu0 %419
    %v421 = vsel %vm74, %v417, 0.0
    %422 = vadd.xlane.f32.xlu0 %v421
    %v423 = vpop.xlane.xlu0 %422
    %v424 = vmul.f32 %v420, %v411
    %v425 = vmul.f32 %v423, %v411
    %v426 = vadd.f32 %v424, 1e-05
    %v427 = vadd.f32 %v425, 1e-05
    %v428 = vrsqrt.pop %v426
    %v429 = vrsqrt.pop %v427
    %v430 = vmul.f32 %v414, %v428
    %v431 = vmul.f32 %v415, %v429
    %v432 = vlaneseq
    %v433 = vshrl.u32 %v432, 7
    %v434 = vsub.s32 0, %v433
    %v435 = vrot.slane %v403, %v434
    %v436 = vmul.f32 %v430, %v435
    %v437 = vmul.f32 %v431, %v435
    %v438 = vlaneseq
    %v439 = vshrl.u32 %v438, 7
    %v440 = vsub.s32 0, %v439
    %v441 = vrot.slane %v404, %v440
    %v442 = vadd.f32 %v436, %v441
    %v443 = vadd.f32 %v437, %v441
    %445 = vset.pattern.permute.xlu0 0
    %446 = vperm.xlu0 %445, %v158
    %v447 = vpop.permute.xlu0 %446
    %450 = vset.pattern.permute.xlu0 0
    %451 = vperm.xlu0 %450, %v159
    %v452 = vpop.permute.xlu0 %451
    %v454 = vmul.f32 %v442, %v447
    %v455 = vmul.f32 %v443, %v452
    %v456 = vld [vmem:[%s14 + $0x7] sm:$0x1]
    %v457 = vld [vmem:[%s14 + $0x8] sm:$0x1]
    %v458 = vsel %vm74, %v454, 0.0
    %459 = vadd.xlane.f32.xlu0 %v458
    %v460 = vpop.xlane.xlu0 %459
    %v461 = vsel %vm74, %v455, 0.0
    %462 = vadd.xlane.f32.xlu0 %v461
    %v463 = vpop.xlane.xlu0 %462
    %v464 = vmul.f32 %v460, %v411
    %v465 = vmul.f32 %v463, %v411
    %v466 = vsub.f32 %v454, %v464
    %v467 = vsub.f32 %v455, %v465
    %v468 = vmul.f32 %v466, %v466
    %v469 = vmul.f32 %v467, %v467
    %v470 = vsel %vm74, %v468, 0.0
    %471 = vadd.xlane.f32.xlu0 %v470
    %v472 = vpop.xlane.xlu0 %471
    %v473 = vsel %vm74, %v469, 0.0
    %474 = vadd.xlane.f32.xlu0 %v473
    %v475 = vpop.xlane.xlu0 %474
    %v476 = vmul.f32 %v472, %v411
    %v477 = vmul.f32 %v475, %v411
    %v478 = vadd.f32 %v476, 1e-05
    %v479 = vadd.f32 %v477, 1e-05
    %v480 = vrsqrt.pop %v478
    %v481 = vrsqrt.pop %v479
    %v482 = vmul.f32 %v466, %v480
    %v483 = vmul.f32 %v467, %v481
    %v484 = vlaneseq
    %v485 = vshrl.u32 %v484, 7
    %v486 = vsub.s32 0, %v485
    %v487 = vrot.slane %v456, %v486
    %v488 = vmul.f32 %v482, %v487
    %v489 = vmul.f32 %v483, %v487
    %v490 = vlaneseq
    %v491 = vshrl.u32 %v490, 7
    %v492 = vsub.s32 0, %v491
    %v493 = vrot.slane %v457, %v492
    %v494 = vadd.f32 %v488, %v493
    %v495 = vadd.f32 %v489, %v493
    %v496 = vld [vmem:[%s6] sm:$0xff]
    %v497 = vld [vmem:[%s6 + $0x8] sm:$0xff]
    %v498 = vld [vmem:[%s6 + $0x10] sm:$0xff]
    %v499 = vld [vmem:[%s6 + $0x18] sm:$0xff]
    %v500 = vld [vmem:[%s14 + $0x9] sm:$0x1]
    %v501 = vlaneseq
    %v502 = vshrl.u32 %v501, 7
    %v503 = vsub.s32 0, %v502
    %v504 = vrot.slane %v500, %v503
    %v506 = vsel %vm74, %v494, 0
    %v509 = vsel %vm74, %v495, 0
    %511 = vmatprep.subr.mxu0 0.0
    %512 = vmatpush1.msra.mxu0 %v496
    %513 = vmatprep.subr.mxu0 0.0
    %514 = vmatpush1.msra.mxu0 %v497
    %515 = vmatprep.subr.mxu0 0.0
    %516 = vmatpush1.msra.mxu0 %v498
    %517 = vmatprep.subr.mxu0 0.0
    %518 = vmatpush1.msra.mxu0 %v499
    %519 = vmatprep.subr.mxu0 0.0
    %520 = vmatpush1.msra.mxu0 0.0
    %521 = vmatprep.subr.mxu0 0.0
    %522 = vmatpush1.msra.mxu0 0.0
    %523 = vmatprep.subr.mxu0 0.0
    %524 = vmatpush1.msra.mxu0 0.0
    %525 = vmatprep.subr.mxu0 0.0
    %526 = vmatpush1.msra.mxu0 0.0
    %527 = vmatprep.subr.mxu0 0.0
    %528 = vmatpush1.msra.mxu0 0.0
    %529 = vmatprep.subr.mxu0 0.0
    %530 = vmatpush1.msra.mxu0 0.0
    %531 = vmatprep.subr.mxu0 0.0
    %532 = vmatpush1.msra.mxu0 0.0
    %533 = vmatprep.subr.mxu0 0.0
    %534 = vmatpush1.msra.mxu0 0.0
    %535 = vmatprep.subr.mxu0 0.0
    %536 = vmatpush1.msra.mxu0 0.0
    %537 = vmatprep.subr.mxu0 0.0
    %538 = vmatpush1.msra.mxu0 0.0
    %539 = vmatprep.subr.mxu0 0.0
    %540 = vmatpush1.msra.mxu0 0.0
    %541 = vmatprep.subr.mxu0 0.0
    %542 = vmatpush1.msra.mxu0 0.0
    %543 = vmatprep.subr.mxu0 0.0
    %544 = vmatpush1.msra.mxu0 0.0
    %545 = vmatprep.subr.mxu0 0.0
    %546 = vmatpush1.msra.mxu0 0.0
    %547 = vmatprep.subr.mxu0 0.0
    %548 = vmatpush1.msra.mxu0 0.0
    %549 = vmatprep.subr.mxu0 0.0
    %550 = vmatpush1.msra.mxu0 0.0
    %551 = vmatprep.subr.mxu0 0.0
    %552 = vmatpush1.msra.mxu0 0.0
    %553 = vmatprep.subr.mxu0 0.0
    %554 = vmatpush1.msra.mxu0 0.0
    %555 = vmatprep.subr.mxu0 0.0
    %556 = vmatpush1.msra.mxu0 0.0
    %557 = vmatprep.subr.mxu0 0.0
    %558 = vmatpush1.msra.mxu0 0.0
    %559 = vmatprep.subr.mxu0 0.0
    %560 = vmatpush1.msra.mxu0 0.0
    %561 = vmatprep.subr.mxu0 0.0
    %562 = vmatpush1.msra.mxu0 0.0
    %563 = vmatprep.subr.mxu0 0.0
    %564 = vmatpush1.msra.mxu0 0.0
    %565 = vmatprep.subr.mxu0 0.0
    %566 = vmatpush1.msra.mxu0 0.0
    %567 = vmatprep.subr.mxu0 0.0
    %568 = vmatpush1.msra.mxu0 0.0
    %569 = vmatprep.subr.mxu0 0.0
    %570 = vmatpush1.msra.mxu0 0.0
    %571 = vmatprep.subr.mxu0 0.0
    %572 = vmatpush1.msra.mxu0 0.0
    %573 = vmatprep.subr.mxu0 0.0
    %574 = vmatpush1.msra.mxu0 0.0
    %575 = vmatprep.mubr.f32.mxu0 0.0
    %576 = vmatmul.mubr.f32.gmra.mrb[0].mxu0 %v506
    %v577 = vpop.f32.mrb[0].mxu0
    %v578 = vadd.f32 %v504, %v577
    %v579 = vpop.f32.mrb[0].mxu0
    %580 = vmatprep.mubr.f32.mxu0 0.0
    %581 = vmatmul.mubr.f32.gmra.mrb[0].mxu0 %v509
    %v582 = vpop.f32.mrb[0].mxu0
    %v583 = vadd.f32 %v504, %v582
    %v584 = vpop.f32.mrb[0].mxu0
    %585 = vdwg.mxu0
    %vm586 = vcmask 785408
    %587 = vst.msk [vmem:[#allocation2] sm:$0xff] %vm586, %v578
    %588 = vst.msk [vmem:[#allocation2 + $0x8] sm:$0xff] %vm586, %v583
    %v589 = vld [vmem:[#allocation2] sm:$0xff]
    %591 = vrot.lane.b32.xlu0 %v589, 96
    %v592 = vpop.permute.xlu0 %591
    %vm593 = vcmask 64512
    %v594 = vsel %vm593, %v589, 0
    %v596 = vsel %vm593, %v592, 0
    %598 = vmatprep.subr.mxu0 0.0
    %599 = vmatpush1.xpose.msra.mxu0 %v596
    %600 = vmatprep.subr.mxu0 0.0
    %601 = vmatpush1.xpose.msra.mxu0 0.0
    %602 = vmatprep.subr.mxu0 0.0
    %603 = vmatpush1.xpose.msra.mxu0 0.0
    %604 = vmatprep.subr.mxu0 0.0
    %605 = vmatpush1.xpose.msra.mxu0 0.0
    %606 = vmatprep.subr.mxu0 0.0
    %607 = vmatpush1.xpose.msra.mxu0 0.0
    %608 = vmatprep.subr.mxu0 0.0
    %609 = vmatpush1.xpose.msra.mxu0 0.0
    %610 = vmatprep.subr.mxu0 0.0
    %611 = vmatpush1.xpose.msra.mxu0 0.0
    %612 = vmatprep.subr.mxu0 0.0
    %613 = vmatpush1.xpose.msra.mxu0 0.0
    %614 = vmatprep.subr.mxu0 0.0
    %615 = vmatpush1.xpose.msra.mxu0 0.0
    %616 = vmatprep.subr.mxu0 0.0
    %617 = vmatpush1.xpose.msra.mxu0 0.0
    %618 = vmatprep.subr.mxu0 0.0
    %619 = vmatpush1.xpose.msra.mxu0 0.0
    %620 = vmatprep.subr.mxu0 0.0
    %621 = vmatpush1.xpose.msra.mxu0 0.0
    %622 = vmatprep.subr.mxu0 0.0
    %623 = vmatpush1.xpose.msra.mxu0 0.0
    %624 = vmatprep.subr.mxu0 0.0
    %625 = vmatpush1.xpose.msra.mxu0 0.0
    %626 = vmatprep.subr.mxu0 0.0
    %627 = vmatpush1.xpose.msra.mxu0 0.0
    %628 = vmatprep.subr.mxu0 0.0
    %629 = vmatpush1.xpose.msra.mxu0 0.0
    %630 = vmatprep.subr.mxu0 0.0
    %631 = vmatpush1.xpose.msra.mxu0 0.0
    %632 = vmatprep.subr.mxu0 0.0
    %633 = vmatpush1.xpose.msra.mxu0 0.0
    %634 = vmatprep.subr.mxu0 0.0
    %635 = vmatpush1.xpose.msra.mxu0 0.0
    %636 = vmatprep.subr.mxu0 0.0
    %637 = vmatpush1.xpose.msra.mxu0 0.0
    %638 = vmatprep.subr.mxu0 0.0
    %639 = vmatpush1.xpose.msra.mxu0 0.0
    %640 = vmatprep.subr.mxu0 0.0
    %641 = vmatpush1.xpose.msra.mxu0 0.0
    %642 = vmatprep.subr.mxu0 0.0
    %643 = vmatpush1.xpose.msra.mxu0 0.0
    %644 = vmatprep.subr.mxu0 0.0
    %645 = vmatpush1.xpose.msra.mxu0 0.0
    %646 = vmatprep.subr.mxu0 0.0
    %647 = vmatpush1.xpose.msra.mxu0 0.0
    %648 = vmatprep.subr.mxu0 0.0
    %649 = vmatpush1.xpose.msra.mxu0 0.0
    %650 = vmatprep.subr.mxu0 0.0
    %651 = vmatpush1.xpose.msra.mxu0 0.0
    %652 = vmatprep.subr.mxu0 0.0
    %653 = vmatpush1.xpose.msra.mxu0 0.0
    %654 = vmatprep.subr.mxu0 0.0
    %655 = vmatpush1.xpose.msra.mxu0 0.0
    %656 = vmatprep.subr.mxu0 0.0
    %657 = vmatpush1.xpose.msra.mxu0 0.0
    %658 = vmatprep.subr.mxu0 0.0
    %659 = vmatpush1.xpose.msra.mxu0 0.0
    %660 = vmatprep.subr.mxu0 0.0
    %661 = vmatpush1.xpose.msra.mxu0 0.0
    %662 = vmatprep.mubr.f32.mxu0 0.0
    %663 = vmatmul.mubr.f32.gmra.mrb[0].mxu0 %v594
    %v664 = vpop.f32.mrb[0].mxu0
    %v665 = vadd.f32 0.0, %v664
    %v666 = vpop.f32.mrb[0].mxu0
    %667 = vdwg.mxu0
    %v668 = vmul.f32 %v665, 0.35355338
    %v669 = vld [vmem:[#allocation4] sm:$0xff]
    %v670 = vadd.f32 %v668, %v669
    %v671 = vlaneseq
    %v672 = vshrl.u32 %v671, 7
    %v673 = vsub.s32 0, %v672
    %v674 = vrot.slane %v161, %v673
    %v675 = vadd.f32 %v670, %v674
    %v676 = vsel %vm593, %v675, -inf
    %677 = vmax.xlane.f32.xlu0 %v676
    %v678 = vpop.xlane.xlu0 %677
    %v679 = vsub.f32 %v675, %v678
    %v680 = vmul.f32 %v679, 1.442695
    %v681 = vpow.pop %v680
    %v682 = vsel %vm593, %v681, 0.0
    %683 = vadd.xlane.f32.xlu0 %v682
    %v684 = vpop.xlane.xlu0 %683
    %v685 = vrcp.pop %v684
    %v686 = vmul.f32 %v681, %v685
    %687 = vrot.lane.b32.xlu0 %v589, 64
    %v688 = vpop.permute.xlu0 %687
    %v691 = vsel %vm593, %v686, 0
    %693 = vmatprep.subr.mxu0 0.0
    %694 = vmatpush1.msra.mxu0 %v688
    %695 = vmatprep.subr.mxu0 0.0
    %696 = vmatpush1.msra.mxu0 0.0
    %697 = vmatprep.subr.mxu0 0.0
    %698 = vmatpush1.msra.mxu0 0.0
    %699 = vmatprep.subr.mxu0 0.0
    %700 = vmatpush1.msra.mxu0 0.0
    %701 = vmatprep.subr.mxu0 0.0
    %702 = vmatpush1.msra.mxu0 0.0
    %703 = vmatprep.subr.mxu0 0.0
    %704 = vmatpush1.msra.mxu0 0.0
    %705 = vmatprep.subr.mxu0 0.0
    %706 = vmatpush1.msra.mxu0 0.0
    %707 = vmatprep.subr.mxu0 0.0
    %708 = vmatpush1.msra.mxu0 0.0
    %709 = vmatprep.subr.mxu0 0.0
    %710 = vmatpush1.msra.mxu0 0.0
    %711 = vmatprep.subr.mxu0 0.0
    %712 = vmatpush1.msra.mxu0 0.0
    %713 = vmatprep.subr.mxu0 0.0
    %714 = vmatpush1.msra.mxu0 0.0
    %715 = vmatprep.subr.mxu0 0.0
    %716 = vmatpush1.msra.mxu0 0.0
    %717 = vmatprep.subr.mxu0 0.0
    %718 = vmatpush1.msra.mxu0 0.0
    %719 = vmatprep.subr.mxu0 0.0
    %720 = vmatpush1.msra.mxu0 0.0
    %721 = vmatprep.subr.mxu0 0.0
    %722 = vmatpush1.msra.mxu0 0.0
    %723 = vmatprep.subr.mxu0 0.0
    %724 = vmatpush1.msra.mxu0 0.0
    %725 = vmatprep.subr.mxu0 0.0
    %726 = vmatpush1.msra.mxu0 0.0
    %727 = vmatprep.subr.mxu0 0.0
    %728 = vmatpush1.msra.mxu0 0.0
    %729 = vmatprep.subr.mxu0 0.0
    %730 = vmatpush1.msra.mxu0 0.0
    %731 = vmatprep.subr.mxu0 0.0
    %732 = vmatpush1.msra.mxu0 0.0
    %733 = vmatprep.subr.mxu0 0.0
    %734 = vmatpush1.msra.mxu0 0.0
    %735 = vmatprep.subr.mxu0 0.0
    %736 = vmatpush1.msra.mxu0 0.0
    %737 = vmatprep.subr.mxu0 0.0
    %738 = vmatpush1.msra.mxu0 0.0
    %739 = vmatprep.subr.mxu0 0.0
    %740 = vmatpush1.msra.mxu0 0.0
    %741 = vmatprep.subr.mxu0 0.0
    %742 = vmatpush1.msra.mxu0 0.0
    %743 = vmatprep.subr.mxu0 0.0
    %744 = vmatpush1.msra.mxu0 0.0
    %745 = vmatprep.subr.mxu0 0.0
    %746 = vmatpush1.msra.mxu0 0.0
    %747 = vmatprep.subr.mxu0 0.0
    %748 = vmatpush1.msra.mxu0 0.0
    %749 = vmatprep.subr.mxu0 0.0
    %750 = vmatpush1.msra.mxu0 0.0
    %751 = vmatprep.subr.mxu0 0.0
    %752 = vmatpush1.msra.mxu0 0.0
    %753 = vmatprep.subr.mxu0 0.0
    %754 = vmatpush1.msra.mxu0 0.0
    %755 = vmatprep.subr.mxu0 0.0
    %756 = vmatpush1.msra.mxu0 0.0
    %757 = vmatprep.mubr.f32.mxu0 0.0
    %758 = vmatmul.mubr.f32.gmra.mrb[0].mxu0 %v691
    %v759 = vpop.f32.mrb[0].mxu0
    %v760 = vadd.f32 0.0, %v759
    %v761 = vpop.f32.mrb[0].mxu0
    %762 = vdwg.mxu0
    %763 = vst.msk [vmem:[#allocation3] sm:$0xff] %vm593, %v760
    %v764 = vld [vmem:[#allocation2] sm:$0xff]
    %766 = vrot.lane.b32.xlu0 %v764, 120
    %v767 = vpop.permute.xlu0 %766
    %768 = vrot.lane.b32.xlu0 %v764, 88
    %v769 = vpop.permute.xlu0 %768
    %v770 = vsel %vm593, %v767, 0
    %v772 = vsel %vm593, %v769, 0
    %774 = vmatprep.subr.mxu0 0.0
    %775 = vmatpush1.xpose.msra.mxu0 %v772
    %776 = vmatprep.subr.mxu0 0.0
    %777 = vmatpush1.xpose.msra.mxu0 0.0
    %778 = vmatprep.subr.mxu0 0.0
    %779 = vmatpush1.xpose.msra.mxu0 0.0
    %780 = vmatprep.subr.mxu0 0.0
    %781 = vmatpush1.xpose.msra.mxu0 0.0
    %782 = vmatprep.subr.mxu0 0.0
    %783 = vmatpush1.xpose.msra.mxu0 0.0
    %784 = vmatprep.subr.mxu0 0.0
    %785 = vmatpush1.xpose.msra.mxu0 0.0
    %786 = vmatprep.subr.mxu0 0.0
    %787 = vmatpush1.xpose.msra.mxu0 0.0
    %788 = vmatprep.subr.mxu0 0.0
    %789 = vmatpush1.xpose.msra.mxu0 0.0
    %790 = vmatprep.subr.mxu0 0.0
    %791 = vmatpush1.xpose.msra.mxu0 0.0
    %792 = vmatprep.subr.mxu0 0.0
    %793 = vmatpush1.xpose.msra.mxu0 0.0
    %794 = vmatprep.subr.mxu0 0.0
    %795 = vmatpush1.xpose.msra.mxu0 0.0
    %796 = vmatprep.subr.mxu0 0.0
    %797 = vmatpush1.xpose.msra.mxu0 0.0
    %798 = vmatprep.subr.mxu0 0.0
    %799 = vmatpush1.xpose.msra.mxu0 0.0
    %800 = vmatprep.subr.mxu0 0.0
    %801 = vmatpush1.xpose.msra.mxu0 0.0
    %802 = vmatprep.subr.mxu0 0.0
    %803 = vmatpush1.xpose.msra.mxu0 0.0
    %804 = vmatprep.subr.mxu0 0.0
    %805 = vmatpush1.xpose.msra.mxu0 0.0
    %806 = vmatprep.subr.mxu0 0.0
    %807 = vmatpush1.xpose.msra.mxu0 0.0
    %808 = vmatprep.subr.mxu0 0.0
    %809 = vmatpush1.xpose.msra.mxu0 0.0
    %810 = vmatprep.subr.mxu0 0.0
    %811 = vmatpush1.xpose.msra.mxu0 0.0
    %812 = vmatprep.subr.mxu0 0.0
    %813 = vmatpush1.xpose.msra.mxu0 0.0
    %814 = vmatprep.subr.mxu0 0.0
    %815 = vmatpush1.xpose.msra.mxu0 0.0
    %816 = vmatprep.subr.mxu0 0.0
    %817 = vmatpush1.xpose.msra.mxu0 0.0
    %818 = vmatprep.subr.mxu0 0.0
    %819 = vmatpush1.xpose.msra.mxu0 0.0
    %820 = vmatprep.subr.mxu0 0.0
    %821 = vmatpush1.xpose.msra.mxu0 0.0
    %822 = vmatprep.subr.mxu0 0.0
    %823 = vmatpush1.xpose.msra.mxu0 0.0
    %824 = vmatprep.subr.mxu0 0.0
    %825 = vmatpush1.xpose.msra.mxu0 0.0
    %826 = vmatprep.subr.mxu0 0.0
    %827 = vmatpush1.xpose.msra.mxu0 0.0
    %828 = vmatprep.subr.mxu0 0.0
    %829 = vmatpush1.xpose.msra.mxu0 0.0
    %830 = vmatprep.subr.mxu0 0.0
    %831 = vmatpush1.xpose.msra.mxu0 0.0
    %832 = vmatprep.subr.mxu0 0.0
    %833 = vmatpush1.xpose.msra.mxu0 0.0
    %834 = vmatprep.subr.mxu0 0.0
    %835 = vmatpush1.xpose.msra.mxu0 0.0
    %836 = vmatprep.subr.mxu0 0.0
    %837 = vmatpush1.xpose.msra.mxu0 0.0
    %838 = vmatprep.mubr.f32.mxu0 0.0
    %839 = vmatmul.mubr.f32.gmra.mrb[0].mxu0 %v770
    %v840 = vpop.f32.mrb[0].mxu0
    %v841 = vadd.f32 0.0, %v840
    %v842 = vpop.f32.mrb[0].mxu0
    %843 = vdwg.mxu0
    %v844 = vmul.f32 %v841, 0.35355338
    %v845 = vld [vmem:[#allocation4] sm:$0xff]
    %847 = vrot.lane.b32.xlu0 %v845, 120
    %v848 = vpop.permute.xlu0 %847
    %v850 = vadd.f32 %v844, %v848
    %v851 = vadd.f32 %v850, %v674
    %v852 = vsel %vm593, %v851, -inf
    %853 = vmax.xlane.f32.xlu0 %v852
    %v854 = vpop.xlane.xlu0 %853
    %v855 = vsub.f32 %v851, %v854
    %v856 = vmul.f32 %v855, 1.442695
    %v857 = vpow.pop %v856
    %v858 = vsel %vm593, %v857, 0.0
    %859 = vadd.xlane.f32.xlu0 %v858
    %v860 = vpop.xlane.xlu0 %859
    %v861 = vrcp.pop %v860
    %v862 = vmul.f32 %v857, %v861
    %863 = vrot.lane.b32.xlu0 %v764, 56
    %v864 = vpop.permute.xlu0 %863
    %v867 = vsel %vm593, %v862, 0
    %869 = vmatprep.subr.mxu0 0.0
    %870 = vmatpush1.msra.mxu0 %v864
    %871 = vmatprep.subr.mxu0 0.0
    %872 = vmatpush1.msra.mxu0 0.0
    %873 = vmatprep.subr.mxu0 0.0
    %874 = vmatpush1.msra.mxu0 0.0
    %875 = vmatprep.subr.mxu0 0.0
    %876 = vmatpush1.msra.mxu0 0.0
    %877 = vmatprep.subr.mxu0 0.0
    %878 = vmatpush1.msra.mxu0 0.0
    %879 = vmatprep.subr.mxu0 0.0
    %880 = vmatpush1.msra.mxu0 0.0
    %881 = vmatprep.subr.mxu0 0.0
    %882 = vmatpush1.msra.mxu0 0.0
    %883 = vmatprep.subr.mxu0 0.0
    %884 = vmatpush1.msra.mxu0 0.0
    %885 = vmatprep.subr.mxu0 0.0
    %886 = vmatpush1.msra.mxu0 0.0
    %887 = vmatprep.subr.mxu0 0.0
    %888 = vmatpush1.msra.mxu0 0.0
    %889 = vmatprep.subr.mxu0 0.0
    %890 = vmatpush1.msra.mxu0 0.0
    %891 = vmatprep.subr.mxu0 0.0
    %892 = vmatpush1.msra.mxu0 0.0
    %893 = vmatprep.subr.mxu0 0.0
    %894 = vmatpush1.msra.mxu0 0.0
    %895 = vmatprep.subr.mxu0 0.0
    %896 = vmatpush1.msra.mxu0 0.0
    %897 = vmatprep.subr.mxu0 0.0
    %898 = vmatpush1.msra.mxu0 0.0
    %899 = vmatprep.subr.mxu0 0.0
    %900 = vmatpush1.msra.mxu0 0.0
    %901 = vmatprep.subr.mxu0 0.0
    %902 = vmatpush1.msra.mxu0 0.0
    %903 = vmatprep.subr.mxu0 0.0
    %904 = vmatpush1.msra.mxu0 0.0
    %905 = vmatprep.subr.mxu0 0.0
    %906 = vmatpush1.msra.mxu0 0.0
    %907 = vmatprep.subr.mxu0 0.0
    %908 = vmatpush1.msra.mxu0 0.0
    %909 = vmatprep.subr.mxu0 0.0
    %910 = vmatpush1.msra.mxu0 0.0
    %911 = vmatprep.subr.mxu0 0.0
    %912 = vmatpush1.msra.mxu0 0.0
    %913 = vmatprep.subr.mxu0 0.0
    %914 = vmatpush1.msra.mxu0 0.0
    %915 = vmatprep.subr.mxu0 0.0
    %916 = vmatpush1.msra.mxu0 0.0
    %917 = vmatprep.subr.mxu0 0.0
    %918 = vmatpush1.msra.mxu0 0.0
    %919 = vmatprep.subr.mxu0 0.0
    %920 = vmatpush1.msra.mxu0 0.0
    %921 = vmatprep.subr.mxu0 0.0
    %922 = vmatpush1.msra.mxu0 0.0
    %923 = vmatprep.subr.mxu0 0.0
    %924 = vmatpush1.msra.mxu0 0.0
    %925 = vmatprep.subr.mxu0 0.0
    %926 = vmatpush1.msra.mxu0 0.0
    %927 = vmatprep.subr.mxu0 0.0
    %928 = vmatpush1.msra.mxu0 0.0
    %929 = vmatprep.subr.mxu0 0.0
    %930 = vmatpush1.msra.mxu0 0.0
    %931 = vmatprep.subr.mxu0 0.0
    %932 = vmatpush1.msra.mxu0 0.0
    %933 = vmatprep.mubr.f32.mxu0 0.0
    %934 = vmatmul.mubr.f32.gmra.mrb[0].mxu0 %v867
    %v935 = vpop.f32.mrb[0].mxu0
    %v936 = vadd.f32 0.0, %v935
    %v937 = vpop.f32.mrb[0].mxu0
    %938 = vdwg.mxu0
    %940 = vrot.lane.b32.xlu0 %v936, 8
    %v941 = vpop.permute.xlu0 %940
    %vm943 = vcmask 130112
    %944 = vst.msk [vmem:[#allocation3] sm:$0xff] %vm943, %v941
    %v945 = vld [vmem:[#allocation2] sm:$0xff]
    %947 = vrot.lane.b32.xlu0 %v945, 112
    %v948 = vpop.permute.xlu0 %947
    %949 = vrot.lane.b32.xlu0 %v945, 80
    %v950 = vpop.permute.xlu0 %949
    %v951 = vsel %vm593, %v948, 0
    %v953 = vsel %vm593, %v950, 0
    %955 = vmatprep.subr.mxu0 0.0
    %956 = vmatpush1.xpose.msra.mxu0 %v953
    %957 = vmatprep.subr.mxu0 0.0
    %958 = vmatpush1.xpose.msra.mxu0 0.0
    %959 = vmatprep.subr.mxu0 0.0
    %960 = vmatpush1.xpose.msra.mxu0 0.0
    %961 = vmatprep.subr.mxu0 0.0
    %962 = vmatpush1.xpose.msra.mxu0 0.0
    %963 = vmatprep.subr.mxu0 0.0
    %964 = vmatpush1.xpose.msra.mxu0 0.0
    %965 = vmatprep.subr.mxu0 0.0
    %966 = vmatpush1.xpose.msra.mxu0 0.0
    %967 = vmatprep.subr.mxu0 0.0
    %968 = vmatpush1.xpose.msra.mxu0 0.0
    %969 = vmatprep.subr.mxu0 0.0
    %970 = vmatpush1.xpose.msra.mxu0 0.0
    %971 = vmatprep.subr.mxu0 0.0
    %972 = vmatpush1.xpose.msra.mxu0 0.0
    %973 = vmatprep.subr.mxu0 0.0
    %974 = vmatpush1.xpose.msra.mxu0 0.0
    %975 = vmatprep.subr.mxu0 0.0
    %976 = vmatpush1.xpose.msra.mxu0 0.0
    %977 = vmatprep.subr.mxu0 0.0
    %978 = vmatpush1.xpose.msra.mxu0 0.0
    %979 = vmatprep.subr.mxu0 0.0
    %980 = vmatpush1.xpose.msra.mxu0 0.0
    %981 = vmatprep.subr.mxu0 0.0
    %982 = vmatpush1.xpose.msra.mxu0 0.0
    %983 = vmatprep.subr.mxu0 0.0
    %984 = vmatpush1.xpose.msra.mxu0 0.0
    %985 = vmatprep.subr.mxu0 0.0
    %986 = vmatpush1.xpose.msra.mxu0 0.0
    %987 = vmatprep.subr.mxu0 0.0
    %988 = vmatpush1.xpose.msra.mxu0 0.0
    %989 = vmatprep.subr.mxu0 0.0
    %990 = vmatpush1.xpose.msra.mxu0 0.0
    %991 = vmatprep.subr.mxu0 0.0
    %992 = vmatpush1.xpose.msra.mxu0 0.0
    %993 = vmatprep.subr.mxu0 0.0
    %994 = vmatpush1.xpose.msra.mxu0 0.0
    %995 = vmatprep.subr.mxu0 0.0
    %996 = vmatpush1.xpose.msra.mxu0 0.0
    %997 = vmatprep.subr.mxu0 0.0
    %998 = vmatpush1.xpose.msra.mxu0 0.0
    %999 = vmatprep.subr.mxu0 0.0
    %1000 = vmatpush1.xpose.msra.mxu0 0.0
    %1001 = vmatprep.subr.mxu0 0.0
    %1002 = vmatpush1.xpose.msra.mxu0 0.0
    %1003 = vmatprep.subr.mxu0 0.0
    %1004 = vmatpush1.xpose.msra.mxu0 0.0
    %1005 = vmatprep.subr.mxu0 0.0
    %1006 = vmatpush1.xpose.msra.mxu0 0.0
    %1007 = vmatprep.subr.mxu0 0.0
    %1008 = vmatpush1.xpose.msra.mxu0 0.0
    %1009 = vmatprep.subr.mxu0 0.0
    %1010 = vmatpush1.xpose.msra.mxu0 0.0
    %1011 = vmatprep.subr.mxu0 0.0
    %1012 = vmatpush1.xpose.msra.mxu0 0.0
    %1013 = vmatprep.subr.mxu0 0.0
    %1014 = vmatpush1.xpose.msra.mxu0 0.0
    %1015 = vmatprep.subr.mxu0 0.0
    %1016 = vmatpush1.xpose.msra.mxu0 0.0
    %1017 = vmatprep.subr.mxu0 0.0
    %1018 = vmatpush1.xpose.msra.mxu0 0.0
    %1019 = vmatprep.mubr.f32.mxu0 0.0
    %1020 = vmatmul.mubr.f32.gmra.mrb[0].mxu0 %v951
    %v1021 = vpop.f32.mrb[0].mxu0
    %v1022 = vadd.f32 0.0, %v1021
    %v1023 = vpop.f32.mrb[0].mxu0
    %1024 = vdwg.mxu0
    %v1025 = vmul.f32 %v1022, 0.35355338
    %v1026 = vld [vmem:[#allocation4] sm:$0xff]
    %1028 = vrot.lane.b32.xlu0 %v1026, 112
    %v1029 = vpop.permute.xlu0 %1028
    %v1031 = vadd.f32 %v1025, %v1029
    %v1032 = vadd.f32 %v1031, %v674
    %v1033 = vsel %vm593, %v1032, -inf
    %1034 = vmax.xlane.f32.xlu0 %v1033
    %v1035 = vpop.xlane.xlu0 %1034
    %v1036 = vsub.f32 %v1032, %v1035
    %v1037 = vmul.f32 %v1036, 1.442695
    %v1038 = vpow.pop %v1037
    %v1039 = vsel %vm593, %v1038, 0.0
    %1040 = vadd.xlane.f32.xlu0 %v1039
    %v1041 = vpop.xlane.xlu0 %1040
    %v1042 = vrcp.pop %v1041
    %v1043 = vmul.f32 %v1038, %v1042
    %1044 = vrot.lane.b32.xlu0 %v945, 48
    %v1045 = vpop.permute.xlu0 %1044
    %v1048 = vsel %vm593, %v1043, 0
    %1050 = vmatprep.subr.mxu0 0.0
    %1051 = vmatpush1.msra.mxu0 %v1045
    %1052 = vmatprep.subr.mxu0 0.0
    %1053 = vmatpush1.msra.mxu0 0.0
    %1054 = vmatprep.subr.mxu0 0.0
    %1055 = vmatpush1.msra.mxu0 0.0
    %1056 = vmatprep.subr.mxu0 0.0
    %1057 = vmatpush1.msra.mxu0 0.0
    %1058 = vmatprep.subr.mxu0 0.0
    %1059 = vmatpush1.msra.mxu0 0.0
    %1060 = vmatprep.subr.mxu0 0.0
    %1061 = vmatpush1.msra.mxu0 0.0
    %1062 = vmatprep.subr.mxu0 0.0
    %1063 = vmatpush1.msra.mxu0 0.0
    %1064 = vmatprep.subr.mxu0 0.0
    %1065 = vmatpush1.msra.mxu0 0.0
    %1066 = vmatprep.subr.mxu0 0.0
    %1067 = vmatpush1.msra.mxu0 0.0
    %1068 = vmatprep.subr.mxu0 0.0
    %1069 = vmatpush1.msra.mxu0 0.0
    %1070 = vmatprep.subr.mxu0 0.0
    %1071 = vmatpush1.msra.mxu0 0.0
    %1072 = vmatprep.subr.mxu0 0.0
    %1073 = vmatpush1.msra.mxu0 0.0
    %1074 = vmatprep.subr.mxu0 0.0
    %1075 = vmatpush1.msra.mxu0 0.0
    %1076 = vmatprep.subr.mxu0 0.0
    %1077 = vmatpush1.msra.mxu0 0.0
    %1078 = vmatprep.subr.mxu0 0.0
    %1079 = vmatpush1.msra.mxu0 0.0
    %1080 = vmatprep.subr.mxu0 0.0
    %1081 = vmatpush1.msra.mxu0 0.0
    %1082 = vmatprep.subr.mxu0 0.0
    %1083 = vmatpush1.msra.mxu0 0.0
    %1084 = vmatprep.subr.mxu0 0.0
    %1085 = vmatpush1.msra.mxu0 0.0
    %1086 = vmatprep.subr.mxu0 0.0
    %1087 = vmatpush1.msra.mxu0 0.0
    %1088 = vmatprep.subr.mxu0 0.0
    %1089 = vmatpush1.msra.mxu0 0.0
    %1090 = vmatprep.subr.mxu0 0.0
    %1091 = vmatpush1.msra.mxu0 0.0
    %1092 = vmatprep.subr.mxu0 0.0
    %1093 = vmatpush1.msra.mxu0 0.0
    %1094 = vmatprep.subr.mxu0 0.0
    %1095 = vmatpush1.msra.mxu0 0.0
    %1096 = vmatprep.subr.mxu0 0.0
    %1097 = vmatpush1.msra.mxu0 0.0
    %1098 = vmatprep.subr.mxu0 0.0
    %1099 = vmatpush1.msra.mxu0 0.0
    %1100 = vmatprep.subr.mxu0 0.0
    %1101 = vmatpush1.msra.mxu0 0.0
    %1102 = vmatprep.subr.mxu0 0.0
    %1103 = vmatpush1.msra.mxu0 0.0
    %1104 = vmatprep.subr.mxu0 0.0
    %1105 = vmatpush1.msra.mxu0 0.0
    %1106 = vmatprep.subr.mxu0 0.0
    %1107 = vmatpush1.msra.mxu0 0.0
    %1108 = vmatprep.subr.mxu0 0.0
    %1109 = vmatpush1.msra.mxu0 0.0
    %1110 = vmatprep.subr.mxu0 0.0
    %1111 = vmatpush1.msra.mxu0 0.0
    %1112 = vmatprep.subr.mxu0 0.0
    %1113 = vmatpush1.msra.mxu0 0.0
    %1114 = vmatprep.mubr.f32.mxu0 0.0
    %1115 = vmatmul.mubr.f32.gmra.mrb[0].mxu0 %v1048
    %v1116 = vpop.f32.mrb[0].mxu0
    %v1117 = vadd.f32 0.0, %v1116
    %v1118 = vpop.f32.mrb[0].mxu0
    %1119 = vdwg.mxu0
    %1121 = vrot.lane.b32.xlu0 %v1117, 16
    %v1122 = vpop.permute.xlu0 %1121
    %vm1124 = vcmask 195712
    %1125 = vst.msk [vmem:[#allocation3] sm:$0xff] %vm1124, %v1122
    %v1126 = vld [vmem:[#allocation2] sm:$0xff]
    %1128 = vrot.lane.b32.xlu0 %v1126, 104
    %v1129 = vpop.permute.xlu0 %1128
    %1130 = vrot.lane.b32.xlu0 %v1126, 72
    %v1131 = vpop.permute.xlu0 %1130
    %v1132 = vsel %vm593, %v1129, 0
    %v1134 = vsel %vm593, %v1131, 0
    %1136 = vmatprep.subr.mxu0 0.0
    %1137 = vmatpush1.xpose.msra.mxu0 %v1134
    %1138 = vmatprep.subr.mxu0 0.0
    %1139 = vmatpush1.xpose.msra.mxu0 0.0
    %1140 = vmatprep.subr.mxu0 0.0
    %1141 = vmatpush1.xpose.msra.mxu0 0.0
    %1142 = vmatprep.subr.mxu0 0.0
    %1143 = vmatpush1.xpose.msra.mxu0 0.0
    %1144 = vmatprep.subr.mxu0 0.0
    %1145 = vmatpush1.xpose.msra.mxu0 0.0
    %1146 = vmatprep.subr.mxu0 0.0
    %1147 = vmatpush1.xpose.msra.mxu0 0.0
    %1148 = vmatprep.subr.mxu0 0.0
    %1149 = vmatpush1.xpose.msra.mxu0 0.0
    %1150 = vmatprep.subr.mxu0 0.0
    %1151 = vmatpush1.xpose.msra.mxu0 0.0
    %1152 = vmatprep.subr.mxu0 0.0
    %1153 = vmatpush1.xpose.msra.mxu0 0.0
    %1154 = vmatprep.subr.mxu0 0.0
    %1155 = vmatpush1.xpose.msra.mxu0 0.0
    %1156 = vmatprep.subr.mxu0 0.0
    %1157 = vmatpush1.xpose.msra.mxu0 0.0
    %1158 = vmatprep.subr.mxu0 0.0
    %1159 = vmatpush1.xpose.msra.mxu0 0.0
    %1160 = vmatprep.subr.mxu0 0.0
    %1161 = vmatpush1.xpose.msra.mxu0 0.0
    %1162 = vmatprep.subr.mxu0 0.0
    %1163 = vmatpush1.xpose.msra.mxu0 0.0
    %1164 = vmatprep.subr.mxu0 0.0
    %1165 = vmatpush1.xpose.msra.mxu0 0.0
    %1166 = vmatprep.subr.mxu0 0.0
    %1167 = vmatpush1.xpose.msra.mxu0 0.0
    %1168 = vmatprep.subr.mxu0 0.0
    %1169 = vmatpush1.xpose.msra.mxu0 0.0
    %1170 = vmatprep.subr.mxu0 0.0
    %1171 = vmatpush1.xpose.msra.mxu0 0.0
    %1172 = vmatprep.subr.mxu0 0.0
    %1173 = vmatpush1.xpose.msra.mxu0 0.0
    %1174 = vmatprep.subr.mxu0 0.0
    %1175 = vmatpush1.xpose.msra.mxu0 0.0
    %1176 = vmatprep.subr.mxu0 0.0
    %1177 = vmatpush1.xpose.msra.mxu0 0.0
    %1178 = vmatprep.subr.mxu0 0.0
    %1179 = vmatpush1.xpose.msra.mxu0 0.0
    %1180 = vmatprep.subr.mxu0 0.0
    %1181 = vmatpush1.xpose.msra.mxu0 0.0
    %1182 = vmatprep.subr.mxu0 0.0
    %1183 = vmatpush1.xpose.msra.mxu0 0.0
    %1184 = vmatprep.subr.mxu0 0.0
    %1185 = vmatpush1.xpose.msra.mxu0 0.0
    %1186 = vmatprep.subr.mxu0 0.0
    %1187 = vmatpush1.xpose.msra.mxu0 0.0
    %1188 = vmatprep.subr.mxu0 0.0
    %1189 = vmatpush1.xpose.msra.mxu0 0.0
    %1190 = vmatprep.subr.mxu0 0.0
    %1191 = vmatpush1.xpose.msra.mxu0 0.0
    %1192 = vmatprep.subr.mxu0 0.0
    %1193 = vmatpush1.xpose.msra.mxu0 0.0
    %1194 = vmatprep.subr.mxu0 0.0
    %1195 = vmatpush1.xpose.msra.mxu0 0.0
    %1196 = vmatprep.subr.mxu0 0.0
    %1197 = vmatpush1.xpose.msra.mxu0 0.0
    %1198 = vmatprep.subr.mxu0 0.0
    %1199 = vmatpush1.xpose.msra.mxu0 0.0
    %1200 = vmatprep.mubr.f32.mxu0 0.0
    %1201 = vmatmul.mubr.f32.gmra.mrb[0].mxu0 %v1132
    %v1202 = vpop.f32.mrb[0].mxu0
    %v1203 = vadd.f32 0.0, %v1202
    %v1204 = vpop.f32.mrb[0].mxu0
    %1205 = vdwg.mxu0
    %v1206 = vmul.f32 %v1203, 0.35355338
    %v1207 = vld [vmem:[#allocation4] sm:$0xff]
    %1209 = vrot.lane.b32.xlu0 %v1207, 104
    %v1210 = vpop.permute.xlu0 %1209
    %v1212 = vadd.f32 %v1206, %v1210
    %v1213 = vadd.f32 %v1212, %v674
    %v1214 = vsel %vm593, %v1213, -inf
    %1215 = vmax.xlane.f32.xlu0 %v1214
    %v1216 = vpop.xlane.xlu0 %1215
    %v1217 = vsub.f32 %v1213, %v1216
    %v1218 = vmul.f32 %v1217, 1.442695
    %v1219 = vpow.pop %v1218
    %v1220 = vsel %vm593, %v1219, 0.0
    %1221 = vadd.xlane.f32.xlu0 %v1220
    %v1222 = vpop.xlane.xlu0 %1221
    %v1223 = vrcp.pop %v1222
    %v1224 = vmul.f32 %v1219, %v1223
    %1225 = vrot.lane.b32.xlu0 %v1126, 40
    %v1226 = vpop.permute.xlu0 %1225
    %v1229 = vsel %vm593, %v1224, 0
    %1231 = vmatprep.subr.mxu0 0.0
    %1232 = vmatpush1.msra.mxu0 %v1226
    %1233 = vmatprep.subr.mxu0 0.0
    %1234 = vmatpush1.msra.mxu0 0.0
    %1235 = vmatprep.subr.mxu0 0.0
    %1236 = vmatpush1.msra.mxu0 0.0
    %1237 = vmatprep.subr.mxu0 0.0
    %1238 = vmatpush1.msra.mxu0 0.0
    %1239 = vmatprep.subr.mxu0 0.0
    %1240 = vmatpush1.msra.mxu0 0.0
    %1241 = vmatprep.subr.mxu0 0.0
    %1242 = vmatpush1.msra.mxu0 0.0
    %1243 = vmatprep.subr.mxu0 0.0
    %1244 = vmatpush1.msra.mxu0 0.0
    %1245 = vmatprep.subr.mxu0 0.0
    %1246 = vmatpush1.msra.mxu0 0.0
    %1247 = vmatprep.subr.mxu0 0.0
    %1248 = vmatpush1.msra.mxu0 0.0
    %1249 = vmatprep.subr.mxu0 0.0
    %1250 = vmatpush1.msra.mxu0 0.0
    %1251 = vmatprep.subr.mxu0 0.0
    %1252 = vmatpush1.msra.mxu0 0.0
    %1253 = vmatprep.subr.mxu0 0.0
    %1254 = vmatpush1.msra.mxu0 0.0
    %1255 = vmatprep.subr.mxu0 0.0
    %1256 = vmatpush1.msra.mxu0 0.0
    %1257 = vmatprep.subr.mxu0 0.0
    %1258 = vmatpush1.msra.mxu0 0.0
    %1259 = vmatprep.subr.mxu0 0.0
    %1260 = vmatpush1.msra.mxu0 0.0
    %1261 = vmatprep.subr.mxu0 0.0
    %1262 = vmatpush1.msra.mxu0 0.0
    %1263 = vmatprep.subr.mxu0 0.0
    %1264 = vmatpush1.msra.mxu0 0.0
    %1265 = vmatprep.subr.mxu0 0.0
    %1266 = vmatpush1.msra.mxu0 0.0
    %1267 = vmatprep.subr.mxu0 0.0
    %1268 = vmatpush1.msra.mxu0 0.0
    %1269 = vmatprep.subr.mxu0 0.0
    %1270 = vmatpush1.msra.mxu0 0.0
    %1271 = vmatprep.subr.mxu0 0.0
    %1272 = vmatpush1.msra.mxu0 0.0
    %1273 = vmatprep.subr.mxu0 0.0
    %1274 = vmatpush1.msra.mxu0 0.0
    %1275 = vmatprep.subr.mxu0 0.0
    %1276 = vmatpush1.msra.mxu0 0.0
    %1277 = vmatprep.subr.mxu0 0.0
    %1278 = vmatpush1.msra.mxu0 0.0
    %1279 = vmatprep.subr.mxu0 0.0
    %1280 = vmatpush1.msra.mxu0 0.0
    %1281 = vmatprep.subr.mxu0 0.0
    %1282 = vmatpush1.msra.mxu0 0.0
    %1283 = vmatprep.subr.mxu0 0.0
    %1284 = vmatpush1.msra.mxu0 0.0
    %1285 = vmatprep.subr.mxu0 0.0
    %1286 = vmatpush1.msra.mxu0 0.0
    %1287 = vmatprep.subr.mxu0 0.0
    %1288 = vmatpush1.msra.mxu0 0.0
    %1289 = vmatprep.subr.mxu0 0.0
    %1290 = vmatpush1.msra.mxu0 0.0
    %1291 = vmatprep.subr.mxu0 0.0
    %1292 = vmatpush1.msra.mxu0 0.0
    %1293 = vmatprep.subr.mxu0 0.0
    %1294 = vmatpush1.msra.mxu0 0.0
    %1295 = vmatprep.mubr.f32.mxu0 0.0
    %1296 = vmatmul.mubr.f32.gmra.mrb[0].mxu0 %v1229
    %v1297 = vpop.f32.mrb[0].mxu0
    %v1298 = vadd.f32 0.0, %v1297
    %v1299 = vpop.f32.mrb[0].mxu0
    %1300 = vdwg.mxu0
    %1302 = vrot.lane.b32.xlu0 %v1298, 24
    %v1303 = vpop.permute.xlu0 %1302
    %vm1305 = vcmask 261312
    %1306 = vst.msk [vmem:[#allocation3] sm:$0xff] %vm1305, %v1303
    %v1307 = vld [vmem:[#allocation2 + $0x8] sm:$0xff]
    %1309 = vrot.lane.b32.xlu0 %v1307, 96
    %v1310 = vpop.permute.xlu0 %1309
    %v1311 = vsel %vm593, %v1307, 0
    %v1313 = vsel %vm593, %v1310, 0
    %1315 = vmatprep.subr.mxu0 0.0
    %1316 = vmatpush1.xpose.msra.mxu0 %v1313
    %1317 = vmatprep.subr.mxu0 0.0
    %1318 = vmatpush1.xpose.msra.mxu0 0.0
    %1319 = vmatprep.subr.mxu0 0.0
    %1320 = vmatpush1.xpose.msra.mxu0 0.0
    %1321 = vmatprep.subr.mxu0 0.0
    %1322 = vmatpush1.xpose.msra.mxu0 0.0
    %1323 = vmatprep.subr.mxu0 0.0
    %1324 = vmatpush1.xpose.msra.mxu0 0.0
    %1325 = vmatprep.subr.mxu0 0.0
    %1326 = vmatpush1.xpose.msra.mxu0 0.0
    %1327 = vmatprep.subr.mxu0 0.0
    %1328 = vmatpush1.xpose.msra.mxu0 0.0
    %1329 = vmatprep.subr.mxu0 0.0
    %1330 = vmatpush1.xpose.msra.mxu0 0.0
    %1331 = vmatprep.subr.mxu0 0.0
    %1332 = vmatpush1.xpose.msra.mxu0 0.0
    %1333 = vmatprep.subr.mxu0 0.0
    %1334 = vmatpush1.xpose.msra.mxu0 0.0
    %1335 = vmatprep.subr.mxu0 0.0
    %1336 = vmatpush1.xpose.msra.mxu0 0.0
    %1337 = vmatprep.subr.mxu0 0.0
    %1338 = vmatpush1.xpose.msra.mxu0 0.0
    %1339 = vmatprep.subr.mxu0 0.0
    %1340 = vmatpush1.xpose.msra.mxu0 0.0
    %1341 = vmatprep.subr.mxu0 0.0
    %1342 = vmatpush1.xpose.msra.mxu0 0.0
    %1343 = vmatprep.subr.mxu0 0.0
    %1344 = vmatpush1.xpose.msra.mxu0 0.0
    %1345 = vmatprep.subr.mxu0 0.0
    %1346 = vmatpush1.xpose.msra.mxu0 0.0
    %1347 = vmatprep.subr.mxu0 0.0
    %1348 = vmatpush1.xpose.msra.mxu0 0.0
    %1349 = vmatprep.subr.mxu0 0.0
    %1350 = vmatpush1.xpose.msra.mxu0 0.0
    %1351 = vmatprep.subr.mxu0 0.0
    %1352 = vmatpush1.xpose.msra.mxu0 0.0
    %1353 = vmatprep.subr.mxu0 0.0
    %1354 = vmatpush1.xpose.msra.mxu0 0.0
    %1355 = vmatprep.subr.mxu0 0.0
    %1356 = vmatpush1.xpose.msra.mxu0 0.0
    %1357 = vmatprep.subr.mxu0 0.0
    %1358 = vmatpush1.xpose.msra.mxu0 0.0
    %1359 = vmatprep.subr.mxu0 0.0
    %1360 = vmatpush1.xpose.msra.mxu0 0.0
    %1361 = vmatprep.subr.mxu0 0.0
    %1362 = vmatpush1.xpose.msra.mxu0 0.0
    %1363 = vmatprep.subr.mxu0 0.0
    %1364 = vmatpush1.xpose.msra.mxu0 0.0
    %1365 = vmatprep.subr.mxu0 0.0
    %1366 = vmatpush1.xpose.msra.mxu0 0.0
    %1367 = vmatprep.subr.mxu0 0.0
    %1368 = vmatpush1.xpose.msra.mxu0 0.0
    %1369 = vmatprep.subr.mxu0 0.0
    %1370 = vmatpush1.xpose.msra.mxu0 0.0
    %1371 = vmatprep.subr.mxu0 0.0
    %1372 = vmatpush1.xpose.msra.mxu0 0.0
    %1373 = vmatprep.subr.mxu0 0.0
    %1374 = vmatpush1.xpose.msra.mxu0 0.0
    %1375 = vmatprep.subr.mxu0 0.0
    %1376 = vmatpush1.xpose.msra.mxu0 0.0
    %1377 = vmatprep.subr.mxu0 0.0
    %1378 = vmatpush1.xpose.msra.mxu0 0.0
    %1379 = vmatprep.mubr.f32.mxu0 0.0
    %1380 = vmatmul.mubr.f32.gmra.mrb[0].mxu0 %v1311
    %v1381 = vpop.f32.mrb[0].mxu0
    %v1382 = vadd.f32 0.0, %v1381
    %v1383 = vpop.f32.mrb[0].mxu0
    %1384 = vdwg.mxu0
    %v1385 = vmul.f32 %v1382, 0.35355338
    %v1386 = vld [vmem:[#allocation4 + $0x8] sm:$0xff]
    %v1387 = vadd.f32 %v1385, %v1386
    %v1388 = vlaneseq
    %v1389 = vshrl.u32 %v1388, 7
    %v1390 = vsub.s32 1, %v1389
    %v1391 = vrot.slane %v161, %v1390
    %v1392 = vadd.f32 %v1387, %v1391
    %v1393 = vsel %vm593, %v1392, -inf
    %1394 = vmax.xlane.f32.xlu0 %v1393
    %v1395 = vpop.xlane.xlu0 %1394
    %v1396 = vsub.f32 %v1392, %v1395
    %v1397 = vmul.f32 %v1396, 1.442695
    %v1398 = vpow.pop %v1397
    %v1399 = vsel %vm593, %v1398, 0.0
    %1400 = vadd.xlane.f32.xlu0 %v1399
    %v1401 = vpop.xlane.xlu0 %1400
    %v1402 = vrcp.pop %v1401
    %v1403 = vmul.f32 %v1398, %v1402
    %1404 = vrot.lane.b32.xlu0 %v1307, 64
    %v1405 = vpop.permute.xlu0 %1404
    %v1408 = vsel %vm593, %v1403, 0
    %1410 = vmatprep.subr.mxu0 0.0
    %1411 = vmatpush1.msra.mxu0 %v1405
    %1412 = vmatprep.subr.mxu0 0.0
    %1413 = vmatpush1.msra.mxu0 0.0
    %1414 = vmatprep.subr.mxu0 0.0
    %1415 = vmatpush1.msra.mxu0 0.0
    %1416 = vmatprep.subr.mxu0 0.0
    %1417 = vmatpush1.msra.mxu0 0.0
    %1418 = vmatprep.subr.mxu0 0.0
    %1419 = vmatpush1.msra.mxu0 0.0
    %1420 = vmatprep.subr.mxu0 0.0
    %1421 = vmatpush1.msra.mxu0 0.0
    %1422 = vmatprep.subr.mxu0 0.0
    %1423 = vmatpush1.msra.mxu0 0.0
    %1424 = vmatprep.subr.mxu0 0.0
    %1425 = vmatpush1.msra.mxu0 0.0
    %1426 = vmatprep.subr.mxu0 0.0
    %1427 = vmatpush1.msra.mxu0 0.0
    %1428 = vmatprep.subr.mxu0 0.0
    %1429 = vmatpush1.msra.mxu0 0.0
    %1430 = vmatprep.subr.mxu0 0.0
    %1431 = vmatpush1.msra.mxu0 0.0
    %1432 = vmatprep.subr.mxu0 0.0
    %1433 = vmatpush1.msra.mxu0 0.0
    %1434 = vmatprep.subr.mxu0 0.0
    %1435 = vmatpush1.msra.mxu0 0.0
    %1436 = vmatprep.subr.mxu0 0.0
    %1437 = vmatpush1.msra.mxu0 0.0
    %1438 = vmatprep.subr.mxu0 0.0
    %1439 = vmatpush1.msra.mxu0 0.0
    %1440 = vmatprep.subr.mxu0 0.0
    %1441 = vmatpush1.msra.mxu0 0.0
    %1442 = vmatprep.subr.mxu0 0.0
    %1443 = vmatpush1.msra.mxu0 0.0
    %1444 = vmatprep.subr.mxu0 0.0
    %1445 = vmatpush1.msra.mxu0 0.0
    %1446 = vmatprep.subr.mxu0 0.0
    %1447 = vmatpush1.msra.mxu0 0.0
    %1448 = vmatprep.subr.mxu0 0.0
    %1449 = vmatpush1.msra.mxu0 0.0
    %1450 = vmatprep.subr.mxu0 0.0
    %1451 = vmatpush1.msra.mxu0 0.0
    %1452 = vmatprep.subr.mxu0 0.0
    %1453 = vmatpush1.msra.mxu0 0.0
    %1454 = vmatprep.subr.mxu0 0.0
    %1455 = vmatpush1.msra.mxu0 0.0
    %1456 = vmatprep.subr.mxu0 0.0
    %1457 = vmatpush1.msra.mxu0 0.0
    %1458 = vmatprep.subr.mxu0 0.0
    %1459 = vmatpush1.msra.mxu0 0.0
    %1460 = vmatprep.subr.mxu0 0.0
    %1461 = vmatpush1.msra.mxu0 0.0
    %1462 = vmatprep.subr.mxu0 0.0
    %1463 = vmatpush1.msra.mxu0 0.0
    %1464 = vmatprep.subr.mxu0 0.0
    %1465 = vmatpush1.msra.mxu0 0.0
    %1466 = vmatprep.subr.mxu0 0.0
    %1467 = vmatpush1.msra.mxu0 0.0
    %1468 = vmatprep.subr.mxu0 0.0
    %1469 = vmatpush1.msra.mxu0 0.0
    %1470 = vmatprep.subr.mxu0 0.0
    %1471 = vmatpush1.msra.mxu0 0.0
    %1472 = vmatprep.subr.mxu0 0.0
    %1473 = vmatpush1.msra.mxu0 0.0
    %1474 = vmatprep.mubr.f32.mxu0 0.0
    %1475 = vmatmul.mubr.f32.gmra.mrb[0].mxu0 %v1408
    %v1476 = vpop.f32.mrb[0].mxu0
    %v1477 = vadd.f32 0.0, %v1476
    %v1478 = vpop.f32.mrb[0].mxu0
    %1479 = vdwg.mxu0
    %1480 = vst.msk [vmem:[#allocation3 + $0x8] sm:$0xff] %vm593, %v1477
    %v1481 = vld [vmem:[#allocation2 + $0x8] sm:$0xff]
    %1483 = vrot.lane.b32.xlu0 %v1481, 120
    %v1484 = vpop.permute.xlu0 %1483
    %1485 = vrot.lane.b32.xlu0 %v1481, 88
    %v1486 = vpop.permute.xlu0 %1485
    %v1487 = vsel %vm593, %v1484, 0
    %v1489 = vsel %vm593, %v1486, 0
    %1491 = vmatprep.subr.mxu0 0.0
    %1492 = vmatpush1.xpose.msra.mxu0 %v1489
    %1493 = vmatprep.subr.mxu0 0.0
    %1494 = vmatpush1.xpose.msra.mxu0 0.0
    %1495 = vmatprep.subr.mxu0 0.0
    %1496 = vmatpush1.xpose.msra.mxu0 0.0
    %1497 = vmatprep.subr.mxu0 0.0
    %1498 = vmatpush1.xpose.msra.mxu0 0.0
    %1499 = vmatprep.subr.mxu0 0.0
    %1500 = vmatpush1.xpose.msra.mxu0 0.0
    %1501 = vmatprep.subr.mxu0 0.0
    %1502 = vmatpush1.xpose.msra.mxu0 0.0
    %1503 = vmatprep.subr.mxu0 0.0
    %1504 = vmatpush1.xpose.msra.mxu0 0.0
    %1505 = vmatprep.subr.mxu0 0.0
    %1506 = vmatpush1.xpose.msra.mxu0 0.0
    %1507 = vmatprep.subr.mxu0 0.0
    %1508 = vmatpush1.xpose.msra.mxu0 0.0
    %1509 = vmatprep.subr.mxu0 0.0
    %1510 = vmatpush1.xpose.msra.mxu0 0.0
    %1511 = vmatprep.subr.mxu0 0.0
    %1512 = vmatpush1.xpose.msra.mxu0 0.0
    %1513 = vmatprep.subr.mxu0 0.0
    %1514 = vmatpush1.xpose.msra.mxu0 0.0
    %1515 = vmatprep.subr.mxu0 0.0
    %1516 = vmatpush1.xpose.msra.mxu0 0.0
    %1517 = vmatprep.subr.mxu0 0.0
    %1518 = vmatpush1.xpose.msra.mxu0 0.0
    %1519 = vmatprep.subr.mxu0 0.0
    %1520 = vmatpush1.xpose.msra.mxu0 0.0
    %1521 = vmatprep.subr.mxu0 0.0
    %1522 = vmatpush1.xpose.msra.mxu0 0.0
    %1523 = vmatprep.subr.mxu0 0.0
    %1524 = vmatpush1.xpose.msra.mxu0 0.0
    %1525 = vmatprep.subr.mxu0 0.0
    %1526 = vmatpush1.xpose.msra.mxu0 0.0
    %1527 = vmatprep.subr.mxu0 0.0
    %1528 = vmatpush1.xpose.msra.mxu0 0.0
    %1529 = vmatprep.subr.mxu0 0.0
    %1530 = vmatpush1.xpose.msra.mxu0 0.0
    %1531 = vmatprep.subr.mxu0 0.0
    %1532 = vmatpush1.xpose.msra.mxu0 0.0
    %1533 = vmatprep.subr.mxu0 0.0
    %1534 = vmatpush1.xpose.msra.mxu0 0.0
    %1535 = vmatprep.subr.mxu0 0.0
    %1536 = vmatpush1.xpose.msra.mxu0 0.0
    %1537 = vmatprep.subr.mxu0 0.0
    %1538 = vmatpush1.xpose.msra.mxu0 0.0
    %1539 = vmatprep.subr.mxu0 0.0
    %1540 = vmatpush1.xpose.msra.mxu0 0.0
    %1541 = vmatprep.subr.mxu0 0.0
    %1542 = vmatpush1.xpose.msra.mxu0 0.0
    %1543 = vmatprep.subr.mxu0 0.0
    %1544 = vmatpush1.xpose.msra.mxu0 0.0
    %1545 = vmatprep.subr.mxu0 0.0
    %1546 = vmatpush1.xpose.msra.mxu0 0.0
    %1547 = vmatprep.subr.mxu0 0.0
    %1548 = vmatpush1.xpose.msra.mxu0 0.0
    %1549 = vmatprep.subr.mxu0 0.0
    %1550 = vmatpush1.xpose.msra.mxu0 0.0
    %1551 = vmatprep.subr.mxu0 0.0
    %1552 = vmatpush1.xpose.msra.mxu0 0.0
    %1553 = vmatprep.subr.mxu0 0.0
    %1554 = vmatpush1.xpose.msra.mxu0 0.0
    %1555 = vmatprep.mubr.f32.mxu0 0.0
    %1556 = vmatmul.mubr.f32.gmra.mrb[0].mxu0 %v1487
    %v1557 = vpop.f32.mrb[0].mxu0
    %v1558 = vadd.f32 0.0, %v1557
    %v1559 = vpop.f32.mrb[0].mxu0
    %1560 = vdwg.mxu0
    %v1561 = vmul.f32 %v1558, 0.35355338
    %v1562 = vld [vmem:[#allocation4 + $0x8] sm:$0xff]
    %1564 = vrot.lane.b32.xlu0 %v1562, 120
    %v1565 = vpop.permute.xlu0 %1564
    %v1567 = vadd.f32 %v1561, %v1565
    %v1568 = vadd.f32 %v1567, %v1391
    %v1569 = vsel %vm593, %v1568, -inf
    %1570 = vmax.xlane.f32.xlu0 %v1569
    %v1571 = vpop.xlane.xlu0 %1570
    %v1572 = vsub.f32 %v1568, %v1571
    %v1573 = vmul.f32 %v1572, 1.442695
    %v1574 = vpow.pop %v1573
    %v1575 = vsel %vm593, %v1574, 0.0
    %1576 = vadd.xlane.f32.xlu0 %v1575
    %v1577 = vpop.xlane.xlu0 %1576
    %v1578 = vrcp.pop %v1577
    %v1579 = vmul.f32 %v1574, %v1578
    %1580 = vrot.lane.b32.xlu0 %v1481, 56
    %v1581 = vpop.permute.xlu0 %1580
    %v1584 = vsel %vm593, %v1579, 0
    %1586 = vmatprep.subr.mxu0 0.0
    %1587 = vmatpush1.msra.mxu0 %v1581
    %1588 = vmatprep.subr.mxu0 0.0
    %1589 = vmatpush1.msra.mxu0 0.0
    %1590 = vmatprep.subr.mxu0 0.0
    %1591 = vmatpush1.msra.mxu0 0.0
    %1592 = vmatprep.subr.mxu0 0.0
    %1593 = vmatpush1.msra.mxu0 0.0
    %1594 = vmatprep.subr.mxu0 0.0
    %1595 = vmatpush1.msra.mxu0 0.0
    %1596 = vmatprep.subr.mxu0 0.0
    %1597 = vmatpush1.msra.mxu0 0.0
    %1598 = vmatprep.subr.mxu0 0.0
    %1599 = vmatpush1.msra.mxu0 0.0
    %1600 = vmatprep.subr.mxu0 0.0
    %1601 = vmatpush1.msra.mxu0 0.0
    %1602 = vmatprep.subr.mxu0 0.0
    %1603 = vmatpush1.msra.mxu0 0.0
    %1604 = vmatprep.subr.mxu0 0.0
    %1605 = vmatpush1.msra.mxu0 0.0
    %1606 = vmatprep.subr.mxu0 0.0
    %1607 = vmatpush1.msra.mxu0 0.0
    %1608 = vmatprep.subr.mxu0 0.0
    %1609 = vmatpush1.msra.mxu0 0.0
    %1610 = vmatprep.subr.mxu0 0.0
    %1611 = vmatpush1.msra.mxu0 0.0
    %1612 = vmatprep.subr.mxu0 0.0
    %1613 = vmatpush1.msra.mxu0 0.0
    %1614 = vmatprep.subr.mxu0 0.0
    %1615 = vmatpush1.msra.mxu0 0.0
    %1616 = vmatprep.subr.mxu0 0.0
    %1617 = vmatpush1.msra.mxu0 0.0
    %1618 = vmatprep.subr.mxu0 0.0
    %1619 = vmatpush1.msra.mxu0 0.0
    %1620 = vmatprep.subr.mxu0 0.0
    %1621 = vmatpush1.msra.mxu0 0.0
    %1622 = vmatprep.subr.mxu0 0.0
    %1623 = vmatpush1.msra.mxu0 0.0
    %1624 = vmatprep.subr.mxu0 0.0
    %1625 = vmatpush1.msra.mxu0 0.0
    %1626 = vmatprep.subr.mxu0 0.0
    %1627 = vmatpush1.msra.mxu0 0.0
    %1628 = vmatprep.subr.mxu0 0.0
    %1629 = vmatpush1.msra.mxu0 0.0
    %1630 = vmatprep.subr.mxu0 0.0
    %1631 = vmatpush1.msra.mxu0 0.0
    %1632 = vmatprep.subr.mxu0 0.0
    %1633 = vmatpush1.msra.mxu0 0.0
    %1634 = vmatprep.subr.mxu0 0.0
    %1635 = vmatpush1.msra.mxu0 0.0
    %1636 = vmatprep.subr.mxu0 0.0
    %1637 = vmatpush1.msra.mxu0 0.0
    %1638 = vmatprep.subr.mxu0 0.0
    %1639 = vmatpush1.msra.mxu0 0.0
    %1640 = vmatprep.subr.mxu0 0.0
    %1641 = vmatpush1.msra.mxu0 0.0
    %1642 = vmatprep.subr.mxu0 0.0
    %1643 = vmatpush1.msra.mxu0 0.0
    %1644 = vmatprep.subr.mxu0 0.0
    %1645 = vmatpush1.msra.mxu0 0.0
    %1646 = vmatprep.subr.mxu0 0.0
    %1647 = vmatpush1.msra.mxu0 0.0
    %1648 = vmatprep.subr.mxu0 0.0
    %1649 = vmatpush1.msra.mxu0 0.0
    %1650 = vmatprep.mubr.f32.mxu0 0.0
    %1651 = vmatmul.mubr.f32.gmra.mrb[0].mxu0 %v1584
    %v1652 = vpop.f32.mrb[0].mxu0
    %v1653 = vadd.f32 0.0, %v1652
    %v1654 = vpop.f32.mrb[0].mxu0
    %1655 = vdwg.mxu0
    %1657 = vrot.lane.b32.xlu0 %v1653, 8
    %v1658 = vpop.permute.xlu0 %1657
    %1660 = vst.msk [vmem:[#allocation3 + $0x8] sm:$0xff] %vm943, %v1658
    %v1661 = vld [vmem:[#allocation2 + $0x8] sm:$0xff]
    %1663 = vrot.lane.b32.xlu0 %v1661, 112
    %v1664 = vpop.permute.xlu0 %1663
    %1665 = vrot.lane.b32.xlu0 %v1661, 80
    %v1666 = vpop.permute.xlu0 %1665
    %v1667 = vsel %vm593, %v1664, 0
    %v1669 = vsel %vm593, %v1666, 0
    %1671 = vmatprep.subr.mxu0 0.0
    %1672 = vmatpush1.xpose.msra.mxu0 %v1669
    %1673 = vmatprep.subr.mxu0 0.0
    %1674 = vmatpush1.xpose.msra.mxu0 0.0
    %1675 = vmatprep.subr.mxu0 0.0
    %1676 = vmatpush1.xpose.msra.mxu0 0.0
    %1677 = vmatprep.subr.mxu0 0.0
    %1678 = vmatpush1.xpose.msra.mxu0 0.0
    %1679 = vmatprep.subr.mxu0 0.0
    %1680 = vmatpush1.xpose.msra.mxu0 0.0
    %1681 = vmatprep.subr.mxu0 0.0
    %1682 = vmatpush1.xpose.msra.mxu0 0.0
    %1683 = vmatprep.subr.mxu0 0.0
    %1684 = vmatpush1.xpose.msra.mxu0 0.0
    %1685 = vmatprep.subr.mxu0 0.0
    %1686 = vmatpush1.xpose.msra.mxu0 0.0
    %1687 = vmatprep.subr.mxu0 0.0
    %1688 = vmatpush1.xpose.msra.mxu0 0.0
    %1689 = vmatprep.subr.mxu0 0.0
    %1690 = vmatpush1.xpose.msra.mxu0 0.0
    %1691 = vmatprep.subr.mxu0 0.0
    %1692 = vmatpush1.xpose.msra.mxu0 0.0
    %1693 = vmatprep.subr.mxu0 0.0
    %1694 = vmatpush1.xpose.msra.mxu0 0.0
    %1695 = vmatprep.subr.mxu0 0.0
    %1696 = vmatpush1.xpose.msra.mxu0 0.0
    %1697 = vmatprep.subr.mxu0 0.0
    %1698 = vmatpush1.xpose.msra.mxu0 0.0
    %1699 = vmatprep.subr.mxu0 0.0
    %1700 = vmatpush1.xpose.msra.mxu0 0.0
    %1701 = vmatprep.subr.mxu0 0.0
    %1702 = vmatpush1.xpose.msra.mxu0 0.0
    %1703 = vmatprep.subr.mxu0 0.0
    %1704 = vmatpush1.xpose.msra.mxu0 0.0
    %1705 = vmatprep.subr.mxu0 0.0
    %1706 = vmatpush1.xpose.msra.mxu0 0.0
    %1707 = vmatprep.subr.mxu0 0.0
    %1708 = vmatpush1.xpose.msra.mxu0 0.0
    %1709 = vmatprep.subr.mxu0 0.0
    %1710 = vmatpush1.xpose.msra.mxu0 0.0
    %1711 = vmatprep.subr.mxu0 0.0
    %1712 = vmatpush1.xpose.msra.mxu0 0.0
    %1713 = vmatprep.subr.mxu0 0.0
    %1714 = vmatpush1.xpose.msra.mxu0 0.0
    %1715 = vmatprep.subr.mxu0 0.0
    %1716 = vmatpush1.xpose.msra.mxu0 0.0
    %1717 = vmatprep.subr.mxu0 0.0
    %1718 = vmatpush1.xpose.msra.mxu0 0.0
    %1719 = vmatprep.subr.mxu0 0.0
    %1720 = vmatpush1.xpose.msra.mxu0 0.0
    %1721 = vmatprep.subr.mxu0 0.0
    %1722 = vmatpush1.xpose.msra.mxu0 0.0
    %1723 = vmatprep.subr.mxu0 0.0
    %1724 = vmatpush1.xpose.msra.mxu0 0.0
    %1725 = vmatprep.subr.mxu0 0.0
    %1726 = vmatpush1.xpose.msra.mxu0 0.0
    %1727 = vmatprep.subr.mxu0 0.0
    %1728 = vmatpush1.xpose.msra.mxu0 0.0
    %1729 = vmatprep.subr.mxu0 0.0
    %1730 = vmatpush1.xpose.msra.mxu0 0.0
    %1731 = vmatprep.subr.mxu0 0.0
    %1732 = vmatpush1.xpose.msra.mxu0 0.0
    %1733 = vmatprep.subr.mxu0 0.0
    %1734 = vmatpush1.xpose.msra.mxu0 0.0
    %1735 = vmatprep.mubr.f32.mxu0 0.0
    %1736 = vmatmul.mubr.f32.gmra.mrb[0].mxu0 %v1667
    %v1737 = vpop.f32.mrb[0].mxu0
    %v1738 = vadd.f32 0.0, %v1737
    %v1739 = vpop.f32.mrb[0].mxu0
    %1740 = vdwg.mxu0
    %v1741 = vmul.f32 %v1738, 0.35355338
    %v1742 = vld [vmem:[#allocation4 + $0x8] sm:$0xff]
    %1744 = vrot.lane.b32.xlu0 %v1742, 112
    %v1745 = vpop.permute.xlu0 %1744
    %v1747 = vadd.f32 %v1741, %v1745
    %v1748 = vadd.f32 %v1747, %v1391
    %v1749 = vsel %vm593, %v1748, -inf
    %1750 = vmax.xlane.f32.xlu0 %v1749
    %v1751 = vpop.xlane.xlu0 %1750
    %v1752 = vsub.f32 %v1748, %v1751
    %v1753 = vmul.f32 %v1752, 1.442695
    %v1754 = vpow.pop %v1753
    %v1755 = vsel %vm593, %v1754, 0.0
    %1756 = vadd.xlane.f32.xlu0 %v1755
    %v1757 = vpop.xlane.xlu0 %1756
    %v1758 = vrcp.pop %v1757
    %v1759 = vmul.f32 %v1754, %v1758
    %1760 = vrot.lane.b32.xlu0 %v1661, 48
    %v1761 = vpop.permute.xlu0 %1760
    %v1764 = vsel %vm593, %v1759, 0
    %1766 = vmatprep.subr.mxu0 0.0
    %1767 = vmatpush1.msra.mxu0 %v1761
    %1768 = vmatprep.subr.mxu0 0.0
    %1769 = vmatpush1.msra.mxu0 0.0
    %1770 = vmatprep.subr.mxu0 0.0
    %1771 = vmatpush1.msra.mxu0 0.0
    %1772 = vmatprep.subr.mxu0 0.0
    %1773 = vmatpush1.msra.mxu0 0.0
    %1774 = vmatprep.subr.mxu0 0.0
    %1775 = vmatpush1.msra.mxu0 0.0
    %1776 = vmatprep.subr.mxu0 0.0
    %1777 = vmatpush1.msra.mxu0 0.0
    %1778 = vmatprep.subr.mxu0 0.0
    %1779 = vmatpush1.msra.mxu0 0.0
    %1780 = vmatprep.subr.mxu0 0.0
    %1781 = vmatpush1.msra.mxu0 0.0
    %1782 = vmatprep.subr.mxu0 0.0
    %1783 = vmatpush1.msra.mxu0 0.0
    %1784 = vmatprep.subr.mxu0 0.0
    %1785 = vmatpush1.msra.mxu0 0.0
    %1786 = vmatprep.subr.mxu0 0.0
    %1787 = vmatpush1.msra.mxu0 0.0
    %1788 = vmatprep.subr.mxu0 0.0
    %1789 = vmatpush1.msra.mxu0 0.0
    %1790 = vmatprep.subr.mxu0 0.0
    %1791 = vmatpush1.msra.mxu0 0.0
    %1792 = vmatprep.subr.mxu0 0.0
    %1793 = vmatpush1.msra.mxu0 0.0
    %1794 = vmatprep.subr.mxu0 0.0
    %1795 = vmatpush1.msra.mxu0 0.0
    %1796 = vmatprep.subr.mxu0 0.0
    %1797 = vmatpush1.msra.mxu0 0.0
    %1798 = vmatprep.subr.mxu0 0.0
    %1799 = vmatpush1.msra.mxu0 0.0
    %1800 = vmatprep.subr.mxu0 0.0
    %1801 = vmatpush1.msra.mxu0 0.0
    %1802 = vmatprep.subr.mxu0 0.0
    %1803 = vmatpush1.msra.mxu0 0.0
    %1804 = vmatprep.subr.mxu0 0.0
    %1805 = vmatpush1.msra.mxu0 0.0
    %1806 = vmatprep.subr.mxu0 0.0
    %1807 = vmatpush1.msra.mxu0 0.0
    %1808 = vmatprep.subr.mxu0 0.0
    %1809 = vmatpush1.msra.mxu0 0.0
    %1810 = vmatprep.subr.mxu0 0.0
    %1811 = vmatpush1.msra.mxu0 0.0
    %1812 = vmatprep.subr.mxu0 0.0
    %1813 = vmatpush1.msra.mxu0 0.0
    %1814 = vmatprep.subr.mxu0 0.0
    %1815 = vmatpush1.msra.mxu0 0.0
    %1816 = vmatprep.subr.mxu0 0.0
    %1817 = vmatpush1.msra.mxu0 0.0
    %1818 = vmatprep.subr.mxu0 0.0
    %1819 = vmatpush1.msra.mxu0 0.0
    %1820 = vmatprep.subr.mxu0 0.0
    %1821 = vmatpush1.msra.mxu0 0.0
    %1822 = vmatprep.subr.mxu0 0.0
    %1823 = vmatpush1.msra.mxu0 0.0
    %1824 = vmatprep.subr.mxu0 0.0
    %1825 = vmatpush1.msra.mxu0 0.0
    %1826 = vmatprep.subr.mxu0 0.0
    %1827 = vmatpush1.msra.mxu0 0.0
    %1828 = vmatprep.subr.mxu0 0.0
    %1829 = vmatpush1.msra.mxu0 0.0
    %1830 = vmatprep.mubr.f32.mxu0 0.0
    %1831 = vmatmul.mubr.f32.gmra.mrb[0].mxu0 %v1764
    %v1832 = vpop.f32.mrb[0].mxu0
    %v1833 = vadd.f32 0.0, %v1832
    %v1834 = vpop.f32.mrb[0].mxu0
    %1835 = vdwg.mxu0
    %1837 = vrot.lane.b32.xlu0 %v1833, 16
    %v1838 = vpop.permute.xlu0 %1837
    %1840 = vst.msk [vmem:[#allocation3 + $0x8] sm:$0xff] %vm1124, %v1838
    %v1841 = vld [vmem:[#allocation2 + $0x8] sm:$0xff]
    %1843 = vrot.lane.b32.xlu0 %v1841, 104
    %v1844 = vpop.permute.xlu0 %1843
    %1845 = vrot.lane.b32.xlu0 %v1841, 72
    %v1846 = vpop.permute.xlu0 %1845
    %v1847 = vsel %vm593, %v1844, 0
    %v1849 = vsel %vm593, %v1846, 0
    %1851 = vmatprep.subr.mxu0 0.0
    %1852 = vmatpush1.xpose.msra.mxu0 %v1849
    %1853 = vmatprep.subr.mxu0 0.0
    %1854 = vmatpush1.xpose.msra.mxu0 0.0
    %1855 = vmatprep.subr.mxu0 0.0
    %1856 = vmatpush1.xpose.msra.mxu0 0.0
    %1857 = vmatprep.subr.mxu0 0.0
    %1858 = vmatpush1.xpose.msra.mxu0 0.0
    %1859 = vmatprep.subr.mxu0 0.0
    %1860 = vmatpush1.xpose.msra.mxu0 0.0
    %1861 = vmatprep.subr.mxu0 0.0
    %1862 = vmatpush1.xpose.msra.mxu0 0.0
    %1863 = vmatprep.subr.mxu0 0.0
    %1864 = vmatpush1.xpose.msra.mxu0 0.0
    %1865 = vmatprep.subr.mxu0 0.0
    %1866 = vmatpush1.xpose.msra.mxu0 0.0
    %1867 = vmatprep.subr.mxu0 0.0
    %1868 = vmatpush1.xpose.msra.mxu0 0.0
    %1869 = vmatprep.subr.mxu0 0.0
    %1870 = vmatpush1.xpose.msra.mxu0 0.0
    %1871 = vmatprep.subr.mxu0 0.0
    %1872 = vmatpush1.xpose.msra.mxu0 0.0
    %1873 = vmatprep.subr.mxu0 0.0
    %1874 = vmatpush1.xpose.msra.mxu0 0.0
    %1875 = vmatprep.subr.mxu0 0.0
    %1876 = vmatpush1.xpose.msra.mxu0 0.0
    %1877 = vmatprep.subr.mxu0 0.0
    %1878 = vmatpush1.xpose.msra.mxu0 0.0
    %1879 = vmatprep.subr.mxu0 0.0
    %1880 = vmatpush1.xpose.msra.mxu0 0.0
    %1881 = vmatprep.subr.mxu0 0.0
    %1882 = vmatpush1.xpose.msra.mxu0 0.0
    %1883 = vmatprep.subr.mxu0 0.0
    %1884 = vmatpush1.xpose.msra.mxu0 0.0
    %1885 = vmatprep.subr.mxu0 0.0
    %1886 = vmatpush1.xpose.msra.mxu0 0.0
    %1887 = vmatprep.subr.mxu0 0.0
    %1888 = vmatpush1.xpose.msra.mxu0 0.0
    %1889 = vmatprep.subr.mxu0 0.0
    %1890 = vmatpush1.xpose.msra.mxu0 0.0
    %1891 = vmatprep.subr.mxu0 0.0
    %1892 = vmatpush1.xpose.msra.mxu0 0.0
    %1893 = vmatprep.subr.mxu0 0.0
    %1894 = vmatpush1.xpose.msra.mxu0 0.0
    %1895 = vmatprep.subr.mxu0 0.0
    %1896 = vmatpush1.xpose.msra.mxu0 0.0
    %1897 = vmatprep.subr.mxu0 0.0
    %1898 = vmatpush1.xpose.msra.mxu0 0.0
    %1899 = vmatprep.subr.mxu0 0.0
    %1900 = vmatpush1.xpose.msra.mxu0 0.0
    %1901 = vmatprep.subr.mxu0 0.0
    %1902 = vmatpush1.xpose.msra.mxu0 0.0
    %1903 = vmatprep.subr.mxu0 0.0
    %1904 = vmatpush1.xpose.msra.mxu0 0.0
    %1905 = vmatprep.subr.mxu0 0.0
    %1906 = vmatpush1.xpose.msra.mxu0 0.0
    %1907 = vmatprep.subr.mxu0 0.0
    %1908 = vmatpush1.xpose.msra.mxu0 0.0
    %1909 = vmatprep.subr.mxu0 0.0
    %1910 = vmatpush1.xpose.msra.mxu0 0.0
    %1911 = vmatprep.subr.mxu0 0.0
    %1912 = vmatpush1.xpose.msra.mxu0 0.0
    %1913 = vmatprep.subr.mxu0 0.0
    %1914 = vmatpush1.xpose.msra.mxu0 0.0
    %1915 = vmatprep.mubr.f32.mxu0 0.0
    %1916 = vmatmul.mubr.f32.gmra.mrb[0].mxu0 %v1847
    %v1917 = vpop.f32.mrb[0].mxu0
    %v1918 = vadd.f32 0.0, %v1917
    %v1919 = vpop.f32.mrb[0].mxu0
    %1920 = vdwg.mxu0
    %v1921 = vmul.f32 %v1918, 0.35355338
    %v1922 = vld [vmem:[#allocation4 + $0x8] sm:$0xff]
    %1924 = vrot.lane.b32.xlu0 %v1922, 104
    %v1925 = vpop.permute.xlu0 %1924
    %v1927 = vadd.f32 %v1921, %v1925
    %v1928 = vadd.f32 %v1927, %v1391
    %v1929 = vsel %vm593, %v1928, -inf
    %1930 = vmax.xlane.f32.xlu0 %v1929
    %v1931 = vpop.xlane.xlu0 %1930
    %v1932 = vsub.f32 %v1928, %v1931
    %v1933 = vmul.f32 %v1932, 1.442695
    %v1934 = vpow.pop %v1933
    %v1935 = vsel %vm593, %v1934, 0.0
    %1936 = vadd.xlane.f32.xlu0 %v1935
    %v1937 = vpop.xlane.xlu0 %1936
    %v1938 = vrcp.pop %v1937
    %v1939 = vmul.f32 %v1934, %v1938
    %1940 = vrot.lane.b32.xlu0 %v1841, 40
    %v1941 = vpop.permute.xlu0 %1940
    %v1944 = vsel %vm593, %v1939, 0
    %1946 = vmatprep.subr.mxu0 0.0
    %1947 = vmatpush1.msra.mxu0 %v1941
    %1948 = vmatprep.subr.mxu0 0.0
    %1949 = vmatpush1.msra.mxu0 0.0
    %1950 = vmatprep.subr.mxu0 0.0
    %1951 = vmatpush1.msra.mxu0 0.0
    %1952 = vmatprep.subr.mxu0 0.0
    %1953 = vmatpush1.msra.mxu0 0.0
    %1954 = vmatprep.subr.mxu0 0.0
    %1955 = vmatpush1.msra.mxu0 0.0
    %1956 = vmatprep.subr.mxu0 0.0
    %1957 = vmatpush1.msra.mxu0 0.0
    %1958 = vmatprep.subr.mxu0 0.0
    %1959 = vmatpush1.msra.mxu0 0.0
    %1960 = vmatprep.subr.mxu0 0.0
    %1961 = vmatpush1.msra.mxu0 0.0
    %1962 = vmatprep.subr.mxu0 0.0
    %1963 = vmatpush1.msra.mxu0 0.0
    %1964 = vmatprep.subr.mxu0 0.0
    %1965 = vmatpush1.msra.mxu0 0.0
    %1966 = vmatprep.subr.mxu0 0.0
    %1967 = vmatpush1.msra.mxu0 0.0
    %1968 = vmatprep.subr.mxu0 0.0
    %1969 = vmatpush1.msra.mxu0 0.0
    %1970 = vmatprep.subr.mxu0 0.0
    %1971 = vmatpush1.msra.mxu0 0.0
    %1972 = vmatprep.subr.mxu0 0.0
    %1973 = vmatpush1.msra.mxu0 0.0
    %1974 = vmatprep.subr.mxu0 0.0
    %1975 = vmatpush1.msra.mxu0 0.0
    %1976 = vmatprep.subr.mxu0 0.0
    %1977 = vmatpush1.msra.mxu0 0.0
    %1978 = vmatprep.subr.mxu0 0.0
    %1979 = vmatpush1.msra.mxu0 0.0
    %1980 = vmatprep.subr.mxu0 0.0
    %1981 = vmatpush1.msra.mxu0 0.0
    %1982 = vmatprep.subr.mxu0 0.0
    %1983 = vmatpush1.msra.mxu0 0.0
    %1984 = vmatprep.subr.mxu0 0.0
    %1985 = vmatpush1.msra.mxu0 0.0
    %1986 = vmatprep.subr.mxu0 0.0
    %1987 = vmatpush1.msra.mxu0 0.0
    %1988 = vmatprep.subr.mxu0 0.0
    %1989 = vmatpush1.msra.mxu0 0.0
    %1990 = vmatprep.subr.mxu0 0.0
    %1991 = vmatpush1.msra.mxu0 0.0
    %1992 = vmatprep.subr.mxu0 0.0
    %1993 = vmatpush1.msra.mxu0 0.0
    %1994 = vmatprep.subr.mxu0 0.0
    %1995 = vmatpush1.msra.mxu0 0.0
    %1996 = vmatprep.subr.mxu0 0.0
    %1997 = vmatpush1.msra.mxu0 0.0
    %1998 = vmatprep.subr.mxu0 0.0
    %1999 = vmatpush1.msra.mxu0 0.0
    %2000 = vmatprep.subr.mxu0 0.0
    %2001 = vmatpush1.msra.mxu0 0.0
    %2002 = vmatprep.subr.mxu0 0.0
    %2003 = vmatpush1.msra.mxu0 0.0
    %2004 = vmatprep.subr.mxu0 0.0
    %2005 = vmatpush1.msra.mxu0 0.0
    %2006 = vmatprep.subr.mxu0 0.0
    %2007 = vmatpush1.msra.mxu0 0.0
    %2008 = vmatprep.subr.mxu0 0.0
    %2009 = vmatpush1.msra.mxu0 0.0
    %2010 = vmatprep.mubr.f32.mxu0 0.0
    %2011 = vmatmul.mubr.f32.gmra.mrb[0].mxu0 %v1944
    %v2012 = vpop.f32.mrb[0].mxu0
    %v2013 = vadd.f32 0.0, %v2012
    %v2014 = vpop.f32.mrb[0].mxu0
    %2015 = vdwg.mxu0
    %2017 = vrot.lane.b32.xlu0 %v2013, 24
    %v2018 = vpop.permute.xlu0 %2017
    %2020 = vst.msk [vmem:[#allocation3 + $0x8] sm:$0xff] %vm1305, %v2018
    %v2021 = vld [vmem:[#allocation3] sm:$0xff]
    %v2022 = vld [vmem:[#allocation3 + $0x8] sm:$0xff]
    %v2023 = vld [vmem:[%s7] sm:$0xff]
    %v2024 = vld [vmem:[%s7 + $0x8] sm:$0xff]
    %v2025 = vld [vmem:[%s7 + $0x10] sm:$0xff]
    %v2026 = vld [vmem:[%s7 + $0x18] sm:$0xff]
    %v2028 = vsel %vm74, %v2021, 0
    %v2031 = vsel %vm74, %v2022, 0
    %2033 = vmatprep.subr.mxu0 0.0
    %2034 = vmatpush1.msra.mxu0 %v2023
    %2035 = vmatprep.subr.mxu0 0.0
    %2036 = vmatpush1.msra.mxu0 %v2024
    %2037 = vmatprep.subr.mxu0 0.0
    %2038 = vmatpush1.msra.mxu0 %v2025
    %2039 = vmatprep.subr.mxu0 0.0
    %2040 = vmatpush1.msra.mxu0 %v2026
    %2041 = vmatprep.subr.mxu0 0.0
    %2042 = vmatpush1.msra.mxu0 0.0
    %2043 = vmatprep.subr.mxu0 0.0
    %2044 = vmatpush1.msra.mxu0 0.0
    %2045 = vmatprep.subr.mxu0 0.0
    %2046 = vmatpush1.msra.mxu0 0.0
    %2047 = vmatprep.subr.mxu0 0.0
    %2048 = vmatpush1.msra.mxu0 0.0
    %2049 = vmatprep.subr.mxu0 0.0
    %2050 = vmatpush1.msra.mxu0 0.0
    %2051 = vmatprep.subr.mxu0 0.0
    %2052 = vmatpush1.msra.mxu0 0.0
    %2053 = vmatprep.subr.mxu0 0.0
    %2054 = vmatpush1.msra.mxu0 0.0
    %2055 = vmatprep.subr.mxu0 0.0
    %2056 = vmatpush1.msra.mxu0 0.0
    %2057 = vmatprep.subr.mxu0 0.0
    %2058 = vmatpush1.msra.mxu0 0.0
    %2059 = vmatprep.subr.mxu0 0.0
    %2060 = vmatpush1.msra.mxu0 0.0
    %2061 = vmatprep.subr.mxu0 0.0
    %2062 = vmatpush1.msra.mxu0 0.0
    %2063 = vmatprep.subr.mxu0 0.0
    %2064 = vmatpush1.msra.mxu0 0.0
    %2065 = vmatprep.subr.mxu0 0.0
    %2066 = vmatpush1.msra.mxu0 0.0
    %2067 = vmatprep.subr.mxu0 0.0
    %2068 = vmatpush1.msra.mxu0 0.0
    %2069 = vmatprep.subr.mxu0 0.0
    %2070 = vmatpush1.msra.mxu0 0.0
    %2071 = vmatprep.subr.mxu0 0.0
    %2072 = vmatpush1.msra.mxu0 0.0
    %2073 = vmatprep.subr.mxu0 0.0
    %2074 = vmatpush1.msra.mxu0 0.0
    %2075 = vmatprep.subr.mxu0 0.0
    %2076 = vmatpush1.msra.mxu0 0.0
    %2077 = vmatprep.subr.mxu0 0.0
    %2078 = vmatpush1.msra.mxu0 0.0
    %2079 = vmatprep.subr.mxu0 0.0
    %2080 = vmatpush1.msra.mxu0 0.0
    %2081 = vmatprep.subr.mxu0 0.0
    %2082 = vmatpush1.msra.mxu0 0.0
    %2083 = vmatprep.subr.mxu0 0.0
    %2084 = vmatpush1.msra.mxu0 0.0
    %2085 = vmatprep.subr.mxu0 0.0
    %2086 = vmatpush1.msra.mxu0 0.0
    %2087 = vmatprep.subr.mxu0 0.0
    %2088 = vmatpush1.msra.mxu0 0.0
    %2089 = vmatprep.subr.mxu0 0.0
    %2090 = vmatpush1.msra.mxu0 0.0
    %2091 = vmatprep.subr.mxu0 0.0
    %2092 = vmatpush1.msra.mxu0 0.0
    %2093 = vmatprep.subr.mxu0 0.0
    %2094 = vmatpush1.msra.mxu0 0.0
    %2095 = vmatprep.subr.mxu0 0.0
    %2096 = vmatpush1.msra.mxu0 0.0
    %2097 = vmatprep.mubr.f32.mxu0 0.0
    %2098 = vmatmul.mubr.f32.gmra.mrb[0].mxu0 %v2028
    %v2099 = vpop.f32.mrb[0].mxu0
    %v2100 = vadd.f32 0.0, %v2099
    %v2101 = vpop.f32.mrb[0].mxu0
    %2102 = vmatprep.mubr.f32.mxu0 0.0
    %2103 = vmatmul.mubr.f32.gmra.mrb[0].mxu0 %v2031
    %v2104 = vpop.f32.mrb[0].mxu0
    %v2105 = vadd.f32 0.0, %v2104
    %v2106 = vpop.f32.mrb[0].mxu0
    %2107 = vdwg.mxu0
    %v2108 = vadd.f32 %v454, %v2100
    %v2109 = vadd.f32 %v455, %v2105
    %v2110 = vld [vmem:[%s14 + $0xa] sm:$0x1]
    %v2111 = vlaneseq
    %v2112 = vshrl.u32 %v2111, 7
    %v2113 = vsub.s32 0, %v2112
    %v2114 = vrot.slane %v2110, %v2113
    %v2115 = vadd.f32 %v2108, %v2114
    %v2116 = vadd.f32 %v2109, %v2114
    %v2117 = vld [vmem:[%s14 + $0xb] sm:$0x1]
    %v2118 = vld [vmem:[%s14 + $0xc] sm:$0x1]
    %v2119 = vsel %vm74, %v2115, 0.0
    %2120 = vadd.xlane.f32.xlu0 %v2119
    %v2121 = vpop.xlane.xlu0 %2120
    %v2122 = vsel %vm74, %v2116, 0.0
    %2123 = vadd.xlane.f32.xlu0 %v2122
    %v2124 = vpop.xlane.xlu0 %2123
    %v2125 = vmul.f32 %v2121, %v411
    %v2126 = vmul.f32 %v2124, %v411
    %v2127 = vsub.f32 %v2115, %v2125
    %v2128 = vsub.f32 %v2116, %v2126
    %v2129 = vmul.f32 %v2127, %v2127
    %v2130 = vmul.f32 %v2128, %v2128
    %v2131 = vsel %vm74, %v2129, 0.0
    %2132 = vadd.xlane.f32.xlu0 %v2131
    %v2133 = vpop.xlane.xlu0 %2132
    %v2134 = vsel %vm74, %v2130, 0.0
    %2135 = vadd.xlane.f32.xlu0 %v2134
    %v2136 = vpop.xlane.xlu0 %2135
    %v2137 = vmul.f32 %v2133, %v411
    %v2138 = vmul.f32 %v2136, %v411
    %v2139 = vadd.f32 %v2137, 1e-05
    %v2140 = vadd.f32 %v2138, 1e-05
    %v2141 = vrsqrt.pop %v2139
    %v2142 = vrsqrt.pop %v2140
    %v2143 = vmul.f32 %v2127, %v2141
    %v2144 = vmul.f32 %v2128, %v2142
    %v2145 = vlaneseq
    %v2146 = vshrl.u32 %v2145, 7
    %v2147 = vsub.s32 0, %v2146
    %v2148 = vrot.slane %v2117, %v2147
    %v2149 = vmul.f32 %v2143, %v2148
    %v2150 = vmul.f32 %v2144, %v2148
    %v2151 = vlaneseq
    %v2152 = vshrl.u32 %v2151, 7
    %v2153 = vsub.s32 0, %v2152
    %v2154 = vrot.slane %v2118, %v2153
    %v2155 = vadd.f32 %v2149, %v2154
    %v2156 = vadd.f32 %v2150, %v2154
    %v2157 = vld [vmem:[%s8] sm:$0xff]
    %v2158 = vld [vmem:[%s8 + $0x8] sm:$0xff]
    %v2159 = vld [vmem:[%s8 + $0x10] sm:$0xff]
    %v2160 = vld [vmem:[%s8 + $0x18] sm:$0xff]
    %v2161 = vld [vmem:[%s14 + $0xd] sm:$0x1]
    %v2162 = vlaneseq
    %v2163 = vshrl.u32 %v2162, 7
    %v2164 = vsub.s32 0, %v2163
    %v2165 = vrot.slane %v2161, %v2164
    %v2167 = vsel %vm74, %v2155, 0
    %v2170 = vsel %vm74, %v2156, 0
    %2172 = vmatprep.subr.mxu0 0.0
    %2173 = vmatpush1.msra.mxu0 %v2157
    %2174 = vmatprep.subr.mxu0 0.0
    %2175 = vmatpush1.msra.mxu0 %v2158
    %2176 = vmatprep.subr.mxu0 0.0
    %2177 = vmatpush1.msra.mxu0 %v2159
    %2178 = vmatprep.subr.mxu0 0.0
    %2179 = vmatpush1.msra.mxu0 %v2160
    %2180 = vmatprep.subr.mxu0 0.0
    %2181 = vmatpush1.msra.mxu0 0.0
    %2182 = vmatprep.subr.mxu0 0.0
    %2183 = vmatpush1.msra.mxu0 0.0
    %2184 = vmatprep.subr.mxu0 0.0
    %2185 = vmatpush1.msra.mxu0 0.0
    %2186 = vmatprep.subr.mxu0 0.0
    %2187 = vmatpush1.msra.mxu0 0.0
    %2188 = vmatprep.subr.mxu0 0.0
    %2189 = vmatpush1.msra.mxu0 0.0
    %2190 = vmatprep.subr.mxu0 0.0
    %2191 = vmatpush1.msra.mxu0 0.0
    %2192 = vmatprep.subr.mxu0 0.0
    %2193 = vmatpush1.msra.mxu0 0.0
    %2194 = vmatprep.subr.mxu0 0.0
    %2195 = vmatpush1.msra.mxu0 0.0
    %2196 = vmatprep.subr.mxu0 0.0
    %2197 = vmatpush1.msra.mxu0 0.0
    %2198 = vmatprep.subr.mxu0 0.0
    %2199 = vmatpush1.msra.mxu0 0.0
    %2200 = vmatprep.subr.mxu0 0.0
    %2201 = vmatpush1.msra.mxu0 0.0
    %2202 = vmatprep.subr.mxu0 0.0
    %2203 = vmatpush1.msra.mxu0 0.0
    %2204 = vmatprep.subr.mxu0 0.0
    %2205 = vmatpush1.msra.mxu0 0.0
    %2206 = vmatprep.subr.mxu0 0.0
    %2207 = vmatpush1.msra.mxu0 0.0
    %2208 = vmatprep.subr.mxu0 0.0
    %2209 = vmatpush1.msra.mxu0 0.0
    %2210 = vmatprep.subr.mxu0 0.0
    %2211 = vmatpush1.msra.mxu0 0.0
    %2212 = vmatprep.subr.mxu0 0.0
    %2213 = vmatpush1.msra.mxu0 0.0
    %2214 = vmatprep.subr.mxu0 0.0
    %2215 = vmatpush1.msra.mxu0 0.0
    %2216 = vmatprep.subr.mxu0 0.0
    %2217 = vmatpush1.msra.mxu0 0.0
    %2218 = vmatprep.subr.mxu0 0.0
    %2219 = vmatpush1.msra.mxu0 0.0
    %2220 = vmatprep.subr.mxu0 0.0
    %2221 = vmatpush1.msra.mxu0 0.0
    %2222 = vmatprep.subr.mxu0 0.0
    %2223 = vmatpush1.msra.mxu0 0.0
    %2224 = vmatprep.subr.mxu0 0.0
    %2225 = vmatpush1.msra.mxu0 0.0
    %2226 = vmatprep.subr.mxu0 0.0
    %2227 = vmatpush1.msra.mxu0 0.0
    %2228 = vmatprep.subr.mxu0 0.0
    %2229 = vmatpush1.msra.mxu0 0.0
    %2230 = vmatprep.subr.mxu0 0.0
    %2231 = vmatpush1.msra.mxu0 0.0
    %2232 = vmatprep.subr.mxu0 0.0
    %2233 = vmatpush1.msra.mxu0 0.0
    %2234 = vmatprep.subr.mxu0 0.0
    %2235 = vmatpush1.msra.mxu0 0.0
    %2236 = vmatprep.mubr.f32.mxu0 0.0
    %2237 = vmatmul.mubr.f32.gmra.mrb[0].mxu0 %v2167
    %v2238 = vpop.f32.mrb[0].mxu0
    %v2239 = vadd.f32 %v2165, %v2238
    %v2240 = vpop.f32.mrb[0].mxu0
    %2241 = vmatprep.mubr.f32.mxu0 0.0
    %2242 = vmatmul.mubr.f32.gmra.mrb[0].mxu0 %v2170
    %v2243 = vpop.f32.mrb[0].mxu0
    %v2244 = vadd.f32 %v2165, %v2243
    %v2245 = vpop.f32.mrb[0].mxu0
    %2246 = vdwg.mxu0
    %v2247 = vmul.f32 %v2239, 0.5
    %v2248 = vmul.f32 %v2244, 0.5
    %v2249 = vmul.f32 %v2239, 0.044715
    %v2250 = vmul.f32 %v2244, 0.044715
    %v2251 = vmul.f32 %v2249, %v2239
    %v2252 = vmul.f32 %v2250, %v2244
    %v2253 = vmul.f32 %v2251, %v2239
    %v2254 = vmul.f32 %v2252, %v2244
    %v2255 = vadd.f32 %v2239, %v2253
    %v2256 = vadd.f32 %v2244, %v2254
    %v2257 = vmul.f32 %v2255, 0.7978846
    %v2258 = vmul.f32 %v2256, 0.7978846
    %v2259 = vtanh.pop %v2257
    %v2260 = vtanh.pop %v2258
    %v2261 = vadd.f32 %v2259, 1.0
    %v2262 = vadd.f32 %v2260, 1.0
    %v2263 = vmul.f32 %v2247, %v2261
    %v2264 = vmul.f32 %v2248, %v2262
    %v2265 = vld [vmem:[%s9] sm:$0xff]
    %v2266 = vld [vmem:[%s9 + $0x8] sm:$0xff]
    %v2267 = vld [vmem:[%s9 + $0x10] sm:$0xff]
    %v2268 = vld [vmem:[%s9 + $0x18] sm:$0xff]
    %v2269 = vld [vmem:[%s9 + $0x20] sm:$0xff]
    %v2270 = vld [vmem:[%s9 + $0x28] sm:$0xff]
    %v2271 = vld [vmem:[%s9 + $0x30] sm:$0xff]
    %v2272 = vld [vmem:[%s9 + $0x38] sm:$0xff]
    %vm2273 = vcmask 523264
    %v2275 = vsel %vm2273, %v2263, 0
    %v2278 = vsel %vm2273, %v2264, 0
    %2280 = vmatprep.subr.mxu0 0.0
    %2281 = vmatpush1.msra.mxu0 %v2265
    %2282 = vmatprep.subr.mxu0 0.0
    %2283 = vmatpush1.msra.mxu0 %v2266
    %2284 = vmatprep.subr.mxu0 0.0
    %2285 = vmatpush1.msra.mxu0 %v2267
    %2286 = vmatprep.subr.mxu0 0.0
    %2287 = vmatpush1.msra.mxu0 %v2268
    %2288 = vmatprep.subr.mxu0 0.0
    %2289 = vmatpush1.msra.mxu0 %v2269
    %2290 = vmatprep.subr.mxu0 0.0
    %2291 = vmatpush1.msra.mxu0 %v2270
    %2292 = vmatprep.subr.mxu0 0.0
    %2293 = vmatpush1.msra.mxu0 %v2271
    %2294 = vmatprep.subr.mxu0 0.0
    %2295 = vmatpush1.msra.mxu0 %v2272
    %2296 = vmatprep.subr.mxu0 0.0
    %2297 = vmatpush1.msra.mxu0 0.0
    %2298 = vmatprep.subr.mxu0 0.0
    %2299 = vmatpush1.msra.mxu0 0.0
    %2300 = vmatprep.subr.mxu0 0.0
    %2301 = vmatpush1.msra.mxu0 0.0
    %2302 = vmatprep.subr.mxu0 0.0
    %2303 = vmatpush1.msra.mxu0 0.0
    %2304 = vmatprep.subr.mxu0 0.0
    %2305 = vmatpush1.msra.mxu0 0.0
    %2306 = vmatprep.subr.mxu0 0.0
    %2307 = vmatpush1.msra.mxu0 0.0
    %2308 = vmatprep.subr.mxu0 0.0
    %2309 = vmatpush1.msra.mxu0 0.0
    %2310 = vmatprep.subr.mxu0 0.0
    %2311 = vmatpush1.msra.mxu0 0.0
    %2312 = vmatprep.subr.mxu0 0.0
    %2313 = vmatpush1.msra.mxu0 0.0
    %2314 = vmatprep.subr.mxu0 0.0
    %2315 = vmatpush1.msra.mxu0 0.0
    %2316 = vmatprep.subr.mxu0 0.0
    %2317 = vmatpush1.msra.mxu0 0.0
    %2318 = vmatprep.subr.mxu0 0.0
    %2319 = vmatpush1.msra.mxu0 0.0
    %2320 = vmatprep.subr.mxu0 0.0
    %2321 = vmatpush1.msra.mxu0 0.0
    %2322 = vmatprep.subr.mxu0 0.0
    %2323 = vmatpush1.msra.mxu0 0.0
    %2324 = vmatprep.subr.mxu0 0.0
    %2325 = vmatpush1.msra.mxu0 0.0
    %2326 = vmatprep.subr.mxu0 0.0
    %2327 = vmatpush1.msra.mxu0 0.0
    %2328 = vmatprep.subr.mxu0 0.0
    %2329 = vmatpush1.msra.mxu0 0.0
    %2330 = vmatprep.subr.mxu0 0.0
    %2331 = vmatpush1.msra.mxu0 0.0
    %2332 = vmatprep.subr.mxu0 0.0
    %2333 = vmatpush1.msra.mxu0 0.0
    %2334 = vmatprep.subr.mxu0 0.0
    %2335 = vmatpush1.msra.mxu0 0.0
    %2336 = vmatprep.subr.mxu0 0.0
    %2337 = vmatpush1.msra.mxu0 0.0
    %2338 = vmatprep.subr.mxu0 0.0
    %2339 = vmatpush1.msra.mxu0 0.0
    %2340 = vmatprep.subr.mxu0 0.0
    %2341 = vmatpush1.msra.mxu0 0.0
    %2342 = vmatprep.subr.mxu0 0.0
    %2343 = vmatpush1.msra.mxu0 0.0
    %2344 = vmatprep.mubr.f32.mxu0 0.0
    %2345 = vmatmul.mubr.f32.gmra.mrb[0].mxu0 %v2275
    %v2346 = vpop.f32.mrb[0].mxu0
    %v2347 = vadd.f32 0.0, %v2346
    %v2348 = vpop.f32.mrb[0].mxu0
    %2349 = vmatprep.mubr.f32.mxu0 0.0
    %2350 = vmatmul.mubr.f32.gmra.mrb[0].mxu0 %v2278
    %v2351 = vpop.f32.mrb[0].mxu0
    %v2352 = vadd.f32 0.0, %v2351
    %v2353 = vpop.f32.mrb[0].mxu0
    %2354 = vdwg.mxu0
    %v2355 = vadd.f32 %v2115, %v2347
    %v2356 = vadd.f32 %v2116, %v2352
    %v2357 = vld [vmem:[%s14 + $0xe] sm:$0x1]
    %v2358 = vlaneseq
    %v2359 = vshrl.u32 %v2358, 7
    %v2360 = vsub.s32 0, %v2359
    %v2361 = vrot.slane %v2357, %v2360
    %v2362 = vadd.f32 %v2355, %v2361
    %v2363 = vadd.f32 %v2356, %v2361
    %v2364 = vld [vmem:[%s14 + $0xf] sm:$0x1]
    %v2365 = vld [vmem:[%s14 + $0x10] sm:$0x1]
    %v2366 = vsel %vm74, %v2362, 0.0
    %2367 = vadd.xlane.f32.xlu0 %v2366
    %v2368 = vpop.xlane.xlu0 %2367
    %v2369 = vsel %vm74, %v2363, 0.0
    %2370 = vadd.xlane.f32.xlu0 %v2369
    %v2371 = vpop.xlane.xlu0 %2370
    %v2372 = vmul.f32 %v2368, %v411
    %v2373 = vmul.f32 %v2371, %v411
    %v2374 = vsub.f32 %v2362, %v2372
    %v2375 = vsub.f32 %v2363, %v2373
    %v2376 = vmul.f32 %v2374, %v2374
    %v2377 = vmul.f32 %v2375, %v2375
    %v2378 = vsel %vm74, %v2376, 0.0
    %2379 = vadd.xlane.f32.xlu0 %v2378
    %v2380 = vpop.xlane.xlu0 %2379
    %v2381 = vsel %vm74, %v2377, 0.0
    %2382 = vadd.xlane.f32.xlu0 %v2381
    %v2383 = vpop.xlane.xlu0 %2382
    %v2384 = vmul.f32 %v2380, %v411
    %v2385 = vmul.f32 %v2383, %v411
    %v2386 = vadd.f32 %v2384, 1e-05
    %v2387 = vadd.f32 %v2385, 1e-05
    %v2388 = vrsqrt.pop %v2386
    %v2389 = vrsqrt.pop %v2387
    %v2390 = vmul.f32 %v2374, %v2388
    %v2391 = vmul.f32 %v2375, %v2389
    %v2392 = vlaneseq
    %v2393 = vshrl.u32 %v2392, 7
    %v2394 = vsub.s32 0, %v2393
    %v2395 = vrot.slane %v2364, %v2394
    %v2396 = vmul.f32 %v2390, %v2395
    %v2397 = vmul.f32 %v2391, %v2395
    %v2398 = vlaneseq
    %v2399 = vshrl.u32 %v2398, 7
    %v2400 = vsub.s32 0, %v2399
    %v2401 = vrot.slane %v2365, %v2400
    %v2402 = vadd.f32 %v2396, %v2401
    %v2403 = vadd.f32 %v2397, %v2401
    %s2404 = scalar_lea.vmem %s6, 32
    %v2405 = vld [vmem:[%s2404] sm:$0xff]
    %v2406 = vld [vmem:[%s2404 + $0x8] sm:$0xff]
    %v2407 = vld [vmem:[%s2404 + $0x10] sm:$0xff]
    %v2408 = vld [vmem:[%s2404 + $0x18] sm:$0xff]
    %v2409 = vld [vmem:[%s14 + $0x11] sm:$0x1]
    %v2410 = vlaneseq
    %v2411 = vshrl.u32 %v2410, 7
    %v2412 = vsub.s32 0, %v2411
    %v2413 = vrot.slane %v2409, %v2412
    %v2415 = vsel %vm74, %v2402, 0
    %v2418 = vsel %vm74, %v2403, 0
    %2420 = vmatprep.subr.mxu0 0.0
    %2421 = vmatpush1.msra.mxu0 %v2405
    %2422 = vmatprep.subr.mxu0 0.0
    %2423 = vmatpush1.msra.mxu0 %v2406
    %2424 = vmatprep.subr.mxu0 0.0
    %2425 = vmatpush1.msra.mxu0 %v2407
    %2426 = vmatprep.subr.mxu0 0.0
    %2427 = vmatpush1.msra.mxu0 %v2408
    %2428 = vmatprep.subr.mxu0 0.0
    %2429 = vmatpush1.msra.mxu0 0.0
    %2430 = vmatprep.subr.mxu0 0.0
    %2431 = vmatpush1.msra.mxu0 0.0
    %2432 = vmatprep.subr.mxu0 0.0
    %2433 = vmatpush1.msra.mxu0 0.0
    %2434 = vmatprep.subr.mxu0 0.0
    %2435 = vmatpush1.msra.mxu0 0.0
    %2436 = vmatprep.subr.mxu0 0.0
    %2437 = vmatpush1.msra.mxu0 0.0
    %2438 = vmatprep.subr.mxu0 0.0
    %2439 = vmatpush1.msra.mxu0 0.0
    %2440 = vmatprep.subr.mxu0 0.0
    %2441 = vmatpush1.msra.mxu0 0.0
    %2442 = vmatprep.subr.mxu0 0.0
    %2443 = vmatpush1.msra.mxu0 0.0
    %2444 = vmatprep.subr.mxu0 0.0
    %2445 = vmatpush1.msra.mxu0 0.0
    %2446 = vmatprep.subr.mxu0 0.0
    %2447 = vmatpush1.msra.mxu0 0.0
    %2448 = vmatprep.subr.mxu0 0.0
    %2449 = vmatpush1.msra.mxu0 0.0
    %2450 = vmatprep.subr.mxu0 0.0
    %2451 = vmatpush1.msra.mxu0 0.0
    %2452 = vmatprep.subr.mxu0 0.0
    %2453 = vmatpush1.msra.mxu0 0.0
    %2454 = vmatprep.subr.mxu0 0.0
    %2455 = vmatpush1.msra.mxu0 0.0
    %2456 = vmatprep.subr.mxu0 0.0
    %2457 = vmatpush1.msra.mxu0 0.0
    %2458 = vmatprep.subr.mxu0 0.0
    %2459 = vmatpush1.msra.mxu0 0.0
    %2460 = vmatprep.subr.mxu0 0.0
    %2461 = vmatpush1.msra.mxu0 0.0
    %2462 = vmatprep.subr.mxu0 0.0
    %2463 = vmatpush1.msra.mxu0 0.0
    %2464 = vmatprep.subr.mxu0 0.0
    %2465 = vmatpush1.msra.mxu0 0.0
    %2466 = vmatprep.subr.mxu0 0.0
    %2467 = vmatpush1.msra.mxu0 0.0
    %2468 = vmatprep.subr.mxu0 0.0
    %2469 = vmatpush1.msra.mxu0 0.0
    %2470 = vmatprep.subr.mxu0 0.0
    %2471 = vmatpush1.msra.mxu0 0.0
    %2472 = vmatprep.subr.mxu0 0.0
    %2473 = vmatpush1.msra.mxu0 0.0
    %2474 = vmatprep.subr.mxu0 0.0
    %2475 = vmatpush1.msra.mxu0 0.0
    %2476 = vmatprep.subr.mxu0 0.0
    %2477 = vmatpush1.msra.mxu0 0.0
    %2478 = vmatprep.subr.mxu0 0.0
    %2479 = vmatpush1.msra.mxu0 0.0
    %2480 = vmatprep.subr.mxu0 0.0
    %2481 = vmatpush1.msra.mxu0 0.0
    %2482 = vmatprep.subr.mxu0 0.0
    %2483 = vmatpush1.msra.mxu0 0.0
    %2484 = vmatprep.mubr.f32.mxu0 0.0
    %2485 = vmatmul.mubr.f32.gmra.mrb[0].mxu0 %v2415
    %v2486 = vpop.f32.mrb[0].mxu0
    %v2487 = vadd.f32 %v2413, %v2486
    %v2488 = vpop.f32.mrb[0].mxu0
    %2489 = vmatprep.mubr.f32.mxu0 0.0
    %2490 = vmatmul.mubr.f32.gmra.mrb[0].mxu0 %v2418
    %v2491 = vpop.f32.mrb[0].mxu0
    %v2492 = vadd.f32 %v2413, %v2491
    %v2493 = vpop.f32.mrb[0].mxu0
    %2494 = vdwg.mxu0
    %2495 = vst.msk [vmem:[#allocation2] sm:$0xff] %vm586, %v2487
    %2496 = vst.msk [vmem:[#allocation2 + $0x8] sm:$0xff] %vm586, %v2492
    %v2497 = vld [vmem:[#allocation2] sm:$0xff]
    %2499 = vrot.lane.b32.xlu0 %v2497, 96
    %v2500 = vpop.permute.xlu0 %2499
    %v2501 = vsel %vm593, %v2497, 0
    %v2503 = vsel %vm593, %v2500, 0
    %2505 = vmatprep.subr.mxu0 0.0
    %2506 = vmatpush1.xpose.msra.mxu0 %v2503
    %2507 = vmatprep.subr.mxu0 0.0
    %2508 = vmatpush1.xpose.msra.mxu0 0.0
    %2509 = vmatprep.subr.mxu0 0.0
    %2510 = vmatpush1.xpose.msra.mxu0 0.0
    %2511 = vmatprep.subr.mxu0 0.0
    %2512 = vmatpush1.xpose.msra.mxu0 0.0
    %2513 = vmatprep.subr.mxu0 0.0
    %2514 = vmatpush1.xpose.msra.mxu0 0.0
    %2515 = vmatprep.subr.mxu0 0.0
    %2516 = vmatpush1.xpose.msra.mxu0 0.0
    %2517 = vmatprep.subr.mxu0 0.0
    %2518 = vmatpush1.xpose.msra.mxu0 0.0
    %2519 = vmatprep.subr.mxu0 0.0
    %2520 = vmatpush1.xpose.msra.mxu0 0.0
    %2521 = vmatprep.subr.mxu0 0.0
    %2522 = vmatpush1.xpose.msra.mxu0 0.0
    %2523 = vmatprep.subr.mxu0 0.0
    %2524 = vmatpush1.xpose.msra.mxu0 0.0
    %2525 = vmatprep.subr.mxu0 0.0
    %2526 = vmatpush1.xpose.msra.mxu0 0.0
    %2527 = vmatprep.subr.mxu0 0.0
    %2528 = vmatpush1.xpose.msra.mxu0 0.0
    %2529 = vmatprep.subr.mxu0 0.0
    %2530 = vmatpush1.xpose.msra.mxu0 0.0
    %2531 = vmatprep.subr.mxu0 0.0
    %2532 = vmatpush1.xpose.msra.mxu0 0.0
    %2533 = vmatprep.subr.mxu0 0.0
    %2534 = vmatpush1.xpose.msra.mxu0 0.0
    %2535 = vmatprep.subr.mxu0 0.0
    %2536 = vmatpush1.xpose.msra.mxu0 0.0
    %2537 = vmatprep.subr.mxu0 0.0
    %2538 = vmatpush1.xpose.msra.mxu0 0.0
    %2539 = vmatprep.subr.mxu0 0.0
    %2540 = vmatpush1.xpose.msra.mxu0 0.0
    %2541 = vmatprep.subr.mxu0 0.0
    %2542 = vmatpush1.xpose.msra.mxu0 0.0
    %2543 = vmatprep.subr.mxu0 0.0
    %2544 = vmatpush1.xpose.msra.mxu0 0.0
    %2545 = vmatprep.subr.mxu0 0.0
    %2546 = vmatpush1.xpose.msra.mxu0 0.0
    %2547 = vmatprep.subr.mxu0 0.0
    %2548 = vmatpush1.xpose.msra.mxu0 0.0
    %2549 = vmatprep.subr.mxu0 0.0
    %2550 = vmatpush1.xpose.msra.mxu0 0.0
    %2551 = vmatprep.subr.mxu0 0.0
    %2552 = vmatpush1.xpose.msra.mxu0 0.0
    %2553 = vmatprep.subr.mxu0 0.0
    %2554 = vmatpush1.xpose.msra.mxu0 0.0
    %2555 = vmatprep.subr.mxu0 0.0
    %2556 = vmatpush1.xpose.msra.mxu0 0.0
    %2557 = vmatprep.subr.mxu0 0.0
    %2558 = vmatpush1.xpose.msra.mxu0 0.0
    %2559 = vmatprep.subr.mxu0 0.0
    %2560 = vmatpush1.xpose.msra.mxu0 0.0
    %2561 = vmatprep.subr.mxu0 0.0
    %2562 = vmatpush1.xpose.msra.mxu0 0.0
    %2563 = vmatprep.subr.mxu0 0.0
    %2564 = vmatpush1.xpose.msra.mxu0 0.0
    %2565 = vmatprep.subr.mxu0 0.0
    %2566 = vmatpush1.xpose.msra.mxu0 0.0
    %2567 = vmatprep.subr.mxu0 0.0
    %2568 = vmatpush1.xpose.msra.mxu0 0.0
    %2569 = vmatprep.mubr.f32.mxu0 0.0
    %2570 = vmatmul.mubr.f32.gmra.mrb[0].mxu0 %v2501
    %v2571 = vpop.f32.mrb[0].mxu0
    %v2572 = vadd.f32 0.0, %v2571
    %v2573 = vpop.f32.mrb[0].mxu0
    %2574 = vdwg.mxu0
    %v2575 = vmul.f32 %v2572, 0.35355338
    %v2576 = vld [vmem:[#allocation4] sm:$0xff]
    %v2577 = vadd.f32 %v2575, %v2576
    %v2578 = vadd.f32 %v2577, %v674
    %v2579 = vsel %vm593, %v2578, -inf
    %2580 = vmax.xlane.f32.xlu0 %v2579
    %v2581 = vpop.xlane.xlu0 %2580
    %v2582 = vsub.f32 %v2578, %v2581
    %v2583 = vmul.f32 %v2582, 1.442695
    %v2584 = vpow.pop %v2583
    %v2585 = vsel %vm593, %v2584, 0.0
    %2586 = vadd.xlane.f32.xlu0 %v2585
    %v2587 = vpop.xlane.xlu0 %2586
    %v2588 = vrcp.pop %v2587
    %v2589 = vmul.f32 %v2584, %v2588
    %2590 = vrot.lane.b32.xlu0 %v2497, 64
    %v2591 = vpop.permute.xlu0 %2590
    %v2594 = vsel %vm593, %v2589, 0
    %2596 = vmatprep.subr.mxu0 0.0
    %2597 = vmatpush1.msra.mxu0 %v2591
    %2598 = vmatprep.subr.mxu0 0.0
    %2599 = vmatpush1.msra.mxu0 0.0
    %2600 = vmatprep.subr.mxu0 0.0
    %2601 = vmatpush1.msra.mxu0 0.0
    %2602 = vmatprep.subr.mxu0 0.0
    %2603 = vmatpush1.msra.mxu0 0.0
    %2604 = vmatprep.subr.mxu0 0.0
    %2605 = vmatpush1.msra.mxu0 0.0
    %2606 = vmatprep.subr.mxu0 0.0
    %2607 = vmatpush1.msra.mxu0 0.0
    %2608 = vmatprep.subr.mxu0 0.0
    %2609 = vmatpush1.msra.mxu0 0.0
    %2610 = vmatprep.subr.mxu0 0.0
    %2611 = vmatpush1.msra.mxu0 0.0
    %2612 = vmatprep.subr.mxu0 0.0
    %2613 = vmatpush1.msra.mxu0 0.0
    %2614 = vmatprep.subr.mxu0 0.0
    %2615 = vmatpush1.msra.mxu0 0.0
    %2616 = vmatprep.subr.mxu0 0.0
    %2617 = vmatpush1.msra.mxu0 0.0
    %2618 = vmatprep.subr.mxu0 0.0
    %2619 = vmatpush1.msra.mxu0 0.0
    %2620 = vmatprep.subr.mxu0 0.0
    %2621 = vmatpush1.msra.mxu0 0.0
    %2622 = vmatprep.subr.mxu0 0.0
    %2623 = vmatpush1.msra.mxu0 0.0
    %2624 = vmatprep.subr.mxu0 0.0
    %2625 = vmatpush1.msra.mxu0 0.0
    %2626 = vmatprep.subr.mxu0 0.0
    %2627 = vmatpush1.msra.mxu0 0.0
    %2628 = vmatprep.subr.mxu0 0.0
    %2629 = vmatpush1.msra.mxu0 0.0
    %2630 = vmatprep.subr.mxu0 0.0
    %2631 = vmatpush1.msra.mxu0 0.0
    %2632 = vmatprep.subr.mxu0 0.0
    %2633 = vmatpush1.msra.mxu0 0.0
    %2634 = vmatprep.subr.mxu0 0.0
    %2635 = vmatpush1.msra.mxu0 0.0
    %2636 = vmatprep.subr.mxu0 0.0
    %2637 = vmatpush1.msra.mxu0 0.0
    %2638 = vmatprep.subr.mxu0 0.0
    %2639 = vmatpush1.msra.mxu0 0.0
    %2640 = vmatprep.subr.mxu0 0.0
    %2641 = vmatpush1.msra.mxu0 0.0
    %2642 = vmatprep.subr.mxu0 0.0
    %2643 = vmatpush1.msra.mxu0 0.0
    %2644 = vmatprep.subr.mxu0 0.0
    %2645 = vmatpush1.msra.mxu0 0.0
    %2646 = vmatprep.subr.mxu0 0.0
    %2647 = vmatpush1.msra.mxu0 0.0
    %2648 = vmatprep.subr.mxu0 0.0
    %2649 = vmatpush1.msra.mxu0 0.0
    %2650 = vmatprep.subr.mxu0 0.0
    %2651 = vmatpush1.msra.mxu0 0.0
    %2652 = vmatprep.subr.mxu0 0.0
    %2653 = vmatpush1.msra.mxu0 0.0
    %2654 = vmatprep.subr.mxu0 0.0
    %2655 = vmatpush1.msra.mxu0 0.0
    %2656 = vmatprep.subr.mxu0 0.0
    %2657 = vmatpush1.msra.mxu0 0.0
    %2658 = vmatprep.subr.mxu0 0.0
    %2659 = vmatpush1.msra.mxu0 0.0
    %2660 = vmatprep.mubr.f32.mxu0 0.0
    %2661 = vmatmul.mubr.f32.gmra.mrb[0].mxu0 %v2594
    %v2662 = vpop.f32.mrb[0].mxu0
    %v2663 = vadd.f32 0.0, %v2662
    %v2664 = vpop.f32.mrb[0].mxu0
    %2665 = vdwg.mxu0
    %2666 = vst.msk [vmem:[#allocation3] sm:$0xff] %vm593, %v2663
    %v2667 = vld [vmem:[#allocation2] sm:$0xff]
    %2669 = vrot.lane.b32.xlu0 %v2667, 120
    %v2670 = vpop.permute.xlu0 %2669
    %2671 = vrot.lane.b32.xlu0 %v2667, 88
    %v2672 = vpop.permute.xlu0 %2671
    %v2673 = vsel %vm593, %v2670, 0
    %v2675 = vsel %vm593, %v2672, 0
    %2677 = vmatprep.subr.mxu0 0.0
    %2678 = vmatpush1.xpose.msra.mxu0 %v2675
    %2679 = vmatprep.subr.mxu0 0.0
    %2680 = vmatpush1.xpose.msra.mxu0 0.0
    %2681 = vmatprep.subr.mxu0 0.0
    %2682 = vmatpush1.xpose.msra.mxu0 0.0
    %2683 = vmatprep.subr.mxu0 0.0
    %2684 = vmatpush1.xpose.msra.mxu0 0.0
    %2685 = vmatprep.subr.mxu0 0.0
    %2686 = vmatpush1.xpose.msra.mxu0 0.0
    %2687 = vmatprep.subr.mxu0 0.0
    %2688 = vmatpush1.xpose.msra.mxu0 0.0
    %2689 = vmatprep.subr.mxu0 0.0
    %2690 = vmatpush1.xpose.msra.mxu0 0.0
    %2691 = vmatprep.subr.mxu0 0.0
    %2692 = vmatpush1.xpose.msra.mxu0 0.0
    %2693 = vmatprep.subr.mxu0 0.0
    %2694 = vmatpush1.xpose.msra.mxu0 0.0
    %2695 = vmatprep.subr.mxu0 0.0
    %2696 = vmatpush1.xpose.msra.mxu0 0.0
    %2697 = vmatprep.subr.mxu0 0.0
    %2698 = vmatpush1.xpose.msra.mxu0 0.0
    %2699 = vmatprep.subr.mxu0 0.0
    %2700 = vmatpush1.xpose.msra.mxu0 0.0
    %2701 = vmatprep.subr.mxu0 0.0
    %2702 = vmatpush1.xpose.msra.mxu0 0.0
    %2703 = vmatprep.subr.mxu0 0.0
    %2704 = vmatpush1.xpose.msra.mxu0 0.0
    %2705 = vmatprep.subr.mxu0 0.0
    %2706 = vmatpush1.xpose.msra.mxu0 0.0
    %2707 = vmatprep.subr.mxu0 0.0
    %2708 = vmatpush1.xpose.msra.mxu0 0.0
    %2709 = vmatprep.subr.mxu0 0.0
    %2710 = vmatpush1.xpose.msra.mxu0 0.0
    %2711 = vmatprep.subr.mxu0 0.0
    %2712 = vmatpush1.xpose.msra.mxu0 0.0
    %2713 = vmatprep.subr.mxu0 0.0
    %2714 = vmatpush1.xpose.msra.mxu0 0.0
    %2715 = vmatprep.subr.mxu0 0.0
    %2716 = vmatpush1.xpose.msra.mxu0 0.0
    %2717 = vmatprep.subr.mxu0 0.0
    %2718 = vmatpush1.xpose.msra.mxu0 0.0
    %2719 = vmatprep.subr.mxu0 0.0
    %2720 = vmatpush1.xpose.msra.mxu0 0.0
    %2721 = vmatprep.subr.mxu0 0.0
    %2722 = vmatpush1.xpose.msra.mxu0 0.0
    %2723 = vmatprep.subr.mxu0 0.0
    %2724 = vmatpush1.xpose.msra.mxu0 0.0
    %2725 = vmatprep.subr.mxu0 0.0
    %2726 = vmatpush1.xpose.msra.mxu0 0.0
    %2727 = vmatprep.subr.mxu0 0.0
    %2728 = vmatpush1.xpose.msra.mxu0 0.0
    %2729 = vmatprep.subr.mxu0 0.0
    %2730 = vmatpush1.xpose.msra.mxu0 0.0
    %2731 = vmatprep.subr.mxu0 0.0
    %2732 = vmatpush1.xpose.msra.mxu0 0.0
    %2733 = vmatprep.subr.mxu0 0.0
    %2734 = vmatpush1.xpose.msra.mxu0 0.0
    %2735 = vmatprep.subr.mxu0 0.0
    %2736 = vmatpush1.xpose.msra.mxu0 0.0
    %2737 = vmatprep.subr.mxu0 0.0
    %2738 = vmatpush1.xpose.msra.mxu0 0.0
    %2739 = vmatprep.subr.mxu0 0.0
    %2740 = vmatpush1.xpose.msra.mxu0 0.0
    %2741 = vmatprep.mubr.f32.mxu0 0.0
    %2742 = vmatmul.mubr.f32.gmra.mrb[0].mxu0 %v2673
    %v2743 = vpop.f32.mrb[0].mxu0
    %v2744 = vadd.f32 0.0, %v2743
    %v2745 = vpop.f32.mrb[0].mxu0
    %2746 = vdwg.mxu0
    %v2747 = vmul.f32 %v2744, 0.35355338
    %v2748 = vld [vmem:[#allocation4] sm:$0xff]
    %2750 = vrot.lane.b32.xlu0 %v2748, 120
    %v2751 = vpop.permute.xlu0 %2750
    %v2753 = vadd.f32 %v2747, %v2751
    %v2754 = vadd.f32 %v2753, %v674
    %v2755 = vsel %vm593, %v2754, -inf
    %2756 = vmax.xlane.f32.xlu0 %v2755
    %v2757 = vpop.xlane.xlu0 %2756
    %v2758 = vsub.f32 %v2754, %v2757
    %v2759 = vmul.f32 %v2758, 1.442695
    %v2760 = vpow.pop %v2759
    %v2761 = vsel %vm593, %v2760, 0.0
    %2762 = vadd.xlane.f32.xlu0 %v2761
    %v2763 = vpop.xlane.xlu0 %2762
    %v2764 = vrcp.pop %v2763
    %v2765 = vmul.f32 %v2760, %v2764
    %2766 = vrot.lane.b32.xlu0 %v2667, 56
    %v2767 = vpop.permute.xlu0 %2766
    %v2770 = vsel %vm593, %v2765, 0
    %2772 = vmatprep.subr.mxu0 0.0
    %2773 = vmatpush1.msra.mxu0 %v2767
    %2774 = vmatprep.subr.mxu0 0.0
    %2775 = vmatpush1.msra.mxu0 0.0
    %2776 = vmatprep.subr.mxu0 0.0
    %2777 = vmatpush1.msra.mxu0 0.0
    %2778 = vmatprep.subr.mxu0 0.0
    %2779 = vmatpush1.msra.mxu0 0.0
    %2780 = vmatprep.subr.mxu0 0.0
    %2781 = vmatpush1.msra.mxu0 0.0
    %2782 = vmatprep.subr.mxu0 0.0
    %2783 = vmatpush1.msra.mxu0 0.0
    %2784 = vmatprep.subr.mxu0 0.0
    %2785 = vmatpush1.msra.mxu0 0.0
    %2786 = vmatprep.subr.mxu0 0.0
    %2787 = vmatpush1.msra.mxu0 0.0
    %2788 = vmatprep.subr.mxu0 0.0
    %2789 = vmatpush1.msra.mxu0 0.0
    %2790 = vmatprep.subr.mxu0 0.0
    %2791 = vmatpush1.msra.mxu0 0.0
    %2792 = vmatprep.subr.mxu0 0.0
    %2793 = vmatpush1.msra.mxu0 0.0
    %2794 = vmatprep.subr.mxu0 0.0
    %2795 = vmatpush1.msra.mxu0 0.0
    %2796 = vmatprep.subr.mxu0 0.0
    %2797 = vmatpush1.msra.mxu0 0.0
    %2798 = vmatprep.subr.mxu0 0.0
    %2799 = vmatpush1.msra.mxu0 0.0
    %2800 = vmatprep.subr.mxu0 0.0
    %2801 = vmatpush1.msra.mxu0 0.0
    %2802 = vmatprep.subr.mxu0 0.0
    %2803 = vmatpush1.msra.mxu0 0.0
    %2804 = vmatprep.subr.mxu0 0.0
    %2805 = vmatpush1.msra.mxu0 0.0
    %2806 = vmatprep.subr.mxu0 0.0
    %2807 = vmatpush1.msra.mxu0 0.0
    %2808 = vmatprep.subr.mxu0 0.0
    %2809 = vmatpush1.msra.mxu0 0.0
    %2810 = vmatprep.subr.mxu0 0.0
    %2811 = vmatpush1.msra.mxu0 0.0
    %2812 = vmatprep.subr.mxu0 0.0
    %2813 = vmatpush1.msra.mxu0 0.0
    %2814 = vmatprep.subr.mxu0 0.0
    %2815 = vmatpush1.msra.mxu0 0.0
    %2816 = vmatprep.subr.mxu0 0.0
    %2817 = vmatpush1.msra.mxu0 0.0
    %2818 = vmatprep.subr.mxu0 0.0
    %2819 = vmatpush1.msra.mxu0 0.0
    %2820 = vmatprep.subr.mxu0 0.0
    %2821 = vmatpush1.msra.mxu0 0.0
    %2822 = vmatprep.subr.mxu0 0.0
    %2823 = vmatpush1.msra.mxu0 0.0
    %2824 = vmatprep.subr.mxu0 0.0
    %2825 = vmatpush1.msra.mxu0 0.0
    %2826 = vmatprep.subr.mxu0 0.0
    %2827 = vmatpush1.msra.mxu0 0.0
    %2828 = vmatprep.subr.mxu0 0.0
    %2829 = vmatpush1.msra.mxu0 0.0
    %2830 = vmatprep.subr.mxu0 0.0
    %2831 = vmatpush1.msra.mxu0 0.0
    %2832 = vmatprep.subr.mxu0 0.0
    %2833 = vmatpush1.msra.mxu0 0.0
    %2834 = vmatprep.subr.mxu0 0.0
    %2835 = vmatpush1.msra.mxu0 0.0
    %2836 = vmatprep.mubr.f32.mxu0 0.0
    %2837 = vmatmul.mubr.f32.gmra.mrb[0].mxu0 %v2770
    %v2838 = vpop.f32.mrb[0].mxu0
    %v2839 = vadd.f32 0.0, %v2838
    %v2840 = vpop.f32.mrb[0].mxu0
    %2841 = vdwg.mxu0
    %2843 = vrot.lane.b32.xlu0 %v2839, 8
    %v2844 = vpop.permute.xlu0 %2843
    %2846 = vst.msk [vmem:[#allocation3] sm:$0xff] %vm943, %v2844
    %v2847 = vld [vmem:[#allocation2] sm:$0xff]
    %2849 = vrot.lane.b32.xlu0 %v2847, 112
    %v2850 = vpop.permute.xlu0 %2849
    %2851 = vrot.lane.b32.xlu0 %v2847, 80
    %v2852 = vpop.permute.xlu0 %2851
    %v2853 = vsel %vm593, %v2850, 0
    %v2855 = vsel %vm593, %v2852, 0
    %2857 = vmatprep.subr.mxu0 0.0
    %2858 = vmatpush1.xpose.msra.mxu0 %v2855
    %2859 = vmatprep.subr.mxu0 0.0
    %2860 = vmatpush1.xpose.msra.mxu0 0.0
    %2861 = vmatprep.subr.mxu0 0.0
    %2862 = vmatpush1.xpose.msra.mxu0 0.0
    %2863 = vmatprep.subr.mxu0 0.0
    %2864 = vmatpush1.xpose.msra.mxu0 0.0
    %2865 = vmatprep.subr.mxu0 0.0
    %2866 = vmatpush1.xpose.msra.mxu0 0.0
    %2867 = vmatprep.subr.mxu0 0.0
    %2868 = vmatpush1.xpose.msra.mxu0 0.0
    %2869 = vmatprep.subr.mxu0 0.0
    %2870 = vmatpush1.xpose.msra.mxu0 0.0
    %2871 = vmatprep.subr.mxu0 0.0
    %2872 = vmatpush1.xpose.msra.mxu0 0.0
    %2873 = vmatprep.subr.mxu0 0.0
    %2874 = vmatpush1.xpose.msra.mxu0 0.0
    %2875 = vmatprep.subr.mxu0 0.0
    %2876 = vmatpush1.xpose.msra.mxu0 0.0
    %2877 = vmatprep.subr.mxu0 0.0
    %2878 = vmatpush1.xpose.msra.mxu0 0.0
    %2879 = vmatprep.subr.mxu0 0.0
    %2880 = vmatpush1.xpose.msra.mxu0 0.0
    %2881 = vmatprep.subr.mxu0 0.0
    %2882 = vmatpush1.xpose.msra.mxu0 0.0
    %2883 = vmatprep.subr.mxu0 0.0
    %2884 = vmatpush1.xpose.msra.mxu0 0.0
    %2885 = vmatprep.subr.mxu0 0.0
    %2886 = vmatpush1.xpose.msra.mxu0 0.0
    %2887 = vmatprep.subr.mxu0 0.0
    %2888 = vmatpush1.xpose.msra.mxu0 0.0
    %2889 = vmatprep.subr.mxu0 0.0
    %2890 = vmatpush1.xpose.msra.mxu0 0.0
    %2891 = vmatprep.subr.mxu0 0.0
    %2892 = vmatpush1.xpose.msra.mxu0 0.0
    %2893 = vmatprep.subr.mxu0 0.0
    %2894 = vmatpush1.xpose.msra.mxu0 0.0
    %2895 = vmatprep.subr.mxu0 0.0
    %2896 = vmatpush1.xpose.msra.mxu0 0.0
    %2897 = vmatprep.subr.mxu0 0.0
    %2898 = vmatpush1.xpose.msra.mxu0 0.0
    %2899 = vmatprep.subr.mxu0 0.0
    %2900 = vmatpush1.xpose.msra.mxu0 0.0
    %2901 = vmatprep.subr.mxu0 0.0
    %2902 = vmatpush1.xpose.msra.mxu0 0.0
    %2903 = vmatprep.subr.mxu0 0.0
    %2904 = vmatpush1.xpose.msra.mxu0 0.0
    %2905 = vmatprep.subr.mxu0 0.0
    %2906 = vmatpush1.xpose.msra.mxu0 0.0
    %2907 = vmatprep.subr.mxu0 0.0
    %2908 = vmatpush1.xpose.msra.mxu0 0.0
    %2909 = vmatprep.subr.mxu0 0.0
    %2910 = vmatpush1.xpose.msra.mxu0 0.0
    %2911 = vmatprep.subr.mxu0 0.0
    %2912 = vmatpush1.xpose.msra.mxu0 0.0
    %2913 = vmatprep.subr.mxu0 0.0
    %2914 = vmatpush1.xpose.msra.mxu0 0.0
    %2915 = vmatprep.subr.mxu0 0.0
    %2916 = vmatpush1.xpose.msra.mxu0 0.0
    %2917 = vmatprep.subr.mxu0 0.0
    %2918 = vmatpush1.xpose.msra.mxu0 0.0
    %2919 = vmatprep.subr.mxu0 0.0
    %2920 = vmatpush1.xpose.msra.mxu0 0.0
    %2921 = vmatprep.mubr.f32.mxu0 0.0
    %2922 = vmatmul.mubr.f32.gmra.mrb[0].mxu0 %v2853
    %v2923 = vpop.f32.mrb[0].mxu0
    %v2924 = vadd.f32 0.0, %v2923
    %v2925 = vpop.f32.mrb[0].mxu0
    %2926 = vdwg.mxu0
    %v2927 = vmul.f32 %v2924, 0.35355338
    %v2928 = vld [vmem:[#allocation4] sm:$0xff]
    %2930 = vrot.lane.b32.xlu0 %v2928, 112
    %v2931 = vpop.permute.xlu0 %2930
    %v2933 = vadd.f32 %v2927, %v2931
    %v2934 = vadd.f32 %v2933, %v674
    %v2935 = vsel %vm593, %v2934, -inf
    %2936 = vmax.xlane.f32.xlu0 %v2935
    %v2937 = vpop.xlane.xlu0 %2936
    %v2938 = vsub.f32 %v2934, %v2937
    %v2939 = vmul.f32 %v2938, 1.442695
    %v2940 = vpow.pop %v2939
    %v2941 = vsel %vm593, %v2940, 0.0
    %2942 = vadd.xlane.f32.xlu0 %v2941
    %v2943 = vpop.xlane.xlu0 %2942
    %v2944 = vrcp.pop %v2943
    %v2945 = vmul.f32 %v2940, %v2944
    %2946 = vrot.lane.b32.xlu0 %v2847, 48
    %v2947 = vpop.permute.xlu0 %2946
    %v2950 = vsel %vm593, %v2945, 0
    %2952 = vmatprep.subr.mxu0 0.0
    %2953 = vmatpush1.msra.mxu0 %v2947
    %2954 = vmatprep.subr.mxu0 0.0
    %2955 = vmatpush1.msra.mxu0 0.0
    %2956 = vmatprep.subr.mxu0 0.0
    %2957 = vmatpush1.msra.mxu0 0.0
    %2958 = vmatprep.subr.mxu0 0.0
    %2959 = vmatpush1.msra.mxu0 0.0
    %2960 = vmatprep.subr.mxu0 0.0
    %2961 = vmatpush1.msra.mxu0 0.0
    %2962 = vmatprep.subr.mxu0 0.0
    %2963 = vmatpush1.msra.mxu0 0.0
    %2964 = vmatprep.subr.mxu0 0.0
    %2965 = vmatpush1.msra.mxu0 0.0
    %2966 = vmatprep.subr.mxu0 0.0
    %2967 = vmatpush1.msra.mxu0 0.0
    %2968 = vmatprep.subr.mxu0 0.0
    %2969 = vmatpush1.msra.mxu0 0.0
    %2970 = vmatprep.subr.mxu0 0.0
    %2971 = vmatpush1.msra.mxu0 0.0
    %2972 = vmatprep.subr.mxu0 0.0
    %2973 = vmatpush1.msra.mxu0 0.0
    %2974 = vmatprep.subr.mxu0 0.0
    %2975 = vmatpush1.msra.mxu0 0.0
    %2976 = vmatprep.subr.mxu0 0.0
    %2977 = vmatpush1.msra.mxu0 0.0
    %2978 = vmatprep.subr.mxu0 0.0
    %2979 = vmatpush1.msra.mxu0 0.0
    %2980 = vmatprep.subr.mxu0 0.0
    %2981 = vmatpush1.msra.mxu0 0.0
    %2982 = vmatprep.subr.mxu0 0.0
    %2983 = vmatpush1.msra.mxu0 0.0
    %2984 = vmatprep.subr.mxu0 0.0
    %2985 = vmatpush1.msra.mxu0 0.0
    %2986 = vmatprep.subr.mxu0 0.0
    %2987 = vmatpush1.msra.mxu0 0.0
    %2988 = vmatprep.subr.mxu0 0.0
    %2989 = vmatpush1.msra.mxu0 0.0
    %2990 = vmatprep.subr.mxu0 0.0
    %2991 = vmatpush1.msra.mxu0 0.0
    %2992 = vmatprep.subr.mxu0 0.0
    %2993 = vmatpush1.msra.mxu0 0.0
    %2994 = vmatprep.subr.mxu0 0.0
    %2995 = vmatpush1.msra.mxu0 0.0
    %2996 = vmatprep.subr.mxu0 0.0
    %2997 = vmatpush1.msra.mxu0 0.0
    %2998 = vmatprep.subr.mxu0 0.0
    %2999 = vmatpush1.msra.mxu0 0.0
    %3000 = vmatprep.subr.mxu0 0.0
    %3001 = vmatpush1.msra.mxu0 0.0
    %3002 = vmatprep.subr.mxu0 0.0
    %3003 = vmatpush1.msra.mxu0 0.0
    %3004 = vmatprep.subr.mxu0 0.0
    %3005 = vmatpush1.msra.mxu0 0.0
    %3006 = vmatprep.subr.mxu0 0.0
    %3007 = vmatpush1.msra.mxu0 0.0
    %3008 = vmatprep.subr.mxu0 0.0
    %3009 = vmatpush1.msra.mxu0 0.0
    %3010 = vmatprep.subr.mxu0 0.0
    %3011 = vmatpush1.msra.mxu0 0.0
    %3012 = vmatprep.subr.mxu0 0.0
    %3013 = vmatpush1.msra.mxu0 0.0
    %3014 = vmatprep.subr.mxu0 0.0
    %3015 = vmatpush1.msra.mxu0 0.0
    %3016 = vmatprep.mubr.f32.mxu0 0.0
    %3017 = vmatmul.mubr.f32.gmra.mrb[0].mxu0 %v2950
    %v3018 = vpop.f32.mrb[0].mxu0
    %v3019 = vadd.f32 0.0, %v3018
    %v3020 = vpop.f32.mrb[0].mxu0
    %3021 = vdwg.mxu0
    %3023 = vrot.lane.b32.xlu0 %v3019, 16
    %v3024 = vpop.permute.xlu0 %3023
    %3026 = vst.msk [vmem:[#allocation3] sm:$0xff] %vm1124, %v3024
    %v3027 = vld [vmem:[#allocation2] sm:$0xff]
    %3029 = vrot.lane.b32.xlu0 %v3027, 104
    %v3030 = vpop.permute.xlu0 %3029
    %3031 = vrot.lane.b32.xlu0 %v3027, 72
    %v3032 = vpop.permute.xlu0 %3031
    %v3033 = vsel %vm593, %v3030, 0
    %v3035 = vsel %vm593, %v3032, 0
    %3037 = vmatprep.subr.mxu0 0.0
    %3038 = vmatpush1.xpose.msra.mxu0 %v3035
    %3039 = vmatprep.subr.mxu0 0.0
    %3040 = vmatpush1.xpose.msra.mxu0 0.0
    %3041 = vmatprep.subr.mxu0 0.0
    %3042 = vmatpush1.xpose.msra.mxu0 0.0
    %3043 = vmatprep.subr.mxu0 0.0
    %3044 = vmatpush1.xpose.msra.mxu0 0.0
    %3045 = vmatprep.subr.mxu0 0.0
    %3046 = vmatpush1.xpose.msra.mxu0 0.0
    %3047 = vmatprep.subr.mxu0 0.0
    %3048 = vmatpush1.xpose.msra.mxu0 0.0
    %3049 = vmatprep.subr.mxu0 0.0
    %3050 = vmatpush1.xpose.msra.mxu0 0.0
    %3051 = vmatprep.subr.mxu0 0.0
    %3052 = vmatpush1.xpose.msra.mxu0 0.0
    %3053 = vmatprep.subr.mxu0 0.0
    %3054 = vmatpush1.xpose.msra.mxu0 0.0
    %3055 = vmatprep.subr.mxu0 0.0
    %3056 = vmatpush1.xpose.msra.mxu0 0.0
    %3057 = vmatprep.subr.mxu0 0.0
    %3058 = vmatpush1.xpose.msra.mxu0 0.0
    %3059 = vmatprep.subr.mxu0 0.0
    %3060 = vmatpush1.xpose.msra.mxu0 0.0
    %3061 = vmatprep.subr.mxu0 0.0
    %3062 = vmatpush1.xpose.msra.mxu0 0.0
    %3063 = vmatprep.subr.mxu0 0.0
    %3064 = vmatpush1.xpose.msra.mxu0 0.0
    %3065 = vmatprep.subr.mxu0 0.0
    %3066 = vmatpush1.xpose.msra.mxu0 0.0
    %3067 = vmatprep.subr.mxu0 0.0
    %3068 = vmatpush1.xpose.msra.mxu0 0.0
    %3069 = vmatprep.subr.mxu0 0.0
    %3070 = vmatpush1.xpose.msra.mxu0 0.0
    %3071 = vmatprep.subr.mxu0 0.0
    %3072 = vmatpush1.xpose.msra.mxu0 0.0
    %3073 = vmatprep.subr.mxu0 0.0
    %3074 = vmatpush1.xpose.msra.mxu0 0.0
    %3075 = vmatprep.subr.mxu0 0.0
    %3076 = vmatpush1.xpose.msra.mxu0 0.0
    %3077 = vmatprep.subr.mxu0 0.0
    %3078 = vmatpush1.xpose.msra.mxu0 0.0
    %3079 = vmatprep.subr.mxu0 0.0
    %3080 = vmatpush1.xpose.msra.mxu0 0.0
    %3081 = vmatprep.subr.mxu0 0.0
    %3082 = vmatpush1.xpose.msra.mxu0 0.0
    %3083 = vmatprep.subr.mxu0 0.0
    %3084 = vmatpush1.xpose.msra.mxu0 0.0
    %3085 = vmatprep.subr.mxu0 0.0
    %3086 = vmatpush1.xpose.msra.mxu0 0.0
    %3087 = vmatprep.subr.mxu0 0.0
    %3088 = vmatpush1.xpose.msra.mxu0 0.0
    %3089 = vmatprep.subr.mxu0 0.0
    %3090 = vmatpush1.xpose.msra.mxu0 0.0
    %3091 = vmatprep.subr.mxu0 0.0
    %3092 = vmatpush1.xpose.msra.mxu0 0.0
    %3093 = vmatprep.subr.mxu0 0.0
    %3094 = vmatpush1.xpose.msra.mxu0 0.0
    %3095 = vmatprep.subr.mxu0 0.0
    %3096 = vmatpush1.xpose.msra.mxu0 0.0
    %3097 = vmatprep.subr.mxu0 0.0
    %3098 = vmatpush1.xpose.msra.mxu0 0.0
    %3099 = vmatprep.subr.mxu0 0.0
    %3100 = vmatpush1.xpose.msra.mxu0 0.0
    %3101 = vmatprep.mubr.f32.mxu0 0.0
    %3102 = vmatmul.mubr.f32.gmra.mrb[0].mxu0 %v3033
    %v3103 = vpop.f32.mrb[0].mxu0
    %v3104 = vadd.f32 0.0, %v3103
    %v3105 = vpop.f32.mrb[0].mxu0
    %3106 = vdwg.mxu0
    %v3107 = vmul.f32 %v3104, 0.35355338
    %v3108 = vld [vmem:[#allocation4] sm:$0xff]
    %3110 = vrot.lane.b32.xlu0 %v3108, 104
    %v3111 = vpop.permute.xlu0 %3110
    %v3113 = vadd.f32 %v3107, %v3111
    %v3114 = vadd.f32 %v3113, %v674
    %v3115 = vsel %vm593, %v3114, -inf
    %3116 = vmax.xlane.f32.xlu0 %v3115
    %v3117 = vpop.xlane.xlu0 %3116
    %v3118 = vsub.f32 %v3114, %v3117
    %v3119 = vmul.f32 %v3118, 1.442695
    %v3120 = vpow.pop %v3119
    %v3121 = vsel %vm593, %v3120, 0.0
    %3122 = vadd.xlane.f32.xlu0 %v3121
    %v3123 = vpop.xlane.xlu0 %3122
    %v3124 = vrcp.pop %v3123
    %v3125 = vmul.f32 %v3120, %v3124
    %3126 = vrot.lane.b32.xlu0 %v3027, 40
    %v3127 = vpop.permute.xlu0 %3126
    %v3130 = vsel %vm593, %v3125, 0
    %3132 = vmatprep.subr.mxu0 0.0
    %3133 = vmatpush1.msra.mxu0 %v3127
    %3134 = vmatprep.subr.mxu0 0.0
    %3135 = vmatpush1.msra.mxu0 0.0
    %3136 = vmatprep.subr.mxu0 0.0
    %3137 = vmatpush1.msra.mxu0 0.0
    %3138 = vmatprep.subr.mxu0 0.0
    %3139 = vmatpush1.msra.mxu0 0.0
    %3140 = vmatprep.subr.mxu0 0.0
    %3141 = vmatpush1.msra.mxu0 0.0
    %3142 = vmatprep.subr.mxu0 0.0
    %3143 = vmatpush1.msra.mxu0 0.0
    %3144 = vmatprep.subr.mxu0 0.0
    %3145 = vmatpush1.msra.mxu0 0.0
    %3146 = vmatprep.subr.mxu0 0.0
    %3147 = vmatpush1.msra.mxu0 0.0
    %3148 = vmatprep.subr.mxu0 0.0
    %3149 = vmatpush1.msra.mxu0 0.0
    %3150 = vmatprep.subr.mxu0 0.0
    %3151 = vmatpush1.msra.mxu0 0.0
    %3152 = vmatprep.subr.mxu0 0.0
    %3153 = vmatpush1.msra.mxu0 0.0
    %3154 = vmatprep.subr.mxu0 0.0
    %3155 = vmatpush1.msra.mxu0 0.0
    %3156 = vmatprep.subr.mxu0 0.0
    %3157 = vmatpush1.msra.mxu0 0.0
    %3158 = vmatprep.subr.mxu0 0.0
    %3159 = vmatpush1.msra.mxu0 0.0
    %3160 = vmatprep.subr.mxu0 0.0
    %3161 = vmatpush1.msra.mxu0 0.0
    %3162 = vmatprep.subr.mxu0 0.0
    %3163 = vmatpush1.msra.mxu0 0.0
    %3164 = vmatprep.subr.mxu0 0.0
    %3165 = vmatpush1.msra.mxu0 0.0
    %3166 = vmatprep.subr.mxu0 0.0
    %3167 = vmatpush1.msra.mxu0 0.0
    %3168 = vmatprep.subr.mxu0 0.0
    %3169 = vmatpush1.msra.mxu0 0.0
    %3170 = vmatprep.subr.mxu0 0.0
    %3171 = vmatpush1.msra.mxu0 0.0
    %3172 = vmatprep.subr.mxu0 0.0
    %3173 = vmatpush1.msra.mxu0 0.0
    %3174 = vmatprep.subr.mxu0 0.0
    %3175 = vmatpush1.msra.mxu0 0.0
    %3176 = vmatprep.subr.mxu0 0.0
    %3177 = vmatpush1.msra.mxu0 0.0
    %3178 = vmatprep.subr.mxu0 0.0
    %3179 = vmatpush1.msra.mxu0 0.0
    %3180 = vmatprep.subr.mxu0 0.0
    %3181 = vmatpush1.msra.mxu0 0.0
    %3182 = vmatprep.subr.mxu0 0.0
    %3183 = vmatpush1.msra.mxu0 0.0
    %3184 = vmatprep.subr.mxu0 0.0
    %3185 = vmatpush1.msra.mxu0 0.0
    %3186 = vmatprep.subr.mxu0 0.0
    %3187 = vmatpush1.msra.mxu0 0.0
    %3188 = vmatprep.subr.mxu0 0.0
    %3189 = vmatpush1.msra.mxu0 0.0
    %3190 = vmatprep.subr.mxu0 0.0
    %3191 = vmatpush1.msra.mxu0 0.0
    %3192 = vmatprep.subr.mxu0 0.0
    %3193 = vmatpush1.msra.mxu0 0.0
    %3194 = vmatprep.subr.mxu0 0.0
    %3195 = vmatpush1.msra.mxu0 0.0
    %3196 = vmatprep.mubr.f32.mxu0 0.0
    %3197 = vmatmul.mubr.f32.gmra.mrb[0].mxu0 %v3130
    %v3198 = vpop.f32.mrb[0].mxu0
    %v3199 = vadd.f32 0.0, %v3198
    %v3200 = vpop.f32.mrb[0].mxu0
    %3201 = vdwg.mxu0
    %3203 = vrot.lane.b32.xlu0 %v3199, 24
    %v3204 = vpop.permute.xlu0 %3203
    %3206 = vst.msk [vmem:[#allocation3] sm:$0xff] %vm1305, %v3204
    %v3207 = vld [vmem:[#allocation2 + $0x8] sm:$0xff]
    %3209 = vrot.lane.b32.xlu0 %v3207, 96
    %v3210 = vpop.permute.xlu0 %3209
    %v3211 = vsel %vm593, %v3207, 0
    %v3213 = vsel %vm593, %v3210, 0
    %3215 = vmatprep.subr.mxu0 0.0
    %3216 = vmatpush1.xpose.msra.mxu0 %v3213
    %3217 = vmatprep.subr.mxu0 0.0
    %3218 = vmatpush1.xpose.msra.mxu0 0.0
    %3219 = vmatprep.subr.mxu0 0.0
    %3220 = vmatpush1.xpose.msra.mxu0 0.0
    %3221 = vmatprep.subr.mxu0 0.0
    %3222 = vmatpush1.xpose.msra.mxu0 0.0
    %3223 = vmatprep.subr.mxu0 0.0
    %3224 = vmatpush1.xpose.msra.mxu0 0.0
    %3225 = vmatprep.subr.mxu0 0.0
    %3226 = vmatpush1.xpose.msra.mxu0 0.0
    %3227 = vmatprep.subr.mxu0 0.0
    %3228 = vmatpush1.xpose.msra.mxu0 0.0
    %3229 = vmatprep.subr.mxu0 0.0
    %3230 = vmatpush1.xpose.msra.mxu0 0.0
    %3231 = vmatprep.subr.mxu0 0.0
    %3232 = vmatpush1.xpose.msra.mxu0 0.0
    %3233 = vmatprep.subr.mxu0 0.0
    %3234 = vmatpush1.xpose.msra.mxu0 0.0
    %3235 = vmatprep.subr.mxu0 0.0
    %3236 = vmatpush1.xpose.msra.mxu0 0.0
    %3237 = vmatprep.subr.mxu0 0.0
    %3238 = vmatpush1.xpose.msra.mxu0 0.0
    %3239 = vmatprep.subr.mxu0 0.0
    %3240 = vmatpush1.xpose.msra.mxu0 0.0
    %3241 = vmatprep.subr.mxu0 0.0
    %3242 = vmatpush1.xpose.msra.mxu0 0.0
    %3243 = vmatprep.subr.mxu0 0.0
    %3244 = vmatpush1.xpose.msra.mxu0 0.0
    %3245 = vmatprep.subr.mxu0 0.0
    %3246 = vmatpush1.xpose.msra.mxu0 0.0
    %3247 = vmatprep.subr.mxu0 0.0
    %3248 = vmatpush1.xpose.msra.mxu0 0.0
    %3249 = vmatprep.subr.mxu0 0.0
    %3250 = vmatpush1.xpose.msra.mxu0 0.0
    %3251 = vmatprep.subr.mxu0 0.0
    %3252 = vmatpush1.xpose.msra.mxu0 0.0
    %3253 = vmatprep.subr.mxu0 0.0
    %3254 = vmatpush1.xpose.msra.mxu0 0.0
    %3255 = vmatprep.subr.mxu0 0.0
    %3256 = vmatpush1.xpose.msra.mxu0 0.0
    %3257 = vmatprep.subr.mxu0 0.0
    %3258 = vmatpush1.xpose.msra.mxu0 0.0
    %3259 = vmatprep.subr.mxu0 0.0
    %3260 = vmatpush1.xpose.msra.mxu0 0.0
    %3261 = vmatprep.subr.mxu0 0.0
    %3262 = vmatpush1.xpose.msra.mxu0 0.0
    %3263 = vmatprep.subr.mxu0 0.0
    %3264 = vmatpush1.xpose.msra.mxu0 0.0
    %3265 = vmatprep.subr.mxu0 0.0
    %3266 = vmatpush1.xpose.msra.mxu0 0.0
    %3267 = vmatprep.subr.mxu0 0.0
    %3268 = vmatpush1.xpose.msra.mxu0 0.0
    %3269 = vmatprep.subr.mxu0 0.0
    %3270 = vmatpush1.xpose.msra.mxu0 0.0
    %3271 = vmatprep.subr.mxu0 0.0
    %3272 = vmatpush1.xpose.msra.mxu0 0.0
    %3273 = vmatprep.subr.mxu0 0.0
    %3274 = vmatpush1.xpose.msra.mxu0 0.0
    %3275 = vmatprep.subr.mxu0 0.0
    %3276 = vmatpush1.xpose.msra.mxu0 0.0
    %3277 = vmatprep.subr.mxu0 0.0
    %3278 = vmatpush1.xpose.msra.mxu0 0.0
    %3279 = vmatprep.mubr.f32.mxu0 0.0
    %3280 = vmatmul.mubr.f32.gmra.mrb[0].mxu0 %v3211
    %v3281 = vpop.f32.mrb[0].mxu0
    %v3282 = vadd.f32 0.0, %v3281
    %v3283 = vpop.f32.mrb[0].mxu0
    %3284 = vdwg.mxu0
    %v3285 = vmul.f32 %v3282, 0.35355338
    %v3286 = vld [vmem:[#allocation4 + $0x8] sm:$0xff]
    %v3287 = vadd.f32 %v3285, %v3286
    %v3288 = vadd.f32 %v3287, %v1391
    %v3289 = vsel %vm593, %v3288, -inf
    %3290 = vmax.xlane.f32.xlu0 %v3289
    %v3291 = vpop.xlane.xlu0 %3290
    %v3292 = vsub.f32 %v3288, %v3291
    %v3293 = vmul.f32 %v3292, 1.442695
    %v3294 = vpow.pop %v3293
    %v3295 = vsel %vm593, %v3294, 0.0
    %3296 = vadd.xlane.f32.xlu0 %v3295
    %v3297 = vpop.xlane.xlu0 %3296
    %v3298 = vrcp.pop %v3297
    %v3299 = vmul.f32 %v3294, %v3298
    %3300 = vrot.lane.b32.xlu0 %v3207, 64
    %v3301 = vpop.permute.xlu0 %3300
    %v3304 = vsel %vm593, %v3299, 0
    %3306 = vmatprep.subr.mxu0 0.0
    %3307 = vmatpush1.msra.mxu0 %v3301
    %3308 = vmatprep.subr.mxu0 0.0
    %3309 = vmatpush1.msra.mxu0 0.0
    %3310 = vmatprep.subr.mxu0 0.0
    %3311 = vmatpush1.msra.mxu0 0.0
    %3312 = vmatprep.subr.mxu0 0.0
    %3313 = vmatpush1.msra.mxu0 0.0
    %3314 = vmatprep.subr.mxu0 0.0
    %3315 = vmatpush1.msra.mxu0 0.0
    %3316 = vmatprep.subr.mxu0 0.0
    %3317 = vmatpush1.msra.mxu0 0.0
    %3318 = vmatprep.subr.mxu0 0.0
    %3319 = vmatpush1.msra.mxu0 0.0
    %3320 = vmatprep.subr.mxu0 0.0
    %3321 = vmatpush1.msra.mxu0 0.0
    %3322 = vmatprep.subr.mxu0 0.0
    %3323 = vmatpush1.msra.mxu0 0.0
    %3324 = vmatprep.subr.mxu0 0.0
    %3325 = vmatpush1.msra.mxu0 0.0
    %3326 = vmatprep.subr.mxu0 0.0
    %3327 = vmatpush1.msra.mxu0 0.0
    %3328 = vmatprep.subr.mxu0 0.0
    %3329 = vmatpush1.msra.mxu0 0.0
    %3330 = vmatprep.subr.mxu0 0.0
    %3331 = vmatpush1.msra.mxu0 0.0
    %3332 = vmatprep.subr.mxu0 0.0
    %3333 = vmatpush1.msra.mxu0 0.0
    %3334 = vmatprep.subr.mxu0 0.0
    %3335 = vmatpush1.msra.mxu0 0.0
    %3336 = vmatprep.subr.mxu0 0.0
    %3337 = vmatpush1.msra.mxu0 0.0
    %3338 = vmatprep.subr.mxu0 0.0
    %3339 = vmatpush1.msra.mxu0 0.0
    %3340 = vmatprep.subr.mxu0 0.0
    %3341 = vmatpush1.msra.mxu0 0.0
    %3342 = vmatprep.subr.mxu0 0.0
    %3343 = vmatpush1.msra.mxu0 0.0
    %3344 = vmatprep.subr.mxu0 0.0
    %3345 = vmatpush1.msra.mxu0 0.0
    %3346 = vmatprep.subr.mxu0 0.0
    %3347 = vmatpush1.msra.mxu0 0.0
    %3348 = vmatprep.subr.mxu0 0.0
    %3349 = vmatpush1.msra.mxu0 0.0
    %3350 = vmatprep.subr.mxu0 0.0
    %3351 = vmatpush1.msra.mxu0 0.0
    %3352 = vmatprep.subr.mxu0 0.0
    %3353 = vmatpush1.msra.mxu0 0.0
    %3354 = vmatprep.subr.mxu0 0.0
    %3355 = vmatpush1.msra.mxu0 0.0
    %3356 = vmatprep.subr.mxu0 0.0
    %3357 = vmatpush1.msra.mxu0 0.0
    %3358 = vmatprep.subr.mxu0 0.0
    %3359 = vmatpush1.msra.mxu0 0.0
    %3360 = vmatprep.subr.mxu0 0.0
    %3361 = vmatpush1.msra.mxu0 0.0
    %3362 = vmatprep.subr.mxu0 0.0
    %3363 = vmatpush1.msra.mxu0 0.0
    %3364 = vmatprep.subr.mxu0 0.0
    %3365 = vmatpush1.msra.mxu0 0.0
    %3366 = vmatprep.subr.mxu0 0.0
    %3367 = vmatpush1.msra.mxu0 0.0
    %3368 = vmatprep.subr.mxu0 0.0
    %3369 = vmatpush1.msra.mxu0 0.0
    %3370 = vmatprep.mubr.f32.mxu0 0.0
    %3371 = vmatmul.mubr.f32.gmra.mrb[0].mxu0 %v3304
    %v3372 = vpop.f32.mrb[0].mxu0
    %v3373 = vadd.f32 0.0, %v3372
    %v3374 = vpop.f32.mrb[0].mxu0
    %3375 = vdwg.mxu0
    %3376 = vst.msk [vmem:[#allocation3 + $0x8] sm:$0xff] %vm593, %v3373
    %v3377 = vld [vmem:[#allocation2 + $0x8] sm:$0xff]
    %3379 = vrot.lane.b32.xlu0 %v3377, 120
    %v3380 = vpop.permute.xlu0 %3379
    %3381 = vrot.lane.b32.xlu0 %v3377, 88
    %v3382 = vpop.permute.xlu0 %3381
    %v3383 = vsel %vm593, %v3380, 0
    %v3385 = vsel %vm593, %v3382, 0
    %3387 = vmatprep.subr.mxu0 0.0
    %3388 = vmatpush1.xpose.msra.mxu0 %v3385
    %3389 = vmatprep.subr.mxu0 0.0
    %3390 = vmatpush1.xpose.msra.mxu0 0.0
    %3391 = vmatprep.subr.mxu0 0.0
    %3392 = vmatpush1.xpose.msra.mxu0 0.0
    %3393 = vmatprep.subr.mxu0 0.0
    %3394 = vmatpush1.xpose.msra.mxu0 0.0
    %3395 = vmatprep.subr.mxu0 0.0
    %3396 = vmatpush1.xpose.msra.mxu0 0.0
    %3397 = vmatprep.subr.mxu0 0.0
    %3398 = vmatpush1.xpose.msra.mxu0 0.0
    %3399 = vmatprep.subr.mxu0 0.0
    %3400 = vmatpush1.xpose.msra.mxu0 0.0
    %3401 = vmatprep.subr.mxu0 0.0
    %3402 = vmatpush1.xpose.msra.mxu0 0.0
    %3403 = vmatprep.subr.mxu0 0.0
    %3404 = vmatpush1.xpose.msra.mxu0 0.0
    %3405 = vmatprep.subr.mxu0 0.0
    %3406 = vmatpush1.xpose.msra.mxu0 0.0
    %3407 = vmatprep.subr.mxu0 0.0
    %3408 = vmatpush1.xpose.msra.mxu0 0.0
    %3409 = vmatprep.subr.mxu0 0.0
    %3410 = vmatpush1.xpose.msra.mxu0 0.0
    %3411 = vmatprep.subr.mxu0 0.0
    %3412 = vmatpush1.xpose.msra.mxu0 0.0
    %3413 = vmatprep.subr.mxu0 0.0
    %3414 = vmatpush1.xpose.msra.mxu0 0.0
    %3415 = vmatprep.subr.mxu0 0.0
    %3416 = vmatpush1.xpose.msra.mxu0 0.0
    %3417 = vmatprep.subr.mxu0 0.0
    %3418 = vmatpush1.xpose.msra.mxu0 0.0
    %3419 = vmatprep.subr.mxu0 0.0
    %3420 = vmatpush1.xpose.msra.mxu0 0.0
    %3421 = vmatprep.subr.mxu0 0.0
    %3422 = vmatpush1.xpose.msra.mxu0 0.0
    %3423 = vmatprep.subr.mxu0 0.0
    %3424 = vmatpush1.xpose.msra.mxu0 0.0
    %3425 = vmatprep.subr.mxu0 0.0
    %3426 = vmatpush1.xpose.msra.mxu0 0.0
    %3427 = vmatprep.subr.mxu0 0.0
    %3428 = vmatpush1.xpose.msra.mxu0 0.0
    %3429 = vmatprep.subr.mxu0 0.0
    %3430 = vmatpush1.xpose.msra.mxu0 0.0
    %3431 = vmatprep.subr.mxu0 0.0
    %3432 = vmatpush1.xpose.msra.mxu0 0.0
    %3433 = vmatprep.subr.mxu0 0.0
    %3434 = vmatpush1.xpose.msra.mxu0 0.0
    %3435 = vmatprep.subr.mxu0 0.0
    %3436 = vmatpush1.xpose.msra.mxu0 0.0
    %3437 = vmatprep.subr.mxu0 0.0
    %3438 = vmatpush1.xpose.msra.mxu0 0.0
    %3439 = vmatprep.subr.mxu0 0.0
    %3440 = vmatpush1.xpose.msra.mxu0 0.0
    %3441 = vmatprep.subr.mxu0 0.0
    %3442 = vmatpush1.xpose.msra.mxu0 0.0
    %3443 = vmatprep.subr.mxu0 0.0
    %3444 = vmatpush1.xpose.msra.mxu0 0.0
    %3445 = vmatprep.subr.mxu0 0.0
    %3446 = vmatpush1.xpose.msra.mxu0 0.0
    %3447 = vmatprep.subr.mxu0 0.0
    %3448 = vmatpush1.xpose.msra.mxu0 0.0
    %3449 = vmatprep.subr.mxu0 0.0
    %3450 = vmatpush1.xpose.msra.mxu0 0.0
    %3451 = vmatprep.mubr.f32.mxu0 0.0
    %3452 = vmatmul.mubr.f32.gmra.mrb[0].mxu0 %v3383
    %v3453 = vpop.f32.mrb[0].mxu0
    %v3454 = vadd.f32 0.0, %v3453
    %v3455 = vpop.f32.mrb[0].mxu0
    %3456 = vdwg.mxu0
    %v3457 = vmul.f32 %v3454, 0.35355338
    %v3458 = vld [vmem:[#allocation4 + $0x8] sm:$0xff]
    %3460 = vrot.lane.b32.xlu0 %v3458, 120
    %v3461 = vpop.permute.xlu0 %3460
    %v3463 = vadd.f32 %v3457, %v3461
    %v3464 = vadd.f32 %v3463, %v1391
    %v3465 = vsel %vm593, %v3464, -inf
    %3466 = vmax.xlane.f32.xlu0 %v3465
    %v3467 = vpop.xlane.xlu0 %3466
    %v3468 = vsub.f32 %v3464, %v3467
    %v3469 = vmul.f32 %v3468, 1.442695
    %v3470 = vpow.pop %v3469
    %v3471 = vsel %vm593, %v3470, 0.0
    %3472 = vadd.xlane.f32.xlu0 %v3471
    %v3473 = vpop.xlane.xlu0 %3472
    %v3474 = vrcp.pop %v3473
    %v3475 = vmul.f32 %v3470, %v3474
    %3476 = vrot.lane.b32.xlu0 %v3377, 56
    %v3477 = vpop.permute.xlu0 %3476
    %v3480 = vsel %vm593, %v3475, 0
    %3482 = vmatprep.subr.mxu0 0.0
    %3483 = vmatpush1.msra.mxu0 %v3477
    %3484 = vmatprep.subr.mxu0 0.0
    %3485 = vmatpush1.msra.mxu0 0.0
    %3486 = vmatprep.subr.mxu0 0.0
    %3487 = vmatpush1.msra.mxu0 0.0
    %3488 = vmatprep.subr.mxu0 0.0
    %3489 = vmatpush1.msra.mxu0 0.0
    %3490 = vmatprep.subr.mxu0 0.0
    %3491 = vmatpush1.msra.mxu0 0.0
    %3492 = vmatprep.subr.mxu0 0.0
    %3493 = vmatpush1.msra.mxu0 0.0
    %3494 = vmatprep.subr.mxu0 0.0
    %3495 = vmatpush1.msra.mxu0 0.0
    %3496 = vmatprep.subr.mxu0 0.0
    %3497 = vmatpush1.msra.mxu0 0.0
    %3498 = vmatprep.subr.mxu0 0.0
    %3499 = vmatpush1.msra.mxu0 0.0
    %3500 = vmatprep.subr.mxu0 0.0
    %3501 = vmatpush1.msra.mxu0 0.0
    %3502 = vmatprep.subr.mxu0 0.0
    %3503 = vmatpush1.msra.mxu0 0.0
    %3504 = vmatprep.subr.mxu0 0.0
    %3505 = vmatpush1.msra.mxu0 0.0
    %3506 = vmatprep.subr.mxu0 0.0
    %3507 = vmatpush1.msra.mxu0 0.0
    %3508 = vmatprep.subr.mxu0 0.0
    %3509 = vmatpush1.msra.mxu0 0.0
    %3510 = vmatprep.subr.mxu0 0.0
    %3511 = vmatpush1.msra.mxu0 0.0
    %3512 = vmatprep.subr.mxu0 0.0
    %3513 = vmatpush1.msra.mxu0 0.0
    %3514 = vmatprep.subr.mxu0 0.0
    %3515 = vmatpush1.msra.mxu0 0.0
    %3516 = vmatprep.subr.mxu0 0.0
    %3517 = vmatpush1.msra.mxu0 0.0
    %3518 = vmatprep.subr.mxu0 0.0
    %3519 = vmatpush1.msra.mxu0 0.0
    %3520 = vmatprep.subr.mxu0 0.0
    %3521 = vmatpush1.msra.mxu0 0.0
    %3522 = vmatprep.subr.mxu0 0.0
    %3523 = vmatpush1.msra.mxu0 0.0
    %3524 = vmatprep.subr.mxu0 0.0
    %3525 = vmatpush1.msra.mxu0 0.0
    %3526 = vmatprep.subr.mxu0 0.0
    %3527 = vmatpush1.msra.mxu0 0.0
    %3528 = vmatprep.subr.mxu0 0.0
    %3529 = vmatpush1.msra.mxu0 0.0
    %3530 = vmatprep.subr.mxu0 0.0
    %3531 = vmatpush1.msra.mxu0 0.0
    %3532 = vmatprep.subr.mxu0 0.0
    %3533 = vmatpush1.msra.mxu0 0.0
    %3534 = vmatprep.subr.mxu0 0.0
    %3535 = vmatpush1.msra.mxu0 0.0
    %3536 = vmatprep.subr.mxu0 0.0
    %3537 = vmatpush1.msra.mxu0 0.0
    %3538 = vmatprep.subr.mxu0 0.0
    %3539 = vmatpush1.msra.mxu0 0.0
    %3540 = vmatprep.subr.mxu0 0.0
    %3541 = vmatpush1.msra.mxu0 0.0
    %3542 = vmatprep.subr.mxu0 0.0
    %3543 = vmatpush1.msra.mxu0 0.0
    %3544 = vmatprep.subr.mxu0 0.0
    %3545 = vmatpush1.msra.mxu0 0.0
    %3546 = vmatprep.mubr.f32.mxu0 0.0
    %3547 = vmatmul.mubr.f32.gmra.mrb[0].mxu0 %v3480
    %v3548 = vpop.f32.mrb[0].mxu0
    %v3549 = vadd.f32 0.0, %v3548
    %v3550 = vpop.f32.mrb[0].mxu0
    %3551 = vdwg.mxu0
    %3553 = vrot.lane.b32.xlu0 %v3549, 8
    %v3554 = vpop.permute.xlu0 %3553
    %3556 = vst.msk [vmem:[#allocation3 + $0x8] sm:$0xff] %vm943, %v3554
    %v3557 = vld [vmem:[#allocation2 + $0x8] sm:$0xff]
    %3559 = vrot.lane.b32.xlu0 %v3557, 112
    %v3560 = vpop.permute.xlu0 %3559
    %3561 = vrot.lane.b32.xlu0 %v3557, 80
    %v3562 = vpop.permute.xlu0 %3561
    %v3563 = vsel %vm593, %v3560, 0
    %v3565 = vsel %vm593, %v3562, 0
    %3567 = vmatprep.subr.mxu0 0.0
    %3568 = vmatpush1.xpose.msra.mxu0 %v3565
    %3569 = vmatprep.subr.mxu0 0.0
    %3570 = vmatpush1.xpose.msra.mxu0 0.0
    %3571 = vmatprep.subr.mxu0 0.0
    %3572 = vmatpush1.xpose.msra.mxu0 0.0
    %3573 = vmatprep.subr.mxu0 0.0
    %3574 = vmatpush1.xpose.msra.mxu0 0.0
    %3575 = vmatprep.subr.mxu0 0.0
    %3576 = vmatpush1.xpose.msra.mxu0 0.0
    %3577 = vmatprep.subr.mxu0 0.0
    %3578 = vmatpush1.xpose.msra.mxu0 0.0
    %3579 = vmatprep.subr.mxu0 0.0
    %3580 = vmatpush1.xpose.msra.mxu0 0.0
    %3581 = vmatprep.subr.mxu0 0.0
    %3582 = vmatpush1.xpose.msra.mxu0 0.0
    %3583 = vmatprep.subr.mxu0 0.0
    %3584 = vmatpush1.xpose.msra.mxu0 0.0
    %3585 = vmatprep.subr.mxu0 0.0
    %3586 = vmatpush1.xpose.msra.mxu0 0.0
    %3587 = vmatprep.subr.mxu0 0.0
    %3588 = vmatpush1.xpose.msra.mxu0 0.0
    %3589 = vmatprep.subr.mxu0 0.0
    %3590 = vmatpush1.xpose.msra.mxu0 0.0
    %3591 = vmatprep.subr.mxu0 0.0
    %3592 = vmatpush1.xpose.msra.mxu0 0.0
    %3593 = vmatprep.subr.mxu0 0.0
    %3594 = vmatpush1.xpose.msra.mxu0 0.0
    %3595 = vmatprep.subr.mxu0 0.0
    %3596 = vmatpush1.xpose.msra.mxu0 0.0
    %3597 = vmatprep.subr.mxu0 0.0
    %3598 = vmatpush1.xpose.msra.mxu0 0.0
    %3599 = vmatprep.subr.mxu0 0.0
    %3600 = vmatpush1.xpose.msra.mxu0 0.0
    %3601 = vmatprep.subr.mxu0 0.0
    %3602 = vmatpush1.xpose.msra.mxu0 0.0
    %3603 = vmatprep.subr.mxu0 0.0
    %3604 = vmatpush1.xpose.msra.mxu0 0.0
    %3605 = vmatprep.subr.mxu0 0.0
    %3606 = vmatpush1.xpose.msra.mxu0 0.0
    %3607 = vmatprep.subr.mxu0 0.0
    %3608 = vmatpush1.xpose.msra.mxu0 0.0
    %3609 = vmatprep.subr.mxu0 0.0
    %3610 = vmatpush1.xpose.msra.mxu0 0.0
    %3611 = vmatprep.subr.mxu0 0.0
    %3612 = vmatpush1.xpose.msra.mxu0 0.0
    %3613 = vmatprep.subr.mxu0 0.0
    %3614 = vmatpush1.xpose.msra.mxu0 0.0
    %3615 = vmatprep.subr.mxu0 0.0
    %3616 = vmatpush1.xpose.msra.mxu0 0.0
    %3617 = vmatprep.subr.mxu0 0.0
    %3618 = vmatpush1.xpose.msra.mxu0 0.0
    %3619 = vmatprep.subr.mxu0 0.0
    %3620 = vmatpush1.xpose.msra.mxu0 0.0
    %3621 = vmatprep.subr.mxu0 0.0
    %3622 = vmatpush1.xpose.msra.mxu0 0.0
    %3623 = vmatprep.subr.mxu0 0.0
    %3624 = vmatpush1.xpose.msra.mxu0 0.0
    %3625 = vmatprep.subr.mxu0 0.0
    %3626 = vmatpush1.xpose.msra.mxu0 0.0
    %3627 = vmatprep.subr.mxu0 0.0
    %3628 = vmatpush1.xpose.msra.mxu0 0.0
    %3629 = vmatprep.subr.mxu0 0.0
    %3630 = vmatpush1.xpose.msra.mxu0 0.0
    %3631 = vmatprep.mubr.f32.mxu0 0.0
    %3632 = vmatmul.mubr.f32.gmra.mrb[0].mxu0 %v3563
    %v3633 = vpop.f32.mrb[0].mxu0
    %v3634 = vadd.f32 0.0, %v3633
    %v3635 = vpop.f32.mrb[0].mxu0
    %3636 = vdwg.mxu0
    %v3637 = vmul.f32 %v3634, 0.35355338
    %v3638 = vld [vmem:[#allocation4 + $0x8] sm:$0xff]
    %3640 = vrot.lane.b32.xlu0 %v3638, 112
    %v3641 = vpop.permute.xlu0 %3640
    %v3643 = vadd.f32 %v3637, %v3641
    %v3644 = vadd.f32 %v3643, %v1391
    %v3645 = vsel %vm593, %v3644, -inf
    %3646 = vmax.xlane.f32.xlu0 %v3645
    %v3647 = vpop.xlane.xlu0 %3646
    %v3648 = vsub.f32 %v3644, %v3647
    %v3649 = vmul.f32 %v3648, 1.442695
    %v3650 = vpow.pop %v3649
    %v3651 = vsel %vm593, %v3650, 0.0
    %3652 = vadd.xlane.f32.xlu0 %v3651
    %v3653 = vpop.xlane.xlu0 %3652
    %v3654 = vrcp.pop %v3653
    %v3655 = vmul.f32 %v3650, %v3654
    %3656 = vrot.lane.b32.xlu0 %v3557, 48
    %v3657 = vpop.permute.xlu0 %3656
    %v3660 = vsel %vm593, %v3655, 0
    %3662 = vmatprep.subr.mxu0 0.0
    %3663 = vmatpush1.msra.mxu0 %v3657
    %3664 = vmatprep.subr.mxu0 0.0
    %3665 = vmatpush1.msra.mxu0 0.0
    %3666 = vmatprep.subr.mxu0 0.0
    %3667 = vmatpush1.msra.mxu0 0.0
    %3668 = vmatprep.subr.mxu0 0.0
    %3669 = vmatpush1.msra.mxu0 0.0
    %3670 = vmatprep.subr.mxu0 0.0
    %3671 = vmatpush1.msra.mxu0 0.0
    %3672 = vmatprep.subr.mxu0 0.0
    %3673 = vmatpush1.msra.mxu0 0.0
    %3674 = vmatprep.subr.mxu0 0.0
    %3675 = vmatpush1.msra.mxu0 0.0
    %3676 = vmatprep.subr.mxu0 0.0
    %3677 = vmatpush1.msra.mxu0 0.0
    %3678 = vmatprep.subr.mxu0 0.0
    %3679 = vmatpush1.msra.mxu0 0.0
    %3680 = vmatprep.subr.mxu0 0.0
    %3681 = vmatpush1.msra.mxu0 0.0
    %3682 = vmatprep.subr.mxu0 0.0
    %3683 = vmatpush1.msra.mxu0 0.0
    %3684 = vmatprep.subr.mxu0 0.0
    %3685 = vmatpush1.msra.mxu0 0.0
    %3686 = vmatprep.subr.mxu0 0.0
    %3687 = vmatpush1.msra.mxu0 0.0
    %3688 = vmatprep.subr.mxu0 0.0
    %3689 = vmatpush1.msra.mxu0 0.0
    %3690 = vmatprep.subr.mxu0 0.0
    %3691 = vmatpush1.msra.mxu0 0.0
    %3692 = vmatprep.subr.mxu0 0.0
    %3693 = vmatpush1.msra.mxu0 0.0
    %3694 = vmatprep.subr.mxu0 0.0
    %3695 = vmatpush1.msra.mxu0 0.0
    %3696 = vmatprep.subr.mxu0 0.0
    %3697 = vmatpush1.msra.mxu0 0.0
    %3698 = vmatprep.subr.mxu0 0.0
    %3699 = vmatpush1.msra.mxu0 0.0
    %3700 = vmatprep.subr.mxu0 0.0
    %3701 = vmatpush1.msra.mxu0 0.0
    %3702 = vmatprep.subr.mxu0 0.0
    %3703 = vmatpush1.msra.mxu0 0.0
    %3704 = vmatprep.subr.mxu0 0.0
    %3705 = vmatpush1.msra.mxu0 0.0
    %3706 = vmatprep.subr.mxu0 0.0
    %3707 = vmatpush1.msra.mxu0 0.0
    %3708 = vmatprep.subr.mxu0 0.0
    %3709 = vmatpush1.msra.mxu0 0.0
    %3710 = vmatprep.subr.mxu0 0.0
    %3711 = vmatpush1.msra.mxu0 0.0
    %3712 = vmatprep.subr.mxu0 0.0
    %3713 = vmatpush1.msra.mxu0 0.0
    %3714 = vmatprep.subr.mxu0 0.0
    %3715 = vmatpush1.msra.mxu0 0.0
    %3716 = vmatprep.subr.mxu0 0.0
    %3717 = vmatpush1.msra.mxu0 0.0
    %3718 = vmatprep.subr.mxu0 0.0
    %3719 = vmatpush1.msra.mxu0 0.0
    %3720 = vmatprep.subr.mxu0 0.0
    %3721 = vmatpush1.msra.mxu0 0.0
    %3722 = vmatprep.subr.mxu0 0.0
    %3723 = vmatpush1.msra.mxu0 0.0
    %3724 = vmatprep.subr.mxu0 0.0
    %3725 = vmatpush1.msra.mxu0 0.0
    %3726 = vmatprep.mubr.f32.mxu0 0.0
    %3727 = vmatmul.mubr.f32.gmra.mrb[0].mxu0 %v3660
    %v3728 = vpop.f32.mrb[0].mxu0
    %v3729 = vadd.f32 0.0, %v3728
    %v3730 = vpop.f32.mrb[0].mxu0
    %3731 = vdwg.mxu0
    %3733 = vrot.lane.b32.xlu0 %v3729, 16
    %v3734 = vpop.permute.xlu0 %3733
    %3736 = vst.msk [vmem:[#allocation3 + $0x8] sm:$0xff] %vm1124, %v3734
    %v3737 = vld [vmem:[#allocation2 + $0x8] sm:$0xff]
    %3739 = vrot.lane.b32.xlu0 %v3737, 104
    %v3740 = vpop.permute.xlu0 %3739
    %3741 = vrot.lane.b32.xlu0 %v3737, 72
    %v3742 = vpop.permute.xlu0 %3741
    %v3743 = vsel %vm593, %v3740, 0
    %v3745 = vsel %vm593, %v3742, 0
    %3747 = vmatprep.subr.mxu0 0.0
    %3748 = vmatpush1.xpose.msra.mxu0 %v3745
    %3749 = vmatprep.subr.mxu0 0.0
    %3750 = vmatpush1.xpose.msra.mxu0 0.0
    %3751 = vmatprep.subr.mxu0 0.0
    %3752 = vmatpush1.xpose.msra.mxu0 0.0
    %3753 = vmatprep.subr.mxu0 0.0
    %3754 = vmatpush1.xpose.msra.mxu0 0.0
    %3755 = vmatprep.subr.mxu0 0.0
    %3756 = vmatpush1.xpose.msra.mxu0 0.0
    %3757 = vmatprep.subr.mxu0 0.0
    %3758 = vmatpush1.xpose.msra.mxu0 0.0
    %3759 = vmatprep.subr.mxu0 0.0
    %3760 = vmatpush1.xpose.msra.mxu0 0.0
    %3761 = vmatprep.subr.mxu0 0.0
    %3762 = vmatpush1.xpose.msra.mxu0 0.0
    %3763 = vmatprep.subr.mxu0 0.0
    %3764 = vmatpush1.xpose.msra.mxu0 0.0
    %3765 = vmatprep.subr.mxu0 0.0
    %3766 = vmatpush1.xpose.msra.mxu0 0.0
    %3767 = vmatprep.subr.mxu0 0.0
    %3768 = vmatpush1.xpose.msra.mxu0 0.0
    %3769 = vmatprep.subr.mxu0 0.0
    %3770 = vmatpush1.xpose.msra.mxu0 0.0
    %3771 = vmatprep.subr.mxu0 0.0
    %3772 = vmatpush1.xpose.msra.mxu0 0.0
    %3773 = vmatprep.subr.mxu0 0.0
    %3774 = vmatpush1.xpose.msra.mxu0 0.0
    %3775 = vmatprep.subr.mxu0 0.0
    %3776 = vmatpush1.xpose.msra.mxu0 0.0
    %3777 = vmatprep.subr.mxu0 0.0
    %3778 = vmatpush1.xpose.msra.mxu0 0.0
    %3779 = vmatprep.subr.mxu0 0.0
    %3780 = vmatpush1.xpose.msra.mxu0 0.0
    %3781 = vmatprep.subr.mxu0 0.0
    %3782 = vmatpush1.xpose.msra.mxu0 0.0
    %3783 = vmatprep.subr.mxu0 0.0
    %3784 = vmatpush1.xpose.msra.mxu0 0.0
    %3785 = vmatprep.subr.mxu0 0.0
    %3786 = vmatpush1.xpose.msra.mxu0 0.0
    %3787 = vmatprep.subr.mxu0 0.0
    %3788 = vmatpush1.xpose.msra.mxu0 0.0
    %3789 = vmatprep.subr.mxu0 0.0
    %3790 = vmatpush1.xpose.msra.mxu0 0.0
    %3791 = vmatprep.subr.mxu0 0.0
    %3792 = vmatpush1.xpose.msra.mxu0 0.0
    %3793 = vmatprep.subr.mxu0 0.0
    %3794 = vmatpush1.xpose.msra.mxu0 0.0
    %3795 = vmatprep.subr.mxu0 0.0
    %3796 = vmatpush1.xpose.msra.mxu0 0.0
    %3797 = vmatprep.subr.mxu0 0.0
    %3798 = vmatpush1.xpose.msra.mxu0 0.0
    %3799 = vmatprep.subr.mxu0 0.0
    %3800 = vmatpush1.xpose.msra.mxu0 0.0
    %3801 = vmatprep.subr.mxu0 0.0
    %3802 = vmatpush1.xpose.msra.mxu0 0.0
    %3803 = vmatprep.subr.mxu0 0.0
    %3804 = vmatpush1.xpose.msra.mxu0 0.0
    %3805 = vmatprep.subr.mxu0 0.0
    %3806 = vmatpush1.xpose.msra.mxu0 0.0
    %3807 = vmatprep.subr.mxu0 0.0
    %3808 = vmatpush1.xpose.msra.mxu0 0.0
    %3809 = vmatprep.subr.mxu0 0.0
    %3810 = vmatpush1.xpose.msra.mxu0 0.0
    %3811 = vmatprep.mubr.f32.mxu0 0.0
    %3812 = vmatmul.mubr.f32.gmra.mrb[0].mxu0 %v3743
    %v3813 = vpop.f32.mrb[0].mxu0
    %v3814 = vadd.f32 0.0, %v3813
    %v3815 = vpop.f32.mrb[0].mxu0
    %3816 = vdwg.mxu0
    %v3817 = vmul.f32 %v3814, 0.35355338
    %v3818 = vld [vmem:[#allocation4 + $0x8] sm:$0xff]
    %3820 = vrot.lane.b32.xlu0 %v3818, 104
    %v3821 = vpop.permute.xlu0 %3820
    %v3823 = vadd.f32 %v3817, %v3821
    %v3824 = vadd.f32 %v3823, %v1391
    %v3825 = vsel %vm593, %v3824, -inf
    %3826 = vmax.xlane.f32.xlu0 %v3825
    %v3827 = vpop.xlane.xlu0 %3826
    %v3828 = vsub.f32 %v3824, %v3827
    %v3829 = vmul.f32 %v3828, 1.442695
    %v3830 = vpow.pop %v3829
    %v3831 = vsel %vm593, %v3830, 0.0
    %3832 = vadd.xlane.f32.xlu0 %v3831
    %v3833 = vpop.xlane.xlu0 %3832
    %v3834 = vrcp.pop %v3833
    %v3835 = vmul.f32 %v3830, %v3834
    %3836 = vrot.lane.b32.xlu0 %v3737, 40
    %v3837 = vpop.permute.xlu0 %3836
    %v3840 = vsel %vm593, %v3835, 0
    %3842 = vmatprep.subr.mxu0 0.0
    %3843 = vmatpush1.msra.mxu0 %v3837
    %3844 = vmatprep.subr.mxu0 0.0
    %3845 = vmatpush1.msra.mxu0 0.0
    %3846 = vmatprep.subr.mxu0 0.0
    %3847 = vmatpush1.msra.mxu0 0.0
    %3848 = vmatprep.subr.mxu0 0.0
    %3849 = vmatpush1.msra.mxu0 0.0
    %3850 = vmatprep.subr.mxu0 0.0
    %3851 = vmatpush1.msra.mxu0 0.0
    %3852 = vmatprep.subr.mxu0 0.0
    %3853 = vmatpush1.msra.mxu0 0.0
    %3854 = vmatprep.subr.mxu0 0.0
    %3855 = vmatpush1.msra.mxu0 0.0
    %3856 = vmatprep.subr.mxu0 0.0
    %3857 = vmatpush1.msra.mxu0 0.0
    %3858 = vmatprep.subr.mxu0 0.0
    %3859 = vmatpush1.msra.mxu0 0.0
    %3860 = vmatprep.subr.mxu0 0.0
    %3861 = vmatpush1.msra.mxu0 0.0
    %3862 = vmatprep.subr.mxu0 0.0
    %3863 = vmatpush1.msra.mxu0 0.0
    %3864 = vmatprep.subr.mxu0 0.0
    %3865 = vmatpush1.msra.mxu0 0.0
    %3866 = vmatprep.subr.mxu0 0.0
    %3867 = vmatpush1.msra.mxu0 0.0
    %3868 = vmatprep.subr.mxu0 0.0
    %3869 = vmatpush1.msra.mxu0 0.0
    %3870 = vmatprep.subr.mxu0 0.0
    %3871 = vmatpush1.msra.mxu0 0.0
    %3872 = vmatprep.subr.mxu0 0.0
    %3873 = vmatpush1.msra.mxu0 0.0
    %3874 = vmatprep.subr.mxu0 0.0
    %3875 = vmatpush1.msra.mxu0 0.0
    %3876 = vmatprep.subr.mxu0 0.0
    %3877 = vmatpush1.msra.mxu0 0.0
    %3878 = vmatprep.subr.mxu0 0.0
    %3879 = vmatpush1.msra.mxu0 0.0
    %3880 = vmatprep.subr.mxu0 0.0
    %3881 = vmatpush1.msra.mxu0 0.0
    %3882 = vmatprep.subr.mxu0 0.0
    %3883 = vmatpush1.msra.mxu0 0.0
    %3884 = vmatprep.subr.mxu0 0.0
    %3885 = vmatpush1.msra.mxu0 0.0
    %3886 = vmatprep.subr.mxu0 0.0
    %3887 = vmatpush1.msra.mxu0 0.0
    %3888 = vmatprep.subr.mxu0 0.0
    %3889 = vmatpush1.msra.mxu0 0.0
    %3890 = vmatprep.subr.mxu0 0.0
    %3891 = vmatpush1.msra.mxu0 0.0
    %3892 = vmatprep.subr.mxu0 0.0
    %3893 = vmatpush1.msra.mxu0 0.0
    %3894 = vmatprep.subr.mxu0 0.0
    %3895 = vmatpush1.msra.mxu0 0.0
    %3896 = vmatprep.subr.mxu0 0.0
    %3897 = vmatpush1.msra.mxu0 0.0
    %3898 = vmatprep.subr.mxu0 0.0
    %3899 = vmatpush1.msra.mxu0 0.0
    %3900 = vmatprep.subr.mxu0 0.0
    %3901 = vmatpush1.msra.mxu0 0.0
    %3902 = vmatprep.subr.mxu0 0.0
    %3903 = vmatpush1.msra.mxu0 0.0
    %3904 = vmatprep.subr.mxu0 0.0
    %3905 = vmatpush1.msra.mxu0 0.0
    %3906 = vmatprep.mubr.f32.mxu0 0.0
    %3907 = vmatmul.mubr.f32.gmra.mrb[0].mxu0 %v3840
    %v3908 = vpop.f32.mrb[0].mxu0
    %v3909 = vadd.f32 0.0, %v3908
    %v3910 = vpop.f32.mrb[0].mxu0
    %3911 = vdwg.mxu0
    %3913 = vrot.lane.b32.xlu0 %v3909, 24
    %v3914 = vpop.permute.xlu0 %3913
    %3916 = vst.msk [vmem:[#allocation3 + $0x8] sm:$0xff] %vm1305, %v3914
    %v3917 = vld [vmem:[#allocation3] sm:$0xff]
    %v3918 = vld [vmem:[#allocation3 + $0x8] sm:$0xff]
    %s3919 = scalar_lea.vmem %s7, 32
    %v3920 = vld [vmem:[%s3919] sm:$0xff]
    %v3921 = vld [vmem:[%s3919 + $0x8] sm:$0xff]
    %v3922 = vld [vmem:[%s3919 + $0x10] sm:$0xff]
    %v3923 = vld [vmem:[%s3919 + $0x18] sm:$0xff]
    %v3925 = vsel %vm74, %v3917, 0
    %v3928 = vsel %vm74, %v3918, 0
    %3930 = vmatprep.subr.mxu0 0.0
    %3931 = vmatpush1.msra.mxu0 %v3920
    %3932 = vmatprep.subr.mxu0 0.0
    %3933 = vmatpush1.msra.mxu0 %v3921
    %3934 = vmatprep.subr.mxu0 0.0
    %3935 = vmatpush1.msra.mxu0 %v3922
    %3936 = vmatprep.subr.mxu0 0.0
    %3937 = vmatpush1.msra.mxu0 %v3923
    %3938 = vmatprep.subr.mxu0 0.0
    %3939 = vmatpush1.msra.mxu0 0.0
    %3940 = vmatprep.subr.mxu0 0.0
    %3941 = vmatpush1.msra.mxu0 0.0
    %3942 = vmatprep.subr.mxu0 0.0
    %3943 = vmatpush1.msra.mxu0 0.0
    %3944 = vmatprep.subr.mxu0 0.0
    %3945 = vmatpush1.msra.mxu0 0.0
    %3946 = vmatprep.subr.mxu0 0.0
    %3947 = vmatpush1.msra.mxu0 0.0
    %3948 = vmatprep.subr.mxu0 0.0
    %3949 = vmatpush1.msra.mxu0 0.0
    %3950 = vmatprep.subr.mxu0 0.0
    %3951 = vmatpush1.msra.mxu0 0.0
    %3952 = vmatprep.subr.mxu0 0.0
    %3953 = vmatpush1.msra.mxu0 0.0
    %3954 = vmatprep.subr.mxu0 0.0
    %3955 = vmatpush1.msra.mxu0 0.0
    %3956 = vmatprep.subr.mxu0 0.0
    %3957 = vmatpush1.msra.mxu0 0.0
    %3958 = vmatprep.subr.mxu0 0.0
    %3959 = vmatpush1.msra.mxu0 0.0
    %3960 = vmatprep.subr.mxu0 0.0
    %3961 = vmatpush1.msra.mxu0 0.0
    %3962 = vmatprep.subr.mxu0 0.0
    %3963 = vmatpush1.msra.mxu0 0.0
    %3964 = vmatprep.subr.mxu0 0.0
    %3965 = vmatpush1.msra.mxu0 0.0
    %3966 = vmatprep.subr.mxu0 0.0
    %3967 = vmatpush1.msra.mxu0 0.0
    %3968 = vmatprep.subr.mxu0 0.0
    %3969 = vmatpush1.msra.mxu0 0.0
    %3970 = vmatprep.subr.mxu0 0.0
    %3971 = vmatpush1.msra.mxu0 0.0
    %3972 = vmatprep.subr.mxu0 0.0
    %3973 = vmatpush1.msra.mxu0 0.0
    %3974 = vmatprep.subr.mxu0 0.0
    %3975 = vmatpush1.msra.mxu0 0.0
    %3976 = vmatprep.subr.mxu0 0.0
    %3977 = vmatpush1.msra.mxu0 0.0
    %3978 = vmatprep.subr.mxu0 0.0
    %3979 = vmatpush1.msra.mxu0 0.0
    %3980 = vmatprep.subr.mxu0 0.0
    %3981 = vmatpush1.msra.mxu0 0.0
    %3982 = vmatprep.subr.mxu0 0.0
    %3983 = vmatpush1.msra.mxu0 0.0
    %3984 = vmatprep.subr.mxu0 0.0
    %3985 = vmatpush1.msra.mxu0 0.0
    %3986 = vmatprep.subr.mxu0 0.0
    %3987 = vmatpush1.msra.mxu0 0.0
    %3988 = vmatprep.subr.mxu0 0.0
    %3989 = vmatpush1.msra.mxu0 0.0
    %3990 = vmatprep.subr.mxu0 0.0
    %3991 = vmatpush1.msra.mxu0 0.0
    %3992 = vmatprep.subr.mxu0 0.0
    %3993 = vmatpush1.msra.mxu0 0.0
    %3994 = vmatprep.mubr.f32.mxu0 0.0
    %3995 = vmatmul.mubr.f32.gmra.mrb[0].mxu0 %v3925
    %v3996 = vpop.f32.mrb[0].mxu0
    %v3997 = vadd.f32 0.0, %v3996
    %v3998 = vpop.f32.mrb[0].mxu0
    %3999 = vmatprep.mubr.f32.mxu0 0.0
    %4000 = vmatmul.mubr.f32.gmra.mrb[0].mxu0 %v3928
    %v4001 = vpop.f32.mrb[0].mxu0
    %v4002 = vadd.f32 0.0, %v4001
    %v4003 = vpop.f32.mrb[0].mxu0
    %4004 = vdwg.mxu0
    %v4005 = vadd.f32 %v2362, %v3997
    %v4006 = vadd.f32 %v2363, %v4002
    %v4007 = vld [vmem:[%s14 + $0x12] sm:$0x1]
    %v4008 = vlaneseq
    %v4009 = vshrl.u32 %v4008, 7
    %v4010 = vsub.s32 0, %v4009
    %v4011 = vrot.slane %v4007, %v4010
    %v4012 = vadd.f32 %v4005, %v4011
    %v4013 = vadd.f32 %v4006, %v4011
    %v4014 = vld [vmem:[%s14 + $0x13] sm:$0x1]
    %v4015 = vld [vmem:[%s14 + $0x14] sm:$0x1]
    %v4016 = vsel %vm74, %v4012, 0.0
    %4017 = vadd.xlane.f32.xlu0 %v4016
    %v4018 = vpop.xlane.xlu0 %4017
    %v4019 = vsel %vm74, %v4013, 0.0
    %4020 = vadd.xlane.f32.xlu0 %v4019
    %v4021 = vpop.xlane.xlu0 %4020
    %v4022 = vmul.f32 %v4018, %v411
    %v4023 = vmul.f32 %v4021, %v411
    %v4024 = vsub.f32 %v4012, %v4022
    %v4025 = vsub.f32 %v4013, %v4023
    %v4026 = vmul.f32 %v4024, %v4024
    %v4027 = vmul.f32 %v4025, %v4025
    %v4028 = vsel %vm74, %v4026, 0.0
    %4029 = vadd.xlane.f32.xlu0 %v4028
    %v4030 = vpop.xlane.xlu0 %4029
    %v4031 = vsel %vm74, %v4027, 0.0
    %4032 = vadd.xlane.f32.xlu0 %v4031
    %v4033 = vpop.xlane.xlu0 %4032
    %v4034 = vmul.f32 %v4030, %v411
    %v4035 = vmul.f32 %v4033, %v411
    %v4036 = vadd.f32 %v4034, 1e-05
    %v4037 = vadd.f32 %v4035, 1e-05
    %v4038 = vrsqrt.pop %v4036
    %v4039 = vrsqrt.pop %v4037
    %v4040 = vmul.f32 %v4024, %v4038
    %v4041 = vmul.f32 %v4025, %v4039
    %v4042 = vlaneseq
    %v4043 = vshrl.u32 %v4042, 7
    %v4044 = vsub.s32 0, %v4043
    %v4045 = vrot.slane %v4014, %v4044
    %v4046 = vmul.f32 %v4040, %v4045
    %v4047 = vmul.f32 %v4041, %v4045
    %v4048 = vlaneseq
    %v4049 = vshrl.u32 %v4048, 7
    %v4050 = vsub.s32 0, %v4049
    %v4051 = vrot.slane %v4015, %v4050
    %v4052 = vadd.f32 %v4046, %v4051
    %v4053 = vadd.f32 %v4047, %v4051
    %s4054 = scalar_lea.vmem %s8, 32
    %v4055 = vld [vmem:[%s4054] sm:$0xff]
    %v4056 = vld [vmem:[%s4054 + $0x8] sm:$0xff]
    %v4057 = vld [vmem:[%s4054 + $0x10] sm:$0xff]
    %v4058 = vld [vmem:[%s4054 + $0x18] sm:$0xff]
    %v4059 = vld [vmem:[%s14 + $0x15] sm:$0x1]
    %v4060 = vlaneseq
    %v4061 = vshrl.u32 %v4060, 7
    %v4062 = vsub.s32 0, %v4061
    %v4063 = vrot.slane %v4059, %v4062
    %v4065 = vsel %vm74, %v4052, 0
    %v4068 = vsel %vm74, %v4053, 0
    %4070 = vmatprep.subr.mxu0 0.0
    %4071 = vmatpush1.msra.mxu0 %v4055
    %4072 = vmatprep.subr.mxu0 0.0
    %4073 = vmatpush1.msra.mxu0 %v4056
    %4074 = vmatprep.subr.mxu0 0.0
    %4075 = vmatpush1.msra.mxu0 %v4057
    %4076 = vmatprep.subr.mxu0 0.0
    %4077 = vmatpush1.msra.mxu0 %v4058
    %4078 = vmatprep.subr.mxu0 0.0
    %4079 = vmatpush1.msra.mxu0 0.0
    %4080 = vmatprep.subr.mxu0 0.0
    %4081 = vmatpush1.msra.mxu0 0.0
    %4082 = vmatprep.subr.mxu0 0.0
    %4083 = vmatpush1.msra.mxu0 0.0
    %4084 = vmatprep.subr.mxu0 0.0
    %4085 = vmatpush1.msra.mxu0 0.0
    %4086 = vmatprep.subr.mxu0 0.0
    %4087 = vmatpush1.msra.mxu0 0.0
    %4088 = vmatprep.subr.mxu0 0.0
    %4089 = vmatpush1.msra.mxu0 0.0
    %4090 = vmatprep.subr.mxu0 0.0
    %4091 = vmatpush1.msra.mxu0 0.0
    %4092 = vmatprep.subr.mxu0 0.0
    %4093 = vmatpush1.msra.mxu0 0.0
    %4094 = vmatprep.subr.mxu0 0.0
    %4095 = vmatpush1.msra.mxu0 0.0
    %4096 = vmatprep.subr.mxu0 0.0
    %4097 = vmatpush1.msra.mxu0 0.0
    %4098 = vmatprep.subr.mxu0 0.0
    %4099 = vmatpush1.msra.mxu0 0.0
    %4100 = vmatprep.subr.mxu0 0.0
    %4101 = vmatpush1.msra.mxu0 0.0
    %4102 = vmatprep.subr.mxu0 0.0
    %4103 = vmatpush1.msra.mxu0 0.0
    %4104 = vmatprep.subr.mxu0 0.0
    %4105 = vmatpush1.msra.mxu0 0.0
    %4106 = vmatprep.subr.mxu0 0.0
    %4107 = vmatpush1.msra.mxu0 0.0
    %4108 = vmatprep.subr.mxu0 0.0
    %4109 = vmatpush1.msra.mxu0 0.0
    %4110 = vmatprep.subr.mxu0 0.0
    %4111 = vmatpush1.msra.mxu0 0.0
    %4112 = vmatprep.subr.mxu0 0.0
    %4113 = vmatpush1.msra.mxu0 0.0
    %4114 = vmatprep.subr.mxu0 0.0
    %4115 = vmatpush1.msra.mxu0 0.0
    %4116 = vmatprep.subr.mxu0 0.0
    %4117 = vmatpush1.msra.mxu0 0.0
    %4118 = vmatprep.subr.mxu0 0.0
    %4119 = vmatpush1.msra.mxu0 0.0
    %4120 = vmatprep.subr.mxu0 0.0
    %4121 = vmatpush1.msra.mxu0 0.0
    %4122 = vmatprep.subr.mxu0 0.0
    %4123 = vmatpush1.msra.mxu0 0.0
    %4124 = vmatprep.subr.mxu0 0.0
    %4125 = vmatpush1.msra.mxu0 0.0
    %4126 = vmatprep.subr.mxu0 0.0
    %4127 = vmatpush1.msra.mxu0 0.0
    %4128 = vmatprep.subr.mxu0 0.0
    %4129 = vmatpush1.msra.mxu0 0.0
    %4130 = vmatprep.subr.mxu0 0.0
    %4131 = vmatpush1.msra.mxu0 0.0
    %4132 = vmatprep.subr.mxu0 0.0
    %4133 = vmatpush1.msra.mxu0 0.0
    %4134 = vmatprep.mubr.f32.mxu0 0.0
    %4135 = vmatmul.mubr.f32.gmra.mrb[0].mxu0 %v4065
    %v4136 = vpop.f32.mrb[0].mxu0
    %v4137 = vadd.f32 %v4063, %v4136
    %v4138 = vpop.f32.mrb[0].mxu0
    %4139 = vmatprep.mubr.f32.mxu0 0.0
    %4140 = vmatmul.mubr.f32.gmra.mrb[0].mxu0 %v4068
    %v4141 = vpop.f32.mrb[0].mxu0
    %v4142 = vadd.f32 %v4063, %v4141
    %v4143 = vpop.f32.mrb[0].mxu0
    %4144 = vdwg.mxu0
    %v4145 = vmul.f32 %v4137, 0.5
    %v4146 = vmul.f32 %v4142, 0.5
    %v4147 = vmul.f32 %v4137, 0.044715
    %v4148 = vmul.f32 %v4142, 0.044715
    %v4149 = vmul.f32 %v4147, %v4137
    %v4150 = vmul.f32 %v4148, %v4142
    %v4151 = vmul.f32 %v4149, %v4137
    %v4152 = vmul.f32 %v4150, %v4142
    %v4153 = vadd.f32 %v4137, %v4151
    %v4154 = vadd.f32 %v4142, %v4152
    %v4155 = vmul.f32 %v4153, 0.7978846
    %v4156 = vmul.f32 %v4154, 0.7978846
    %v4157 = vtanh.pop %v4155
    %v4158 = vtanh.pop %v4156
    %v4159 = vadd.f32 %v4157, 1.0
    %v4160 = vadd.f32 %v4158, 1.0
    %v4161 = vmul.f32 %v4145, %v4159
    %v4162 = vmul.f32 %v4146, %v4160
    %s4163 = scalar_lea.vmem %s9, 64
    %v4164 = vld [vmem:[%s4163] sm:$0xff]
    %v4165 = vld [vmem:[%s4163 + $0x8] sm:$0xff]
    %v4166 = vld [vmem:[%s4163 + $0x10] sm:$0xff]
    %v4167 = vld [vmem:[%s4163 + $0x18] sm:$0xff]
    %v4168 = vld [vmem:[%s4163 + $0x20] sm:$0xff]
    %v4169 = vld [vmem:[%s4163 + $0x28] sm:$0xff]
    %v4170 = vld [vmem:[%s4163 + $0x30] sm:$0xff]
    %v4171 = vld [vmem:[%s4163 + $0x38] sm:$0xff]
    %v4173 = vsel %vm2273, %v4161, 0
    %v4176 = vsel %vm2273, %v4162, 0
    %4178 = vmatprep.subr.mxu0 0.0
    %4179 = vmatpush1.msra.mxu0 %v4164
    %4180 = vmatprep.subr.mxu0 0.0
    %4181 = vmatpush1.msra.mxu0 %v4165
    %4182 = vmatprep.subr.mxu0 0.0
    %4183 = vmatpush1.msra.mxu0 %v4166
    %4184 = vmatprep.subr.mxu0 0.0
    %4185 = vmatpush1.msra.mxu0 %v4167
    %4186 = vmatprep.subr.mxu0 0.0
    %4187 = vmatpush1.msra.mxu0 %v4168
    %4188 = vmatprep.subr.mxu0 0.0
    %4189 = vmatpush1.msra.mxu0 %v4169
    %4190 = vmatprep.subr.mxu0 0.0
    %4191 = vmatpush1.msra.mxu0 %v4170
    %4192 = vmatprep.subr.mxu0 0.0
    %4193 = vmatpush1.msra.mxu0 %v4171
    %4194 = vmatprep.subr.mxu0 0.0
    %4195 = vmatpush1.msra.mxu0 0.0
    %4196 = vmatprep.subr.mxu0 0.0
    %4197 = vmatpush1.msra.mxu0 0.0
    %4198 = vmatprep.subr.mxu0 0.0
    %4199 = vmatpush1.msra.mxu0 0.0
    %4200 = vmatprep.subr.mxu0 0.0
    %4201 = vmatpush1.msra.mxu0 0.0
    %4202 = vmatprep.subr.mxu0 0.0
    %4203 = vmatpush1.msra.mxu0 0.0
    %4204 = vmatprep.subr.mxu0 0.0
    %4205 = vmatpush1.msra.mxu0 0.0
    %4206 = vmatprep.subr.mxu0 0.0
    %4207 = vmatpush1.msra.mxu0 0.0
    %4208 = vmatprep.subr.mxu0 0.0
    %4209 = vmatpush1.msra.mxu0 0.0
    %4210 = vmatprep.subr.mxu0 0.0
    %4211 = vmatpush1.msra.mxu0 0.0
    %4212 = vmatprep.subr.mxu0 0.0
    %4213 = vmatpush1.msra.mxu0 0.0
    %4214 = vmatprep.subr.mxu0 0.0
    %4215 = vmatpush1.msra.mxu0 0.0
    %4216 = vmatprep.subr.mxu0 0.0
    %4217 = vmatpush1.msra.mxu0 0.0
    %4218 = vmatprep.subr.mxu0 0.0
    %4219 = vmatpush1.msra.mxu0 0.0
    %4220 = vmatprep.subr.mxu0 0.0
    %4221 = vmatpush1.msra.mxu0 0.0
    %4222 = vmatprep.subr.mxu0 0.0
    %4223 = vmatpush1.msra.mxu0 0.0
    %4224 = vmatprep.subr.mxu0 0.0
    %4225 = vmatpush1.msra.mxu0 0.0
    %4226 = vmatprep.subr.mxu0 0.0
    %4227 = vmatpush1.msra.mxu0 0.0
    %4228 = vmatprep.subr.mxu0 0.0
    %4229 = vmatpush1.msra.mxu0 0.0
    %4230 = vmatprep.subr.mxu0 0.0
    %4231 = vmatpush1.msra.mxu0 0.0
    %4232 = vmatprep.subr.mxu0 0.0
    %4233 = vmatpush1.msra.mxu0 0.0
    %4234 = vmatprep.subr.mxu0 0.0
    %4235 = vmatpush1.msra.mxu0 0.0
    %4236 = vmatprep.subr.mxu0 0.0
    %4237 = vmatpush1.msra.mxu0 0.0
    %4238 = vmatprep.subr.mxu0 0.0
    %4239 = vmatpush1.msra.mxu0 0.0
    %4240 = vmatprep.subr.mxu0 0.0
    %4241 = vmatpush1.msra.mxu0 0.0
    %4242 = vmatprep.mubr.f32.mxu0 0.0
    %4243 = vmatmul.mubr.f32.gmra.mrb[0].mxu0 %v4173
    %v4244 = vpop.f32.mrb[0].mxu0
    %v4245 = vadd.f32 0.0, %v4244
    %v4246 = vpop.f32.mrb[0].mxu0
    %4247 = vmatprep.mubr.f32.mxu0 0.0
    %4248 = vmatmul.mubr.f32.gmra.mrb[0].mxu0 %v4176
    %v4249 = vpop.f32.mrb[0].mxu0
    %v4250 = vadd.f32 0.0, %v4249
    %v4251 = vpop.f32.mrb[0].mxu0
    %4252 = vdwg.mxu0
    %v4253 = vadd.f32 %v4012, %v4245
    %v4254 = vadd.f32 %v4013, %v4250
    %v4255 = vld [vmem:[%s14 + $0x16] sm:$0x1]
    %v4256 = vlaneseq
    %v4257 = vshrl.u32 %v4256, 7
    %v4258 = vsub.s32 0, %v4257
    %v4259 = vrot.slane %v4255, %v4258
    %v4260 = vadd.f32 %v4253, %v4259
    %v4261 = vadd.f32 %v4254, %v4259
    %v4262 = vld [vmem:[%s14 + $0x17] sm:$0x1]
    %v4263 = vld [vmem:[%s14 + $0x18] sm:$0x1]
    %v4264 = vsel %vm74, %v4260, 0.0
    %4265 = vadd.xlane.f32.xlu0 %v4264
    %v4266 = vpop.xlane.xlu0 %4265
    %v4267 = vsel %vm74, %v4261, 0.0
    %4268 = vadd.xlane.f32.xlu0 %v4267
    %v4269 = vpop.xlane.xlu0 %4268
    %v4270 = vmul.f32 %v4266, %v411
    %v4271 = vmul.f32 %v4269, %v411
    %v4272 = vsub.f32 %v4260, %v4270
    %v4273 = vsub.f32 %v4261, %v4271
    %v4274 = vmul.f32 %v4272, %v4272
    %v4275 = vmul.f32 %v4273, %v4273
    %v4276 = vsel %vm74, %v4274, 0.0
    %4277 = vadd.xlane.f32.xlu0 %v4276
    %v4278 = vpop.xlane.xlu0 %4277
    %v4279 = vsel %vm74, %v4275, 0.0
    %4280 = vadd.xlane.f32.xlu0 %v4279
    %v4281 = vpop.xlane.xlu0 %4280
    %v4282 = vmul.f32 %v4278, %v411
    %v4283 = vmul.f32 %v4281, %v411
    %v4284 = vadd.f32 %v4282, 1e-05
    %v4285 = vadd.f32 %v4283, 1e-05
    %v4286 = vrsqrt.pop %v4284
    %v4287 = vrsqrt.pop %v4285
    %v4288 = vmul.f32 %v4272, %v4286
    %v4289 = vmul.f32 %v4273, %v4287
    %v4290 = vlaneseq
    %v4291 = vshrl.u32 %v4290, 7
    %v4292 = vsub.s32 0, %v4291
    %v4293 = vrot.slane %v4262, %v4292
    %v4294 = vmul.f32 %v4288, %v4293
    %v4295 = vmul.f32 %v4289, %v4293
    %v4296 = vlaneseq
    %v4297 = vshrl.u32 %v4296, 7
    %v4298 = vsub.s32 0, %v4297
    %v4299 = vrot.slane %v4263, %v4298
    %v4300 = vadd.f32 %v4294, %v4299
    %v4301 = vadd.f32 %v4295, %v4299
    %v4302 = vld [vmem:[%s10] sm:$0xff]
    %v4303 = vld [vmem:[%s10 + $0x8] sm:$0xff]
    %v4304 = vld [vmem:[%s10 + $0x10] sm:$0xff]
    %v4305 = vld [vmem:[%s10 + $0x18] sm:$0xff]
    %v4306 = vld [vmem:[%s14 + $0x19] sm:$0x1]
    %v4307 = vlaneseq
    %v4308 = vshrl.u32 %v4307, 7
    %v4309 = vsub.s32 0, %v4308
    %v4310 = vrot.slane %v4306, %v4309
    %v4312 = vsel %vm74, %v4300, 0
    %v4315 = vsel %vm74, %v4301, 0
    %4317 = vmatprep.subr.mxu0 0.0
    %4318 = vmatpush1.msra.mxu0 %v4302
    %4319 = vmatprep.subr.mxu0 0.0
    %4320 = vmatpush1.msra.mxu0 %v4303
    %4321 = vmatprep.subr.mxu0 0.0
    %4322 = vmatpush1.msra.mxu0 %v4304
    %4323 = vmatprep.subr.mxu0 0.0
    %4324 = vmatpush1.msra.mxu0 %v4305
    %4325 = vmatprep.subr.mxu0 0.0
    %4326 = vmatpush1.msra.mxu0 0.0
    %4327 = vmatprep.subr.mxu0 0.0
    %4328 = vmatpush1.msra.mxu0 0.0
    %4329 = vmatprep.subr.mxu0 0.0
    %4330 = vmatpush1.msra.mxu0 0.0
    %4331 = vmatprep.subr.mxu0 0.0
    %4332 = vmatpush1.msra.mxu0 0.0
    %4333 = vmatprep.subr.mxu0 0.0
    %4334 = vmatpush1.msra.mxu0 0.0
    %4335 = vmatprep.subr.mxu0 0.0
    %4336 = vmatpush1.msra.mxu0 0.0
    %4337 = vmatprep.subr.mxu0 0.0
    %4338 = vmatpush1.msra.mxu0 0.0
    %4339 = vmatprep.subr.mxu0 0.0
    %4340 = vmatpush1.msra.mxu0 0.0
    %4341 = vmatprep.subr.mxu0 0.0
    %4342 = vmatpush1.msra.mxu0 0.0
    %4343 = vmatprep.subr.mxu0 0.0
    %4344 = vmatpush1.msra.mxu0 0.0
    %4345 = vmatprep.subr.mxu0 0.0
    %4346 = vmatpush1.msra.mxu0 0.0
    %4347 = vmatprep.subr.mxu0 0.0
    %4348 = vmatpush1.msra.mxu0 0.0
    %4349 = vmatprep.subr.mxu0 0.0
    %4350 = vmatpush1.msra.mxu0 0.0
    %4351 = vmatprep.subr.mxu0 0.0
    %4352 = vmatpush1.msra.mxu0 0.0
    %4353 = vmatprep.subr.mxu0 0.0
    %4354 = vmatpush1.msra.mxu0 0.0
    %4355 = vmatprep.subr.mxu0 0.0
    %4356 = vmatpush1.msra.mxu0 0.0
    %4357 = vmatprep.subr.mxu0 0.0
    %4358 = vmatpush1.msra.mxu0 0.0
    %4359 = vmatprep.subr.mxu0 0.0
    %4360 = vmatpush1.msra.mxu0 0.0
    %4361 = vmatprep.subr.mxu0 0.0
    %4362 = vmatpush1.msra.mxu0 0.0
    %4363 = vmatprep.subr.mxu0 0.0
    %4364 = vmatpush1.msra.mxu0 0.0
    %4365 = vmatprep.subr.mxu0 0.0
    %4366 = vmatpush1.msra.mxu0 0.0
    %4367 = vmatprep.subr.mxu0 0.0
    %4368 = vmatpush1.msra.mxu0 0.0
    %4369 = vmatprep.subr.mxu0 0.0
    %4370 = vmatpush1.msra.mxu0 0.0
    %4371 = vmatprep.subr.mxu0 0.0
    %4372 = vmatpush1.msra.mxu0 0.0
    %4373 = vmatprep.subr.mxu0 0.0
    %4374 = vmatpush1.msra.mxu0 0.0
    %4375 = vmatprep.subr.mxu0 0.0
    %4376 = vmatpush1.msra.mxu0 0.0
    %4377 = vmatprep.subr.mxu0 0.0
    %4378 = vmatpush1.msra.mxu0 0.0
    %4379 = vmatprep.subr.mxu0 0.0
    %4380 = vmatpush1.msra.mxu0 0.0
    %4381 = vmatprep.mubr.f32.mxu0 0.0
    %4382 = vmatmul.mubr.f32.gmra.mrb[0].mxu0 %v4312
    %v4383 = vpop.f32.mrb[0].mxu0
    %v4384 = vadd.f32 %v4310, %v4383
    %v4385 = vpop.f32.mrb[0].mxu0
    %4386 = vmatprep.mubr.f32.mxu0 0.0
    %4387 = vmatmul.mubr.f32.gmra.mrb[0].mxu0 %v4315
    %v4388 = vpop.f32.mrb[0].mxu0
    %v4389 = vadd.f32 %v4310, %v4388
    %v4390 = vpop.f32.mrb[0].mxu0
    %4391 = vdwg.mxu0
    %v4392 = vmul.f32 %v4384, 0.5
    %v4393 = vmul.f32 %v4389, 0.5
    %v4394 = vmul.f32 %v4384, 0.044715
    %v4395 = vmul.f32 %v4389, 0.044715
    %v4396 = vmul.f32 %v4394, %v4384
    %v4397 = vmul.f32 %v4395, %v4389
    %v4398 = vmul.f32 %v4396, %v4384
    %v4399 = vmul.f32 %v4397, %v4389
    %v4400 = vadd.f32 %v4384, %v4398
    %v4401 = vadd.f32 %v4389, %v4399
    %v4402 = vmul.f32 %v4400, 0.7978846
    %v4403 = vmul.f32 %v4401, 0.7978846
    %v4404 = vtanh.pop %v4402
    %v4405 = vtanh.pop %v4403
    %v4406 = vadd.f32 %v4404, 1.0
    %v4407 = vadd.f32 %v4405, 1.0
    %v4408 = vmul.f32 %v4392, %v4406
    %v4409 = vmul.f32 %v4393, %v4407
    %v4410 = vld [vmem:[%s14 + $0x1a] sm:$0x1]
    %v4411 = vld [vmem:[%s14 + $0x1b] sm:$0x1]
    %v4412 = vsel %vm74, %v4408, 0.0
    %4413 = vadd.xlane.f32.xlu0 %v4412
    %v4414 = vpop.xlane.xlu0 %4413
    %v4415 = vsel %vm74, %v4409, 0.0
    %4416 = vadd.xlane.f32.xlu0 %v4415
    %v4417 = vpop.xlane.xlu0 %4416
    %v4418 = vmul.f32 %v4414, %v411
    %v4419 = vmul.f32 %v4417, %v411
    %v4420 = vsub.f32 %v4408, %v4418
    %v4421 = vsub.f32 %v4409, %v4419
    %v4422 = vmul.f32 %v4420, %v4420
    %v4423 = vmul.f32 %v4421, %v4421
    %v4424 = vsel %vm74, %v4422, 0.0
    %4425 = vadd.xlane.f32.xlu0 %v4424
    %v4426 = vpop.xlane.xlu0 %4425
    %v4427 = vsel %vm74, %v4423, 0.0
    %4428 = vadd.xlane.f32.xlu0 %v4427
    %v4429 = vpop.xlane.xlu0 %4428
    %v4430 = vmul.f32 %v4426, %v411
    %v4431 = vmul.f32 %v4429, %v411
    %v4432 = vadd.f32 %v4430, 1e-05
    %v4433 = vadd.f32 %v4431, 1e-05
    %v4434 = vrsqrt.pop %v4432
    %v4435 = vrsqrt.pop %v4433
    %v4436 = vmul.f32 %v4420, %v4434
    %v4437 = vmul.f32 %v4421, %v4435
    %v4438 = vlaneseq
    %v4439 = vshrl.u32 %v4438, 7
    %v4440 = vsub.s32 0, %v4439
    %v4441 = vrot.slane %v4410, %v4440
    %v4442 = vmul.f32 %v4436, %v4441
    %v4443 = vmul.f32 %v4437, %v4441
    %v4444 = vlaneseq
    %v4445 = vshrl.u32 %v4444, 7
    %v4446 = vsub.s32 0, %v4445
    %v4447 = vrot.slane %v4411, %v4446
    %v4448 = vadd.f32 %v4442, %v4447
    %v4449 = vadd.f32 %v4443, %v4447
    %v4450 = vld [vmem:[%s11] sm:$0xff]
    %v4451 = vld [vmem:[%s11 + $0x8] sm:$0xff]
    %v4452 = vld [vmem:[%s11 + $0x10] sm:$0xff]
    %v4453 = vld [vmem:[%s11 + $0x18] sm:$0xff]
    %v4454 = vld [vmem:[%s11 + $0x20] sm:$0xff]
    %v4455 = vld [vmem:[%s11 + $0x28] sm:$0xff]
    %v4456 = vld [vmem:[%s11 + $0x30] sm:$0xff]
    %v4457 = vld [vmem:[%s11 + $0x38] sm:$0xff]
    %v4458 = vld [vmem:[%s11 + $0x40] sm:$0xff]
    %v4459 = vld [vmem:[%s11 + $0x48] sm:$0xff]
    %v4460 = vld [vmem:[%s11 + $0x50] sm:$0xff]
    %v4461 = vld [vmem:[%s11 + $0x58] sm:$0xff]
    %v4462 = vld [vmem:[%s12] sm:$0x7]
    %v4464 = vlaneseq
    %v4465 = vshrl.u32 %v4464, 7
    %v4466 = vsub.s32 0, %v4465
    %v4467 = vrot.slane %v4462, %v4466
    %v4468 = vlaneseq
    %v4469 = vshrl.u32 %v4468, 7
    %v4470 = vsub.s32 1, %v4469
    %v4471 = vrot.slane %v4462, %v4470
    %v4472 = vlaneseq
    %v4473 = vshrl.u32 %v4472, 7
    %v4474 = vsub.s32 2, %v4473
    %v4475 = vrot.slane %v4462, %v4474
    %v4480 = vsel %vm74, %v4448, 0
    %v4483 = vsel %vm74, %v4449, 0
    %4485 = vmatprep.subr.mxu0 %v4451
    %4486 = vmatpush1.msra.mxu0 %v4450
    %4487 = vmatprep.subr.mxu0 %v4454
    %4488 = vmatpush1.msra.mxu0 %v4453
    %4489 = vmatprep.subr.mxu0 %v4457
    %4490 = vmatpush1.msra.mxu0 %v4456
    %4491 = vmatprep.subr.mxu0 %v4460
    %4492 = vmatpush1.msra.mxu0 %v4459
    %4493 = vmatprep.subr.mxu0 0.0
    %4494 = vmatpush1.msra.mxu0 0.0
    %4495 = vmatprep.subr.mxu0 0.0
    %4496 = vmatpush1.msra.mxu0 0.0
    %4497 = vmatprep.subr.mxu0 0.0
    %4498 = vmatpush1.msra.mxu0 0.0
    %4499 = vmatprep.subr.mxu0 0.0
    %4500 = vmatpush1.msra.mxu0 0.0
    %4501 = vmatprep.subr.mxu0 0.0
    %4502 = vmatpush1.msra.mxu0 0.0
    %4503 = vmatprep.subr.mxu0 0.0
    %4504 = vmatpush1.msra.mxu0 0.0
    %4505 = vmatprep.subr.mxu0 0.0
    %4506 = vmatpush1.msra.mxu0 0.0
    %4507 = vmatprep.subr.mxu0 0.0
    %4508 = vmatpush1.msra.mxu0 0.0
    %4509 = vmatprep.subr.mxu0 0.0
    %4510 = vmatpush1.msra.mxu0 0.0
    %4511 = vmatprep.subr.mxu0 0.0
    %4512 = vmatpush1.msra.mxu0 0.0
    %4513 = vmatprep.subr.mxu0 0.0
    %4514 = vmatpush1.msra.mxu0 0.0
    %4515 = vmatprep.subr.mxu0 0.0
    %4516 = vmatpush1.msra.mxu0 0.0
    %4517 = vmatprep.subr.mxu0 0.0
    %4518 = vmatpush1.msra.mxu0 0.0
    %4519 = vmatprep.subr.mxu0 0.0
    %4520 = vmatpush1.msra.mxu0 0.0
    %4521 = vmatprep.subr.mxu0 0.0
    %4522 = vmatpush1.msra.mxu0 0.0
    %4523 = vmatprep.subr.mxu0 0.0
    %4524 = vmatpush1.msra.mxu0 0.0
    %4525 = vmatprep.subr.mxu0 0.0
    %4526 = vmatpush1.msra.mxu0 0.0
    %4527 = vmatprep.subr.mxu0 0.0
    %4528 = vmatpush1.msra.mxu0 0.0
    %4529 = vmatprep.subr.mxu0 0.0
    %4530 = vmatpush1.msra.mxu0 0.0
    %4531 = vmatprep.subr.mxu0 0.0
    %4532 = vmatpush1.msra.mxu0 0.0
    %4533 = vmatprep.subr.mxu0 0.0
    %4534 = vmatpush1.msra.mxu0 0.0
    %4535 = vmatprep.subr.mxu0 0.0
    %4536 = vmatpush1.msra.mxu0 0.0
    %4537 = vmatprep.subr.mxu0 0.0
    %4538 = vmatpush1.msra.mxu0 0.0
    %4539 = vmatprep.subr.mxu0 0.0
    %4540 = vmatpush1.msra.mxu0 0.0
    %4541 = vmatprep.subr.mxu0 0.0
    %4542 = vmatpush1.msra.mxu0 0.0
    %4543 = vmatprep.subr.mxu0 0.0
    %4544 = vmatpush1.msra.mxu0 0.0
    %4545 = vmatprep.subr.mxu0 0.0
    %4546 = vmatpush1.msra.mxu0 0.0
    %4547 = vmatprep.subr.mxu0 0.0
    %4548 = vmatpush1.msra.mxu0 0.0
    %4549 = vmatprep.mubr.f32.mxu0 0.0
    %4550 = vmatmul.mubr.f32.gmra.mrb[0].mxu0 %v4480
    %v4551 = vpop.f32.mrb[0].mxu0
    %v4552 = vadd.f32 %v4467, %v4551
    %v4553 = vpop.f32.mrb[0].mxu0
    %v4554 = vadd.f32 %v4471, %v4553
    %4555 = vmatprep.mubr.f32.mxu0 0.0
    %4556 = vmatmul.mubr.f32.gmra.mrb[0].mxu0 %v4483
    %v4557 = vpop.f32.mrb[0].mxu0
    %v4558 = vadd.f32 %v4467, %v4557
    %v4559 = vpop.f32.mrb[0].mxu0
    %v4560 = vadd.f32 %v4471, %v4559
    %4561 = vdwg.mxu0
    %4562 = vmatprep.subr.mxu0 0.0
    %4563 = vmatpush1.msra.mxu0 %v4452
    %4564 = vmatprep.subr.mxu0 0.0
    %4565 = vmatpush1.msra.mxu0 %v4455
    %4566 = vmatprep.subr.mxu0 0.0
    %4567 = vmatpush1.msra.mxu0 %v4458
    %4568 = vmatprep.subr.mxu0 0.0
    %4569 = vmatpush1.msra.mxu0 %v4461
    %4570 = vmatprep.subr.mxu0 0.0
    %4571 = vmatpush1.msra.mxu0 0.0
    %4572 = vmatprep.subr.mxu0 0.0
    %4573 = vmatpush1.msra.mxu0 0.0
    %4574 = vmatprep.subr.mxu0 0.0
    %4575 = vmatpush1.msra.mxu0 0.0
    %4576 = vmatprep.subr.mxu0 0.0
    %4577 = vmatpush1.msra.mxu0 0.0
    %4578 = vmatprep.subr.mxu0 0.0
    %4579 = vmatpush1.msra.mxu0 0.0
    %4580 = vmatprep.subr.mxu0 0.0
    %4581 = vmatpush1.msra.mxu0 0.0
    %4582 = vmatprep.subr.mxu0 0.0
    %4583 = vmatpush1.msra.mxu0 0.0
    %4584 = vmatprep.subr.mxu0 0.0
    %4585 = vmatpush1.msra.mxu0 0.0
    %4586 = vmatprep.subr.mxu0 0.0
    %4587 = vmatpush1.msra.mxu0 0.0
    %4588 = vmatprep.subr.mxu0 0.0
    %4589 = vmatpush1.msra.mxu0 0.0
    %4590 = vmatprep.subr.mxu0 0.0
    %4591 = vmatpush1.msra.mxu0 0.0
    %4592 = vmatprep.subr.mxu0 0.0
    %4593 = vmatpush1.msra.mxu0 0.0
    %4594 = vmatprep.subr.mxu0 0.0
    %4595 = vmatpush1.msra.mxu0 0.0
    %4596 = vmatprep.subr.mxu0 0.0
    %4597 = vmatpush1.msra.mxu0 0.0
    %4598 = vmatprep.subr.mxu0 0.0
    %4599 = vmatpush1.msra.mxu0 0.0
    %4600 = vmatprep.subr.mxu0 0.0
    %4601 = vmatpush1.msra.mxu0 0.0
    %4602 = vmatprep.subr.mxu0 0.0
    %4603 = vmatpush1.msra.mxu0 0.0
    %4604 = vmatprep.subr.mxu0 0.0
    %4605 = vmatpush1.msra.mxu0 0.0
    %4606 = vmatprep.subr.mxu0 0.0
    %4607 = vmatpush1.msra.mxu0 0.0
    %4608 = vmatprep.subr.mxu0 0.0
    %4609 = vmatpush1.msra.mxu0 0.0
    %4610 = vmatprep.subr.mxu0 0.0
    %4611 = vmatpush1.msra.mxu0 0.0
    %4612 = vmatprep.subr.mxu0 0.0
    %4613 = vmatpush1.msra.mxu0 0.0
    %4614 = vmatprep.subr.mxu0 0.0
    %4615 = vmatpush1.msra.mxu0 0.0
    %4616 = vmatprep.subr.mxu0 0.0
    %4617 = vmatpush1.msra.mxu0 0.0
    %4618 = vmatprep.subr.mxu0 0.0
    %4619 = vmatpush1.msra.mxu0 0.0
    %4620 = vmatprep.subr.mxu0 0.0
    %4621 = vmatpush1.msra.mxu0 0.0
    %4622 = vmatprep.subr.mxu0 0.0
    %4623 = vmatpush1.msra.mxu0 0.0
    %4624 = vmatprep.subr.mxu0 0.0
    %4625 = vmatpush1.msra.mxu0 0.0
    %4626 = vmatprep.mubr.f32.mxu0 0.0
    %4627 = vmatmul.mubr.f32.gmra.mrb[0].mxu0 %v4480
    %v4628 = vpop.f32.mrb[0].mxu0
    %v4629 = vadd.f32 %v4475, %v4628
    %v4630 = vpop.f32.mrb[0].mxu0
    %4631 = vmatprep.mubr.f32.mxu0 0.0
    %4632 = vmatmul.mubr.f32.gmra.mrb[0].mxu0 %v4483
    %v4633 = vpop.f32.mrb[0].mxu0
    %v4634 = vadd.f32 %v4475, %v4633
    %v4635 = vpop.f32.mrb[0].mxu0
    %4636 = vdwg.mxu0
    %v4637 = vld [vmem:[%s13] sm:$0x3]
    %vm4638 = vcmask 130048
    %v4640 = vsel %vm4638, %v4637, 0
    %4642 = vmatprep.subr.mxu0 %v4554
    %4643 = vmatpush1.msra.mxu0 %v4552
    %4644 = vmatprep.subr.mxu0 %v4560
    %4645 = vmatpush1.msra.mxu0 %v4558
    %4646 = vmatprep.subr.mxu0 0.0
    %4647 = vmatpush1.msra.mxu0 0.0
    %4648 = vmatprep.subr.mxu0 0.0
    %4649 = vmatpush1.msra.mxu0 0.0
    %4650 = vmatprep.subr.mxu0 0.0
    %4651 = vmatpush1.msra.mxu0 0.0
    %4652 = vmatprep.subr.mxu0 0.0
    %4653 = vmatpush1.msra.mxu0 0.0
    %4654 = vmatprep.subr.mxu0 0.0
    %4655 = vmatpush1.msra.mxu0 0.0
    %4656 = vmatprep.subr.mxu0 0.0
    %4657 = vmatpush1.msra.mxu0 0.0
    %4658 = vmatprep.subr.mxu0 0.0
    %4659 = vmatpush1.msra.mxu0 0.0
    %4660 = vmatprep.subr.mxu0 0.0
    %4661 = vmatpush1.msra.mxu0 0.0
    %4662 = vmatprep.subr.mxu0 0.0
    %4663 = vmatpush1.msra.mxu0 0.0
    %4664 = vmatprep.subr.mxu0 0.0
    %4665 = vmatpush1.msra.mxu0 0.0
    %4666 = vmatprep.subr.mxu0 0.0
    %4667 = vmatpush1.msra.mxu0 0.0
    %4668 = vmatprep.subr.mxu0 0.0
    %4669 = vmatpush1.msra.mxu0 0.0
    %4670 = vmatprep.subr.mxu0 0.0
    %4671 = vmatpush1.msra.mxu0 0.0
    %4672 = vmatprep.subr.mxu0 0.0
    %4673 = vmatpush1.msra.mxu0 0.0
    %4674 = vmatprep.subr.mxu0 0.0
    %4675 = vmatpush1.msra.mxu0 0.0
    %4676 = vmatprep.subr.mxu0 0.0
    %4677 = vmatpush1.msra.mxu0 0.0
    %4678 = vmatprep.subr.mxu0 0.0
    %4679 = vmatpush1.msra.mxu0 0.0
    %4680 = vmatprep.subr.mxu0 0.0
    %4681 = vmatpush1.msra.mxu0 0.0
    %4682 = vmatprep.subr.mxu0 0.0
    %4683 = vmatpush1.msra.mxu0 0.0
    %4684 = vmatprep.subr.mxu0 0.0
    %4685 = vmatpush1.msra.mxu0 0.0
    %4686 = vmatprep.subr.mxu0 0.0
    %4687 = vmatpush1.msra.mxu0 0.0
    %4688 = vmatprep.subr.mxu0 0.0
    %4689 = vmatpush1.msra.mxu0 0.0
    %4690 = vmatprep.subr.mxu0 0.0
    %4691 = vmatpush1.msra.mxu0 0.0
    %4692 = vmatprep.subr.mxu0 0.0
    %4693 = vmatpush1.msra.mxu0 0.0
    %4694 = vmatprep.subr.mxu0 0.0
    %4695 = vmatpush1.msra.mxu0 0.0
    %4696 = vmatprep.subr.mxu0 0.0
    %4697 = vmatpush1.msra.mxu0 0.0
    %4698 = vmatprep.subr.mxu0 0.0
    %4699 = vmatpush1.msra.mxu0 0.0
    %4700 = vmatprep.subr.mxu0 0.0
    %4701 = vmatpush1.msra.mxu0 0.0
    %4702 = vmatprep.subr.mxu0 0.0
    %4703 = vmatpush1.msra.mxu0 0.0
    %4704 = vmatprep.subr.mxu0 0.0
    %4705 = vmatpush1.msra.mxu0 0.0
    %4706 = vmatprep.mubr.f32.mxu0 0.0
    %4707 = vmatmul.mubr.f32.gmra.mrb[0].mxu0 %v4640
    %v4708 = vpop.f32.mrb[0].mxu0
    %v4709 = vadd.f32 0.0, %v4708
    %v4710 = vpop.f32.mrb[0].mxu0
    %v4711 = vadd.f32 0.0, %v4710
    %4712 = vdwg.mxu0
    %4713 = vmatprep.subr.mxu0 0.0
    %4714 = vmatpush1.msra.mxu0 %v4629
    %4715 = vmatprep.subr.mxu0 0.0
    %4716 = vmatpush1.msra.mxu0 %v4634
    %4717 = vmatprep.subr.mxu0 0.0
    %4718 = vmatpush1.msra.mxu0 0.0
    %4719 = vmatprep.subr.mxu0 0.0
    %4720 = vmatpush1.msra.mxu0 0.0
    %4721 = vmatprep.subr.mxu0 0.0
    %4722 = vmatpush1.msra.mxu0 0.0
    %4723 = vmatprep.subr.mxu0 0.0
    %4724 = vmatpush1.msra.mxu0 0.0
    %4725 = vmatprep.subr.mxu0 0.0
    %4726 = vmatpush1.msra.mxu0 0.0
    %4727 = vmatprep.subr.mxu0 0.0
    %4728 = vmatpush1.msra.mxu0 0.0
    %4729 = vmatprep.subr.mxu0 0.0
    %4730 = vmatpush1.msra.mxu0 0.0
    %4731 = vmatprep.subr.mxu0 0.0
    %4732 = vmatpush1.msra.mxu0 0.0
    %4733 = vmatprep.subr.mxu0 0.0
    %4734 = vmatpush1.msra.mxu0 0.0
    %4735 = vmatprep.subr.mxu0 0.0
    %4736 = vmatpush1.msra.mxu0 0.0
    %4737 = vmatprep.subr.mxu0 0.0
    %4738 = vmatpush1.msra.mxu0 0.0
    %4739 = vmatprep.subr.mxu0 0.0
    %4740 = vmatpush1.msra.mxu0 0.0
    %4741 = vmatprep.subr.mxu0 0.0
    %4742 = vmatpush1.msra.mxu0 0.0
    %4743 = vmatprep.subr.mxu0 0.0
    %4744 = vmatpush1.msra.mxu0 0.0
    %4745 = vmatprep.subr.mxu0 0.0
    %4746 = vmatpush1.msra.mxu0 0.0
    %4747 = vmatprep.subr.mxu0 0.0
    %4748 = vmatpush1.msra.mxu0 0.0
    %4749 = vmatprep.subr.mxu0 0.0
    %4750 = vmatpush1.msra.mxu0 0.0
    %4751 = vmatprep.subr.mxu0 0.0
    %4752 = vmatpush1.msra.mxu0 0.0
    %4753 = vmatprep.subr.mxu0 0.0
    %4754 = vmatpush1.msra.mxu0 0.0
    %4755 = vmatprep.subr.mxu0 0.0
    %4756 = vmatpush1.msra.mxu0 0.0
    %4757 = vmatprep.subr.mxu0 0.0
    %4758 = vmatpush1.msra.mxu0 0.0
    %4759 = vmatprep.subr.mxu0 0.0
    %4760 = vmatpush1.msra.mxu0 0.0
    %4761 = vmatprep.subr.mxu0 0.0
    %4762 = vmatpush1.msra.mxu0 0.0
    %4763 = vmatprep.subr.mxu0 0.0
    %4764 = vmatpush1.msra.mxu0 0.0
    %4765 = vmatprep.subr.mxu0 0.0
    %4766 = vmatpush1.msra.mxu0 0.0
    %4767 = vmatprep.subr.mxu0 0.0
    %4768 = vmatpush1.msra.mxu0 0.0
    %4769 = vmatprep.subr.mxu0 0.0
    %4770 = vmatpush1.msra.mxu0 0.0
    %4771 = vmatprep.subr.mxu0 0.0
    %4772 = vmatpush1.msra.mxu0 0.0
    %4773 = vmatprep.subr.mxu0 0.0
    %4774 = vmatpush1.msra.mxu0 0.0
    %4775 = vmatprep.subr.mxu0 0.0
    %4776 = vmatpush1.msra.mxu0 0.0
    %4777 = vmatprep.mubr.f32.mxu0 0.0
    %4778 = vmatmul.mubr.f32.gmra.mrb[0].mxu0 %v4640
    %v4779 = vpop.f32.mrb[0].mxu0
    %v4780 = vadd.f32 0.0, %v4779
    %v4781 = vpop.f32.mrb[0].mxu0
    %4782 = vdwg.mxu0
    %v4786 = vcombine.low %v4709, %v4711
    %v4788 = vunpack.c.l.s4 1983009808
    %v4789 = vunpack.c.0.s8 %v4788
    %v4790 = vlaneseq
    %v4791 = vshrl.u32 %v4790, 7
    %v4792 = vsub.s32 %v4789, %v4791
    %v4793 = vrot.slane %v4786, %v4792
    %v4795 = vunpack.c.l.s4 1983009808
    %v4796 = vunpack.c.0.s8 %v4795
    %v4797 = vlaneseq
    %v4798 = vshrl.u32 %v4797, 7
    %v4799 = vsub.s32 %v4796, %v4798
    %v4800 = vrot.slane %v4780, %v4799
    %v4801 = vcombine.low %v4793, %v4800
    %4803 = vst [vmem:[#allocation5] sm:$0x3f] %v4801
    // Predicated region
    $region62: #{forward.1} parent=1 // pred_check
      _
    $region63: #{forward.1} parent=1 // pred_check_branch
      %4805 = sbr.rel (0) target = $region65
    $region64: #{forward.1} parent=1 // pred_region
      %s4807 = ssub.s32 96, 96
      %4808 = vsyncadd [#allocation6], %s4807
      %s4810 = sshll.u32 [#allocation5], 4
      %s4811 = int_to_ptr.vmem [resolvable:$true] %s4810
      %4813 = dma.vmem_to_hbm [thread:$0]  %s4811, 96, %s15, [#allocation6]
    $region65: #{forward.1} parent=1 // pred_fallthru
      _
    // Predicated region
    $region66: #{forward.1} parent=1 // pred_check
      _
    $region67: #{forward.1} parent=1 // pred_check_branch
      %4815 = sbr.rel (0) target = $region69
    $region68: #{forward.1} parent=1 // pred_region
      %4816 = dma.done [#allocation6], 96
    $region69: #{forward.1} parent=1 // pred_fallthru
      _
    %4817 = vsyncpa [#allocation6], 1

</llo_original>
